<compile_context>
chip_gen: v6e
topology: v6e:2x2x1
jax: 0.10.0
libtpu: 0.0.40
codegen_flags: <defaults>
</compile_context>

<pallas_src>
import functools
import math

import jax
import jax.numpy as jnp
from jax.experimental import pallas as pl
from jax.experimental.pallas import tpu as pltpu

_EPS = 1e-5      # torch LayerNorm default
_SLAB_W = 128    # lane width of the packed slabs (multiple of 128 -> unmasked loads)


# --------------------------------------------------------------------------- slab packer
def _pack_rows(entries, width=_SLAB_W):
    """Pack a list of (name, 2D f32 array) into one lane-dense (rows, width) slab.

    Each entry starts on an 8-row (sublane tile) boundary.  Returns the slab plus a
    dict name -> (row0, nrows, ncols) of *static* offsets for in-kernel slicing.
    """
    offs, parts, r = {}, [], 0
    for name, a in entries:
        a = jnp.asarray(a, jnp.float32)
        assert a.ndim == 2 and a.shape[1] <= width, (name, a.shape)
        nr, nc = a.shape
        nr_pad = ((nr + 7) // 8) * 8
        block = jnp.zeros((nr_pad, width), jnp.float32).at[:nr, :nc].set(a)
        parts.append(block)
        offs[name] = (r, nr, nc)
        r += nr_pad
    return jnp.concatenate(parts, axis=0), offs


# --------------------------------------------------------------------------- fused kernel
def _gboot_kernel(data_ref, par_ref, o_ref, *, B, Fi, T, N, M, C, Ha, Hg,
                  kd, vd, half, doff, poff):
    f32 = jnp.float32

    def rd(name):
        r0, nr, nc = poff[name]
        return par_ref[r0:r0 + nr, :nc]          # static slice -> small VMEM load

    def ln_last(z, g, b):
        mu = jnp.mean(z, axis=-1, keepdims=True)
        var = jnp.mean((z - mu) ** 2, axis=-1, keepdims=True)
        return (z - mu) * jax.lax.rsqrt(var + _EPS) * g + b

    # ---------------- inputs (two read-only layouts packed in one slab) ----------------
    r0, nr, nc = doff['ftn']
    x_ftn = data_ref[r0:r0 + nr, :nc].reshape(B, Fi, T, N)         # (B, F, T, N)
    r0, nr, nc = doff['nft']
    x_nft = data_ref[r0:r0 + nr, :nc]                              # (B*N, F*T), col = f*T + t

    # ---------------- EmbedT: LayerNorm(data.permute(0,2,3,1) + emb[pos]) --------------
    x = ln_last(x_ftn + rd('embT')[None, None], rd('gT'), rd('bT'))

    # ---------------- TAt: temporal multi-head attention (single fused QKV dot) --------
    residual = x
    qkv = jnp.dot(x.reshape(B * Fi * T, N), rd('wqkv'),
                  preferred_element_type=f32)                      # (B*F*T, Ha*(2kd+vd))
    scale = 1.0 / math.sqrt(kd)
    ctx_heads = []
    for h in range(Ha):                                            # Ha is tiny, static loop
        c0 = h * (2 * kd + vd)
        qh = qkv[:, c0:c0 + kd].reshape(B * Fi, T, kd)
        kh = qkv[:, c0 + kd:c0 + 2 * kd].reshape(B * Fi, T, kd)
        vh = qkv[:, c0 + 2 * kd:c0 + 2 * kd + vd].reshape(B * Fi, T, vd)
        s = jnp.einsum('gqd,gkd->gqk', qh, kh,
                       preferred_element_type=f32) * scale         # (B*F, Tq, Tk)
        # NOTE: reproduces torch F.softmax(scores, dim=3) -> softmax over the QUERY axis.
        s = s - jnp.max(s, axis=1, keepdims=True)
        es = jnp.exp(s)
        a = es * pl.reciprocal(jnp.sum(es, axis=1, keepdims=True), approx=True)
        ctx_heads.append(jnp.einsum('gqk,gkd->gqd', a, vh,
                                    preferred_element_type=f32))   # (B*F, T, vd)
    ctx = jnp.concatenate(ctx_heads, axis=-1).reshape(B * Fi * T, Ha * vd)
    attn = jnp.dot(ctx, rd('wfc'), preferred_element_type=f32).reshape(B, Fi, T, N)
    x = ln_last(attn + residual, rd('gA'), rd('bA'))
    # dropout(p=0.02): identity (inference)

    # ---------------- feature_temporal_mixer: Conv2d(T, M, (1, F)) as ONE dot ----------
    xcat = jnp.concatenate([x[b].reshape(Fi * T, N) for b in range(B)], axis=1)  # (F*T, B*N)
    xm = jnp.dot(xcat.T, rd('wmix'), preferred_element_type=f32) + rd('bmix')    # (B*N, M)

    # ---------------- EmbedS ----------------
    xm = ln_last(xm.reshape(B, N, M) + rd('embS')[None], rd('gS'), rd('bS'))
    xm = xm.reshape(B * N, M)
    # dropout: identity

    # ---------------- GATv2: dense masked attention, all (head, batch) groups batched --
    xlr = jnp.dot(xm, rd('wlr'), preferred_element_type=f32) + rd('blr')         # (B*N, Hg*2T)
    xl_list, xr_list = [], []
    for h in range(Hg):
        c0 = 2 * h * T
        xl_list.append(xlr[:, c0:c0 + T].reshape(B, N, T))
        xr_list.append(xlr[:, c0 + T:c0 + 2 * T].reshape(B, N, T))
    xl = jnp.concatenate(xl_list, axis=0)                          # (Hg*B, N, T), g = h*B + b
    xr = jnp.concatenate(xr_list, axis=0)
    eij = xr[:, :, None, :] + xl[:, None, :, :]                    # (G, Ni, Nj, T)
    eij = jnp.where(eij > 0, eij, 0.2 * eij)                       # LeakyReLU(0.2)
    sc = jnp.sum(eij * rd('attg')[:, None, None, :], axis=-1) + rd('mask')[None]
    sc = sc - jnp.max(sc, axis=-1, keepdims=True)                  # softmax over sources j
    pe = jnp.exp(sc)
    alpha = pe * pl.reciprocal(jnp.sum(pe, axis=-1, keepdims=True), approx=True)
    rg = jnp.einsum('gij,gjt->git', alpha, xl, preferred_element_type=f32)  # (G, N, T)
    # re-assemble to (B*N, C*T) with col = c*T + t (gat_headers == out_features)
    rg_nct = jnp.concatenate(
        [rg[h * B:(h + 1) * B].reshape(B * N, T) for h in range(Hg)],
        axis=-1) + rd('gatb')                                      # (B*N, C*T)

    # ---------------- GTU(3/5/7) + fc, folded into two lane-dense dots -----------------
    pq = jnp.dot(rg_nct, rd('kall2'), preferred_element_type=f32) + rd('bconv')  # (B*N, 2*half)
    gate = jnp.tanh(pq[:, :half]) * jax.nn.sigmoid(pq[:, half:])   # (B*N, half)
    y = jnp.dot(gate, rd('fmat'), preferred_element_type=f32) + rd('bfc')         # (B*N, C*T)
    y = jnp.maximum(y, 0.0)

    # ---------------- residual 1x1 conv + relu ------------------------------------------
    res = jnp.dot(x_nft, rd('rmat'), preferred_element_type=f32) + rd('rb')       # (B*N, C*T)
    y = jnp.maximum(res + y, 0.0)

    # ---------------- final LayerNorm over channels via a channel-averaging matmul ------
    mu = jnp.dot(y, rd('amat'), preferred_element_type=f32)
    var = jnp.maximum(jnp.dot(y * y, rd('amat'), preferred_element_type=f32) - mu * mu, 0.0)
    o_ref[...] = (y - mu) * jax.lax.rsqrt(var + _EPS) * rd('gln') + rd('bln')


# --------------------------------------------------------------------------- forward wrapper
def gboot_block_forward(data, edges, p, *, in_features, out_features, node_num,
                        time_num, model_dim, k_dim, v_dim, attention_headers,
                        gat_headers):
    B, N, Fi, T = data.shape
    assert Fi == in_features and N == node_num and T == time_num
    assert gat_headers == out_features, "gates require gat_headers == out_features"
    C, Ha, Hg, M, kd, vd = out_features, attention_headers, gat_headers, model_dim, k_dim, v_dim
    wouts = (T - 2, T - 4, T - 6)            # GTU kernel widths 3 / 5 / 7
    half = C * sum(wouts)
    f32 = jnp.float32

    # -------- data slab: both read-only layouts of the input, one DMA --------
    d32 = data.astype(f32)
    data_slab, doff = _pack_rows([
        ('ftn', jnp.transpose(d32, (0, 2, 3, 1)).reshape(B * Fi * T, N)),   # (B*F*T, N)
        ('nft', d32.reshape(B * N, Fi * T)),                                # (B*N, F*T)
    ])

    # -------- parameter slab (single DMA, static in-kernel slices) --------
    # TAt fused QKV: per-head [q(kd) | k(kd) | v(vd)] column blocks
    qkv_cols = []
    for h in range(Ha):
        qkv_cols += [p['tat_wq'][:, h * kd:(h + 1) * kd],
                     p['tat_wk'][:, h * kd:(h + 1) * kd],
                     p['tat_wv'][:, h * vd:(h + 1) * vd]]
    wqkv = jnp.concatenate(qkv_cols, axis=-1)                        # (N, Ha*(2kd+vd))

    # mixer Conv2d(T -> M, kernel (1, F)) flattened to (F*T, M)
    wmix = jnp.transpose(p['mix_w'], (2, 1, 0)).reshape(Fi * T, M)

    # GATv2 fused lin_l|lin_r, per-head [l(T) | r(T)] column blocks
    wlr_cols, blr_cols = [], []
    for h in range(Hg):
        wlr_cols += [p['gat_wl'][:, h * T:(h + 1) * T], p['gat_wr'][:, h * T:(h + 1) * T]]
        blr_cols += [p['gat_bl'][h * T:(h + 1) * T], p['gat_br'][h * T:(h + 1) * T]]
    wlr = jnp.concatenate(wlr_cols, axis=-1)                         # (M, Hg*2T)
    blr = jnp.concatenate(blr_cols).reshape(1, Hg * 2 * T)
    attg = jnp.repeat(p['gat_att'], B, axis=0)                       # (Hg*B, T), row = h*B + b
    gatb = p['gat_bias'].reshape(1, Hg * T)
    # dense additive adjacency mask (edges = (src, dst); messages j->i), + self loops
    mask = jnp.full((N, N), -1e9, f32)
    mask = mask.at[edges[1], edges[0]].set(0.0)
    mask = mask.at[jnp.arange(N), jnp.arange(N)].set(0.0)

    # GTU convs folded into a single (C*T, 2*half) matrix: columns = [p-halves | q-halves]
    p_blocks, q_blocks, bp, bq, f_blocks = [], [], [], [], []
    off = 0
    for ksz, wout in zip((3, 5, 7), wouts):
        t_i = jnp.arange(T)[None, :, None]
        w_i = jnp.arange(wout)[:, None, None]
        d_i = jnp.arange(ksz)[None, None, :]
        sel = (t_i == w_i + d_i).astype(f32)                         # (wout, T, ksz)
        for tag, kdst, bdst in (('p', p_blocks, bp), ('q', q_blocks, bq)):
            w2 = p[f'gate{ksz}_w{tag}']                              # (C*ksz, C), row = c*ksz + d
            wocd = w2.reshape(C, ksz, C).transpose(2, 0, 1)          # (o, c, d)
            kdst.append(jnp.einsum('ocd,wtd->ctow', wocd, sel).reshape(C * T, C * wout))
            bdst.append(jnp.repeat(p[f'gate{ksz}_b{tag}'], wout))
        # fc (Linear(3T-12 -> T)) rows for this gate's (o, w) columns
        f_blocks.append(jnp.einsum('ab,wt->awbt', jnp.eye(C, dtype=f32),
                                   p['fc_w'][off:off + wout, :]).reshape(C * wout, C * T))
        off += wout
    kall2 = jnp.concatenate(p_blocks + q_blocks, axis=1)             # (C*T, 2*half)
    bconv = jnp.concatenate(bp + bq).reshape(1, 2 * half)
    fmat = jnp.concatenate(f_blocks, axis=0)                         # (half, C*T)
    bfc = jnp.tile(p['fc_b'], C).reshape(1, C * T)

    # residual 1x1 conv expressed as a (F*T, C*T) matmul
    rmat = jnp.einsum('fo,ab->faob', p['res_w'],
                      jnp.eye(T, dtype=f32)).reshape(Fi * T, C * T)
    rb = jnp.repeat(p['res_b'], T).reshape(1, C * T)

    # final LayerNorm(out_features): channel-averaging matrix + expanded gamma/beta
    amat = jnp.tile(jnp.eye(T, dtype=f32), (C, C)) / C               # (C*T, C*T)
    gln = jnp.repeat(p['ln_g'], T).reshape(1, C * T)
    bln = jnp.repeat(p['ln_b'], T).reshape(1, C * T)

    par_slab, poff = _pack_rows([
        ('embT', p['embT_table']),
        ('gT', p['embT_ln_g'].reshape(1, N)), ('bT', p['embT_ln_b'].reshape(1, N)),
        ('wqkv', wqkv), ('wfc', p['tat_fc']),
        ('gA', p['tat_ln_g'].reshape(1, N)), ('bA', p['tat_ln_b'].reshape(1, N)),
        ('wmix', wmix), ('bmix', p['mix_b'].reshape(1, M)),
        ('embS', p['embS_table']),
        ('gS', p['embS_ln_g'].reshape(1, M)), ('bS', p['embS_ln_b'].reshape(1, M)),
        ('wlr', wlr), ('blr', blr), ('attg', attg), ('gatb', gatb), ('mask', mask),
        ('kall2', kall2), ('bconv', bconv), ('fmat', fmat), ('bfc', bfc),
        ('rmat', rmat), ('rb', rb),
        ('gln', gln), ('bln', bln), ('amat', amat),
    ])

    kern = functools.partial(_gboot_kernel, B=B, Fi=Fi, T=T, N=N, M=M, C=C,
                             Ha=Ha, Hg=Hg, kd=kd, vd=vd, half=half,
                             doff=doff, poff=poff)
    out = pl.pallas_call(
        kern,
        out_shape=jax.ShapeDtypeStruct((B * N, C * T), f32),
        grid=(1,),                                   # batch folded into a single step
        in_specs=[pl.BlockSpec(data_slab.shape, lambda i: (0, 0)),
                  pl.BlockSpec(par_slab.shape, lambda i: (0, 0))],
        out_specs=pl.BlockSpec((B * N, C * T), lambda i: (0, 0)),
        compiler_params=pltpu.CompilerParams(dimension_semantics=("arbitrary",)),
    )(data_slab, par_slab)
    return out.reshape(B, N, C, T)                                   # (B, N, C, T)


# --------------------------------------------------------------------------- deterministic params
def init_params(key, *, in_features, out_features, node_num, time_num, model_dim,
                k_dim, v_dim, attention_headers, gat_headers):
    keys = iter(jax.random.split(key, 40))

    def nrm(shape, scale=0.1):
        return scale * jax.random.normal(next(keys), shape, jnp.float32)

    Ha, Hg, C = attention_headers, gat_headers, out_features
    N, T, M, Fi = node_num, time_num, model_dim, in_features
    p = {
        'embT_table': nrm((T, N)),
        'embT_ln_g': jnp.ones((N,), jnp.float32), 'embT_ln_b': jnp.zeros((N,), jnp.float32),
        'tat_wq': nrm((N, k_dim * Ha)), 'tat_wk': nrm((N, k_dim * Ha)),
        'tat_wv': nrm((N, v_dim * Ha)), 'tat_fc': nrm((v_dim * Ha, N)),
        'tat_ln_g': jnp.ones((N,), jnp.float32), 'tat_ln_b': jnp.zeros((N,), jnp.float32),
        'mix_w': nrm((M, T, Fi)), 'mix_b': nrm((M,), 0.05),
        'embS_table': nrm((N, M)),
        'embS_ln_g': jnp.ones((M,), jnp.float32), 'embS_ln_b': jnp.zeros((M,), jnp.float32),
        'gat_wl': nrm((M, Hg * T)), 'gat_bl': nrm((Hg * T,), 0.05),
        'gat_wr': nrm((M, Hg * T)), 'gat_br': nrm((Hg * T,), 0.05),
        'gat_att': nrm((Hg, T)), 'gat_bias': nrm((Hg * T,), 0.05),
        'fc_w': nrm((3 * T - 12, T)), 'fc_b': nrm((T,), 0.05),
        'res_w': nrm((Fi, C)), 'res_b': nrm((C,), 0.05),
        'ln_g': jnp.ones((C,), jnp.float32), 'ln_b': jnp.zeros((C,), jnp.float32),
    }
    for ksz in (3, 5, 7):
        p[f'gate{ksz}_wp'] = nrm((C * ksz, C))
        p[f'gate{ksz}_wq'] = nrm((C * ksz, C))
        p[f'gate{ksz}_bp'] = nrm((C,), 0.05)
        p[f'gate{ksz}_bq'] = nrm((C,), 0.05)
    return p


if __name__ == "__main__":
    cfg = dict(in_features=3, out_features=4, node_num=8, time_num=8, model_dim=16,
               k_dim=4, v_dim=4, attention_headers=2, gat_headers=4)
    key = jax.random.PRNGKey(0)
    k_data, k_par = jax.random.split(key)
    data = jax.random.normal(k_data, (2, cfg['node_num'], cfg['in_features'],
                                      cfg['time_num']), jnp.float32)
    # bidirectional ring graph over the N nodes (self-loops added inside the forward)
    n = cfg['node_num']
    src = jnp.concatenate([jnp.arange(n), jnp.arange(n)])
    dst = jnp.concatenate([(jnp.arange(n) + 1) % n, (jnp.arange(n) - 1) % n])
    edges = jnp.stack([src, dst]).astype(jnp.int32)

    params = init_params(k_par, **cfg)
    fwd = jax.jit(functools.partial(gboot_block_forward, **cfg))
    out = jax.block_until_ready(fwd(data, edges, params))

    assert out.shape == (2, cfg['node_num'], cfg['out_features'], cfg['time_num'])
    assert bool(jnp.all(jnp.isfinite(out)))
    print("KERNEL_OK")
</pallas_src>

<mosaic_0001>
module attributes {stable_mosaic.version = 11 : i64} {
  func.func @_gboot_kernel(%arg0: i32, %arg1: memref<64x128xf32, #tpu.memory_space<vmem>>, %arg2: memref<336x128xf32, #tpu.memory_space<vmem>>, %arg3: memref<16x32xf32, #tpu.memory_space<vmem>>) attributes {dimension_semantics = [#tpu.dimension_semantics<arbitrary>], iteration_bounds = array<i64: 1>, scalar_prefetch = 0 : i64, scratch_operands = 0 : i64, tpu.core_type = #tpu.core_type<tc>, window_params = [{pipeline_mode = #tpu.pipeline_mode<synchronous>, transform_indices = @transform_0, window_bounds = array<i64: 64, 128>}, {pipeline_mode = #tpu.pipeline_mode<synchronous>, transform_indices = @transform_1, window_bounds = array<i64: 336, 128>}, {pipeline_mode = #tpu.pipeline_mode<synchronous>, transform_indices = @transform_2, window_bounds = array<i64: 16, 32>}]} {
    %c0 = arith.constant 0 : index
    %c0_0 = arith.constant 0 : index
    %0 = vector.load %arg1[%c0, %c0_0] : memref<64x128xf32, #tpu.memory_space<vmem>>, vector<48x8xf32>
    %1 = vector.shape_cast %0 : vector<48x8xf32> to vector<2x3x8x8xf32>
    %c48 = arith.constant 48 : index
    %c0_1 = arith.constant 0 : index
    %2 = vector.load %arg1[%c48, %c0_1] : memref<64x128xf32, #tpu.memory_space<vmem>>, vector<16x24xf32>
    %c0_2 = arith.constant 0 : index
    %c0_3 = arith.constant 0 : index
    %3 = vector.load %arg2[%c0_2, %c0_3] : memref<336x128xf32, #tpu.memory_space<vmem>>, vector<8x8xf32>
    %4 = vector.shape_cast %3 : vector<8x8xf32> to vector<1x1x8x8xf32>
    %5 = vector.broadcast %4 : vector<1x1x8x8xf32> to vector<2x3x8x8xf32>
    %6 = arith.addf %1, %5 : vector<2x3x8x8xf32>
    %c8 = arith.constant 8 : index
    %c0_4 = arith.constant 0 : index
    %7 = vector.load %arg2[%c8, %c0_4] : memref<336x128xf32, #tpu.memory_space<vmem>>, vector<1x8xf32>
    %c16 = arith.constant 16 : index
    %c0_5 = arith.constant 0 : index
    %8 = vector.load %arg2[%c16, %c0_5] : memref<336x128xf32, #tpu.memory_space<vmem>>, vector<1x8xf32>
    %cst = arith.constant dense<0.000000e+00> : vector<2x3x8xf32>
    %9 = vector.multi_reduction <add>, %6, %cst [3] : vector<2x3x8x8xf32> to vector<2x3x8xf32>
    %10 = vector.shape_cast %9 : vector<2x3x8xf32> to vector<2x3x8x1xf32>
    %cst_6 = arith.constant 8.000000e+00 : f32
    %11 = vector.broadcast %cst_6 : f32 to vector<2x3x8x1xf32>
    %12 = arith.divf %10, %11 : vector<2x3x8x1xf32>
    %13 = vector.broadcast %12 : vector<2x3x8x1xf32> to vector<2x3x8x8xf32>
    %14 = arith.subf %6, %13 : vector<2x3x8x8xf32>
    %15 = arith.mulf %14, %14 : vector<2x3x8x8xf32>
    %cst_7 = arith.constant dense<0.000000e+00> : vector<2x3x8xf32>
    %16 = vector.multi_reduction <add>, %15, %cst_7 [3] : vector<2x3x8x8xf32> to vector<2x3x8xf32>
    %17 = vector.shape_cast %16 : vector<2x3x8xf32> to vector<2x3x8x1xf32>
    %cst_8 = arith.constant 8.000000e+00 : f32
    %18 = vector.broadcast %cst_8 : f32 to vector<2x3x8x1xf32>
    %19 = arith.divf %17, %18 : vector<2x3x8x1xf32>
    %20 = vector.broadcast %12 : vector<2x3x8x1xf32> to vector<2x3x8x8xf32>
    %21 = arith.subf %6, %20 : vector<2x3x8x8xf32>
    %cst_9 = arith.constant 9.99999974E-6 : f32
    %22 = vector.broadcast %cst_9 : f32 to vector<2x3x8x1xf32>
    %23 = arith.addf %19, %22 : vector<2x3x8x1xf32>
    %24 = math.rsqrt %23 : vector<2x3x8x1xf32>
    %25 = vector.broadcast %24 : vector<2x3x8x1xf32> to vector<2x3x8x8xf32>
    %26 = arith.mulf %21, %25 : vector<2x3x8x8xf32>
    %27 = vector.shape_cast %7 : vector<1x8xf32> to vector<1x1x1x8xf32>
    %28 = vector.broadcast %27 : vector<1x1x1x8xf32> to vector<2x3x8x8xf32>
    %29 = arith.mulf %26, %28 : vector<2x3x8x8xf32>
    %30 = vector.shape_cast %8 : vector<1x8xf32> to vector<1x1x1x8xf32>
    %31 = vector.broadcast %30 : vector<1x1x1x8xf32> to vector<2x3x8x8xf32>
    %32 = arith.addf %29, %31 : vector<2x3x8x8xf32>
    %33 = vector.shape_cast %32 : vector<2x3x8x8xf32> to vector<48x8xf32>
    %c24 = arith.constant 24 : index
    %c0_10 = arith.constant 0 : index
    %34 = vector.load %arg2[%c24, %c0_10] : memref<336x128xf32, #tpu.memory_space<vmem>>, vector<8x24xf32>
    %cst_11 = arith.constant dense<0.000000e+00> : vector<48x24xf32>
    %35 = tpu.matmul %33, %34, %cst_11 {dimension_numbers = #tpu.dot_dimension_numbers<[1], [0], [0], [1], [0, 0, 1, 1], [], []>} : vector<48x8xf32>, vector<8x24xf32>, vector<48x24xf32> -> vector<48x24xf32>
    %36 = vector.extract_strided_slice %35 {offsets = [0, 0], sizes = [48, 4], strides = [1, 1]} : vector<48x24xf32> to vector<48x4xf32>
    %37 = vector.shape_cast %36 : vector<48x4xf32> to vector<6x8x4xf32>
    %38 = vector.extract_strided_slice %35 {offsets = [0, 4], sizes = [48, 4], strides = [1, 1]} : vector<48x24xf32> to vector<48x4xf32>
    %39 = vector.shape_cast %38 : vector<48x4xf32> to vector<6x8x4xf32>
    %40 = vector.extract_strided_slice %35 {offsets = [0, 8], sizes = [48, 4], strides = [1, 1]} : vector<48x24xf32> to vector<48x4xf32>
    %41 = vector.shape_cast %40 : vector<48x4xf32> to vector<6x8x4xf32>
    "tpu.trace_start"() <{level = 10 : i32, message = "gqd,gkd->gqk"}> : () -> ()
    %cst_12 = arith.constant dense<0.000000e+00> : vector<6x8x8xf32>
    %42 = tpu.matmul %37, %39, %cst_12 {dimension_numbers = #tpu.dot_dimension_numbers<[2], [2], [1], [1], [0, 0, 0, 1, 1, 1], [0], [0]>} : vector<6x8x4xf32>, vector<6x8x4xf32>, vector<6x8x8xf32> -> vector<6x8x8xf32>
    "tpu.trace_stop"() : () -> ()
    %cst_13 = arith.constant 5.000000e-01 : f32
    %43 = vector.broadcast %cst_13 : f32 to vector<6x8x8xf32>
    %44 = arith.mulf %42, %43 : vector<6x8x8xf32>
    %cst_14 = arith.constant dense<0xFF800000> : vector<6x8xf32>
    %45 = vector.multi_reduction <maximumf>, %44, %cst_14 [1] : vector<6x8x8xf32> to vector<6x8xf32>
    %46 = vector.shape_cast %45 : vector<6x8xf32> to vector<6x1x8xf32>
    %47 = vector.broadcast %46 : vector<6x1x8xf32> to vector<6x8x8xf32>
    %48 = arith.subf %44, %47 : vector<6x8x8xf32>
    %49 = math.exp %48 : vector<6x8x8xf32>
    %cst_15 = arith.constant dense<0.000000e+00> : vector<6x8xf32>
    %50 = vector.multi_reduction <add>, %49, %cst_15 [1] : vector<6x8x8xf32> to vector<6x8xf32>
    %51 = vector.shape_cast %50 : vector<6x8xf32> to vector<6x1x8xf32>
    %52 = tpu.reciprocal %51 {approx = true} : vector<6x1x8xf32> -> vector<6x1x8xf32>
    %53 = vector.broadcast %52 : vector<6x1x8xf32> to vector<6x8x8xf32>
    %54 = arith.mulf %49, %53 : vector<6x8x8xf32>
    "tpu.trace_start"() <{level = 10 : i32, message = "gqk,gkd->gqd"}> : () -> ()
    %cst_16 = arith.constant dense<0.000000e+00> : vector<6x8x4xf32>
    %55 = tpu.matmul %54, %41, %cst_16 {dimension_numbers = #tpu.dot_dimension_numbers<[2], [1], [1], [2], [0, 0, 0, 1, 1, 2], [0], [0]>} : vector<6x8x8xf32>, vector<6x8x4xf32>, vector<6x8x4xf32> -> vector<6x8x4xf32>
    "tpu.trace_stop"() : () -> ()
    %56 = vector.extract_strided_slice %35 {offsets = [0, 12], sizes = [48, 4], strides = [1, 1]} : vector<48x24xf32> to vector<48x4xf32>
    %57 = vector.shape_cast %56 : vector<48x4xf32> to vector<6x8x4xf32>
    %58 = vector.extract_strided_slice %35 {offsets = [0, 16], sizes = [48, 4], strides = [1, 1]} : vector<48x24xf32> to vector<48x4xf32>
    %59 = vector.shape_cast %58 : vector<48x4xf32> to vector<6x8x4xf32>
    %60 = vector.extract_strided_slice %35 {offsets = [0, 20], sizes = [48, 4], strides = [1, 1]} : vector<48x24xf32> to vector<48x4xf32>
    %61 = vector.shape_cast %60 : vector<48x4xf32> to vector<6x8x4xf32>
    "tpu.trace_start"() <{level = 10 : i32, message = "gqd,gkd->gqk"}> : () -> ()
    %cst_17 = arith.constant dense<0.000000e+00> : vector<6x8x8xf32>
    %62 = tpu.matmul %57, %59, %cst_17 {dimension_numbers = #tpu.dot_dimension_numbers<[2], [2], [1], [1], [0, 0, 0, 1, 1, 1], [0], [0]>} : vector<6x8x4xf32>, vector<6x8x4xf32>, vector<6x8x8xf32> -> vector<6x8x8xf32>
    "tpu.trace_stop"() : () -> ()
    %cst_18 = arith.constant 5.000000e-01 : f32
    %63 = vector.broadcast %cst_18 : f32 to vector<6x8x8xf32>
    %64 = arith.mulf %62, %63 : vector<6x8x8xf32>
    %cst_19 = arith.constant dense<0xFF800000> : vector<6x8xf32>
    %65 = vector.multi_reduction <maximumf>, %64, %cst_19 [1] : vector<6x8x8xf32> to vector<6x8xf32>
    %66 = vector.shape_cast %65 : vector<6x8xf32> to vector<6x1x8xf32>
    %67 = vector.broadcast %66 : vector<6x1x8xf32> to vector<6x8x8xf32>
    %68 = arith.subf %64, %67 : vector<6x8x8xf32>
    %69 = math.exp %68 : vector<6x8x8xf32>
    %cst_20 = arith.constant dense<0.000000e+00> : vector<6x8xf32>
    %70 = vector.multi_reduction <add>, %69, %cst_20 [1] : vector<6x8x8xf32> to vector<6x8xf32>
    %71 = vector.shape_cast %70 : vector<6x8xf32> to vector<6x1x8xf32>
    %72 = tpu.reciprocal %71 {approx = true} : vector<6x1x8xf32> -> vector<6x1x8xf32>
    %73 = vector.broadcast %72 : vector<6x1x8xf32> to vector<6x8x8xf32>
    %74 = arith.mulf %69, %73 : vector<6x8x8xf32>
    "tpu.trace_start"() <{level = 10 : i32, message = "gqk,gkd->gqd"}> : () -> ()
    %cst_21 = arith.constant dense<0.000000e+00> : vector<6x8x4xf32>
    %75 = tpu.matmul %74, %61, %cst_21 {dimension_numbers = #tpu.dot_dimension_numbers<[2], [1], [1], [2], [0, 0, 0, 1, 1, 2], [0], [0]>} : vector<6x8x8xf32>, vector<6x8x4xf32>, vector<6x8x4xf32> -> vector<6x8x4xf32>
    "tpu.trace_stop"() : () -> ()
    %76 = tpu.concatenate %55, %75 in 2 : vector<6x8x4xf32>, vector<6x8x4xf32> -> vector<6x8x8xf32>
    %77 = vector.shape_cast %76 : vector<6x8x8xf32> to vector<48x8xf32>
    %c32 = arith.constant 32 : index
    %c0_22 = arith.constant 0 : index
    %78 = vector.load %arg2[%c32, %c0_22] : memref<336x128xf32, #tpu.memory_space<vmem>>, vector<8x8xf32>
    %cst_23 = arith.constant dense<0.000000e+00> : vector<48x8xf32>
    %79 = tpu.matmul %77, %78, %cst_23 {dimension_numbers = #tpu.dot_dimension_numbers<[1], [0], [0], [1], [0, 0, 1, 1], [], []>} : vector<48x8xf32>, vector<8x8xf32>, vector<48x8xf32> -> vector<48x8xf32>
    %80 = vector.shape_cast %79 : vector<48x8xf32> to vector<2x3x8x8xf32>
    %81 = arith.addf %80, %32 : vector<2x3x8x8xf32>
    %c40 = arith.constant 40 : index
    %c0_24 = arith.constant 0 : index
    %82 = vector.load %arg2[%c40, %c0_24] : memref<336x128xf32, #tpu.memory_space<vmem>>, vector<1x8xf32>
    %c48_25 = arith.constant 48 : index
    %c0_26 = arith.constant 0 : index
    %83 = vector.load %arg2[%c48_25, %c0_26] : memref<336x128xf32, #tpu.memory_space<vmem>>, vector<1x8xf32>
    %cst_27 = arith.constant dense<0.000000e+00> : vector<2x3x8xf32>
    %84 = vector.multi_reduction <add>, %81, %cst_27 [3] : vector<2x3x8x8xf32> to vector<2x3x8xf32>
    %85 = vector.shape_cast %84 : vector<2x3x8xf32> to vector<2x3x8x1xf32>
    %cst_28 = arith.constant 8.000000e+00 : f32
    %86 = vector.broadcast %cst_28 : f32 to vector<2x3x8x1xf32>
    %87 = arith.divf %85, %86 : vector<2x3x8x1xf32>
    %88 = vector.broadcast %87 : vector<2x3x8x1xf32> to vector<2x3x8x8xf32>
    %89 = arith.subf %81, %88 : vector<2x3x8x8xf32>
    %90 = arith.mulf %89, %89 : vector<2x3x8x8xf32>
    %cst_29 = arith.constant dense<0.000000e+00> : vector<2x3x8xf32>
    %91 = vector.multi_reduction <add>, %90, %cst_29 [3] : vector<2x3x8x8xf32> to vector<2x3x8xf32>
    %92 = vector.shape_cast %91 : vector<2x3x8xf32> to vector<2x3x8x1xf32>
    %cst_30 = arith.constant 8.000000e+00 : f32
    %93 = vector.broadcast %cst_30 : f32 to vector<2x3x8x1xf32>
    %94 = arith.divf %92, %93 : vector<2x3x8x1xf32>
    %95 = vector.broadcast %87 : vector<2x3x8x1xf32> to vector<2x3x8x8xf32>
    %96 = arith.subf %81, %95 : vector<2x3x8x8xf32>
    %cst_31 = arith.constant 9.99999974E-6 : f32
    %97 = vector.broadcast %cst_31 : f32 to vector<2x3x8x1xf32>
    %98 = arith.addf %94, %97 : vector<2x3x8x1xf32>
    %99 = math.rsqrt %98 : vector<2x3x8x1xf32>
    %100 = vector.broadcast %99 : vector<2x3x8x1xf32> to vector<2x3x8x8xf32>
    %101 = arith.mulf %96, %100 : vector<2x3x8x8xf32>
    %102 = vector.shape_cast %82 : vector<1x8xf32> to vector<1x1x1x8xf32>
    %103 = vector.broadcast %102 : vector<1x1x1x8xf32> to vector<2x3x8x8xf32>
    %104 = arith.mulf %101, %103 : vector<2x3x8x8xf32>
    %105 = vector.shape_cast %83 : vector<1x8xf32> to vector<1x1x1x8xf32>
    %106 = vector.broadcast %105 : vector<1x1x1x8xf32> to vector<2x3x8x8xf32>
    %107 = arith.addf %104, %106 : vector<2x3x8x8xf32>
    %108 = vector.extract_strided_slice %107 {offsets = [0, 0, 0, 0], sizes = [1, 3, 8, 8], strides = [1, 1, 1, 1]} : vector<2x3x8x8xf32> to vector<1x3x8x8xf32>
    %109 = vector.shape_cast %108 : vector<1x3x8x8xf32> to vector<3x8x8xf32>
    %110 = vector.shape_cast %109 : vector<3x8x8xf32> to vector<24x8xf32>
    %111 = vector.extract_strided_slice %107 {offsets = [1, 0, 0, 0], sizes = [1, 3, 8, 8], strides = [1, 1, 1, 1]} : vector<2x3x8x8xf32> to vector<1x3x8x8xf32>
    %112 = vector.shape_cast %111 : vector<1x3x8x8xf32> to vector<3x8x8xf32>
    %113 = vector.shape_cast %112 : vector<3x8x8xf32> to vector<24x8xf32>
    %114 = tpu.concatenate %110, %113 in 1 : vector<24x8xf32>, vector<24x8xf32> -> vector<24x16xf32>
    %115 = tpu.transpose %114, [1, 0] : vector<24x16xf32> -> vector<16x24xf32>
    %c56 = arith.constant 56 : index
    %c0_32 = arith.constant 0 : index
    %116 = vector.load %arg2[%c56, %c0_32] : memref<336x128xf32, #tpu.memory_space<vmem>>, vector<24x16xf32>
    %cst_33 = arith.constant dense<0.000000e+00> : vector<16x16xf32>
    %117 = tpu.matmul %115, %116, %cst_33 {dimension_numbers = #tpu.dot_dimension_numbers<[1], [0], [0], [1], [0, 0, 1, 1], [], []>} : vector<16x24xf32>, vector<24x16xf32>, vector<16x16xf32> -> vector<16x16xf32>
    %c80 = arith.constant 80 : index
    %c0_34 = arith.constant 0 : index
    %118 = vector.load %arg2[%c80, %c0_34] : memref<336x128xf32, #tpu.memory_space<vmem>>, vector<1x16xf32>
    %119 = vector.broadcast %118 : vector<1x16xf32> to vector<16x16xf32>
    %120 = arith.addf %117, %119 : vector<16x16xf32>
    %121 = vector.shape_cast %120 : vector<16x16xf32> to vector<2x8x16xf32>
    %c88 = arith.constant 88 : index
    %c0_35 = arith.constant 0 : index
    %122 = vector.load %arg2[%c88, %c0_35] : memref<336x128xf32, #tpu.memory_space<vmem>>, vector<8x16xf32>
    %123 = vector.shape_cast %122 : vector<8x16xf32> to vector<1x8x16xf32>
    %124 = vector.broadcast %123 : vector<1x8x16xf32> to vector<2x8x16xf32>
    %125 = arith.addf %121, %124 : vector<2x8x16xf32>
    %c96 = arith.constant 96 : index
    %c0_36 = arith.constant 0 : index
    %126 = vector.load %arg2[%c96, %c0_36] : memref<336x128xf32, #tpu.memory_space<vmem>>, vector<1x16xf32>
    %c104 = arith.constant 104 : index
    %c0_37 = arith.constant 0 : index
    %127 = vector.load %arg2[%c104, %c0_37] : memref<336x128xf32, #tpu.memory_space<vmem>>, vector<1x16xf32>
    %cst_38 = arith.constant dense<0.000000e+00> : vector<2x8xf32>
    %128 = vector.multi_reduction <add>, %125, %cst_38 [2] : vector<2x8x16xf32> to vector<2x8xf32>
    %129 = vector.shape_cast %128 : vector<2x8xf32> to vector<2x8x1xf32>
    %cst_39 = arith.constant 1.600000e+01 : f32
    %130 = vector.broadcast %cst_39 : f32 to vector<2x8x1xf32>
    %131 = arith.divf %129, %130 : vector<2x8x1xf32>
    %132 = vector.broadcast %131 : vector<2x8x1xf32> to vector<2x8x16xf32>
    %133 = arith.subf %125, %132 : vector<2x8x16xf32>
    %134 = arith.mulf %133, %133 : vector<2x8x16xf32>
    %cst_40 = arith.constant dense<0.000000e+00> : vector<2x8xf32>
    %135 = vector.multi_reduction <add>, %134, %cst_40 [2] : vector<2x8x16xf32> to vector<2x8xf32>
    %136 = vector.shape_cast %135 : vector<2x8xf32> to vector<2x8x1xf32>
    %cst_41 = arith.constant 1.600000e+01 : f32
    %137 = vector.broadcast %cst_41 : f32 to vector<2x8x1xf32>
    %138 = arith.divf %136, %137 : vector<2x8x1xf32>
    %139 = vector.broadcast %131 : vector<2x8x1xf32> to vector<2x8x16xf32>
    %140 = arith.subf %125, %139 : vector<2x8x16xf32>
    %cst_42 = arith.constant 9.99999974E-6 : f32
    %141 = vector.broadcast %cst_42 : f32 to vector<2x8x1xf32>
    %142 = arith.addf %138, %141 : vector<2x8x1xf32>
    %143 = math.rsqrt %142 : vector<2x8x1xf32>
    %144 = vector.broadcast %143 : vector<2x8x1xf32> to vector<2x8x16xf32>
    %145 = arith.mulf %140, %144 : vector<2x8x16xf32>
    %146 = vector.shape_cast %126 : vector<1x16xf32> to vector<1x1x16xf32>
    %147 = vector.broadcast %146 : vector<1x1x16xf32> to vector<2x8x16xf32>
    %148 = arith.mulf %145, %147 : vector<2x8x16xf32>
    %149 = vector.shape_cast %127 : vector<1x16xf32> to vector<1x1x16xf32>
    %150 = vector.broadcast %149 : vector<1x1x16xf32> to vector<2x8x16xf32>
    %151 = arith.addf %148, %150 : vector<2x8x16xf32>
    %152 = vector.shape_cast %151 : vector<2x8x16xf32> to vector<16x16xf32>
    %c112 = arith.constant 112 : index
    %c0_43 = arith.constant 0 : index
    %153 = vector.load %arg2[%c112, %c0_43] : memref<336x128xf32, #tpu.memory_space<vmem>>, vector<16x64xf32>
    %cst_44 = arith.constant dense<0.000000e+00> : vector<16x64xf32>
    %154 = tpu.matmul %152, %153, %cst_44 {dimension_numbers = #tpu.dot_dimension_numbers<[1], [0], [0], [1], [0, 0, 1, 1], [], []>} : vector<16x16xf32>, vector<16x64xf32>, vector<16x64xf32> -> vector<16x64xf32>
    %c128 = arith.constant 128 : index
    %c0_45 = arith.constant 0 : index
    %155 = vector.load %arg2[%c128, %c0_45] : memref<336x128xf32, #tpu.memory_space<vmem>>, vector<1x64xf32>
    %156 = vector.broadcast %155 : vector<1x64xf32> to vector<16x64xf32>
    %157 = arith.addf %154, %156 : vector<16x64xf32>
    %158 = vector.extract_strided_slice %157 {offsets = [0, 0], sizes = [16, 8], strides = [1, 1]} : vector<16x64xf32> to vector<16x8xf32>
    %159 = vector.shape_cast %158 : vector<16x8xf32> to vector<2x8x8xf32>
    %160 = vector.extract_strided_slice %157 {offsets = [0, 8], sizes = [16, 8], strides = [1, 1]} : vector<16x64xf32> to vector<16x8xf32>
    %161 = vector.shape_cast %160 : vector<16x8xf32> to vector<2x8x8xf32>
    %162 = vector.extract_strided_slice %157 {offsets = [0, 16], sizes = [16, 8], strides = [1, 1]} : vector<16x64xf32> to vector<16x8xf32>
    %163 = vector.shape_cast %162 : vector<16x8xf32> to vector<2x8x8xf32>
    %164 = vector.extract_strided_slice %157 {offsets = [0, 24], sizes = [16, 8], strides = [1, 1]} : vector<16x64xf32> to vector<16x8xf32>
    %165 = vector.shape_cast %164 : vector<16x8xf32> to vector<2x8x8xf32>
    %166 = vector.extract_strided_slice %157 {offsets = [0, 32], sizes = [16, 8], strides = [1, 1]} : vector<16x64xf32> to vector<16x8xf32>
    %167 = vector.shape_cast %166 : vector<16x8xf32> to vector<2x8x8xf32>
    %168 = vector.extract_strided_slice %157 {offsets = [0, 40], sizes = [16, 8], strides = [1, 1]} : vector<16x64xf32> to vector<16x8xf32>
    %169 = vector.shape_cast %168 : vector<16x8xf32> to vector<2x8x8xf32>
    %170 = vector.extract_strided_slice %157 {offsets = [0, 48], sizes = [16, 8], strides = [1, 1]} : vector<16x64xf32> to vector<16x8xf32>
    %171 = vector.shape_cast %170 : vector<16x8xf32> to vector<2x8x8xf32>
    %172 = vector.extract_strided_slice %157 {offsets = [0, 56], sizes = [16, 8], strides = [1, 1]} : vector<16x64xf32> to vector<16x8xf32>
    %173 = vector.shape_cast %172 : vector<16x8xf32> to vector<2x8x8xf32>
    %174 = tpu.concatenate %159, %163, %167, %171 in 0 : vector<2x8x8xf32>, vector<2x8x8xf32>, vector<2x8x8xf32>, vector<2x8x8xf32> -> vector<8x8x8xf32>
    %175 = tpu.concatenate %161, %165, %169, %173 in 0 : vector<2x8x8xf32>, vector<2x8x8xf32>, vector<2x8x8xf32>, vector<2x8x8xf32> -> vector<8x8x8xf32>
    %176 = vector.shape_cast %175 : vector<8x8x8xf32> to vector<8x8x1x8xf32>
    %177 = vector.shape_cast %174 : vector<8x8x8xf32> to vector<8x1x8x8xf32>
    %178 = vector.broadcast %176 : vector<8x8x1x8xf32> to vector<8x8x8x8xf32>
    %179 = vector.broadcast %177 : vector<8x1x8x8xf32> to vector<8x8x8x8xf32>
    %180 = arith.addf %178, %179 : vector<8x8x8x8xf32>
    %cst_46 = arith.constant 0.000000e+00 : f32
    %181 = vector.broadcast %cst_46 : f32 to vector<8x8x8x8xf32>
    %182 = arith.cmpf ogt, %180, %181 : vector<8x8x8x8xf32>
    %cst_47 = arith.constant 2.000000e-01 : f32
    %183 = vector.broadcast %cst_47 : f32 to vector<8x8x8x8xf32>
    %184 = arith.mulf %183, %180 : vector<8x8x8x8xf32>
    %185 = arith.select %182, %180, %184 : vector<8x8x8x8xi1>, vector<8x8x8x8xf32>
    %c136 = arith.constant 136 : index
    %c0_48 = arith.constant 0 : index
    %186 = vector.load %arg2[%c136, %c0_48] : memref<336x128xf32, #tpu.memory_space<vmem>>, vector<8x8xf32>
    %187 = vector.shape_cast %186 : vector<8x8xf32> to vector<8x1x1x8xf32>
    %188 = vector.broadcast %187 : vector<8x1x1x8xf32> to vector<8x8x8x8xf32>
    %189 = arith.mulf %185, %188 : vector<8x8x8x8xf32>
    %cst_49 = arith.constant dense<0.000000e+00> : vector<8x8x8xf32>
    %190 = vector.multi_reduction <add>, %189, %cst_49 [3] : vector<8x8x8x8xf32> to vector<8x8x8xf32>
    %c152 = arith.constant 152 : index
    %c0_50 = arith.constant 0 : index
    %191 = vector.load %arg2[%c152, %c0_50] : memref<336x128xf32, #tpu.memory_space<vmem>>, vector<8x8xf32>
    %192 = vector.shape_cast %191 : vector<8x8xf32> to vector<1x8x8xf32>
    %193 = vector.broadcast %192 : vector<1x8x8xf32> to vector<8x8x8xf32>
    %194 = arith.addf %190, %193 : vector<8x8x8xf32>
    %cst_51 = arith.constant dense<0xFF800000> : vector<8x8xf32>
    %195 = vector.multi_reduction <maximumf>, %194, %cst_51 [2] : vector<8x8x8xf32> to vector<8x8xf32>
    %196 = vector.shape_cast %195 : vector<8x8xf32> to vector<8x8x1xf32>
    %197 = vector.broadcast %196 : vector<8x8x1xf32> to vector<8x8x8xf32>
    %198 = arith.subf %194, %197 : vector<8x8x8xf32>
    %199 = math.exp %198 : vector<8x8x8xf32>
    %cst_52 = arith.constant dense<0.000000e+00> : vector<8x8xf32>
    %200 = vector.multi_reduction <add>, %199, %cst_52 [2] : vector<8x8x8xf32> to vector<8x8xf32>
    %201 = vector.shape_cast %200 : vector<8x8xf32> to vector<8x8x1xf32>
    %202 = tpu.reciprocal %201 {approx = true} : vector<8x8x1xf32> -> vector<8x8x1xf32>
    %203 = vector.broadcast %202 : vector<8x8x1xf32> to vector<8x8x8xf32>
    %204 = arith.mulf %199, %203 : vector<8x8x8xf32>
    "tpu.trace_start"() <{level = 10 : i32, message = "gij,gjt->git"}> : () -> ()
    %cst_53 = arith.constant dense<0.000000e+00> : vector<8x8x8xf32>
    %205 = tpu.matmul %204, %174, %cst_53 {dimension_numbers = #tpu.dot_dimension_numbers<[2], [1], [1], [2], [0, 0, 0, 1, 1, 2], [0], [0]>} : vector<8x8x8xf32>, vector<8x8x8xf32>, vector<8x8x8xf32> -> vector<8x8x8xf32>
    "tpu.trace_stop"() : () -> ()
    %206 = vector.extract_strided_slice %205 {offsets = [0, 0, 0], sizes = [2, 8, 8], strides = [1, 1, 1]} : vector<8x8x8xf32> to vector<2x8x8xf32>
    %207 = vector.shape_cast %206 : vector<2x8x8xf32> to vector<16x8xf32>
    %208 = vector.extract_strided_slice %205 {offsets = [2, 0, 0], sizes = [2, 8, 8], strides = [1, 1, 1]} : vector<8x8x8xf32> to vector<2x8x8xf32>
    %209 = vector.shape_cast %208 : vector<2x8x8xf32> to vector<16x8xf32>
    %210 = vector.extract_strided_slice %205 {offsets = [4, 0, 0], sizes = [2, 8, 8], strides = [1, 1, 1]} : vector<8x8x8xf32> to vector<2x8x8xf32>
    %211 = vector.shape_cast %210 : vector<2x8x8xf32> to vector<16x8xf32>
    %212 = vector.extract_strided_slice %205 {offsets = [6, 0, 0], sizes = [2, 8, 8], strides = [1, 1, 1]} : vector<8x8x8xf32> to vector<2x8x8xf32>
    %213 = vector.shape_cast %212 : vector<2x8x8xf32> to vector<16x8xf32>
    %214 = tpu.concatenate %207, %209, %211, %213 in 1 : vector<16x8xf32>, vector<16x8xf32>, vector<16x8xf32>, vector<16x8xf32> -> vector<16x32xf32>
    %c144 = arith.constant 144 : index
    %c0_54 = arith.constant 0 : index
    %215 = vector.load %arg2[%c144, %c0_54] : memref<336x128xf32, #tpu.memory_space<vmem>>, vector<1x32xf32>
    %216 = vector.broadcast %215 : vector<1x32xf32> to vector<16x32xf32>
    %217 = arith.addf %214, %216 : vector<16x32xf32>
    %c160 = arith.constant 160 : index
    %c0_55 = arith.constant 0 : index
    %218 = vector.load %arg2[%c160, %c0_55] : memref<336x128xf32, #tpu.memory_space<vmem>>, vector<32x96xf32>
    %cst_56 = arith.constant dense<0.000000e+00> : vector<16x96xf32>
    %219 = tpu.matmul %217, %218, %cst_56 {dimension_numbers = #tpu.dot_dimension_numbers<[1], [0], [0], [1], [0, 0, 1, 1], [], []>} : vector<16x32xf32>, vector<32x96xf32>, vector<16x96xf32> -> vector<16x96xf32>
    %c192 = arith.constant 192 : index
    %c0_57 = arith.constant 0 : index
    %220 = vector.load %arg2[%c192, %c0_57] : memref<336x128xf32, #tpu.memory_space<vmem>>, vector<1x96xf32>
    %221 = vector.broadcast %220 : vector<1x96xf32> to vector<16x96xf32>
    %222 = arith.addf %219, %221 : vector<16x96xf32>
    %223 = vector.extract_strided_slice %222 {offsets = [0, 0], sizes = [16, 48], strides = [1, 1]} : vector<16x96xf32> to vector<16x48xf32>
    %224 = math.tanh %223 : vector<16x48xf32>
    %225 = vector.extract_strided_slice %222 {offsets = [0, 48], sizes = [16, 48], strides = [1, 1]} : vector<16x96xf32> to vector<16x48xf32>
    %226 = arith.negf %225 : vector<16x48xf32>
    %227 = math.exp %226 : vector<16x48xf32>
    %cst_58 = arith.constant 1.000000e+00 : f32
    %228 = vector.broadcast %cst_58 : f32 to vector<16x48xf32>
    %229 = arith.addf %228, %227 : vector<16x48xf32>
    %230 = arith.divf %228, %229 : vector<16x48xf32>
    %231 = arith.mulf %224, %230 : vector<16x48xf32>
    %c200 = arith.constant 200 : index
    %c0_59 = arith.constant 0 : index
    %232 = vector.load %arg2[%c200, %c0_59] : memref<336x128xf32, #tpu.memory_space<vmem>>, vector<48x32xf32>
    %cst_60 = arith.constant dense<0.000000e+00> : vector<16x32xf32>
    %233 = tpu.matmul %231, %232, %cst_60 {dimension_numbers = #tpu.dot_dimension_numbers<[1], [0], [0], [1], [0, 0, 1, 1], [], []>} : vector<16x48xf32>, vector<48x32xf32>, vector<16x32xf32> -> vector<16x32xf32>
    %c248 = arith.constant 248 : index
    %c0_61 = arith.constant 0 : index
    %234 = vector.load %arg2[%c248, %c0_61] : memref<336x128xf32, #tpu.memory_space<vmem>>, vector<1x32xf32>
    %235 = vector.broadcast %234 : vector<1x32xf32> to vector<16x32xf32>
    %236 = arith.addf %233, %235 : vector<16x32xf32>
    %cst_62 = arith.constant 0.000000e+00 : f32
    %237 = vector.broadcast %cst_62 : f32 to vector<16x32xf32>
    %238 = arith.maximumf %236, %237 : vector<16x32xf32>
    %c256 = arith.constant 256 : index
    %c0_63 = arith.constant 0 : index
    %239 = vector.load %arg2[%c256, %c0_63] : memref<336x128xf32, #tpu.memory_space<vmem>>, vector<24x32xf32>
    %cst_64 = arith.constant dense<0.000000e+00> : vector<16x32xf32>
    %240 = tpu.matmul %2, %239, %cst_64 {dimension_numbers = #tpu.dot_dimension_numbers<[1], [0], [0], [1], [0, 0, 1, 1], [], []>} : vector<16x24xf32>, vector<24x32xf32>, vector<16x32xf32> -> vector<16x32xf32>
    %c280 = arith.constant 280 : index
    %c0_65 = arith.constant 0 : index
    %241 = vector.load %arg2[%c280, %c0_65] : memref<336x128xf32, #tpu.memory_space<vmem>>, vector<1x32xf32>
    %242 = vector.broadcast %241 : vector<1x32xf32> to vector<16x32xf32>
    %243 = arith.addf %240, %242 : vector<16x32xf32>
    %244 = arith.addf %243, %238 : vector<16x32xf32>
    %cst_66 = arith.constant 0.000000e+00 : f32
    %245 = vector.broadcast %cst_66 : f32 to vector<16x32xf32>
    %246 = arith.maximumf %244, %245 : vector<16x32xf32>
    %c304 = arith.constant 304 : index
    %c0_67 = arith.constant 0 : index
    %247 = vector.load %arg2[%c304, %c0_67] : memref<336x128xf32, #tpu.memory_space<vmem>>, vector<32x32xf32>
    %cst_68 = arith.constant dense<0.000000e+00> : vector<16x32xf32>
    %248 = tpu.matmul %246, %247, %cst_68 {dimension_numbers = #tpu.dot_dimension_numbers<[1], [0], [0], [1], [0, 0, 1, 1], [], []>} : vector<16x32xf32>, vector<32x32xf32>, vector<16x32xf32> -> vector<16x32xf32>
    %249 = arith.mulf %246, %246 : vector<16x32xf32>
    %c304_69 = arith.constant 304 : index
    %c0_70 = arith.constant 0 : index
    %250 = vector.load %arg2[%c304_69, %c0_70] : memref<336x128xf32, #tpu.memory_space<vmem>>, vector<32x32xf32>
    %cst_71 = arith.constant dense<0.000000e+00> : vector<16x32xf32>
    %251 = tpu.matmul %249, %250, %cst_71 {dimension_numbers = #tpu.dot_dimension_numbers<[1], [0], [0], [1], [0, 0, 1, 1], [], []>} : vector<16x32xf32>, vector<32x32xf32>, vector<16x32xf32> -> vector<16x32xf32>
    %252 = arith.mulf %248, %248 : vector<16x32xf32>
    %253 = arith.subf %251, %252 : vector<16x32xf32>
    %cst_72 = arith.constant 0.000000e+00 : f32
    %254 = vector.broadcast %cst_72 : f32 to vector<16x32xf32>
    %255 = arith.maximumf %253, %254 : vector<16x32xf32>
    %256 = arith.subf %246, %248 : vector<16x32xf32>
    %cst_73 = arith.constant 9.99999974E-6 : f32
    %257 = vector.broadcast %cst_73 : f32 to vector<16x32xf32>
    %258 = arith.addf %255, %257 : vector<16x32xf32>
    %259 = math.rsqrt %258 : vector<16x32xf32>
    %260 = arith.mulf %256, %259 : vector<16x32xf32>
    %c288 = arith.constant 288 : index
    %c0_74 = arith.constant 0 : index
    %261 = vector.load %arg2[%c288, %c0_74] : memref<336x128xf32, #tpu.memory_space<vmem>>, vector<1x32xf32>
    %262 = vector.broadcast %261 : vector<1x32xf32> to vector<16x32xf32>
    %263 = arith.mulf %260, %262 : vector<16x32xf32>
    %c296 = arith.constant 296 : index
    %c0_75 = arith.constant 0 : index
    %264 = vector.load %arg2[%c296, %c0_75] : memref<336x128xf32, #tpu.memory_space<vmem>>, vector<1x32xf32>
    %265 = vector.broadcast %264 : vector<1x32xf32> to vector<16x32xf32>
    %266 = arith.addf %263, %265 : vector<16x32xf32>
    %c0_76 = arith.constant 0 : index
    %c0_77 = arith.constant 0 : index
    %267 = vector.load %arg3[%c0_76, %c0_77] : memref<16x32xf32, #tpu.memory_space<vmem>>, vector<16x32xf32>
    tpu.vector_store %arg3[%c0_76, %c0_77], %266 {strides = array<i32>} : memref<16x32xf32, #tpu.memory_space<vmem>>, vector<16x32xf32>,
    return
  }
  func.func @transform_0(%arg0: i32) -> (i32, i32) {
    %c0_i32 = arith.constant 0 : i32
    %c0_i32_0 = arith.constant 0 : i32
    %c0_i32_1 = arith.constant 0 : i32
    return %c0_i32, %c0_i32_0 : i32, i32
  }
  func.func @transform_1(%arg0: i32) -> (i32, i32) {
    %c0_i32 = arith.constant 0 : i32
    %c0_i32_0 = arith.constant 0 : i32
    %c0_i32_1 = arith.constant 0 : i32
    return %c0_i32, %c0_i32_0 : i32, i32
  }
  func.func @transform_2(%arg0: i32) -> (i32, i32) {
    %c0_i32 = arith.constant 0 : i32
    %c0_i32_0 = arith.constant 0 : i32
    %c0_i32_1 = arith.constant 0 : i32
    return %c0_i32, %c0_i32_0 : i32, i32
  }
}

</mosaic_0001>

<llo_original>
// kernel: tile.13
$region0: #{tile.13}
  #allocation0 [shape = 's32[1]{0}', space=sflag, size = 0x4, scoped, tag = 'scoped memory for tile.13']
  %s0 = inlined_call_operand.vmem [shape: f32[8], index: 0, kind: input, shape index: {}]
  %s1 = inlined_call_operand.vmem [shape: f32[4,8], index: 1, kind: output, shape index: {}]
  // Predicated region
  $region2: #{tile.13} parent=0 // pred_check
    _
  $region3: #{tile.13} parent=0 // pred_check_branch
    %3 = sbr.rel (0) target = $region5
  $region4: #{tile.13} parent=0 // pred_region
    _
  $region5: #{tile.13} parent=0 // pred_fallthru
    _
  %v4 = vld [vmem:[%s0] ss:$0 sm:$0xff]
  %5 = vst [vmem:[%s1] sm:$0xf] %v4

// kernel: gboot_block_forward.1
$region0: #{gboot_block_forward.1}
  #allocation0 [shape = 'u32[]', space=smem, size = 0x4, offset = 0x4, fixed_abs, tag = 'smem constant byte address 0x4 - core index']
  #allocation1 [shape = 'u32[144,128]{1,0:T(1,128)}', space=vmem, size = 0x12000, scoped, tag = 'internal scratch']
  %s0 = inlined_call_operand.vmem [shape: f32[64,128], index: 0, kind: input, shape index: {}]
  %s1 = inlined_call_operand.vmem [shape: f32[336,128], index: 1, kind: input, shape index: {}]
  %s2 = inlined_call_operand.vmem [shape: f32[16,32], index: 2, kind: output, shape index: {}]
  %s3 = sld [smem:[#allocation0]]
  $region18: #{gboot_block_forward.1} parent=0
    _
  %s5 = ssub.s32 1, %s3
  %s6 = scalar_select 0, %s5, %s3
  // Predicated region
  $region2: #{gboot_block_forward.1} parent=0 // pred_check
    _
  $region3: #{gboot_block_forward.1} parent=0 // pred_check_branch
    %8 = sbr.rel (0) target = $region5
  $region4: #{gboot_block_forward.1} parent=0 // pred_region
    _
  $region5: #{gboot_block_forward.1} parent=0 // pred_fallthru
    _
  // Predicated region
  $region6: #{gboot_block_forward.1} parent=0 // pred_check
    _
  $region7: #{gboot_block_forward.1} parent=0 // pred_check_branch
    %10 = sbr.rel (0) target = $region9
  $region8: #{gboot_block_forward.1} parent=0 // pred_region
    _
  $region9: #{gboot_block_forward.1} parent=0 // pred_fallthru
    _
  %v11 = vld [vmem:[%s0] sm:$0xff]
  %v12 = vld [vmem:[%s0 + $0x8] sm:$0xff]
  %v13 = vld [vmem:[%s0 + $0x10] sm:$0xff]
  %v14 = vld [vmem:[%s0 + $0x18] sm:$0xff]
  %v15 = vld [vmem:[%s0 + $0x20] sm:$0xff]
  %v16 = vld [vmem:[%s0 + $0x28] sm:$0xff]
  %v17 = vld [vmem:[%s0 + $0x30] sm:$0xff]
  %v18 = vld [vmem:[%s0 + $0x38] sm:$0xff]
  %v19 = vld [vmem:[%s1] sm:$0xff]
  %v20 = vadd.f32 %v11, %v19
  %v21 = vadd.f32 %v12, %v19
  %v22 = vadd.f32 %v13, %v19
  %v23 = vadd.f32 %v14, %v19
  %v24 = vadd.f32 %v15, %v19
  %v25 = vadd.f32 %v16, %v19
  %v26 = vld [vmem:[%s1 + $0x8] sm:$0x1]
  %v27 = vld [vmem:[%s1 + $0x10] sm:$0x1]
  %vm28 = vcmask 64512
  %v29 = vsel %vm28, %v20, 0.0
  %30 = vadd.xlane.f32.xlu0 %v29
  %v31 = vpop.xlane.xlu0 %30
  %v32 = vsel %vm28, %v21, 0.0
  %33 = vadd.xlane.f32.xlu0 %v32
  %v34 = vpop.xlane.xlu0 %33
  %v35 = vsel %vm28, %v22, 0.0
  %36 = vadd.xlane.f32.xlu0 %v35
  %v37 = vpop.xlane.xlu0 %36
  %v38 = vsel %vm28, %v23, 0.0
  %39 = vadd.xlane.f32.xlu0 %v38
  %v40 = vpop.xlane.xlu0 %39
  %v41 = vsel %vm28, %v24, 0.0
  %42 = vadd.xlane.f32.xlu0 %v41
  %v43 = vpop.xlane.xlu0 %42
  %v44 = vsel %vm28, %v25, 0.0
  %45 = vadd.xlane.f32.xlu0 %v44
  %v46 = vpop.xlane.xlu0 %45
  %v47 = vrcp.pop 8.0
  %v48 = vmul.f32 %v31, %v47
  %v49 = vmul.f32 %v34, %v47
  %v50 = vmul.f32 %v37, %v47
  %v51 = vmul.f32 %v40, %v47
  %v52 = vmul.f32 %v43, %v47
  %v53 = vmul.f32 %v46, %v47
  %v54 = vsub.f32 %v20, %v48
  %v55 = vsub.f32 %v21, %v49
  %v56 = vsub.f32 %v22, %v50
  %v57 = vsub.f32 %v23, %v51
  %v58 = vsub.f32 %v24, %v52
  %v59 = vsub.f32 %v25, %v53
  %v60 = vmul.f32 %v54, %v54
  %v61 = vmul.f32 %v55, %v55
  %v62 = vmul.f32 %v56, %v56
  %v63 = vmul.f32 %v57, %v57
  %v64 = vmul.f32 %v58, %v58
  %v65 = vmul.f32 %v59, %v59
  %v66 = vsel %vm28, %v60, 0.0
  %67 = vadd.xlane.f32.xlu0 %v66
  %v68 = vpop.xlane.xlu0 %67
  %v69 = vsel %vm28, %v61, 0.0
  %70 = vadd.xlane.f32.xlu0 %v69
  %v71 = vpop.xlane.xlu0 %70
  %v72 = vsel %vm28, %v62, 0.0
  %73 = vadd.xlane.f32.xlu0 %v72
  %v74 = vpop.xlane.xlu0 %73
  %v75 = vsel %vm28, %v63, 0.0
  %76 = vadd.xlane.f32.xlu0 %v75
  %v77 = vpop.xlane.xlu0 %76
  %v78 = vsel %vm28, %v64, 0.0
  %79 = vadd.xlane.f32.xlu0 %v78
  %v80 = vpop.xlane.xlu0 %79
  %v81 = vsel %vm28, %v65, 0.0
  %82 = vadd.xlane.f32.xlu0 %v81
  %v83 = vpop.xlane.xlu0 %82
  %v84 = vmul.f32 %v68, %v47
  %v85 = vmul.f32 %v71, %v47
  %v86 = vmul.f32 %v74, %v47
  %v87 = vmul.f32 %v77, %v47
  %v88 = vmul.f32 %v80, %v47
  %v89 = vmul.f32 %v83, %v47
  %v90 = vadd.f32 %v84, 1e-05
  %v91 = vadd.f32 %v85, 1e-05
  %v92 = vadd.f32 %v86, 1e-05
  %v93 = vadd.f32 %v87, 1e-05
  %v94 = vadd.f32 %v88, 1e-05
  %v95 = vadd.f32 %v89, 1e-05
  %v96 = vrsqrt.pop %v90
  %v97 = vrsqrt.pop %v91
  %v98 = vrsqrt.pop %v92
  %v99 = vrsqrt.pop %v93
  %v100 = vrsqrt.pop %v94
  %v101 = vrsqrt.pop %v95
  %v102 = vmul.f32 %v54, %v96
  %v103 = vmul.f32 %v55, %v97
  %v104 = vmul.f32 %v56, %v98
  %v105 = vmul.f32 %v57, %v99
  %v106 = vmul.f32 %v58, %v100
  %v107 = vmul.f32 %v59, %v101
  %v108 = vlaneseq
  %v109 = vshrl.u32 %v108, 7
  %v110 = vsub.s32 0, %v109
  %v111 = vrot.slane %v26, %v110
  %v112 = vmul.f32 %v102, %v111
  %v113 = vmul.f32 %v103, %v111
  %v114 = vmul.f32 %v104, %v111
  %v115 = vmul.f32 %v105, %v111
  %v116 = vmul.f32 %v106, %v111
  %v117 = vmul.f32 %v107, %v111
  %v118 = vlaneseq
  %v119 = vshrl.u32 %v118, 7
  %v120 = vsub.s32 0, %v119
  %v121 = vrot.slane %v27, %v120
  %v122 = vadd.f32 %v112, %v121
  %v123 = vadd.f32 %v113, %v121
  %v124 = vadd.f32 %v114, %v121
  %v125 = vadd.f32 %v115, %v121
  %v126 = vadd.f32 %v116, %v121
  %v127 = vadd.f32 %v117, %v121
  %v128 = vld [vmem:[%s1 + $0x18] sm:$0xff]
  %v130 = vsel %vm28, %v122, 0
  %v133 = vsel %vm28, %v123, 0
  %v136 = vsel %vm28, %v124, 0
  %v139 = vsel %vm28, %v125, 0
  %v142 = vsel %vm28, %v126, 0
  %v145 = vsel %vm28, %v127, 0
  %147 = vmatprep.subr.mxu0 0.0
  %148 = vmatpush1.msra.mxu0 0.0
  %149 = vmatprep.subr.mxu0 0.0
  %150 = vmatpush1.msra.mxu0 0.0
  %151 = vmatprep.subr.mxu0 0.0
  %152 = vmatpush1.msra.mxu0 0.0
  %153 = vmatprep.subr.mxu0 0.0
  %154 = vmatpush1.msra.mxu0 0.0
  %155 = vmatprep.subr.mxu0 0.0
  %156 = vmatpush1.msra.mxu0 0.0
  %157 = vmatprep.subr.mxu0 0.0
  %158 = vmatpush1.msra.mxu0 0.0
  %159 = vmatprep.subr.mxu0 0.0
  %160 = vmatpush1.msra.mxu0 0.0
  %161 = vmatprep.subr.mxu0 0.0
  %162 = vmatpush1.msra.mxu0 0.0
  %163 = vmatprep.subr.mxu0 0.0
  %164 = vmatpush1.msra.mxu0 0.0
  %165 = vmatprep.subr.mxu0 0.0
  %166 = vmatpush1.msra.mxu0 0.0
  %167 = vmatprep.subr.mxu0 0.0
  %168 = vmatpush1.msra.mxu0 0.0
  %169 = vmatprep.subr.mxu0 0.0
  %170 = vmatpush1.msra.mxu0 0.0
  %171 = vmatprep.subr.mxu0 0.0
  %172 = vmatpush1.msra.mxu0 0.0
  %173 = vmatprep.subr.mxu0 0.0
  %174 = vmatpush1.msra.mxu0 0.0
  %175 = vmatprep.subr.mxu0 0.0
  %176 = vmatpush1.msra.mxu0 0.0
  %177 = vmatprep.subr.mxu0 0.0
  %178 = vmatpush1.msra.mxu0 %v128
  %179 = vmatprep.subr.mxu0 0.0
  %180 = vmatpush2.msra.mxu0 0.0
  %181 = vmatprep.subr.mxu0 0.0
  %182 = vmatpush2.msra.mxu0 0.0
  %183 = vmatprep.subr.mxu0 0.0
  %184 = vmatpush2.msra.mxu0 0.0
  %185 = vmatprep.subr.mxu0 0.0
  %186 = vmatpush2.msra.mxu0 0.0
  %187 = vmatprep.subr.mxu0 0.0
  %188 = vmatpush2.msra.mxu0 0.0
  %189 = vmatprep.subr.mxu0 0.0
  %190 = vmatpush2.msra.mxu0 0.0
  %191 = vmatprep.subr.mxu0 0.0
  %192 = vmatpush2.msra.mxu0 0.0
  %193 = vmatprep.subr.mxu0 0.0
  %194 = vmatpush2.msra.mxu0 0.0
  %195 = vmatprep.subr.mxu0 0.0
  %196 = vmatpush2.msra.mxu0 0.0
  %197 = vmatprep.subr.mxu0 0.0
  %198 = vmatpush2.msra.mxu0 0.0
  %199 = vmatprep.subr.mxu0 0.0
  %200 = vmatpush2.msra.mxu0 0.0
  %201 = vmatprep.subr.mxu0 0.0
  %202 = vmatpush2.msra.mxu0 0.0
  %203 = vmatprep.subr.mxu0 0.0
  %204 = vmatpush2.msra.mxu0 0.0
  %205 = vmatprep.subr.mxu0 0.0
  %206 = vmatpush2.msra.mxu0 0.0
  %207 = vmatprep.subr.mxu0 0.0
  %208 = vmatpush2.msra.mxu0 0.0
  %209 = vmatprep.subr.mxu0 0.0
  %210 = vmatpush2.msra.mxu0 0.0
  %211 = vmatprep.mubr.f32.mxu0 0.0
  %212 = vmatmul.mubr.f32.gmra.mxu0 %v130
  %v213 = vpop.f32.mrf.mxu0
  %v214 = vadd.f32 0.0, %v213
  %v215 = vpop.f32.mrf.mxu0
  %216 = vmatprep.mubr.f32.mxu0 0.0
  %217 = vmatmul.mubr.f32.gmra.mxu0 %v133
  %v218 = vpop.f32.mrf.mxu0
  %v219 = vadd.f32 0.0, %v218
  %v220 = vpop.f32.mrf.mxu0
  %221 = vmatprep.mubr.f32.mxu0 0.0
  %222 = vmatmul.mubr.f32.gmra.mxu0 %v136
  %v223 = vpop.f32.mrf.mxu0
  %v224 = vadd.f32 0.0, %v223
  %v225 = vpop.f32.mrf.mxu0
  %226 = vmatprep.mubr.f32.mxu0 0.0
  %227 = vmatmul.mubr.f32.gmra.mxu0 %v139
  %v228 = vpop.f32.mrf.mxu0
  %v229 = vadd.f32 0.0, %v228
  %v230 = vpop.f32.mrf.mxu0
  %231 = vmatprep.mubr.f32.mxu0 0.0
  %232 = vmatmul.mubr.f32.gmra.mxu0 %v142
  %v233 = vpop.f32.mrf.mxu0
  %v234 = vadd.f32 0.0, %v233
  %v235 = vpop.f32.mrf.mxu0
  %236 = vmatprep.mubr.f32.mxu0 0.0
  %237 = vmatmul.mubr.f32.gmra.mxu0 %v145
  %v238 = vpop.f32.mrf.mxu0
  %v239 = vadd.f32 0.0, %v238
  %v240 = vpop.f32.mrf.mxu0
  %241 = vdwg.mxu0
  %243 = vrot.lane.b32.xlu0 %v214, 124
  %v244 = vpop.permute.xlu0 %243
  %vm245 = vcmask 31744
  %v246 = vsel %vm245, %v214, 0
  %v248 = vsel %vm245, %v244, 0
  %250 = vmatprep.subr.mxu0 0.0
  %251 = vmatpush1.xpose.msra.mxu0 0.0
  %252 = vmatprep.subr.mxu0 0.0
  %253 = vmatpush1.xpose.msra.mxu0 0.0
  %254 = vmatprep.subr.mxu0 0.0
  %255 = vmatpush1.xpose.msra.mxu0 0.0
  %256 = vmatprep.subr.mxu0 0.0
  %257 = vmatpush1.xpose.msra.mxu0 0.0
  %258 = vmatprep.subr.mxu0 0.0
  %259 = vmatpush1.xpose.msra.mxu0 0.0
  %260 = vmatprep.subr.mxu0 0.0
  %261 = vmatpush1.xpose.msra.mxu0 0.0
  %262 = vmatprep.subr.mxu0 0.0
  %263 = vmatpush1.xpose.msra.mxu0 0.0
  %264 = vmatprep.subr.mxu0 0.0
  %265 = vmatpush1.xpose.msra.mxu0 0.0
  %266 = vmatprep.subr.mxu0 0.0
  %267 = vmatpush1.xpose.msra.mxu0 0.0
  %268 = vmatprep.subr.mxu0 0.0
  %269 = vmatpush1.xpose.msra.mxu0 0.0
  %270 = vmatprep.subr.mxu0 0.0
  %271 = vmatpush1.xpose.msra.mxu0 0.0
  %272 = vmatprep.subr.mxu0 0.0
  %273 = vmatpush1.xpose.msra.mxu0 0.0
  %274 = vmatprep.subr.mxu0 0.0
  %275 = vmatpush1.xpose.msra.mxu0 0.0
  %276 = vmatprep.subr.mxu0 0.0
  %277 = vmatpush1.xpose.msra.mxu0 0.0
  %278 = vmatprep.subr.mxu0 0.0
  %279 = vmatpush1.xpose.msra.mxu0 0.0
  %280 = vmatprep.subr.mxu0 0.0
  %281 = vmatpush1.xpose.msra.mxu0 %v248
  %282 = vmatprep.subr.mxu0 0.0
  %283 = vmatpush2.xpose.msra.mxu0 0.0
  %284 = vmatprep.subr.mxu0 0.0
  %285 = vmatpush2.xpose.msra.mxu0 0.0
  %286 = vmatprep.subr.mxu0 0.0
  %287 = vmatpush2.xpose.msra.mxu0 0.0
  %288 = vmatprep.subr.mxu0 0.0
  %289 = vmatpush2.xpose.msra.mxu0 0.0
  %290 = vmatprep.subr.mxu0 0.0
  %291 = vmatpush2.xpose.msra.mxu0 0.0
  %292 = vmatprep.subr.mxu0 0.0
  %293 = vmatpush2.xpose.msra.mxu0 0.0
  %294 = vmatprep.subr.mxu0 0.0
  %295 = vmatpush2.xpose.msra.mxu0 0.0
  %296 = vmatprep.subr.mxu0 0.0
  %297 = vmatpush2.xpose.msra.mxu0 0.0
  %298 = vmatprep.subr.mxu0 0.0
  %299 = vmatpush2.xpose.msra.mxu0 0.0
  %300 = vmatprep.subr.mxu0 0.0
  %301 = vmatpush2.xpose.msra.mxu0 0.0
  %302 = vmatprep.subr.mxu0 0.0
  %303 = vmatpush2.xpose.msra.mxu0 0.0
  %304 = vmatprep.subr.mxu0 0.0
  %305 = vmatpush2.xpose.msra.mxu0 0.0
  %306 = vmatprep.subr.mxu0 0.0
  %307 = vmatpush2.xpose.msra.mxu0 0.0
  %308 = vmatprep.subr.mxu0 0.0
  %309 = vmatpush2.xpose.msra.mxu0 0.0
  %310 = vmatprep.subr.mxu0 0.0
  %311 = vmatpush2.xpose.msra.mxu0 0.0
  %312 = vmatprep.subr.mxu0 0.0
  %313 = vmatpush2.xpose.msra.mxu0 0.0
  %314 = vmatprep.mubr.f32.mxu0 0.0
  %315 = vmatmul.mubr.f32.gmra.mxu0 %v246
  %v316 = vpop.f32.mrf.mxu0
  %v317 = vadd.f32 0.0, %v316
  %v318 = vpop.f32.mrf.mxu0
  %319 = vdwg.mxu0
  %321 = vrot.lane.b32.xlu0 %v219, 124
  %v322 = vpop.permute.xlu0 %321
  %v323 = vsel %vm245, %v219, 0
  %v325 = vsel %vm245, %v322, 0
  %327 = vmatprep.subr.mxu0 0.0
  %328 = vmatpush1.xpose.msra.mxu0 0.0
  %329 = vmatprep.subr.mxu0 0.0
  %330 = vmatpush1.xpose.msra.mxu0 0.0
  %331 = vmatprep.subr.mxu0 0.0
  %332 = vmatpush1.xpose.msra.mxu0 0.0
  %333 = vmatprep.subr.mxu0 0.0
  %334 = vmatpush1.xpose.msra.mxu0 0.0
  %335 = vmatprep.subr.mxu0 0.0
  %336 = vmatpush1.xpose.msra.mxu0 0.0
  %337 = vmatprep.subr.mxu0 0.0
  %338 = vmatpush1.xpose.msra.mxu0 0.0
  %339 = vmatprep.subr.mxu0 0.0
  %340 = vmatpush1.xpose.msra.mxu0 0.0
  %341 = vmatprep.subr.mxu0 0.0
  %342 = vmatpush1.xpose.msra.mxu0 0.0
  %343 = vmatprep.subr.mxu0 0.0
  %344 = vmatpush1.xpose.msra.mxu0 0.0
  %345 = vmatprep.subr.mxu0 0.0
  %346 = vmatpush1.xpose.msra.mxu0 0.0
  %347 = vmatprep.subr.mxu0 0.0
  %348 = vmatpush1.xpose.msra.mxu0 0.0
  %349 = vmatprep.subr.mxu0 0.0
  %350 = vmatpush1.xpose.msra.mxu0 0.0
  %351 = vmatprep.subr.mxu0 0.0
  %352 = vmatpush1.xpose.msra.mxu0 0.0
  %353 = vmatprep.subr.mxu0 0.0
  %354 = vmatpush1.xpose.msra.mxu0 0.0
  %355 = vmatprep.subr.mxu0 0.0
  %356 = vmatpush1.xpose.msra.mxu0 0.0
  %357 = vmatprep.subr.mxu0 0.0
  %358 = vmatpush1.xpose.msra.mxu0 %v325
  %359 = vmatprep.subr.mxu0 0.0
  %360 = vmatpush2.xpose.msra.mxu0 0.0
  %361 = vmatprep.subr.mxu0 0.0
  %362 = vmatpush2.xpose.msra.mxu0 0.0
  %363 = vmatprep.subr.mxu0 0.0
  %364 = vmatpush2.xpose.msra.mxu0 0.0
  %365 = vmatprep.subr.mxu0 0.0
  %366 = vmatpush2.xpose.msra.mxu0 0.0
  %367 = vmatprep.subr.mxu0 0.0
  %368 = vmatpush2.xpose.msra.mxu0 0.0
  %369 = vmatprep.subr.mxu0 0.0
  %370 = vmatpush2.xpose.msra.mxu0 0.0
  %371 = vmatprep.subr.mxu0 0.0
  %372 = vmatpush2.xpose.msra.mxu0 0.0
  %373 = vmatprep.subr.mxu0 0.0
  %374 = vmatpush2.xpose.msra.mxu0 0.0
  %375 = vmatprep.subr.mxu0 0.0
  %376 = vmatpush2.xpose.msra.mxu0 0.0
  %377 = vmatprep.subr.mxu0 0.0
  %378 = vmatpush2.xpose.msra.mxu0 0.0
  %379 = vmatprep.subr.mxu0 0.0
  %380 = vmatpush2.xpose.msra.mxu0 0.0
  %381 = vmatprep.subr.mxu0 0.0
  %382 = vmatpush2.xpose.msra.mxu0 0.0
  %383 = vmatprep.subr.mxu0 0.0
  %384 = vmatpush2.xpose.msra.mxu0 0.0
  %385 = vmatprep.subr.mxu0 0.0
  %386 = vmatpush2.xpose.msra.mxu0 0.0
  %387 = vmatprep.subr.mxu0 0.0
  %388 = vmatpush2.xpose.msra.mxu0 0.0
  %389 = vmatprep.subr.mxu0 0.0
  %390 = vmatpush2.xpose.msra.mxu0 0.0
  %391 = vmatprep.mubr.f32.mxu0 0.0
  %392 = vmatmul.mubr.f32.gmra.mxu0 %v323
  %v393 = vpop.f32.mrf.mxu0
  %v394 = vadd.f32 0.0, %v393
  %v395 = vpop.f32.mrf.mxu0
  %396 = vdwg.mxu0
  %398 = vrot.lane.b32.xlu0 %v224, 124
  %v399 = vpop.permute.xlu0 %398
  %v400 = vsel %vm245, %v224, 0
  %v402 = vsel %vm245, %v399, 0
  %404 = vmatprep.subr.mxu0 0.0
  %405 = vmatpush1.xpose.msra.mxu0 0.0
  %406 = vmatprep.subr.mxu0 0.0
  %407 = vmatpush1.xpose.msra.mxu0 0.0
  %408 = vmatprep.subr.mxu0 0.0
  %409 = vmatpush1.xpose.msra.mxu0 0.0
  %410 = vmatprep.subr.mxu0 0.0
  %411 = vmatpush1.xpose.msra.mxu0 0.0
  %412 = vmatprep.subr.mxu0 0.0
  %413 = vmatpush1.xpose.msra.mxu0 0.0
  %414 = vmatprep.subr.mxu0 0.0
  %415 = vmatpush1.xpose.msra.mxu0 0.0
  %416 = vmatprep.subr.mxu0 0.0
  %417 = vmatpush1.xpose.msra.mxu0 0.0
  %418 = vmatprep.subr.mxu0 0.0
  %419 = vmatpush1.xpose.msra.mxu0 0.0
  %420 = vmatprep.subr.mxu0 0.0
  %421 = vmatpush1.xpose.msra.mxu0 0.0
  %422 = vmatprep.subr.mxu0 0.0
  %423 = vmatpush1.xpose.msra.mxu0 0.0
  %424 = vmatprep.subr.mxu0 0.0
  %425 = vmatpush1.xpose.msra.mxu0 0.0
  %426 = vmatprep.subr.mxu0 0.0
  %427 = vmatpush1.xpose.msra.mxu0 0.0
  %428 = vmatprep.subr.mxu0 0.0
  %429 = vmatpush1.xpose.msra.mxu0 0.0
  %430 = vmatprep.subr.mxu0 0.0
  %431 = vmatpush1.xpose.msra.mxu0 0.0
  %432 = vmatprep.subr.mxu0 0.0
  %433 = vmatpush1.xpose.msra.mxu0 0.0
  %434 = vmatprep.subr.mxu0 0.0
  %435 = vmatpush1.xpose.msra.mxu0 %v402
  %436 = vmatprep.subr.mxu0 0.0
  %437 = vmatpush2.xpose.msra.mxu0 0.0
  %438 = vmatprep.subr.mxu0 0.0
  %439 = vmatpush2.xpose.msra.mxu0 0.0
  %440 = vmatprep.subr.mxu0 0.0
  %441 = vmatpush2.xpose.msra.mxu0 0.0
  %442 = vmatprep.subr.mxu0 0.0
  %443 = vmatpush2.xpose.msra.mxu0 0.0
  %444 = vmatprep.subr.mxu0 0.0
  %445 = vmatpush2.xpose.msra.mxu0 0.0
  %446 = vmatprep.subr.mxu0 0.0
  %447 = vmatpush2.xpose.msra.mxu0 0.0
  %448 = vmatprep.subr.mxu0 0.0
  %449 = vmatpush2.xpose.msra.mxu0 0.0
  %450 = vmatprep.subr.mxu0 0.0
  %451 = vmatpush2.xpose.msra.mxu0 0.0
  %452 = vmatprep.subr.mxu0 0.0
  %453 = vmatpush2.xpose.msra.mxu0 0.0
  %454 = vmatprep.subr.mxu0 0.0
  %455 = vmatpush2.xpose.msra.mxu0 0.0
  %456 = vmatprep.subr.mxu0 0.0
  %457 = vmatpush2.xpose.msra.mxu0 0.0
  %458 = vmatprep.subr.mxu0 0.0
  %459 = vmatpush2.xpose.msra.mxu0 0.0
  %460 = vmatprep.subr.mxu0 0.0
  %461 = vmatpush2.xpose.msra.mxu0 0.0
  %462 = vmatprep.subr.mxu0 0.0
  %463 = vmatpush2.xpose.msra.mxu0 0.0
  %464 = vmatprep.subr.mxu0 0.0
  %465 = vmatpush2.xpose.msra.mxu0 0.0
  %466 = vmatprep.subr.mxu0 0.0
  %467 = vmatpush2.xpose.msra.mxu0 0.0
  %468 = vmatprep.mubr.f32.mxu0 0.0
  %469 = vmatmul.mubr.f32.gmra.mxu0 %v400
  %v470 = vpop.f32.mrf.mxu0
  %v471 = vadd.f32 0.0, %v470
  %v472 = vpop.f32.mrf.mxu0
  %473 = vdwg.mxu0
  %475 = vrot.lane.b32.xlu0 %v229, 124
  %v476 = vpop.permute.xlu0 %475
  %v477 = vsel %vm245, %v229, 0
  %v479 = vsel %vm245, %v476, 0
  %481 = vmatprep.subr.mxu0 0.0
  %482 = vmatpush1.xpose.msra.mxu0 0.0
  %483 = vmatprep.subr.mxu0 0.0
  %484 = vmatpush1.xpose.msra.mxu0 0.0
  %485 = vmatprep.subr.mxu0 0.0
  %486 = vmatpush1.xpose.msra.mxu0 0.0
  %487 = vmatprep.subr.mxu0 0.0
  %488 = vmatpush1.xpose.msra.mxu0 0.0
  %489 = vmatprep.subr.mxu0 0.0
  %490 = vmatpush1.xpose.msra.mxu0 0.0
  %491 = vmatprep.subr.mxu0 0.0
  %492 = vmatpush1.xpose.msra.mxu0 0.0
  %493 = vmatprep.subr.mxu0 0.0
  %494 = vmatpush1.xpose.msra.mxu0 0.0
  %495 = vmatprep.subr.mxu0 0.0
  %496 = vmatpush1.xpose.msra.mxu0 0.0
  %497 = vmatprep.subr.mxu0 0.0
  %498 = vmatpush1.xpose.msra.mxu0 0.0
  %499 = vmatprep.subr.mxu0 0.0
  %500 = vmatpush1.xpose.msra.mxu0 0.0
  %501 = vmatprep.subr.mxu0 0.0
  %502 = vmatpush1.xpose.msra.mxu0 0.0
  %503 = vmatprep.subr.mxu0 0.0
  %504 = vmatpush1.xpose.msra.mxu0 0.0
  %505 = vmatprep.subr.mxu0 0.0
  %506 = vmatpush1.xpose.msra.mxu0 0.0
  %507 = vmatprep.subr.mxu0 0.0
  %508 = vmatpush1.xpose.msra.mxu0 0.0
  %509 = vmatprep.subr.mxu0 0.0
  %510 = vmatpush1.xpose.msra.mxu0 0.0
  %511 = vmatprep.subr.mxu0 0.0
  %512 = vmatpush1.xpose.msra.mxu0 %v479
  %513 = vmatprep.subr.mxu0 0.0
  %514 = vmatpush2.xpose.msra.mxu0 0.0
  %515 = vmatprep.subr.mxu0 0.0
  %516 = vmatpush2.xpose.msra.mxu0 0.0
  %517 = vmatprep.subr.mxu0 0.0
  %518 = vmatpush2.xpose.msra.mxu0 0.0
  %519 = vmatprep.subr.mxu0 0.0
  %520 = vmatpush2.xpose.msra.mxu0 0.0
  %521 = vmatprep.subr.mxu0 0.0
  %522 = vmatpush2.xpose.msra.mxu0 0.0
  %523 = vmatprep.subr.mxu0 0.0
  %524 = vmatpush2.xpose.msra.mxu0 0.0
  %525 = vmatprep.subr.mxu0 0.0
  %526 = vmatpush2.xpose.msra.mxu0 0.0
  %527 = vmatprep.subr.mxu0 0.0
  %528 = vmatpush2.xpose.msra.mxu0 0.0
  %529 = vmatprep.subr.mxu0 0.0
  %530 = vmatpush2.xpose.msra.mxu0 0.0
  %531 = vmatprep.subr.mxu0 0.0
  %532 = vmatpush2.xpose.msra.mxu0 0.0
  %533 = vmatprep.subr.mxu0 0.0
  %534 = vmatpush2.xpose.msra.mxu0 0.0
  %535 = vmatprep.subr.mxu0 0.0
  %536 = vmatpush2.xpose.msra.mxu0 0.0
  %537 = vmatprep.subr.mxu0 0.0
  %538 = vmatpush2.xpose.msra.mxu0 0.0
  %539 = vmatprep.subr.mxu0 0.0
  %540 = vmatpush2.xpose.msra.mxu0 0.0
  %541 = vmatprep.subr.mxu0 0.0
  %542 = vmatpush2.xpose.msra.mxu0 0.0
  %543 = vmatprep.subr.mxu0 0.0
  %544 = vmatpush2.xpose.msra.mxu0 0.0
  %545 = vmatprep.mubr.f32.mxu0 0.0
  %546 = vmatmul.mubr.f32.gmra.mxu0 %v477
  %v547 = vpop.f32.mrf.mxu0
  %v548 = vadd.f32 0.0, %v547
  %v549 = vpop.f32.mrf.mxu0
  %550 = vdwg.mxu0
  %552 = vrot.lane.b32.xlu0 %v234, 124
  %v553 = vpop.permute.xlu0 %552
  %v554 = vsel %vm245, %v234, 0
  %v556 = vsel %vm245, %v553, 0
  %558 = vmatprep.subr.mxu0 0.0
  %559 = vmatpush1.xpose.msra.mxu0 0.0
  %560 = vmatprep.subr.mxu0 0.0
  %561 = vmatpush1.xpose.msra.mxu0 0.0
  %562 = vmatprep.subr.mxu0 0.0
  %563 = vmatpush1.xpose.msra.mxu0 0.0
  %564 = vmatprep.subr.mxu0 0.0
  %565 = vmatpush1.xpose.msra.mxu0 0.0
  %566 = vmatprep.subr.mxu0 0.0
  %567 = vmatpush1.xpose.msra.mxu0 0.0
  %568 = vmatprep.subr.mxu0 0.0
  %569 = vmatpush1.xpose.msra.mxu0 0.0
  %570 = vmatprep.subr.mxu0 0.0
  %571 = vmatpush1.xpose.msra.mxu0 0.0
  %572 = vmatprep.subr.mxu0 0.0
  %573 = vmatpush1.xpose.msra.mxu0 0.0
  %574 = vmatprep.subr.mxu0 0.0
  %575 = vmatpush1.xpose.msra.mxu0 0.0
  %576 = vmatprep.subr.mxu0 0.0
  %577 = vmatpush1.xpose.msra.mxu0 0.0
  %578 = vmatprep.subr.mxu0 0.0
  %579 = vmatpush1.xpose.msra.mxu0 0.0
  %580 = vmatprep.subr.mxu0 0.0
  %581 = vmatpush1.xpose.msra.mxu0 0.0
  %582 = vmatprep.subr.mxu0 0.0
  %583 = vmatpush1.xpose.msra.mxu0 0.0
  %584 = vmatprep.subr.mxu0 0.0
  %585 = vmatpush1.xpose.msra.mxu0 0.0
  %586 = vmatprep.subr.mxu0 0.0
  %587 = vmatpush1.xpose.msra.mxu0 0.0
  %588 = vmatprep.subr.mxu0 0.0
  %589 = vmatpush1.xpose.msra.mxu0 %v556
  %590 = vmatprep.subr.mxu0 0.0
  %591 = vmatpush2.xpose.msra.mxu0 0.0
  %592 = vmatprep.subr.mxu0 0.0
  %593 = vmatpush2.xpose.msra.mxu0 0.0
  %594 = vmatprep.subr.mxu0 0.0
  %595 = vmatpush2.xpose.msra.mxu0 0.0
  %596 = vmatprep.subr.mxu0 0.0
  %597 = vmatpush2.xpose.msra.mxu0 0.0
  %598 = vmatprep.subr.mxu0 0.0
  %599 = vmatpush2.xpose.msra.mxu0 0.0
  %600 = vmatprep.subr.mxu0 0.0
  %601 = vmatpush2.xpose.msra.mxu0 0.0
  %602 = vmatprep.subr.mxu0 0.0
  %603 = vmatpush2.xpose.msra.mxu0 0.0
  %604 = vmatprep.subr.mxu0 0.0
  %605 = vmatpush2.xpose.msra.mxu0 0.0
  %606 = vmatprep.subr.mxu0 0.0
  %607 = vmatpush2.xpose.msra.mxu0 0.0
  %608 = vmatprep.subr.mxu0 0.0
  %609 = vmatpush2.xpose.msra.mxu0 0.0
  %610 = vmatprep.subr.mxu0 0.0
  %611 = vmatpush2.xpose.msra.mxu0 0.0
  %612 = vmatprep.subr.mxu0 0.0
  %613 = vmatpush2.xpose.msra.mxu0 0.0
  %614 = vmatprep.subr.mxu0 0.0
  %615 = vmatpush2.xpose.msra.mxu0 0.0
  %616 = vmatprep.subr.mxu0 0.0
  %617 = vmatpush2.xpose.msra.mxu0 0.0
  %618 = vmatprep.subr.mxu0 0.0
  %619 = vmatpush2.xpose.msra.mxu0 0.0
  %620 = vmatprep.subr.mxu0 0.0
  %621 = vmatpush2.xpose.msra.mxu0 0.0
  %622 = vmatprep.mubr.f32.mxu0 0.0
  %623 = vmatmul.mubr.f32.gmra.mxu0 %v554
  %v624 = vpop.f32.mrf.mxu0
  %v625 = vadd.f32 0.0, %v624
  %v626 = vpop.f32.mrf.mxu0
  %627 = vdwg.mxu0
  %629 = vrot.lane.b32.xlu0 %v239, 124
  %v630 = vpop.permute.xlu0 %629
  %v631 = vsel %vm245, %v239, 0
  %v633 = vsel %vm245, %v630, 0
  %635 = vmatprep.subr.mxu0 0.0
  %636 = vmatpush1.xpose.msra.mxu0 0.0
  %637 = vmatprep.subr.mxu0 0.0
  %638 = vmatpush1.xpose.msra.mxu0 0.0
  %639 = vmatprep.subr.mxu0 0.0
  %640 = vmatpush1.xpose.msra.mxu0 0.0
  %641 = vmatprep.subr.mxu0 0.0
  %642 = vmatpush1.xpose.msra.mxu0 0.0
  %643 = vmatprep.subr.mxu0 0.0
  %644 = vmatpush1.xpose.msra.mxu0 0.0
  %645 = vmatprep.subr.mxu0 0.0
  %646 = vmatpush1.xpose.msra.mxu0 0.0
  %647 = vmatprep.subr.mxu0 0.0
  %648 = vmatpush1.xpose.msra.mxu0 0.0
  %649 = vmatprep.subr.mxu0 0.0
  %650 = vmatpush1.xpose.msra.mxu0 0.0
  %651 = vmatprep.subr.mxu0 0.0
  %652 = vmatpush1.xpose.msra.mxu0 0.0
  %653 = vmatprep.subr.mxu0 0.0
  %654 = vmatpush1.xpose.msra.mxu0 0.0
  %655 = vmatprep.subr.mxu0 0.0
  %656 = vmatpush1.xpose.msra.mxu0 0.0
  %657 = vmatprep.subr.mxu0 0.0
  %658 = vmatpush1.xpose.msra.mxu0 0.0
  %659 = vmatprep.subr.mxu0 0.0
  %660 = vmatpush1.xpose.msra.mxu0 0.0
  %661 = vmatprep.subr.mxu0 0.0
  %662 = vmatpush1.xpose.msra.mxu0 0.0
  %663 = vmatprep.subr.mxu0 0.0
  %664 = vmatpush1.xpose.msra.mxu0 0.0
  %665 = vmatprep.subr.mxu0 0.0
  %666 = vmatpush1.xpose.msra.mxu0 %v633
  %667 = vmatprep.subr.mxu0 0.0
  %668 = vmatpush2.xpose.msra.mxu0 0.0
  %669 = vmatprep.subr.mxu0 0.0
  %670 = vmatpush2.xpose.msra.mxu0 0.0
  %671 = vmatprep.subr.mxu0 0.0
  %672 = vmatpush2.xpose.msra.mxu0 0.0
  %673 = vmatprep.subr.mxu0 0.0
  %674 = vmatpush2.xpose.msra.mxu0 0.0
  %675 = vmatprep.subr.mxu0 0.0
  %676 = vmatpush2.xpose.msra.mxu0 0.0
  %677 = vmatprep.subr.mxu0 0.0
  %678 = vmatpush2.xpose.msra.mxu0 0.0
  %679 = vmatprep.subr.mxu0 0.0
  %680 = vmatpush2.xpose.msra.mxu0 0.0
  %681 = vmatprep.subr.mxu0 0.0
  %682 = vmatpush2.xpose.msra.mxu0 0.0
  %683 = vmatprep.subr.mxu0 0.0
  %684 = vmatpush2.xpose.msra.mxu0 0.0
  %685 = vmatprep.subr.mxu0 0.0
  %686 = vmatpush2.xpose.msra.mxu0 0.0
  %687 = vmatprep.subr.mxu0 0.0
  %688 = vmatpush2.xpose.msra.mxu0 0.0
  %689 = vmatprep.subr.mxu0 0.0
  %690 = vmatpush2.xpose.msra.mxu0 0.0
  %691 = vmatprep.subr.mxu0 0.0
  %692 = vmatpush2.xpose.msra.mxu0 0.0
  %693 = vmatprep.subr.mxu0 0.0
  %694 = vmatpush2.xpose.msra.mxu0 0.0
  %695 = vmatprep.subr.mxu0 0.0
  %696 = vmatpush2.xpose.msra.mxu0 0.0
  %697 = vmatprep.subr.mxu0 0.0
  %698 = vmatpush2.xpose.msra.mxu0 0.0
  %699 = vmatprep.mubr.f32.mxu0 0.0
  %700 = vmatmul.mubr.f32.gmra.mxu0 %v631
  %v701 = vpop.f32.mrf.mxu0
  %v702 = vadd.f32 0.0, %v701
  %v703 = vpop.f32.mrf.mxu0
  %704 = vdwg.mxu0
  %v705 = vmul.f32 %v317, 0.5
  %v706 = vmul.f32 %v394, 0.5
  %v707 = vmul.f32 %v471, 0.5
  %v708 = vmul.f32 %v548, 0.5
  %v709 = vmul.f32 %v625, 0.5
  %v710 = vmul.f32 %v702, 0.5
  %v711 = vsel %vm28, %v705, -inf
  %v712 = vrot.slane %v711, 4
  %v713 = vmax.f32 %v711, %v712
  %v714 = vrot.slane %v713, 2
  %v715 = vmax.f32 %v713, %v714
  %v716 = vrot.slane %v715, 1
  %v717 = vmax.f32 %v715, %v716
  %v718 = vsel %vm28, %v706, -inf
  %v719 = vrot.slane %v718, 4
  %v720 = vmax.f32 %v718, %v719
  %v721 = vrot.slane %v720, 2
  %v722 = vmax.f32 %v720, %v721
  %v723 = vrot.slane %v722, 1
  %v724 = vmax.f32 %v722, %v723
  %v725 = vsel %vm28, %v707, -inf
  %v726 = vrot.slane %v725, 4
  %v727 = vmax.f32 %v725, %v726
  %v728 = vrot.slane %v727, 2
  %v729 = vmax.f32 %v727, %v728
  %v730 = vrot.slane %v729, 1
  %v731 = vmax.f32 %v729, %v730
  %v732 = vsel %vm28, %v708, -inf
  %v733 = vrot.slane %v732, 4
  %v734 = vmax.f32 %v732, %v733
  %v735 = vrot.slane %v734, 2
  %v736 = vmax.f32 %v734, %v735
  %v737 = vrot.slane %v736, 1
  %v738 = vmax.f32 %v736, %v737
  %v739 = vsel %vm28, %v709, -inf
  %v740 = vrot.slane %v739, 4
  %v741 = vmax.f32 %v739, %v740
  %v742 = vrot.slane %v741, 2
  %v743 = vmax.f32 %v741, %v742
  %v744 = vrot.slane %v743, 1
  %v745 = vmax.f32 %v743, %v744
  %v746 = vsel %vm28, %v710, -inf
  %v747 = vrot.slane %v746, 4
  %v748 = vmax.f32 %v746, %v747
  %v749 = vrot.slane %v748, 2
  %v750 = vmax.f32 %v748, %v749
  %v751 = vrot.slane %v750, 1
  %v752 = vmax.f32 %v750, %v751
  %v753 = vsub.f32 %v705, %v717
  %v754 = vsub.f32 %v706, %v724
  %v755 = vsub.f32 %v707, %v731
  %v756 = vsub.f32 %v708, %v738
  %v757 = vsub.f32 %v709, %v745
  %v758 = vsub.f32 %v710, %v752
  %v759 = vmul.f32 %v753, 1.442695
  %v760 = vpow.pop %v759
  %v761 = vmul.f32 %v754, 1.442695
  %v762 = vpow.pop %v761
  %v763 = vmul.f32 %v755, 1.442695
  %v764 = vpow.pop %v763
  %v765 = vmul.f32 %v756, 1.442695
  %v766 = vpow.pop %v765
  %v767 = vmul.f32 %v757, 1.442695
  %v768 = vpow.pop %v767
  %v769 = vmul.f32 %v758, 1.442695
  %v770 = vpow.pop %v769
  %v771 = vsel %vm28, %v760, 0.0
  %v772 = vrot.slane %v771, 4
  %v773 = vadd.f32 %v771, %v772
  %v774 = vrot.slane %v773, 2
  %v775 = vadd.f32 %v773, %v774
  %v776 = vrot.slane %v775, 1
  %v777 = vadd.f32 %v775, %v776
  %v778 = vsel %vm28, %v762, 0.0
  %v779 = vrot.slane %v778, 4
  %v780 = vadd.f32 %v778, %v779
  %v781 = vrot.slane %v780, 2
  %v782 = vadd.f32 %v780, %v781
  %v783 = vrot.slane %v782, 1
  %v784 = vadd.f32 %v782, %v783
  %v785 = vsel %vm28, %v764, 0.0
  %v786 = vrot.slane %v785, 4
  %v787 = vadd.f32 %v785, %v786
  %v788 = vrot.slane %v787, 2
  %v789 = vadd.f32 %v787, %v788
  %v790 = vrot.slane %v789, 1
  %v791 = vadd.f32 %v789, %v790
  %v792 = vsel %vm28, %v766, 0.0
  %v793 = vrot.slane %v792, 4
  %v794 = vadd.f32 %v792, %v793
  %v795 = vrot.slane %v794, 2
  %v796 = vadd.f32 %v794, %v795
  %v797 = vrot.slane %v796, 1
  %v798 = vadd.f32 %v796, %v797
  %v799 = vsel %vm28, %v768, 0.0
  %v800 = vrot.slane %v799, 4
  %v801 = vadd.f32 %v799, %v800
  %v802 = vrot.slane %v801, 2
  %v803 = vadd.f32 %v801, %v802
  %v804 = vrot.slane %v803, 1
  %v805 = vadd.f32 %v803, %v804
  %v806 = vsel %vm28, %v770, 0.0
  %v807 = vrot.slane %v806, 4
  %v808 = vadd.f32 %v806, %v807
  %v809 = vrot.slane %v808, 2
  %v810 = vadd.f32 %v808, %v809
  %v811 = vrot.slane %v810, 1
  %v812 = vadd.f32 %v810, %v811
  %v813 = vrcp.pop %v777
  %v814 = vrcp.pop %v784
  %v815 = vrcp.pop %v791
  %v816 = vrcp.pop %v798
  %v817 = vrcp.pop %v805
  %v818 = vrcp.pop %v812
  %v819 = vmul.f32 %v760, %v813
  %v820 = vmul.f32 %v762, %v814
  %v821 = vmul.f32 %v764, %v815
  %v822 = vmul.f32 %v766, %v816
  %v823 = vmul.f32 %v768, %v817
  %v824 = vmul.f32 %v770, %v818
  %825 = vrot.lane.b32.xlu0 %v214, 120
  %v826 = vpop.permute.xlu0 %825
  %v829 = vsel %vm28, %v819, 0
  %831 = vmatprep.subr.mxu0 0.0
  %832 = vmatpush1.msra.mxu0 0.0
  %833 = vmatprep.subr.mxu0 0.0
  %834 = vmatpush1.msra.mxu0 0.0
  %835 = vmatprep.subr.mxu0 0.0
  %836 = vmatpush1.msra.mxu0 0.0
  %837 = vmatprep.subr.mxu0 0.0
  %838 = vmatpush1.msra.mxu0 0.0
  %839 = vmatprep.subr.mxu0 0.0
  %840 = vmatpush1.msra.mxu0 0.0
  %841 = vmatprep.subr.mxu0 0.0
  %842 = vmatpush1.msra.mxu0 0.0
  %843 = vmatprep.subr.mxu0 0.0
  %844 = vmatpush1.msra.mxu0 0.0
  %845 = vmatprep.subr.mxu0 0.0
  %846 = vmatpush1.msra.mxu0 0.0
  %847 = vmatprep.subr.mxu0 0.0
  %848 = vmatpush1.msra.mxu0 0.0
  %849 = vmatprep.subr.mxu0 0.0
  %850 = vmatpush1.msra.mxu0 0.0
  %851 = vmatprep.subr.mxu0 0.0
  %852 = vmatpush1.msra.mxu0 0.0
  %853 = vmatprep.subr.mxu0 0.0
  %854 = vmatpush1.msra.mxu0 0.0
  %855 = vmatprep.subr.mxu0 0.0
  %856 = vmatpush1.msra.mxu0 0.0
  %857 = vmatprep.subr.mxu0 0.0
  %858 = vmatpush1.msra.mxu0 0.0
  %859 = vmatprep.subr.mxu0 0.0
  %860 = vmatpush1.msra.mxu0 0.0
  %861 = vmatprep.subr.mxu0 0.0
  %862 = vmatpush1.msra.mxu0 %v826
  %863 = vmatprep.subr.mxu0 0.0
  %864 = vmatpush2.msra.mxu0 0.0
  %865 = vmatprep.subr.mxu0 0.0
  %866 = vmatpush2.msra.mxu0 0.0
  %867 = vmatprep.subr.mxu0 0.0
  %868 = vmatpush2.msra.mxu0 0.0
  %869 = vmatprep.subr.mxu0 0.0
  %870 = vmatpush2.msra.mxu0 0.0
  %871 = vmatprep.subr.mxu0 0.0
  %872 = vmatpush2.msra.mxu0 0.0
  %873 = vmatprep.subr.mxu0 0.0
  %874 = vmatpush2.msra.mxu0 0.0
  %875 = vmatprep.subr.mxu0 0.0
  %876 = vmatpush2.msra.mxu0 0.0
  %877 = vmatprep.subr.mxu0 0.0
  %878 = vmatpush2.msra.mxu0 0.0
  %879 = vmatprep.subr.mxu0 0.0
  %880 = vmatpush2.msra.mxu0 0.0
  %881 = vmatprep.subr.mxu0 0.0
  %882 = vmatpush2.msra.mxu0 0.0
  %883 = vmatprep.subr.mxu0 0.0
  %884 = vmatpush2.msra.mxu0 0.0
  %885 = vmatprep.subr.mxu0 0.0
  %886 = vmatpush2.msra.mxu0 0.0
  %887 = vmatprep.subr.mxu0 0.0
  %888 = vmatpush2.msra.mxu0 0.0
  %889 = vmatprep.subr.mxu0 0.0
  %890 = vmatpush2.msra.mxu0 0.0
  %891 = vmatprep.subr.mxu0 0.0
  %892 = vmatpush2.msra.mxu0 0.0
  %893 = vmatprep.subr.mxu0 0.0
  %894 = vmatpush2.msra.mxu0 0.0
  %895 = vmatprep.mubr.f32.mxu0 0.0
  %896 = vmatmul.mubr.f32.gmra.mxu0 %v829
  %v897 = vpop.f32.mrf.mxu0
  %v898 = vadd.f32 0.0, %v897
  %v899 = vpop.f32.mrf.mxu0
  %900 = vdwg.mxu0
  %901 = vrot.lane.b32.xlu0 %v219, 120
  %v902 = vpop.permute.xlu0 %901
  %v905 = vsel %vm28, %v820, 0
  %907 = vmatprep.subr.mxu0 0.0
  %908 = vmatpush1.msra.mxu0 0.0
  %909 = vmatprep.subr.mxu0 0.0
  %910 = vmatpush1.msra.mxu0 0.0
  %911 = vmatprep.subr.mxu0 0.0
  %912 = vmatpush1.msra.mxu0 0.0
  %913 = vmatprep.subr.mxu0 0.0
  %914 = vmatpush1.msra.mxu0 0.0
  %915 = vmatprep.subr.mxu0 0.0
  %916 = vmatpush1.msra.mxu0 0.0
  %917 = vmatprep.subr.mxu0 0.0
  %918 = vmatpush1.msra.mxu0 0.0
  %919 = vmatprep.subr.mxu0 0.0
  %920 = vmatpush1.msra.mxu0 0.0
  %921 = vmatprep.subr.mxu0 0.0
  %922 = vmatpush1.msra.mxu0 0.0
  %923 = vmatprep.subr.mxu0 0.0
  %924 = vmatpush1.msra.mxu0 0.0
  %925 = vmatprep.subr.mxu0 0.0
  %926 = vmatpush1.msra.mxu0 0.0
  %927 = vmatprep.subr.mxu0 0.0
  %928 = vmatpush1.msra.mxu0 0.0
  %929 = vmatprep.subr.mxu0 0.0
  %930 = vmatpush1.msra.mxu0 0.0
  %931 = vmatprep.subr.mxu0 0.0
  %932 = vmatpush1.msra.mxu0 0.0
  %933 = vmatprep.subr.mxu0 0.0
  %934 = vmatpush1.msra.mxu0 0.0
  %935 = vmatprep.subr.mxu0 0.0
  %936 = vmatpush1.msra.mxu0 0.0
  %937 = vmatprep.subr.mxu0 0.0
  %938 = vmatpush1.msra.mxu0 %v902
  %939 = vmatprep.subr.mxu0 0.0
  %940 = vmatpush2.msra.mxu0 0.0
  %941 = vmatprep.subr.mxu0 0.0
  %942 = vmatpush2.msra.mxu0 0.0
  %943 = vmatprep.subr.mxu0 0.0
  %944 = vmatpush2.msra.mxu0 0.0
  %945 = vmatprep.subr.mxu0 0.0
  %946 = vmatpush2.msra.mxu0 0.0
  %947 = vmatprep.subr.mxu0 0.0
  %948 = vmatpush2.msra.mxu0 0.0
  %949 = vmatprep.subr.mxu0 0.0
  %950 = vmatpush2.msra.mxu0 0.0
  %951 = vmatprep.subr.mxu0 0.0
  %952 = vmatpush2.msra.mxu0 0.0
  %953 = vmatprep.subr.mxu0 0.0
  %954 = vmatpush2.msra.mxu0 0.0
  %955 = vmatprep.subr.mxu0 0.0
  %956 = vmatpush2.msra.mxu0 0.0
  %957 = vmatprep.subr.mxu0 0.0
  %958 = vmatpush2.msra.mxu0 0.0
  %959 = vmatprep.subr.mxu0 0.0
  %960 = vmatpush2.msra.mxu0 0.0
  %961 = vmatprep.subr.mxu0 0.0
  %962 = vmatpush2.msra.mxu0 0.0
  %963 = vmatprep.subr.mxu0 0.0
  %964 = vmatpush2.msra.mxu0 0.0
  %965 = vmatprep.subr.mxu0 0.0
  %966 = vmatpush2.msra.mxu0 0.0
  %967 = vmatprep.subr.mxu0 0.0
  %968 = vmatpush2.msra.mxu0 0.0
  %969 = vmatprep.subr.mxu0 0.0
  %970 = vmatpush2.msra.mxu0 0.0
  %971 = vmatprep.mubr.f32.mxu0 0.0
  %972 = vmatmul.mubr.f32.gmra.mxu0 %v905
  %v973 = vpop.f32.mrf.mxu0
  %v974 = vadd.f32 0.0, %v973
  %v975 = vpop.f32.mrf.mxu0
  %976 = vdwg.mxu0
  %977 = vrot.lane.b32.xlu0 %v224, 120
  %v978 = vpop.permute.xlu0 %977
  %v981 = vsel %vm28, %v821, 0
  %983 = vmatprep.subr.mxu0 0.0
  %984 = vmatpush1.msra.mxu0 0.0
  %985 = vmatprep.subr.mxu0 0.0
  %986 = vmatpush1.msra.mxu0 0.0
  %987 = vmatprep.subr.mxu0 0.0
  %988 = vmatpush1.msra.mxu0 0.0
  %989 = vmatprep.subr.mxu0 0.0
  %990 = vmatpush1.msra.mxu0 0.0
  %991 = vmatprep.subr.mxu0 0.0
  %992 = vmatpush1.msra.mxu0 0.0
  %993 = vmatprep.subr.mxu0 0.0
  %994 = vmatpush1.msra.mxu0 0.0
  %995 = vmatprep.subr.mxu0 0.0
  %996 = vmatpush1.msra.mxu0 0.0
  %997 = vmatprep.subr.mxu0 0.0
  %998 = vmatpush1.msra.mxu0 0.0
  %999 = vmatprep.subr.mxu0 0.0
  %1000 = vmatpush1.msra.mxu0 0.0
  %1001 = vmatprep.subr.mxu0 0.0
  %1002 = vmatpush1.msra.mxu0 0.0
  %1003 = vmatprep.subr.mxu0 0.0
  %1004 = vmatpush1.msra.mxu0 0.0
  %1005 = vmatprep.subr.mxu0 0.0
  %1006 = vmatpush1.msra.mxu0 0.0
  %1007 = vmatprep.subr.mxu0 0.0
  %1008 = vmatpush1.msra.mxu0 0.0
  %1009 = vmatprep.subr.mxu0 0.0
  %1010 = vmatpush1.msra.mxu0 0.0
  %1011 = vmatprep.subr.mxu0 0.0
  %1012 = vmatpush1.msra.mxu0 0.0
  %1013 = vmatprep.subr.mxu0 0.0
  %1014 = vmatpush1.msra.mxu0 %v978
  %1015 = vmatprep.subr.mxu0 0.0
  %1016 = vmatpush2.msra.mxu0 0.0
  %1017 = vmatprep.subr.mxu0 0.0
  %1018 = vmatpush2.msra.mxu0 0.0
  %1019 = vmatprep.subr.mxu0 0.0
  %1020 = vmatpush2.msra.mxu0 0.0
  %1021 = vmatprep.subr.mxu0 0.0
  %1022 = vmatpush2.msra.mxu0 0.0
  %1023 = vmatprep.subr.mxu0 0.0
  %1024 = vmatpush2.msra.mxu0 0.0
  %1025 = vmatprep.subr.mxu0 0.0
  %1026 = vmatpush2.msra.mxu0 0.0
  %1027 = vmatprep.subr.mxu0 0.0
  %1028 = vmatpush2.msra.mxu0 0.0
  %1029 = vmatprep.subr.mxu0 0.0
  %1030 = vmatpush2.msra.mxu0 0.0
  %1031 = vmatprep.subr.mxu0 0.0
  %1032 = vmatpush2.msra.mxu0 0.0
  %1033 = vmatprep.subr.mxu0 0.0
  %1034 = vmatpush2.msra.mxu0 0.0
  %1035 = vmatprep.subr.mxu0 0.0
  %1036 = vmatpush2.msra.mxu0 0.0
  %1037 = vmatprep.subr.mxu0 0.0
  %1038 = vmatpush2.msra.mxu0 0.0
  %1039 = vmatprep.subr.mxu0 0.0
  %1040 = vmatpush2.msra.mxu0 0.0
  %1041 = vmatprep.subr.mxu0 0.0
  %1042 = vmatpush2.msra.mxu0 0.0
  %1043 = vmatprep.subr.mxu0 0.0
  %1044 = vmatpush2.msra.mxu0 0.0
  %1045 = vmatprep.subr.mxu0 0.0
  %1046 = vmatpush2.msra.mxu0 0.0
  %1047 = vmatprep.mubr.f32.mxu0 0.0
  %1048 = vmatmul.mubr.f32.gmra.mxu0 %v981
  %v1049 = vpop.f32.mrf.mxu0
  %v1050 = vadd.f32 0.0, %v1049
  %v1051 = vpop.f32.mrf.mxu0
  %1052 = vdwg.mxu0
  %1053 = vrot.lane.b32.xlu0 %v229, 120
  %v1054 = vpop.permute.xlu0 %1053
  %v1057 = vsel %vm28, %v822, 0
  %1059 = vmatprep.subr.mxu0 0.0
  %1060 = vmatpush1.msra.mxu0 0.0
  %1061 = vmatprep.subr.mxu0 0.0
  %1062 = vmatpush1.msra.mxu0 0.0
  %1063 = vmatprep.subr.mxu0 0.0
  %1064 = vmatpush1.msra.mxu0 0.0
  %1065 = vmatprep.subr.mxu0 0.0
  %1066 = vmatpush1.msra.mxu0 0.0
  %1067 = vmatprep.subr.mxu0 0.0
  %1068 = vmatpush1.msra.mxu0 0.0
  %1069 = vmatprep.subr.mxu0 0.0
  %1070 = vmatpush1.msra.mxu0 0.0
  %1071 = vmatprep.subr.mxu0 0.0
  %1072 = vmatpush1.msra.mxu0 0.0
  %1073 = vmatprep.subr.mxu0 0.0
  %1074 = vmatpush1.msra.mxu0 0.0
  %1075 = vmatprep.subr.mxu0 0.0
  %1076 = vmatpush1.msra.mxu0 0.0
  %1077 = vmatprep.subr.mxu0 0.0
  %1078 = vmatpush1.msra.mxu0 0.0
  %1079 = vmatprep.subr.mxu0 0.0
  %1080 = vmatpush1.msra.mxu0 0.0
  %1081 = vmatprep.subr.mxu0 0.0
  %1082 = vmatpush1.msra.mxu0 0.0
  %1083 = vmatprep.subr.mxu0 0.0
  %1084 = vmatpush1.msra.mxu0 0.0
  %1085 = vmatprep.subr.mxu0 0.0
  %1086 = vmatpush1.msra.mxu0 0.0
  %1087 = vmatprep.subr.mxu0 0.0
  %1088 = vmatpush1.msra.mxu0 0.0
  %1089 = vmatprep.subr.mxu0 0.0
  %1090 = vmatpush1.msra.mxu0 %v1054
  %1091 = vmatprep.subr.mxu0 0.0
  %1092 = vmatpush2.msra.mxu0 0.0
  %1093 = vmatprep.subr.mxu0 0.0
  %1094 = vmatpush2.msra.mxu0 0.0
  %1095 = vmatprep.subr.mxu0 0.0
  %1096 = vmatpush2.msra.mxu0 0.0
  %1097 = vmatprep.subr.mxu0 0.0
  %1098 = vmatpush2.msra.mxu0 0.0
  %1099 = vmatprep.subr.mxu0 0.0
  %1100 = vmatpush2.msra.mxu0 0.0
  %1101 = vmatprep.subr.mxu0 0.0
  %1102 = vmatpush2.msra.mxu0 0.0
  %1103 = vmatprep.subr.mxu0 0.0
  %1104 = vmatpush2.msra.mxu0 0.0
  %1105 = vmatprep.subr.mxu0 0.0
  %1106 = vmatpush2.msra.mxu0 0.0
  %1107 = vmatprep.subr.mxu0 0.0
  %1108 = vmatpush2.msra.mxu0 0.0
  %1109 = vmatprep.subr.mxu0 0.0
  %1110 = vmatpush2.msra.mxu0 0.0
  %1111 = vmatprep.subr.mxu0 0.0
  %1112 = vmatpush2.msra.mxu0 0.0
  %1113 = vmatprep.subr.mxu0 0.0
  %1114 = vmatpush2.msra.mxu0 0.0
  %1115 = vmatprep.subr.mxu0 0.0
  %1116 = vmatpush2.msra.mxu0 0.0
  %1117 = vmatprep.subr.mxu0 0.0
  %1118 = vmatpush2.msra.mxu0 0.0
  %1119 = vmatprep.subr.mxu0 0.0
  %1120 = vmatpush2.msra.mxu0 0.0
  %1121 = vmatprep.subr.mxu0 0.0
  %1122 = vmatpush2.msra.mxu0 0.0
  %1123 = vmatprep.mubr.f32.mxu0 0.0
  %1124 = vmatmul.mubr.f32.gmra.mxu0 %v1057
  %v1125 = vpop.f32.mrf.mxu0
  %v1126 = vadd.f32 0.0, %v1125
  %v1127 = vpop.f32.mrf.mxu0
  %1128 = vdwg.mxu0
  %1129 = vrot.lane.b32.xlu0 %v234, 120
  %v1130 = vpop.permute.xlu0 %1129
  %v1133 = vsel %vm28, %v823, 0
  %1135 = vmatprep.subr.mxu0 0.0
  %1136 = vmatpush1.msra.mxu0 0.0
  %1137 = vmatprep.subr.mxu0 0.0
  %1138 = vmatpush1.msra.mxu0 0.0
  %1139 = vmatprep.subr.mxu0 0.0
  %1140 = vmatpush1.msra.mxu0 0.0
  %1141 = vmatprep.subr.mxu0 0.0
  %1142 = vmatpush1.msra.mxu0 0.0
  %1143 = vmatprep.subr.mxu0 0.0
  %1144 = vmatpush1.msra.mxu0 0.0
  %1145 = vmatprep.subr.mxu0 0.0
  %1146 = vmatpush1.msra.mxu0 0.0
  %1147 = vmatprep.subr.mxu0 0.0
  %1148 = vmatpush1.msra.mxu0 0.0
  %1149 = vmatprep.subr.mxu0 0.0
  %1150 = vmatpush1.msra.mxu0 0.0
  %1151 = vmatprep.subr.mxu0 0.0
  %1152 = vmatpush1.msra.mxu0 0.0
  %1153 = vmatprep.subr.mxu0 0.0
  %1154 = vmatpush1.msra.mxu0 0.0
  %1155 = vmatprep.subr.mxu0 0.0
  %1156 = vmatpush1.msra.mxu0 0.0
  %1157 = vmatprep.subr.mxu0 0.0
  %1158 = vmatpush1.msra.mxu0 0.0
  %1159 = vmatprep.subr.mxu0 0.0
  %1160 = vmatpush1.msra.mxu0 0.0
  %1161 = vmatprep.subr.mxu0 0.0
  %1162 = vmatpush1.msra.mxu0 0.0
  %1163 = vmatprep.subr.mxu0 0.0
  %1164 = vmatpush1.msra.mxu0 0.0
  %1165 = vmatprep.subr.mxu0 0.0
  %1166 = vmatpush1.msra.mxu0 %v1130
  %1167 = vmatprep.subr.mxu0 0.0
  %1168 = vmatpush2.msra.mxu0 0.0
  %1169 = vmatprep.subr.mxu0 0.0
  %1170 = vmatpush2.msra.mxu0 0.0
  %1171 = vmatprep.subr.mxu0 0.0
  %1172 = vmatpush2.msra.mxu0 0.0
  %1173 = vmatprep.subr.mxu0 0.0
  %1174 = vmatpush2.msra.mxu0 0.0
  %1175 = vmatprep.subr.mxu0 0.0
  %1176 = vmatpush2.msra.mxu0 0.0
  %1177 = vmatprep.subr.mxu0 0.0
  %1178 = vmatpush2.msra.mxu0 0.0
  %1179 = vmatprep.subr.mxu0 0.0
  %1180 = vmatpush2.msra.mxu0 0.0
  %1181 = vmatprep.subr.mxu0 0.0
  %1182 = vmatpush2.msra.mxu0 0.0
  %1183 = vmatprep.subr.mxu0 0.0
  %1184 = vmatpush2.msra.mxu0 0.0
  %1185 = vmatprep.subr.mxu0 0.0
  %1186 = vmatpush2.msra.mxu0 0.0
  %1187 = vmatprep.subr.mxu0 0.0
  %1188 = vmatpush2.msra.mxu0 0.0
  %1189 = vmatprep.subr.mxu0 0.0
  %1190 = vmatpush2.msra.mxu0 0.0
  %1191 = vmatprep.subr.mxu0 0.0
  %1192 = vmatpush2.msra.mxu0 0.0
  %1193 = vmatprep.subr.mxu0 0.0
  %1194 = vmatpush2.msra.mxu0 0.0
  %1195 = vmatprep.subr.mxu0 0.0
  %1196 = vmatpush2.msra.mxu0 0.0
  %1197 = vmatprep.subr.mxu0 0.0
  %1198 = vmatpush2.msra.mxu0 0.0
  %1199 = vmatprep.mubr.f32.mxu0 0.0
  %1200 = vmatmul.mubr.f32.gmra.mxu0 %v1133
  %v1201 = vpop.f32.mrf.mxu0
  %v1202 = vadd.f32 0.0, %v1201
  %v1203 = vpop.f32.mrf.mxu0
  %1204 = vdwg.mxu0
  %1205 = vrot.lane.b32.xlu0 %v239, 120
  %v1206 = vpop.permute.xlu0 %1205
  %v1209 = vsel %vm28, %v824, 0
  %1211 = vmatprep.subr.mxu0 0.0
  %1212 = vmatpush1.msra.mxu0 0.0
  %1213 = vmatprep.subr.mxu0 0.0
  %1214 = vmatpush1.msra.mxu0 0.0
  %1215 = vmatprep.subr.mxu0 0.0
  %1216 = vmatpush1.msra.mxu0 0.0
  %1217 = vmatprep.subr.mxu0 0.0
  %1218 = vmatpush1.msra.mxu0 0.0
  %1219 = vmatprep.subr.mxu0 0.0
  %1220 = vmatpush1.msra.mxu0 0.0
  %1221 = vmatprep.subr.mxu0 0.0
  %1222 = vmatpush1.msra.mxu0 0.0
  %1223 = vmatprep.subr.mxu0 0.0
  %1224 = vmatpush1.msra.mxu0 0.0
  %1225 = vmatprep.subr.mxu0 0.0
  %1226 = vmatpush1.msra.mxu0 0.0
  %1227 = vmatprep.subr.mxu0 0.0
  %1228 = vmatpush1.msra.mxu0 0.0
  %1229 = vmatprep.subr.mxu0 0.0
  %1230 = vmatpush1.msra.mxu0 0.0
  %1231 = vmatprep.subr.mxu0 0.0
  %1232 = vmatpush1.msra.mxu0 0.0
  %1233 = vmatprep.subr.mxu0 0.0
  %1234 = vmatpush1.msra.mxu0 0.0
  %1235 = vmatprep.subr.mxu0 0.0
  %1236 = vmatpush1.msra.mxu0 0.0
  %1237 = vmatprep.subr.mxu0 0.0
  %1238 = vmatpush1.msra.mxu0 0.0
  %1239 = vmatprep.subr.mxu0 0.0
  %1240 = vmatpush1.msra.mxu0 0.0
  %1241 = vmatprep.subr.mxu0 0.0
  %1242 = vmatpush1.msra.mxu0 %v1206
  %1243 = vmatprep.subr.mxu0 0.0
  %1244 = vmatpush2.msra.mxu0 0.0
  %1245 = vmatprep.subr.mxu0 0.0
  %1246 = vmatpush2.msra.mxu0 0.0
  %1247 = vmatprep.subr.mxu0 0.0
  %1248 = vmatpush2.msra.mxu0 0.0
  %1249 = vmatprep.subr.mxu0 0.0
  %1250 = vmatpush2.msra.mxu0 0.0
  %1251 = vmatprep.subr.mxu0 0.0
  %1252 = vmatpush2.msra.mxu0 0.0
  %1253 = vmatprep.subr.mxu0 0.0
  %1254 = vmatpush2.msra.mxu0 0.0
  %1255 = vmatprep.subr.mxu0 0.0
  %1256 = vmatpush2.msra.mxu0 0.0
  %1257 = vmatprep.subr.mxu0 0.0
  %1258 = vmatpush2.msra.mxu0 0.0
  %1259 = vmatprep.subr.mxu0 0.0
  %1260 = vmatpush2.msra.mxu0 0.0
  %1261 = vmatprep.subr.mxu0 0.0
  %1262 = vmatpush2.msra.mxu0 0.0
  %1263 = vmatprep.subr.mxu0 0.0
  %1264 = vmatpush2.msra.mxu0 0.0
  %1265 = vmatprep.subr.mxu0 0.0
  %1266 = vmatpush2.msra.mxu0 0.0
  %1267 = vmatprep.subr.mxu0 0.0
  %1268 = vmatpush2.msra.mxu0 0.0
  %1269 = vmatprep.subr.mxu0 0.0
  %1270 = vmatpush2.msra.mxu0 0.0
  %1271 = vmatprep.subr.mxu0 0.0
  %1272 = vmatpush2.msra.mxu0 0.0
  %1273 = vmatprep.subr.mxu0 0.0
  %1274 = vmatpush2.msra.mxu0 0.0
  %1275 = vmatprep.mubr.f32.mxu0 0.0
  %1276 = vmatmul.mubr.f32.gmra.mxu0 %v1209
  %v1277 = vpop.f32.mrf.mxu0
  %v1278 = vadd.f32 0.0, %v1277
  %v1279 = vpop.f32.mrf.mxu0
  %1280 = vdwg.mxu0
  %1281 = vrot.lane.b32.xlu0 %v214, 116
  %v1282 = vpop.permute.xlu0 %1281
  %1283 = vrot.lane.b32.xlu0 %v214, 112
  %v1284 = vpop.permute.xlu0 %1283
  %v1285 = vsel %vm245, %v1282, 0
  %v1287 = vsel %vm245, %v1284, 0
  %1289 = vmatprep.subr.mxu0 0.0
  %1290 = vmatpush1.xpose.msra.mxu0 0.0
  %1291 = vmatprep.subr.mxu0 0.0
  %1292 = vmatpush1.xpose.msra.mxu0 0.0
  %1293 = vmatprep.subr.mxu0 0.0
  %1294 = vmatpush1.xpose.msra.mxu0 0.0
  %1295 = vmatprep.subr.mxu0 0.0
  %1296 = vmatpush1.xpose.msra.mxu0 0.0
  %1297 = vmatprep.subr.mxu0 0.0
  %1298 = vmatpush1.xpose.msra.mxu0 0.0
  %1299 = vmatprep.subr.mxu0 0.0
  %1300 = vmatpush1.xpose.msra.mxu0 0.0
  %1301 = vmatprep.subr.mxu0 0.0
  %1302 = vmatpush1.xpose.msra.mxu0 0.0
  %1303 = vmatprep.subr.mxu0 0.0
  %1304 = vmatpush1.xpose.msra.mxu0 0.0
  %1305 = vmatprep.subr.mxu0 0.0
  %1306 = vmatpush1.xpose.msra.mxu0 0.0
  %1307 = vmatprep.subr.mxu0 0.0
  %1308 = vmatpush1.xpose.msra.mxu0 0.0
  %1309 = vmatprep.subr.mxu0 0.0
  %1310 = vmatpush1.xpose.msra.mxu0 0.0
  %1311 = vmatprep.subr.mxu0 0.0
  %1312 = vmatpush1.xpose.msra.mxu0 0.0
  %1313 = vmatprep.subr.mxu0 0.0
  %1314 = vmatpush1.xpose.msra.mxu0 0.0
  %1315 = vmatprep.subr.mxu0 0.0
  %1316 = vmatpush1.xpose.msra.mxu0 0.0
  %1317 = vmatprep.subr.mxu0 0.0
  %1318 = vmatpush1.xpose.msra.mxu0 0.0
  %1319 = vmatprep.subr.mxu0 0.0
  %1320 = vmatpush1.xpose.msra.mxu0 %v1287
  %1321 = vmatprep.subr.mxu0 0.0
  %1322 = vmatpush2.xpose.msra.mxu0 0.0
  %1323 = vmatprep.subr.mxu0 0.0
  %1324 = vmatpush2.xpose.msra.mxu0 0.0
  %1325 = vmatprep.subr.mxu0 0.0
  %1326 = vmatpush2.xpose.msra.mxu0 0.0
  %1327 = vmatprep.subr.mxu0 0.0
  %1328 = vmatpush2.xpose.msra.mxu0 0.0
  %1329 = vmatprep.subr.mxu0 0.0
  %1330 = vmatpush2.xpose.msra.mxu0 0.0
  %1331 = vmatprep.subr.mxu0 0.0
  %1332 = vmatpush2.xpose.msra.mxu0 0.0
  %1333 = vmatprep.subr.mxu0 0.0
  %1334 = vmatpush2.xpose.msra.mxu0 0.0
  %1335 = vmatprep.subr.mxu0 0.0
  %1336 = vmatpush2.xpose.msra.mxu0 0.0
  %1337 = vmatprep.subr.mxu0 0.0
  %1338 = vmatpush2.xpose.msra.mxu0 0.0
  %1339 = vmatprep.subr.mxu0 0.0
  %1340 = vmatpush2.xpose.msra.mxu0 0.0
  %1341 = vmatprep.subr.mxu0 0.0
  %1342 = vmatpush2.xpose.msra.mxu0 0.0
  %1343 = vmatprep.subr.mxu0 0.0
  %1344 = vmatpush2.xpose.msra.mxu0 0.0
  %1345 = vmatprep.subr.mxu0 0.0
  %1346 = vmatpush2.xpose.msra.mxu0 0.0
  %1347 = vmatprep.subr.mxu0 0.0
  %1348 = vmatpush2.xpose.msra.mxu0 0.0
  %1349 = vmatprep.subr.mxu0 0.0
  %1350 = vmatpush2.xpose.msra.mxu0 0.0
  %1351 = vmatprep.subr.mxu0 0.0
  %1352 = vmatpush2.xpose.msra.mxu0 0.0
  %1353 = vmatprep.mubr.f32.mxu0 0.0
  %1354 = vmatmul.mubr.f32.gmra.mxu0 %v1285
  %v1355 = vpop.f32.mrf.mxu0
  %v1356 = vadd.f32 0.0, %v1355
  %v1357 = vpop.f32.mrf.mxu0
  %1358 = vdwg.mxu0
  %1359 = vrot.lane.b32.xlu0 %v219, 116
  %v1360 = vpop.permute.xlu0 %1359
  %1361 = vrot.lane.b32.xlu0 %v219, 112
  %v1362 = vpop.permute.xlu0 %1361
  %v1363 = vsel %vm245, %v1360, 0
  %v1365 = vsel %vm245, %v1362, 0
  %1367 = vmatprep.subr.mxu0 0.0
  %1368 = vmatpush1.xpose.msra.mxu0 0.0
  %1369 = vmatprep.subr.mxu0 0.0
  %1370 = vmatpush1.xpose.msra.mxu0 0.0
  %1371 = vmatprep.subr.mxu0 0.0
  %1372 = vmatpush1.xpose.msra.mxu0 0.0
  %1373 = vmatprep.subr.mxu0 0.0
  %1374 = vmatpush1.xpose.msra.mxu0 0.0
  %1375 = vmatprep.subr.mxu0 0.0
  %1376 = vmatpush1.xpose.msra.mxu0 0.0
  %1377 = vmatprep.subr.mxu0 0.0
  %1378 = vmatpush1.xpose.msra.mxu0 0.0
  %1379 = vmatprep.subr.mxu0 0.0
  %1380 = vmatpush1.xpose.msra.mxu0 0.0
  %1381 = vmatprep.subr.mxu0 0.0
  %1382 = vmatpush1.xpose.msra.mxu0 0.0
  %1383 = vmatprep.subr.mxu0 0.0
  %1384 = vmatpush1.xpose.msra.mxu0 0.0
  %1385 = vmatprep.subr.mxu0 0.0
  %1386 = vmatpush1.xpose.msra.mxu0 0.0
  %1387 = vmatprep.subr.mxu0 0.0
  %1388 = vmatpush1.xpose.msra.mxu0 0.0
  %1389 = vmatprep.subr.mxu0 0.0
  %1390 = vmatpush1.xpose.msra.mxu0 0.0
  %1391 = vmatprep.subr.mxu0 0.0
  %1392 = vmatpush1.xpose.msra.mxu0 0.0
  %1393 = vmatprep.subr.mxu0 0.0
  %1394 = vmatpush1.xpose.msra.mxu0 0.0
  %1395 = vmatprep.subr.mxu0 0.0
  %1396 = vmatpush1.xpose.msra.mxu0 0.0
  %1397 = vmatprep.subr.mxu0 0.0
  %1398 = vmatpush1.xpose.msra.mxu0 %v1365
  %1399 = vmatprep.subr.mxu0 0.0
  %1400 = vmatpush2.xpose.msra.mxu0 0.0
  %1401 = vmatprep.subr.mxu0 0.0
  %1402 = vmatpush2.xpose.msra.mxu0 0.0
  %1403 = vmatprep.subr.mxu0 0.0
  %1404 = vmatpush2.xpose.msra.mxu0 0.0
  %1405 = vmatprep.subr.mxu0 0.0
  %1406 = vmatpush2.xpose.msra.mxu0 0.0
  %1407 = vmatprep.subr.mxu0 0.0
  %1408 = vmatpush2.xpose.msra.mxu0 0.0
  %1409 = vmatprep.subr.mxu0 0.0
  %1410 = vmatpush2.xpose.msra.mxu0 0.0
  %1411 = vmatprep.subr.mxu0 0.0
  %1412 = vmatpush2.xpose.msra.mxu0 0.0
  %1413 = vmatprep.subr.mxu0 0.0
  %1414 = vmatpush2.xpose.msra.mxu0 0.0
  %1415 = vmatprep.subr.mxu0 0.0
  %1416 = vmatpush2.xpose.msra.mxu0 0.0
  %1417 = vmatprep.subr.mxu0 0.0
  %1418 = vmatpush2.xpose.msra.mxu0 0.0
  %1419 = vmatprep.subr.mxu0 0.0
  %1420 = vmatpush2.xpose.msra.mxu0 0.0
  %1421 = vmatprep.subr.mxu0 0.0
  %1422 = vmatpush2.xpose.msra.mxu0 0.0
  %1423 = vmatprep.subr.mxu0 0.0
  %1424 = vmatpush2.xpose.msra.mxu0 0.0
  %1425 = vmatprep.subr.mxu0 0.0
  %1426 = vmatpush2.xpose.msra.mxu0 0.0
  %1427 = vmatprep.subr.mxu0 0.0
  %1428 = vmatpush2.xpose.msra.mxu0 0.0
  %1429 = vmatprep.subr.mxu0 0.0
  %1430 = vmatpush2.xpose.msra.mxu0 0.0
  %1431 = vmatprep.mubr.f32.mxu0 0.0
  %1432 = vmatmul.mubr.f32.gmra.mxu0 %v1363
  %v1433 = vpop.f32.mrf.mxu0
  %v1434 = vadd.f32 0.0, %v1433
  %v1435 = vpop.f32.mrf.mxu0
  %1436 = vdwg.mxu0
  %1437 = vrot.lane.b32.xlu0 %v224, 116
  %v1438 = vpop.permute.xlu0 %1437
  %1439 = vrot.lane.b32.xlu0 %v224, 112
  %v1440 = vpop.permute.xlu0 %1439
  %v1441 = vsel %vm245, %v1438, 0
  %v1443 = vsel %vm245, %v1440, 0
  %1445 = vmatprep.subr.mxu0 0.0
  %1446 = vmatpush1.xpose.msra.mxu0 0.0
  %1447 = vmatprep.subr.mxu0 0.0
  %1448 = vmatpush1.xpose.msra.mxu0 0.0
  %1449 = vmatprep.subr.mxu0 0.0
  %1450 = vmatpush1.xpose.msra.mxu0 0.0
  %1451 = vmatprep.subr.mxu0 0.0
  %1452 = vmatpush1.xpose.msra.mxu0 0.0
  %1453 = vmatprep.subr.mxu0 0.0
  %1454 = vmatpush1.xpose.msra.mxu0 0.0
  %1455 = vmatprep.subr.mxu0 0.0
  %1456 = vmatpush1.xpose.msra.mxu0 0.0
  %1457 = vmatprep.subr.mxu0 0.0
  %1458 = vmatpush1.xpose.msra.mxu0 0.0
  %1459 = vmatprep.subr.mxu0 0.0
  %1460 = vmatpush1.xpose.msra.mxu0 0.0
  %1461 = vmatprep.subr.mxu0 0.0
  %1462 = vmatpush1.xpose.msra.mxu0 0.0
  %1463 = vmatprep.subr.mxu0 0.0
  %1464 = vmatpush1.xpose.msra.mxu0 0.0
  %1465 = vmatprep.subr.mxu0 0.0
  %1466 = vmatpush1.xpose.msra.mxu0 0.0
  %1467 = vmatprep.subr.mxu0 0.0
  %1468 = vmatpush1.xpose.msra.mxu0 0.0
  %1469 = vmatprep.subr.mxu0 0.0
  %1470 = vmatpush1.xpose.msra.mxu0 0.0
  %1471 = vmatprep.subr.mxu0 0.0
  %1472 = vmatpush1.xpose.msra.mxu0 0.0
  %1473 = vmatprep.subr.mxu0 0.0
  %1474 = vmatpush1.xpose.msra.mxu0 0.0
  %1475 = vmatprep.subr.mxu0 0.0
  %1476 = vmatpush1.xpose.msra.mxu0 %v1443
  %1477 = vmatprep.subr.mxu0 0.0
  %1478 = vmatpush2.xpose.msra.mxu0 0.0
  %1479 = vmatprep.subr.mxu0 0.0
  %1480 = vmatpush2.xpose.msra.mxu0 0.0
  %1481 = vmatprep.subr.mxu0 0.0
  %1482 = vmatpush2.xpose.msra.mxu0 0.0
  %1483 = vmatprep.subr.mxu0 0.0
  %1484 = vmatpush2.xpose.msra.mxu0 0.0
  %1485 = vmatprep.subr.mxu0 0.0
  %1486 = vmatpush2.xpose.msra.mxu0 0.0
  %1487 = vmatprep.subr.mxu0 0.0
  %1488 = vmatpush2.xpose.msra.mxu0 0.0
  %1489 = vmatprep.subr.mxu0 0.0
  %1490 = vmatpush2.xpose.msra.mxu0 0.0
  %1491 = vmatprep.subr.mxu0 0.0
  %1492 = vmatpush2.xpose.msra.mxu0 0.0
  %1493 = vmatprep.subr.mxu0 0.0
  %1494 = vmatpush2.xpose.msra.mxu0 0.0
  %1495 = vmatprep.subr.mxu0 0.0
  %1496 = vmatpush2.xpose.msra.mxu0 0.0
  %1497 = vmatprep.subr.mxu0 0.0
  %1498 = vmatpush2.xpose.msra.mxu0 0.0
  %1499 = vmatprep.subr.mxu0 0.0
  %1500 = vmatpush2.xpose.msra.mxu0 0.0
  %1501 = vmatprep.subr.mxu0 0.0
  %1502 = vmatpush2.xpose.msra.mxu0 0.0
  %1503 = vmatprep.subr.mxu0 0.0
  %1504 = vmatpush2.xpose.msra.mxu0 0.0
  %1505 = vmatprep.subr.mxu0 0.0
  %1506 = vmatpush2.xpose.msra.mxu0 0.0
  %1507 = vmatprep.subr.mxu0 0.0
  %1508 = vmatpush2.xpose.msra.mxu0 0.0
  %1509 = vmatprep.mubr.f32.mxu0 0.0
  %1510 = vmatmul.mubr.f32.gmra.mxu0 %v1441
  %v1511 = vpop.f32.mrf.mxu0
  %v1512 = vadd.f32 0.0, %v1511
  %v1513 = vpop.f32.mrf.mxu0
  %1514 = vdwg.mxu0
  %1515 = vrot.lane.b32.xlu0 %v229, 116
  %v1516 = vpop.permute.xlu0 %1515
  %1517 = vrot.lane.b32.xlu0 %v229, 112
  %v1518 = vpop.permute.xlu0 %1517
  %v1519 = vsel %vm245, %v1516, 0
  %v1521 = vsel %vm245, %v1518, 0
  %1523 = vmatprep.subr.mxu0 0.0
  %1524 = vmatpush1.xpose.msra.mxu0 0.0
  %1525 = vmatprep.subr.mxu0 0.0
  %1526 = vmatpush1.xpose.msra.mxu0 0.0
  %1527 = vmatprep.subr.mxu0 0.0
  %1528 = vmatpush1.xpose.msra.mxu0 0.0
  %1529 = vmatprep.subr.mxu0 0.0
  %1530 = vmatpush1.xpose.msra.mxu0 0.0
  %1531 = vmatprep.subr.mxu0 0.0
  %1532 = vmatpush1.xpose.msra.mxu0 0.0
  %1533 = vmatprep.subr.mxu0 0.0
  %1534 = vmatpush1.xpose.msra.mxu0 0.0
  %1535 = vmatprep.subr.mxu0 0.0
  %1536 = vmatpush1.xpose.msra.mxu0 0.0
  %1537 = vmatprep.subr.mxu0 0.0
  %1538 = vmatpush1.xpose.msra.mxu0 0.0
  %1539 = vmatprep.subr.mxu0 0.0
  %1540 = vmatpush1.xpose.msra.mxu0 0.0
  %1541 = vmatprep.subr.mxu0 0.0
  %1542 = vmatpush1.xpose.msra.mxu0 0.0
  %1543 = vmatprep.subr.mxu0 0.0
  %1544 = vmatpush1.xpose.msra.mxu0 0.0
  %1545 = vmatprep.subr.mxu0 0.0
  %1546 = vmatpush1.xpose.msra.mxu0 0.0
  %1547 = vmatprep.subr.mxu0 0.0
  %1548 = vmatpush1.xpose.msra.mxu0 0.0
  %1549 = vmatprep.subr.mxu0 0.0
  %1550 = vmatpush1.xpose.msra.mxu0 0.0
  %1551 = vmatprep.subr.mxu0 0.0
  %1552 = vmatpush1.xpose.msra.mxu0 0.0
  %1553 = vmatprep.subr.mxu0 0.0
  %1554 = vmatpush1.xpose.msra.mxu0 %v1521
  %1555 = vmatprep.subr.mxu0 0.0
  %1556 = vmatpush2.xpose.msra.mxu0 0.0
  %1557 = vmatprep.subr.mxu0 0.0
  %1558 = vmatpush2.xpose.msra.mxu0 0.0
  %1559 = vmatprep.subr.mxu0 0.0
  %1560 = vmatpush2.xpose.msra.mxu0 0.0
  %1561 = vmatprep.subr.mxu0 0.0
  %1562 = vmatpush2.xpose.msra.mxu0 0.0
  %1563 = vmatprep.subr.mxu0 0.0
  %1564 = vmatpush2.xpose.msra.mxu0 0.0
  %1565 = vmatprep.subr.mxu0 0.0
  %1566 = vmatpush2.xpose.msra.mxu0 0.0
  %1567 = vmatprep.subr.mxu0 0.0
  %1568 = vmatpush2.xpose.msra.mxu0 0.0
  %1569 = vmatprep.subr.mxu0 0.0
  %1570 = vmatpush2.xpose.msra.mxu0 0.0
  %1571 = vmatprep.subr.mxu0 0.0
  %1572 = vmatpush2.xpose.msra.mxu0 0.0
  %1573 = vmatprep.subr.mxu0 0.0
  %1574 = vmatpush2.xpose.msra.mxu0 0.0
  %1575 = vmatprep.subr.mxu0 0.0
  %1576 = vmatpush2.xpose.msra.mxu0 0.0
  %1577 = vmatprep.subr.mxu0 0.0
  %1578 = vmatpush2.xpose.msra.mxu0 0.0
  %1579 = vmatprep.subr.mxu0 0.0
  %1580 = vmatpush2.xpose.msra.mxu0 0.0
  %1581 = vmatprep.subr.mxu0 0.0
  %1582 = vmatpush2.xpose.msra.mxu0 0.0
  %1583 = vmatprep.subr.mxu0 0.0
  %1584 = vmatpush2.xpose.msra.mxu0 0.0
  %1585 = vmatprep.subr.mxu0 0.0
  %1586 = vmatpush2.xpose.msra.mxu0 0.0
  %1587 = vmatprep.mubr.f32.mxu0 0.0
  %1588 = vmatmul.mubr.f32.gmra.mxu0 %v1519
  %v1589 = vpop.f32.mrf.mxu0
  %v1590 = vadd.f32 0.0, %v1589
  %v1591 = vpop.f32.mrf.mxu0
  %1592 = vdwg.mxu0
  %1593 = vrot.lane.b32.xlu0 %v234, 116
  %v1594 = vpop.permute.xlu0 %1593
  %1595 = vrot.lane.b32.xlu0 %v234, 112
  %v1596 = vpop.permute.xlu0 %1595
  %v1597 = vsel %vm245, %v1594, 0
  %v1599 = vsel %vm245, %v1596, 0
  %1601 = vmatprep.subr.mxu0 0.0
  %1602 = vmatpush1.xpose.msra.mxu0 0.0
  %1603 = vmatprep.subr.mxu0 0.0
  %1604 = vmatpush1.xpose.msra.mxu0 0.0
  %1605 = vmatprep.subr.mxu0 0.0
  %1606 = vmatpush1.xpose.msra.mxu0 0.0
  %1607 = vmatprep.subr.mxu0 0.0
  %1608 = vmatpush1.xpose.msra.mxu0 0.0
  %1609 = vmatprep.subr.mxu0 0.0
  %1610 = vmatpush1.xpose.msra.mxu0 0.0
  %1611 = vmatprep.subr.mxu0 0.0
  %1612 = vmatpush1.xpose.msra.mxu0 0.0
  %1613 = vmatprep.subr.mxu0 0.0
  %1614 = vmatpush1.xpose.msra.mxu0 0.0
  %1615 = vmatprep.subr.mxu0 0.0
  %1616 = vmatpush1.xpose.msra.mxu0 0.0
  %1617 = vmatprep.subr.mxu0 0.0
  %1618 = vmatpush1.xpose.msra.mxu0 0.0
  %1619 = vmatprep.subr.mxu0 0.0
  %1620 = vmatpush1.xpose.msra.mxu0 0.0
  %1621 = vmatprep.subr.mxu0 0.0
  %1622 = vmatpush1.xpose.msra.mxu0 0.0
  %1623 = vmatprep.subr.mxu0 0.0
  %1624 = vmatpush1.xpose.msra.mxu0 0.0
  %1625 = vmatprep.subr.mxu0 0.0
  %1626 = vmatpush1.xpose.msra.mxu0 0.0
  %1627 = vmatprep.subr.mxu0 0.0
  %1628 = vmatpush1.xpose.msra.mxu0 0.0
  %1629 = vmatprep.subr.mxu0 0.0
  %1630 = vmatpush1.xpose.msra.mxu0 0.0
  %1631 = vmatprep.subr.mxu0 0.0
  %1632 = vmatpush1.xpose.msra.mxu0 %v1599
  %1633 = vmatprep.subr.mxu0 0.0
  %1634 = vmatpush2.xpose.msra.mxu0 0.0
  %1635 = vmatprep.subr.mxu0 0.0
  %1636 = vmatpush2.xpose.msra.mxu0 0.0
  %1637 = vmatprep.subr.mxu0 0.0
  %1638 = vmatpush2.xpose.msra.mxu0 0.0
  %1639 = vmatprep.subr.mxu0 0.0
  %1640 = vmatpush2.xpose.msra.mxu0 0.0
  %1641 = vmatprep.subr.mxu0 0.0
  %1642 = vmatpush2.xpose.msra.mxu0 0.0
  %1643 = vmatprep.subr.mxu0 0.0
  %1644 = vmatpush2.xpose.msra.mxu0 0.0
  %1645 = vmatprep.subr.mxu0 0.0
  %1646 = vmatpush2.xpose.msra.mxu0 0.0
  %1647 = vmatprep.subr.mxu0 0.0
  %1648 = vmatpush2.xpose.msra.mxu0 0.0
  %1649 = vmatprep.subr.mxu0 0.0
  %1650 = vmatpush2.xpose.msra.mxu0 0.0
  %1651 = vmatprep.subr.mxu0 0.0
  %1652 = vmatpush2.xpose.msra.mxu0 0.0
  %1653 = vmatprep.subr.mxu0 0.0
  %1654 = vmatpush2.xpose.msra.mxu0 0.0
  %1655 = vmatprep.subr.mxu0 0.0
  %1656 = vmatpush2.xpose.msra.mxu0 0.0
  %1657 = vmatprep.subr.mxu0 0.0
  %1658 = vmatpush2.xpose.msra.mxu0 0.0
  %1659 = vmatprep.subr.mxu0 0.0
  %1660 = vmatpush2.xpose.msra.mxu0 0.0
  %1661 = vmatprep.subr.mxu0 0.0
  %1662 = vmatpush2.xpose.msra.mxu0 0.0
  %1663 = vmatprep.subr.mxu0 0.0
  %1664 = vmatpush2.xpose.msra.mxu0 0.0
  %1665 = vmatprep.mubr.f32.mxu0 0.0
  %1666 = vmatmul.mubr.f32.gmra.mxu0 %v1597
  %v1667 = vpop.f32.mrf.mxu0
  %v1668 = vadd.f32 0.0, %v1667
  %v1669 = vpop.f32.mrf.mxu0
  %1670 = vdwg.mxu0
  %1671 = vrot.lane.b32.xlu0 %v239, 116
  %v1672 = vpop.permute.xlu0 %1671
  %1673 = vrot.lane.b32.xlu0 %v239, 112
  %v1674 = vpop.permute.xlu0 %1673
  %v1675 = vsel %vm245, %v1672, 0
  %v1677 = vsel %vm245, %v1674, 0
  %1679 = vmatprep.subr.mxu0 0.0
  %1680 = vmatpush1.xpose.msra.mxu0 0.0
  %1681 = vmatprep.subr.mxu0 0.0
  %1682 = vmatpush1.xpose.msra.mxu0 0.0
  %1683 = vmatprep.subr.mxu0 0.0
  %1684 = vmatpush1.xpose.msra.mxu0 0.0
  %1685 = vmatprep.subr.mxu0 0.0
  %1686 = vmatpush1.xpose.msra.mxu0 0.0
  %1687 = vmatprep.subr.mxu0 0.0
  %1688 = vmatpush1.xpose.msra.mxu0 0.0
  %1689 = vmatprep.subr.mxu0 0.0
  %1690 = vmatpush1.xpose.msra.mxu0 0.0
  %1691 = vmatprep.subr.mxu0 0.0
  %1692 = vmatpush1.xpose.msra.mxu0 0.0
  %1693 = vmatprep.subr.mxu0 0.0
  %1694 = vmatpush1.xpose.msra.mxu0 0.0
  %1695 = vmatprep.subr.mxu0 0.0
  %1696 = vmatpush1.xpose.msra.mxu0 0.0
  %1697 = vmatprep.subr.mxu0 0.0
  %1698 = vmatpush1.xpose.msra.mxu0 0.0
  %1699 = vmatprep.subr.mxu0 0.0
  %1700 = vmatpush1.xpose.msra.mxu0 0.0
  %1701 = vmatprep.subr.mxu0 0.0
  %1702 = vmatpush1.xpose.msra.mxu0 0.0
  %1703 = vmatprep.subr.mxu0 0.0
  %1704 = vmatpush1.xpose.msra.mxu0 0.0
  %1705 = vmatprep.subr.mxu0 0.0
  %1706 = vmatpush1.xpose.msra.mxu0 0.0
  %1707 = vmatprep.subr.mxu0 0.0
  %1708 = vmatpush1.xpose.msra.mxu0 0.0
  %1709 = vmatprep.subr.mxu0 0.0
  %1710 = vmatpush1.xpose.msra.mxu0 %v1677
  %1711 = vmatprep.subr.mxu0 0.0
  %1712 = vmatpush2.xpose.msra.mxu0 0.0
  %1713 = vmatprep.subr.mxu0 0.0
  %1714 = vmatpush2.xpose.msra.mxu0 0.0
  %1715 = vmatprep.subr.mxu0 0.0
  %1716 = vmatpush2.xpose.msra.mxu0 0.0
  %1717 = vmatprep.subr.mxu0 0.0
  %1718 = vmatpush2.xpose.msra.mxu0 0.0
  %1719 = vmatprep.subr.mxu0 0.0
  %1720 = vmatpush2.xpose.msra.mxu0 0.0
  %1721 = vmatprep.subr.mxu0 0.0
  %1722 = vmatpush2.xpose.msra.mxu0 0.0
  %1723 = vmatprep.subr.mxu0 0.0
  %1724 = vmatpush2.xpose.msra.mxu0 0.0
  %1725 = vmatprep.subr.mxu0 0.0
  %1726 = vmatpush2.xpose.msra.mxu0 0.0
  %1727 = vmatprep.subr.mxu0 0.0
  %1728 = vmatpush2.xpose.msra.mxu0 0.0
  %1729 = vmatprep.subr.mxu0 0.0
  %1730 = vmatpush2.xpose.msra.mxu0 0.0
  %1731 = vmatprep.subr.mxu0 0.0
  %1732 = vmatpush2.xpose.msra.mxu0 0.0
  %1733 = vmatprep.subr.mxu0 0.0
  %1734 = vmatpush2.xpose.msra.mxu0 0.0
  %1735 = vmatprep.subr.mxu0 0.0
  %1736 = vmatpush2.xpose.msra.mxu0 0.0
  %1737 = vmatprep.subr.mxu0 0.0
  %1738 = vmatpush2.xpose.msra.mxu0 0.0
  %1739 = vmatprep.subr.mxu0 0.0
  %1740 = vmatpush2.xpose.msra.mxu0 0.0
  %1741 = vmatprep.subr.mxu0 0.0
  %1742 = vmatpush2.xpose.msra.mxu0 0.0
  %1743 = vmatprep.mubr.f32.mxu0 0.0
  %1744 = vmatmul.mubr.f32.gmra.mxu0 %v1675
  %v1745 = vpop.f32.mrf.mxu0
  %v1746 = vadd.f32 0.0, %v1745
  %v1747 = vpop.f32.mrf.mxu0
  %1748 = vdwg.mxu0
  %v1749 = vmul.f32 %v1356, 0.5
  %v1750 = vmul.f32 %v1434, 0.5
  %v1751 = vmul.f32 %v1512, 0.5
  %v1752 = vmul.f32 %v1590, 0.5
  %v1753 = vmul.f32 %v1668, 0.5
  %v1754 = vmul.f32 %v1746, 0.5
  %v1755 = vsel %vm28, %v1749, -inf
  %v1756 = vrot.slane %v1755, 4
  %v1757 = vmax.f32 %v1755, %v1756
  %v1758 = vrot.slane %v1757, 2
  %v1759 = vmax.f32 %v1757, %v1758
  %v1760 = vrot.slane %v1759, 1
  %v1761 = vmax.f32 %v1759, %v1760
  %v1762 = vsel %vm28, %v1750, -inf
  %v1763 = vrot.slane %v1762, 4
  %v1764 = vmax.f32 %v1762, %v1763
  %v1765 = vrot.slane %v1764, 2
  %v1766 = vmax.f32 %v1764, %v1765
  %v1767 = vrot.slane %v1766, 1
  %v1768 = vmax.f32 %v1766, %v1767
  %v1769 = vsel %vm28, %v1751, -inf
  %v1770 = vrot.slane %v1769, 4
  %v1771 = vmax.f32 %v1769, %v1770
  %v1772 = vrot.slane %v1771, 2
  %v1773 = vmax.f32 %v1771, %v1772
  %v1774 = vrot.slane %v1773, 1
  %v1775 = vmax.f32 %v1773, %v1774
  %v1776 = vsel %vm28, %v1752, -inf
  %v1777 = vrot.slane %v1776, 4
  %v1778 = vmax.f32 %v1776, %v1777
  %v1779 = vrot.slane %v1778, 2
  %v1780 = vmax.f32 %v1778, %v1779
  %v1781 = vrot.slane %v1780, 1
  %v1782 = vmax.f32 %v1780, %v1781
  %v1783 = vsel %vm28, %v1753, -inf
  %v1784 = vrot.slane %v1783, 4
  %v1785 = vmax.f32 %v1783, %v1784
  %v1786 = vrot.slane %v1785, 2
  %v1787 = vmax.f32 %v1785, %v1786
  %v1788 = vrot.slane %v1787, 1
  %v1789 = vmax.f32 %v1787, %v1788
  %v1790 = vsel %vm28, %v1754, -inf
  %v1791 = vrot.slane %v1790, 4
  %v1792 = vmax.f32 %v1790, %v1791
  %v1793 = vrot.slane %v1792, 2
  %v1794 = vmax.f32 %v1792, %v1793
  %v1795 = vrot.slane %v1794, 1
  %v1796 = vmax.f32 %v1794, %v1795
  %v1797 = vsub.f32 %v1749, %v1761
  %v1798 = vsub.f32 %v1750, %v1768
  %v1799 = vsub.f32 %v1751, %v1775
  %v1800 = vsub.f32 %v1752, %v1782
  %v1801 = vsub.f32 %v1753, %v1789
  %v1802 = vsub.f32 %v1754, %v1796
  %v1803 = vmul.f32 %v1797, 1.442695
  %v1804 = vpow.pop %v1803
  %v1805 = vmul.f32 %v1798, 1.442695
  %v1806 = vpow.pop %v1805
  %v1807 = vmul.f32 %v1799, 1.442695
  %v1808 = vpow.pop %v1807
  %v1809 = vmul.f32 %v1800, 1.442695
  %v1810 = vpow.pop %v1809
  %v1811 = vmul.f32 %v1801, 1.442695
  %v1812 = vpow.pop %v1811
  %v1813 = vmul.f32 %v1802, 1.442695
  %v1814 = vpow.pop %v1813
  %v1815 = vsel %vm28, %v1804, 0.0
  %v1816 = vrot.slane %v1815, 4
  %v1817 = vadd.f32 %v1815, %v1816
  %v1818 = vrot.slane %v1817, 2
  %v1819 = vadd.f32 %v1817, %v1818
  %v1820 = vrot.slane %v1819, 1
  %v1821 = vadd.f32 %v1819, %v1820
  %v1822 = vsel %vm28, %v1806, 0.0
  %v1823 = vrot.slane %v1822, 4
  %v1824 = vadd.f32 %v1822, %v1823
  %v1825 = vrot.slane %v1824, 2
  %v1826 = vadd.f32 %v1824, %v1825
  %v1827 = vrot.slane %v1826, 1
  %v1828 = vadd.f32 %v1826, %v1827
  %v1829 = vsel %vm28, %v1808, 0.0
  %v1830 = vrot.slane %v1829, 4
  %v1831 = vadd.f32 %v1829, %v1830
  %v1832 = vrot.slane %v1831, 2
  %v1833 = vadd.f32 %v1831, %v1832
  %v1834 = vrot.slane %v1833, 1
  %v1835 = vadd.f32 %v1833, %v1834
  %v1836 = vsel %vm28, %v1810, 0.0
  %v1837 = vrot.slane %v1836, 4
  %v1838 = vadd.f32 %v1836, %v1837
  %v1839 = vrot.slane %v1838, 2
  %v1840 = vadd.f32 %v1838, %v1839
  %v1841 = vrot.slane %v1840, 1
  %v1842 = vadd.f32 %v1840, %v1841
  %v1843 = vsel %vm28, %v1812, 0.0
  %v1844 = vrot.slane %v1843, 4
  %v1845 = vadd.f32 %v1843, %v1844
  %v1846 = vrot.slane %v1845, 2
  %v1847 = vadd.f32 %v1845, %v1846
  %v1848 = vrot.slane %v1847, 1
  %v1849 = vadd.f32 %v1847, %v1848
  %v1850 = vsel %vm28, %v1814, 0.0
  %v1851 = vrot.slane %v1850, 4
  %v1852 = vadd.f32 %v1850, %v1851
  %v1853 = vrot.slane %v1852, 2
  %v1854 = vadd.f32 %v1852, %v1853
  %v1855 = vrot.slane %v1854, 1
  %v1856 = vadd.f32 %v1854, %v1855
  %v1857 = vrcp.pop %v1821
  %v1858 = vrcp.pop %v1828
  %v1859 = vrcp.pop %v1835
  %v1860 = vrcp.pop %v1842
  %v1861 = vrcp.pop %v1849
  %v1862 = vrcp.pop %v1856
  %v1863 = vmul.f32 %v1804, %v1857
  %v1864 = vmul.f32 %v1806, %v1858
  %v1865 = vmul.f32 %v1808, %v1859
  %v1866 = vmul.f32 %v1810, %v1860
  %v1867 = vmul.f32 %v1812, %v1861
  %v1868 = vmul.f32 %v1814, %v1862
  %1869 = vrot.lane.b32.xlu0 %v214, 108
  %v1870 = vpop.permute.xlu0 %1869
  %v1873 = vsel %vm28, %v1863, 0
  %1875 = vmatprep.subr.mxu0 0.0
  %1876 = vmatpush1.msra.mxu0 0.0
  %1877 = vmatprep.subr.mxu0 0.0
  %1878 = vmatpush1.msra.mxu0 0.0
  %1879 = vmatprep.subr.mxu0 0.0
  %1880 = vmatpush1.msra.mxu0 0.0
  %1881 = vmatprep.subr.mxu0 0.0
  %1882 = vmatpush1.msra.mxu0 0.0
  %1883 = vmatprep.subr.mxu0 0.0
  %1884 = vmatpush1.msra.mxu0 0.0
  %1885 = vmatprep.subr.mxu0 0.0
  %1886 = vmatpush1.msra.mxu0 0.0
  %1887 = vmatprep.subr.mxu0 0.0
  %1888 = vmatpush1.msra.mxu0 0.0
  %1889 = vmatprep.subr.mxu0 0.0
  %1890 = vmatpush1.msra.mxu0 0.0
  %1891 = vmatprep.subr.mxu0 0.0
  %1892 = vmatpush1.msra.mxu0 0.0
  %1893 = vmatprep.subr.mxu0 0.0
  %1894 = vmatpush1.msra.mxu0 0.0
  %1895 = vmatprep.subr.mxu0 0.0
  %1896 = vmatpush1.msra.mxu0 0.0
  %1897 = vmatprep.subr.mxu0 0.0
  %1898 = vmatpush1.msra.mxu0 0.0
  %1899 = vmatprep.subr.mxu0 0.0
  %1900 = vmatpush1.msra.mxu0 0.0
  %1901 = vmatprep.subr.mxu0 0.0
  %1902 = vmatpush1.msra.mxu0 0.0
  %1903 = vmatprep.subr.mxu0 0.0
  %1904 = vmatpush1.msra.mxu0 0.0
  %1905 = vmatprep.subr.mxu0 0.0
  %1906 = vmatpush1.msra.mxu0 %v1870
  %1907 = vmatprep.subr.mxu0 0.0
  %1908 = vmatpush2.msra.mxu0 0.0
  %1909 = vmatprep.subr.mxu0 0.0
  %1910 = vmatpush2.msra.mxu0 0.0
  %1911 = vmatprep.subr.mxu0 0.0
  %1912 = vmatpush2.msra.mxu0 0.0
  %1913 = vmatprep.subr.mxu0 0.0
  %1914 = vmatpush2.msra.mxu0 0.0
  %1915 = vmatprep.subr.mxu0 0.0
  %1916 = vmatpush2.msra.mxu0 0.0
  %1917 = vmatprep.subr.mxu0 0.0
  %1918 = vmatpush2.msra.mxu0 0.0
  %1919 = vmatprep.subr.mxu0 0.0
  %1920 = vmatpush2.msra.mxu0 0.0
  %1921 = vmatprep.subr.mxu0 0.0
  %1922 = vmatpush2.msra.mxu0 0.0
  %1923 = vmatprep.subr.mxu0 0.0
  %1924 = vmatpush2.msra.mxu0 0.0
  %1925 = vmatprep.subr.mxu0 0.0
  %1926 = vmatpush2.msra.mxu0 0.0
  %1927 = vmatprep.subr.mxu0 0.0
  %1928 = vmatpush2.msra.mxu0 0.0
  %1929 = vmatprep.subr.mxu0 0.0
  %1930 = vmatpush2.msra.mxu0 0.0
  %1931 = vmatprep.subr.mxu0 0.0
  %1932 = vmatpush2.msra.mxu0 0.0
  %1933 = vmatprep.subr.mxu0 0.0
  %1934 = vmatpush2.msra.mxu0 0.0
  %1935 = vmatprep.subr.mxu0 0.0
  %1936 = vmatpush2.msra.mxu0 0.0
  %1937 = vmatprep.subr.mxu0 0.0
  %1938 = vmatpush2.msra.mxu0 0.0
  %1939 = vmatprep.mubr.f32.mxu0 0.0
  %1940 = vmatmul.mubr.f32.gmra.mxu0 %v1873
  %v1941 = vpop.f32.mrf.mxu0
  %v1942 = vadd.f32 0.0, %v1941
  %v1943 = vpop.f32.mrf.mxu0
  %1944 = vdwg.mxu0
  %1945 = vrot.lane.b32.xlu0 %v219, 108
  %v1946 = vpop.permute.xlu0 %1945
  %v1949 = vsel %vm28, %v1864, 0
  %1951 = vmatprep.subr.mxu0 0.0
  %1952 = vmatpush1.msra.mxu0 0.0
  %1953 = vmatprep.subr.mxu0 0.0
  %1954 = vmatpush1.msra.mxu0 0.0
  %1955 = vmatprep.subr.mxu0 0.0
  %1956 = vmatpush1.msra.mxu0 0.0
  %1957 = vmatprep.subr.mxu0 0.0
  %1958 = vmatpush1.msra.mxu0 0.0
  %1959 = vmatprep.subr.mxu0 0.0
  %1960 = vmatpush1.msra.mxu0 0.0
  %1961 = vmatprep.subr.mxu0 0.0
  %1962 = vmatpush1.msra.mxu0 0.0
  %1963 = vmatprep.subr.mxu0 0.0
  %1964 = vmatpush1.msra.mxu0 0.0
  %1965 = vmatprep.subr.mxu0 0.0
  %1966 = vmatpush1.msra.mxu0 0.0
  %1967 = vmatprep.subr.mxu0 0.0
  %1968 = vmatpush1.msra.mxu0 0.0
  %1969 = vmatprep.subr.mxu0 0.0
  %1970 = vmatpush1.msra.mxu0 0.0
  %1971 = vmatprep.subr.mxu0 0.0
  %1972 = vmatpush1.msra.mxu0 0.0
  %1973 = vmatprep.subr.mxu0 0.0
  %1974 = vmatpush1.msra.mxu0 0.0
  %1975 = vmatprep.subr.mxu0 0.0
  %1976 = vmatpush1.msra.mxu0 0.0
  %1977 = vmatprep.subr.mxu0 0.0
  %1978 = vmatpush1.msra.mxu0 0.0
  %1979 = vmatprep.subr.mxu0 0.0
  %1980 = vmatpush1.msra.mxu0 0.0
  %1981 = vmatprep.subr.mxu0 0.0
  %1982 = vmatpush1.msra.mxu0 %v1946
  %1983 = vmatprep.subr.mxu0 0.0
  %1984 = vmatpush2.msra.mxu0 0.0
  %1985 = vmatprep.subr.mxu0 0.0
  %1986 = vmatpush2.msra.mxu0 0.0
  %1987 = vmatprep.subr.mxu0 0.0
  %1988 = vmatpush2.msra.mxu0 0.0
  %1989 = vmatprep.subr.mxu0 0.0
  %1990 = vmatpush2.msra.mxu0 0.0
  %1991 = vmatprep.subr.mxu0 0.0
  %1992 = vmatpush2.msra.mxu0 0.0
  %1993 = vmatprep.subr.mxu0 0.0
  %1994 = vmatpush2.msra.mxu0 0.0
  %1995 = vmatprep.subr.mxu0 0.0
  %1996 = vmatpush2.msra.mxu0 0.0
  %1997 = vmatprep.subr.mxu0 0.0
  %1998 = vmatpush2.msra.mxu0 0.0
  %1999 = vmatprep.subr.mxu0 0.0
  %2000 = vmatpush2.msra.mxu0 0.0
  %2001 = vmatprep.subr.mxu0 0.0
  %2002 = vmatpush2.msra.mxu0 0.0
  %2003 = vmatprep.subr.mxu0 0.0
  %2004 = vmatpush2.msra.mxu0 0.0
  %2005 = vmatprep.subr.mxu0 0.0
  %2006 = vmatpush2.msra.mxu0 0.0
  %2007 = vmatprep.subr.mxu0 0.0
  %2008 = vmatpush2.msra.mxu0 0.0
  %2009 = vmatprep.subr.mxu0 0.0
  %2010 = vmatpush2.msra.mxu0 0.0
  %2011 = vmatprep.subr.mxu0 0.0
  %2012 = vmatpush2.msra.mxu0 0.0
  %2013 = vmatprep.subr.mxu0 0.0
  %2014 = vmatpush2.msra.mxu0 0.0
  %2015 = vmatprep.mubr.f32.mxu0 0.0
  %2016 = vmatmul.mubr.f32.gmra.mxu0 %v1949
  %v2017 = vpop.f32.mrf.mxu0
  %v2018 = vadd.f32 0.0, %v2017
  %v2019 = vpop.f32.mrf.mxu0
  %2020 = vdwg.mxu0
  %2021 = vrot.lane.b32.xlu0 %v224, 108
  %v2022 = vpop.permute.xlu0 %2021
  %v2025 = vsel %vm28, %v1865, 0
  %2027 = vmatprep.subr.mxu0 0.0
  %2028 = vmatpush1.msra.mxu0 0.0
  %2029 = vmatprep.subr.mxu0 0.0
  %2030 = vmatpush1.msra.mxu0 0.0
  %2031 = vmatprep.subr.mxu0 0.0
  %2032 = vmatpush1.msra.mxu0 0.0
  %2033 = vmatprep.subr.mxu0 0.0
  %2034 = vmatpush1.msra.mxu0 0.0
  %2035 = vmatprep.subr.mxu0 0.0
  %2036 = vmatpush1.msra.mxu0 0.0
  %2037 = vmatprep.subr.mxu0 0.0
  %2038 = vmatpush1.msra.mxu0 0.0
  %2039 = vmatprep.subr.mxu0 0.0
  %2040 = vmatpush1.msra.mxu0 0.0
  %2041 = vmatprep.subr.mxu0 0.0
  %2042 = vmatpush1.msra.mxu0 0.0
  %2043 = vmatprep.subr.mxu0 0.0
  %2044 = vmatpush1.msra.mxu0 0.0
  %2045 = vmatprep.subr.mxu0 0.0
  %2046 = vmatpush1.msra.mxu0 0.0
  %2047 = vmatprep.subr.mxu0 0.0
  %2048 = vmatpush1.msra.mxu0 0.0
  %2049 = vmatprep.subr.mxu0 0.0
  %2050 = vmatpush1.msra.mxu0 0.0
  %2051 = vmatprep.subr.mxu0 0.0
  %2052 = vmatpush1.msra.mxu0 0.0
  %2053 = vmatprep.subr.mxu0 0.0
  %2054 = vmatpush1.msra.mxu0 0.0
  %2055 = vmatprep.subr.mxu0 0.0
  %2056 = vmatpush1.msra.mxu0 0.0
  %2057 = vmatprep.subr.mxu0 0.0
  %2058 = vmatpush1.msra.mxu0 %v2022
  %2059 = vmatprep.subr.mxu0 0.0
  %2060 = vmatpush2.msra.mxu0 0.0
  %2061 = vmatprep.subr.mxu0 0.0
  %2062 = vmatpush2.msra.mxu0 0.0
  %2063 = vmatprep.subr.mxu0 0.0
  %2064 = vmatpush2.msra.mxu0 0.0
  %2065 = vmatprep.subr.mxu0 0.0
  %2066 = vmatpush2.msra.mxu0 0.0
  %2067 = vmatprep.subr.mxu0 0.0
  %2068 = vmatpush2.msra.mxu0 0.0
  %2069 = vmatprep.subr.mxu0 0.0
  %2070 = vmatpush2.msra.mxu0 0.0
  %2071 = vmatprep.subr.mxu0 0.0
  %2072 = vmatpush2.msra.mxu0 0.0
  %2073 = vmatprep.subr.mxu0 0.0
  %2074 = vmatpush2.msra.mxu0 0.0
  %2075 = vmatprep.subr.mxu0 0.0
  %2076 = vmatpush2.msra.mxu0 0.0
  %2077 = vmatprep.subr.mxu0 0.0
  %2078 = vmatpush2.msra.mxu0 0.0
  %2079 = vmatprep.subr.mxu0 0.0
  %2080 = vmatpush2.msra.mxu0 0.0
  %2081 = vmatprep.subr.mxu0 0.0
  %2082 = vmatpush2.msra.mxu0 0.0
  %2083 = vmatprep.subr.mxu0 0.0
  %2084 = vmatpush2.msra.mxu0 0.0
  %2085 = vmatprep.subr.mxu0 0.0
  %2086 = vmatpush2.msra.mxu0 0.0
  %2087 = vmatprep.subr.mxu0 0.0
  %2088 = vmatpush2.msra.mxu0 0.0
  %2089 = vmatprep.subr.mxu0 0.0
  %2090 = vmatpush2.msra.mxu0 0.0
  %2091 = vmatprep.mubr.f32.mxu0 0.0
  %2092 = vmatmul.mubr.f32.gmra.mxu0 %v2025
  %v2093 = vpop.f32.mrf.mxu0
  %v2094 = vadd.f32 0.0, %v2093
  %v2095 = vpop.f32.mrf.mxu0
  %2096 = vdwg.mxu0
  %2097 = vrot.lane.b32.xlu0 %v229, 108
  %v2098 = vpop.permute.xlu0 %2097
  %v2101 = vsel %vm28, %v1866, 0
  %2103 = vmatprep.subr.mxu0 0.0
  %2104 = vmatpush1.msra.mxu0 0.0
  %2105 = vmatprep.subr.mxu0 0.0
  %2106 = vmatpush1.msra.mxu0 0.0
  %2107 = vmatprep.subr.mxu0 0.0
  %2108 = vmatpush1.msra.mxu0 0.0
  %2109 = vmatprep.subr.mxu0 0.0
  %2110 = vmatpush1.msra.mxu0 0.0
  %2111 = vmatprep.subr.mxu0 0.0
  %2112 = vmatpush1.msra.mxu0 0.0
  %2113 = vmatprep.subr.mxu0 0.0
  %2114 = vmatpush1.msra.mxu0 0.0
  %2115 = vmatprep.subr.mxu0 0.0
  %2116 = vmatpush1.msra.mxu0 0.0
  %2117 = vmatprep.subr.mxu0 0.0
  %2118 = vmatpush1.msra.mxu0 0.0
  %2119 = vmatprep.subr.mxu0 0.0
  %2120 = vmatpush1.msra.mxu0 0.0
  %2121 = vmatprep.subr.mxu0 0.0
  %2122 = vmatpush1.msra.mxu0 0.0
  %2123 = vmatprep.subr.mxu0 0.0
  %2124 = vmatpush1.msra.mxu0 0.0
  %2125 = vmatprep.subr.mxu0 0.0
  %2126 = vmatpush1.msra.mxu0 0.0
  %2127 = vmatprep.subr.mxu0 0.0
  %2128 = vmatpush1.msra.mxu0 0.0
  %2129 = vmatprep.subr.mxu0 0.0
  %2130 = vmatpush1.msra.mxu0 0.0
  %2131 = vmatprep.subr.mxu0 0.0
  %2132 = vmatpush1.msra.mxu0 0.0
  %2133 = vmatprep.subr.mxu0 0.0
  %2134 = vmatpush1.msra.mxu0 %v2098
  %2135 = vmatprep.subr.mxu0 0.0
  %2136 = vmatpush2.msra.mxu0 0.0
  %2137 = vmatprep.subr.mxu0 0.0
  %2138 = vmatpush2.msra.mxu0 0.0
  %2139 = vmatprep.subr.mxu0 0.0
  %2140 = vmatpush2.msra.mxu0 0.0
  %2141 = vmatprep.subr.mxu0 0.0
  %2142 = vmatpush2.msra.mxu0 0.0
  %2143 = vmatprep.subr.mxu0 0.0
  %2144 = vmatpush2.msra.mxu0 0.0
  %2145 = vmatprep.subr.mxu0 0.0
  %2146 = vmatpush2.msra.mxu0 0.0
  %2147 = vmatprep.subr.mxu0 0.0
  %2148 = vmatpush2.msra.mxu0 0.0
  %2149 = vmatprep.subr.mxu0 0.0
  %2150 = vmatpush2.msra.mxu0 0.0
  %2151 = vmatprep.subr.mxu0 0.0
  %2152 = vmatpush2.msra.mxu0 0.0
  %2153 = vmatprep.subr.mxu0 0.0
  %2154 = vmatpush2.msra.mxu0 0.0
  %2155 = vmatprep.subr.mxu0 0.0
  %2156 = vmatpush2.msra.mxu0 0.0
  %2157 = vmatprep.subr.mxu0 0.0
  %2158 = vmatpush2.msra.mxu0 0.0
  %2159 = vmatprep.subr.mxu0 0.0
  %2160 = vmatpush2.msra.mxu0 0.0
  %2161 = vmatprep.subr.mxu0 0.0
  %2162 = vmatpush2.msra.mxu0 0.0
  %2163 = vmatprep.subr.mxu0 0.0
  %2164 = vmatpush2.msra.mxu0 0.0
  %2165 = vmatprep.subr.mxu0 0.0
  %2166 = vmatpush2.msra.mxu0 0.0
  %2167 = vmatprep.mubr.f32.mxu0 0.0
  %2168 = vmatmul.mubr.f32.gmra.mxu0 %v2101
  %v2169 = vpop.f32.mrf.mxu0
  %v2170 = vadd.f32 0.0, %v2169
  %v2171 = vpop.f32.mrf.mxu0
  %2172 = vdwg.mxu0
  %2173 = vrot.lane.b32.xlu0 %v234, 108
  %v2174 = vpop.permute.xlu0 %2173
  %v2177 = vsel %vm28, %v1867, 0
  %2179 = vmatprep.subr.mxu0 0.0
  %2180 = vmatpush1.msra.mxu0 0.0
  %2181 = vmatprep.subr.mxu0 0.0
  %2182 = vmatpush1.msra.mxu0 0.0
  %2183 = vmatprep.subr.mxu0 0.0
  %2184 = vmatpush1.msra.mxu0 0.0
  %2185 = vmatprep.subr.mxu0 0.0
  %2186 = vmatpush1.msra.mxu0 0.0
  %2187 = vmatprep.subr.mxu0 0.0
  %2188 = vmatpush1.msra.mxu0 0.0
  %2189 = vmatprep.subr.mxu0 0.0
  %2190 = vmatpush1.msra.mxu0 0.0
  %2191 = vmatprep.subr.mxu0 0.0
  %2192 = vmatpush1.msra.mxu0 0.0
  %2193 = vmatprep.subr.mxu0 0.0
  %2194 = vmatpush1.msra.mxu0 0.0
  %2195 = vmatprep.subr.mxu0 0.0
  %2196 = vmatpush1.msra.mxu0 0.0
  %2197 = vmatprep.subr.mxu0 0.0
  %2198 = vmatpush1.msra.mxu0 0.0
  %2199 = vmatprep.subr.mxu0 0.0
  %2200 = vmatpush1.msra.mxu0 0.0
  %2201 = vmatprep.subr.mxu0 0.0
  %2202 = vmatpush1.msra.mxu0 0.0
  %2203 = vmatprep.subr.mxu0 0.0
  %2204 = vmatpush1.msra.mxu0 0.0
  %2205 = vmatprep.subr.mxu0 0.0
  %2206 = vmatpush1.msra.mxu0 0.0
  %2207 = vmatprep.subr.mxu0 0.0
  %2208 = vmatpush1.msra.mxu0 0.0
  %2209 = vmatprep.subr.mxu0 0.0
  %2210 = vmatpush1.msra.mxu0 %v2174
  %2211 = vmatprep.subr.mxu0 0.0
  %2212 = vmatpush2.msra.mxu0 0.0
  %2213 = vmatprep.subr.mxu0 0.0
  %2214 = vmatpush2.msra.mxu0 0.0
  %2215 = vmatprep.subr.mxu0 0.0
  %2216 = vmatpush2.msra.mxu0 0.0
  %2217 = vmatprep.subr.mxu0 0.0
  %2218 = vmatpush2.msra.mxu0 0.0
  %2219 = vmatprep.subr.mxu0 0.0
  %2220 = vmatpush2.msra.mxu0 0.0
  %2221 = vmatprep.subr.mxu0 0.0
  %2222 = vmatpush2.msra.mxu0 0.0
  %2223 = vmatprep.subr.mxu0 0.0
  %2224 = vmatpush2.msra.mxu0 0.0
  %2225 = vmatprep.subr.mxu0 0.0
  %2226 = vmatpush2.msra.mxu0 0.0
  %2227 = vmatprep.subr.mxu0 0.0
  %2228 = vmatpush2.msra.mxu0 0.0
  %2229 = vmatprep.subr.mxu0 0.0
  %2230 = vmatpush2.msra.mxu0 0.0
  %2231 = vmatprep.subr.mxu0 0.0
  %2232 = vmatpush2.msra.mxu0 0.0
  %2233 = vmatprep.subr.mxu0 0.0
  %2234 = vmatpush2.msra.mxu0 0.0
  %2235 = vmatprep.subr.mxu0 0.0
  %2236 = vmatpush2.msra.mxu0 0.0
  %2237 = vmatprep.subr.mxu0 0.0
  %2238 = vmatpush2.msra.mxu0 0.0
  %2239 = vmatprep.subr.mxu0 0.0
  %2240 = vmatpush2.msra.mxu0 0.0
  %2241 = vmatprep.subr.mxu0 0.0
  %2242 = vmatpush2.msra.mxu0 0.0
  %2243 = vmatprep.mubr.f32.mxu0 0.0
  %2244 = vmatmul.mubr.f32.gmra.mxu0 %v2177
  %v2245 = vpop.f32.mrf.mxu0
  %v2246 = vadd.f32 0.0, %v2245
  %v2247 = vpop.f32.mrf.mxu0
  %2248 = vdwg.mxu0
  %2249 = vrot.lane.b32.xlu0 %v239, 108
  %v2250 = vpop.permute.xlu0 %2249
  %v2253 = vsel %vm28, %v1868, 0
  %2255 = vmatprep.subr.mxu0 0.0
  %2256 = vmatpush1.msra.mxu0 0.0
  %2257 = vmatprep.subr.mxu0 0.0
  %2258 = vmatpush1.msra.mxu0 0.0
  %2259 = vmatprep.subr.mxu0 0.0
  %2260 = vmatpush1.msra.mxu0 0.0
  %2261 = vmatprep.subr.mxu0 0.0
  %2262 = vmatpush1.msra.mxu0 0.0
  %2263 = vmatprep.subr.mxu0 0.0
  %2264 = vmatpush1.msra.mxu0 0.0
  %2265 = vmatprep.subr.mxu0 0.0
  %2266 = vmatpush1.msra.mxu0 0.0
  %2267 = vmatprep.subr.mxu0 0.0
  %2268 = vmatpush1.msra.mxu0 0.0
  %2269 = vmatprep.subr.mxu0 0.0
  %2270 = vmatpush1.msra.mxu0 0.0
  %2271 = vmatprep.subr.mxu0 0.0
  %2272 = vmatpush1.msra.mxu0 0.0
  %2273 = vmatprep.subr.mxu0 0.0
  %2274 = vmatpush1.msra.mxu0 0.0
  %2275 = vmatprep.subr.mxu0 0.0
  %2276 = vmatpush1.msra.mxu0 0.0
  %2277 = vmatprep.subr.mxu0 0.0
  %2278 = vmatpush1.msra.mxu0 0.0
  %2279 = vmatprep.subr.mxu0 0.0
  %2280 = vmatpush1.msra.mxu0 0.0
  %2281 = vmatprep.subr.mxu0 0.0
  %2282 = vmatpush1.msra.mxu0 0.0
  %2283 = vmatprep.subr.mxu0 0.0
  %2284 = vmatpush1.msra.mxu0 0.0
  %2285 = vmatprep.subr.mxu0 0.0
  %2286 = vmatpush1.msra.mxu0 %v2250
  %2287 = vmatprep.subr.mxu0 0.0
  %2288 = vmatpush2.msra.mxu0 0.0
  %2289 = vmatprep.subr.mxu0 0.0
  %2290 = vmatpush2.msra.mxu0 0.0
  %2291 = vmatprep.subr.mxu0 0.0
  %2292 = vmatpush2.msra.mxu0 0.0
  %2293 = vmatprep.subr.mxu0 0.0
  %2294 = vmatpush2.msra.mxu0 0.0
  %2295 = vmatprep.subr.mxu0 0.0
  %2296 = vmatpush2.msra.mxu0 0.0
  %2297 = vmatprep.subr.mxu0 0.0
  %2298 = vmatpush2.msra.mxu0 0.0
  %2299 = vmatprep.subr.mxu0 0.0
  %2300 = vmatpush2.msra.mxu0 0.0
  %2301 = vmatprep.subr.mxu0 0.0
  %2302 = vmatpush2.msra.mxu0 0.0
  %2303 = vmatprep.subr.mxu0 0.0
  %2304 = vmatpush2.msra.mxu0 0.0
  %2305 = vmatprep.subr.mxu0 0.0
  %2306 = vmatpush2.msra.mxu0 0.0
  %2307 = vmatprep.subr.mxu0 0.0
  %2308 = vmatpush2.msra.mxu0 0.0
  %2309 = vmatprep.subr.mxu0 0.0
  %2310 = vmatpush2.msra.mxu0 0.0
  %2311 = vmatprep.subr.mxu0 0.0
  %2312 = vmatpush2.msra.mxu0 0.0
  %2313 = vmatprep.subr.mxu0 0.0
  %2314 = vmatpush2.msra.mxu0 0.0
  %2315 = vmatprep.subr.mxu0 0.0
  %2316 = vmatpush2.msra.mxu0 0.0
  %2317 = vmatprep.subr.mxu0 0.0
  %2318 = vmatpush2.msra.mxu0 0.0
  %2319 = vmatprep.mubr.f32.mxu0 0.0
  %2320 = vmatmul.mubr.f32.gmra.mxu0 %v2253
  %v2321 = vpop.f32.mrf.mxu0
  %v2322 = vadd.f32 0.0, %v2321
  %v2323 = vpop.f32.mrf.mxu0
  %2324 = vdwg.mxu0
  %2331 = vrot.lane.b32.xlu0 %v1942, 4
  %v2332 = vpop.permute.xlu0 %2331
  %2333 = vrot.lane.b32.xlu0 %v2018, 4
  %v2334 = vpop.permute.xlu0 %2333
  %2335 = vrot.lane.b32.xlu0 %v2094, 4
  %v2336 = vpop.permute.xlu0 %2335
  %2337 = vrot.lane.b32.xlu0 %v2170, 4
  %v2338 = vpop.permute.xlu0 %2337
  %2339 = vrot.lane.b32.xlu0 %v2246, 4
  %v2340 = vpop.permute.xlu0 %2339
  %2341 = vrot.lane.b32.xlu0 %v2322, 4
  %v2342 = vpop.permute.xlu0 %2341
  %v2349 = vsel %vm245, %v898, %v2332
  %v2350 = vsel %vm245, %v974, %v2334
  %v2351 = vsel %vm245, %v1050, %v2336
  %v2352 = vsel %vm245, %v1126, %v2338
  %v2353 = vsel %vm245, %v1202, %v2340
  %v2354 = vsel %vm245, %v1278, %v2342
  %v2355 = vld [vmem:[%s1 + $0x20] sm:$0xff]
  %v2357 = vsel %vm28, %v2349, 0
  %v2360 = vsel %vm28, %v2350, 0
  %v2363 = vsel %vm28, %v2351, 0
  %v2366 = vsel %vm28, %v2352, 0
  %v2369 = vsel %vm28, %v2353, 0
  %v2372 = vsel %vm28, %v2354, 0
  %2374 = vmatprep.subr.mxu0 0.0
  %2375 = vmatpush1.msra.mxu0 0.0
  %2376 = vmatprep.subr.mxu0 0.0
  %2377 = vmatpush1.msra.mxu0 0.0
  %2378 = vmatprep.subr.mxu0 0.0
  %2379 = vmatpush1.msra.mxu0 0.0
  %2380 = vmatprep.subr.mxu0 0.0
  %2381 = vmatpush1.msra.mxu0 0.0
  %2382 = vmatprep.subr.mxu0 0.0
  %2383 = vmatpush1.msra.mxu0 0.0
  %2384 = vmatprep.subr.mxu0 0.0
  %2385 = vmatpush1.msra.mxu0 0.0
  %2386 = vmatprep.subr.mxu0 0.0
  %2387 = vmatpush1.msra.mxu0 0.0
  %2388 = vmatprep.subr.mxu0 0.0
  %2389 = vmatpush1.msra.mxu0 0.0
  %2390 = vmatprep.subr.mxu0 0.0
  %2391 = vmatpush1.msra.mxu0 0.0
  %2392 = vmatprep.subr.mxu0 0.0
  %2393 = vmatpush1.msra.mxu0 0.0
  %2394 = vmatprep.subr.mxu0 0.0
  %2395 = vmatpush1.msra.mxu0 0.0
  %2396 = vmatprep.subr.mxu0 0.0
  %2397 = vmatpush1.msra.mxu0 0.0
  %2398 = vmatprep.subr.mxu0 0.0
  %2399 = vmatpush1.msra.mxu0 0.0
  %2400 = vmatprep.subr.mxu0 0.0
  %2401 = vmatpush1.msra.mxu0 0.0
  %2402 = vmatprep.subr.mxu0 0.0
  %2403 = vmatpush1.msra.mxu0 0.0
  %2404 = vmatprep.subr.mxu0 0.0
  %2405 = vmatpush1.msra.mxu0 %v2355
  %2406 = vmatprep.subr.mxu0 0.0
  %2407 = vmatpush2.msra.mxu0 0.0
  %2408 = vmatprep.subr.mxu0 0.0
  %2409 = vmatpush2.msra.mxu0 0.0
  %2410 = vmatprep.subr.mxu0 0.0
  %2411 = vmatpush2.msra.mxu0 0.0
  %2412 = vmatprep.subr.mxu0 0.0
  %2413 = vmatpush2.msra.mxu0 0.0
  %2414 = vmatprep.subr.mxu0 0.0
  %2415 = vmatpush2.msra.mxu0 0.0
  %2416 = vmatprep.subr.mxu0 0.0
  %2417 = vmatpush2.msra.mxu0 0.0
  %2418 = vmatprep.subr.mxu0 0.0
  %2419 = vmatpush2.msra.mxu0 0.0
  %2420 = vmatprep.subr.mxu0 0.0
  %2421 = vmatpush2.msra.mxu0 0.0
  %2422 = vmatprep.subr.mxu0 0.0
  %2423 = vmatpush2.msra.mxu0 0.0
  %2424 = vmatprep.subr.mxu0 0.0
  %2425 = vmatpush2.msra.mxu0 0.0
  %2426 = vmatprep.subr.mxu0 0.0
  %2427 = vmatpush2.msra.mxu0 0.0
  %2428 = vmatprep.subr.mxu0 0.0
  %2429 = vmatpush2.msra.mxu0 0.0
  %2430 = vmatprep.subr.mxu0 0.0
  %2431 = vmatpush2.msra.mxu0 0.0
  %2432 = vmatprep.subr.mxu0 0.0
  %2433 = vmatpush2.msra.mxu0 0.0
  %2434 = vmatprep.subr.mxu0 0.0
  %2435 = vmatpush2.msra.mxu0 0.0
  %2436 = vmatprep.subr.mxu0 0.0
  %2437 = vmatpush2.msra.mxu0 0.0
  %2438 = vmatprep.mubr.f32.mxu0 0.0
  %2439 = vmatmul.mubr.f32.gmra.mxu0 %v2357
  %v2440 = vpop.f32.mrf.mxu0
  %v2441 = vadd.f32 0.0, %v2440
  %v2442 = vpop.f32.mrf.mxu0
  %2443 = vmatprep.mubr.f32.mxu0 0.0
  %2444 = vmatmul.mubr.f32.gmra.mxu0 %v2360
  %v2445 = vpop.f32.mrf.mxu0
  %v2446 = vadd.f32 0.0, %v2445
  %v2447 = vpop.f32.mrf.mxu0
  %2448 = vmatprep.mubr.f32.mxu0 0.0
  %2449 = vmatmul.mubr.f32.gmra.mxu0 %v2363
  %v2450 = vpop.f32.mrf.mxu0
  %v2451 = vadd.f32 0.0, %v2450
  %v2452 = vpop.f32.mrf.mxu0
  %2453 = vmatprep.mubr.f32.mxu0 0.0
  %2454 = vmatmul.mubr.f32.gmra.mxu0 %v2366
  %v2455 = vpop.f32.mrf.mxu0
  %v2456 = vadd.f32 0.0, %v2455
  %v2457 = vpop.f32.mrf.mxu0
  %2458 = vmatprep.mubr.f32.mxu0 0.0
  %2459 = vmatmul.mubr.f32.gmra.mxu0 %v2369
  %v2460 = vpop.f32.mrf.mxu0
  %v2461 = vadd.f32 0.0, %v2460
  %v2462 = vpop.f32.mrf.mxu0
  %2463 = vmatprep.mubr.f32.mxu0 0.0
  %2464 = vmatmul.mubr.f32.gmra.mxu0 %v2372
  %v2465 = vpop.f32.mrf.mxu0
  %v2466 = vadd.f32 0.0, %v2465
  %v2467 = vpop.f32.mrf.mxu0
  %2468 = vdwg.mxu0
  %v2469 = vadd.f32 %v2441, %v122
  %v2470 = vadd.f32 %v2446, %v123
  %v2471 = vadd.f32 %v2451, %v124
  %v2472 = vadd.f32 %v2456, %v125
  %v2473 = vadd.f32 %v2461, %v126
  %v2474 = vadd.f32 %v2466, %v127
  %v2475 = vld [vmem:[%s1 + $0x28] sm:$0x1]
  %v2476 = vld [vmem:[%s1 + $0x30] sm:$0x1]
  %v2477 = vsel %vm28, %v2469, 0.0
  %2478 = vadd.xlane.f32.xlu0 %v2477
  %v2479 = vpop.xlane.xlu0 %2478
  %v2480 = vsel %vm28, %v2470, 0.0
  %2481 = vadd.xlane.f32.xlu0 %v2480
  %v2482 = vpop.xlane.xlu0 %2481
  %v2483 = vsel %vm28, %v2471, 0.0
  %2484 = vadd.xlane.f32.xlu0 %v2483
  %v2485 = vpop.xlane.xlu0 %2484
  %v2486 = vsel %vm28, %v2472, 0.0
  %2487 = vadd.xlane.f32.xlu0 %v2486
  %v2488 = vpop.xlane.xlu0 %2487
  %v2489 = vsel %vm28, %v2473, 0.0
  %2490 = vadd.xlane.f32.xlu0 %v2489
  %v2491 = vpop.xlane.xlu0 %2490
  %v2492 = vsel %vm28, %v2474, 0.0
  %2493 = vadd.xlane.f32.xlu0 %v2492
  %v2494 = vpop.xlane.xlu0 %2493
  %v2495 = vmul.f32 %v2479, %v47
  %v2496 = vmul.f32 %v2482, %v47
  %v2497 = vmul.f32 %v2485, %v47
  %v2498 = vmul.f32 %v2488, %v47
  %v2499 = vmul.f32 %v2491, %v47
  %v2500 = vmul.f32 %v2494, %v47
  %v2501 = vsub.f32 %v2469, %v2495
  %v2502 = vsub.f32 %v2470, %v2496
  %v2503 = vsub.f32 %v2471, %v2497
  %v2504 = vsub.f32 %v2472, %v2498
  %v2505 = vsub.f32 %v2473, %v2499
  %v2506 = vsub.f32 %v2474, %v2500
  %v2507 = vmul.f32 %v2501, %v2501
  %v2508 = vmul.f32 %v2502, %v2502
  %v2509 = vmul.f32 %v2503, %v2503
  %v2510 = vmul.f32 %v2504, %v2504
  %v2511 = vmul.f32 %v2505, %v2505
  %v2512 = vmul.f32 %v2506, %v2506
  %v2513 = vsel %vm28, %v2507, 0.0
  %2514 = vadd.xlane.f32.xlu0 %v2513
  %v2515 = vpop.xlane.xlu0 %2514
  %v2516 = vsel %vm28, %v2508, 0.0
  %2517 = vadd.xlane.f32.xlu0 %v2516
  %v2518 = vpop.xlane.xlu0 %2517
  %v2519 = vsel %vm28, %v2509, 0.0
  %2520 = vadd.xlane.f32.xlu0 %v2519
  %v2521 = vpop.xlane.xlu0 %2520
  %v2522 = vsel %vm28, %v2510, 0.0
  %2523 = vadd.xlane.f32.xlu0 %v2522
  %v2524 = vpop.xlane.xlu0 %2523
  %v2525 = vsel %vm28, %v2511, 0.0
  %2526 = vadd.xlane.f32.xlu0 %v2525
  %v2527 = vpop.xlane.xlu0 %2526
  %v2528 = vsel %vm28, %v2512, 0.0
  %2529 = vadd.xlane.f32.xlu0 %v2528
  %v2530 = vpop.xlane.xlu0 %2529
  %v2531 = vmul.f32 %v2515, %v47
  %v2532 = vmul.f32 %v2518, %v47
  %v2533 = vmul.f32 %v2521, %v47
  %v2534 = vmul.f32 %v2524, %v47
  %v2535 = vmul.f32 %v2527, %v47
  %v2536 = vmul.f32 %v2530, %v47
  %v2537 = vadd.f32 %v2531, 1e-05
  %v2538 = vadd.f32 %v2532, 1e-05
  %v2539 = vadd.f32 %v2533, 1e-05
  %v2540 = vadd.f32 %v2534, 1e-05
  %v2541 = vadd.f32 %v2535, 1e-05
  %v2542 = vadd.f32 %v2536, 1e-05
  %v2543 = vrsqrt.pop %v2537
  %v2544 = vrsqrt.pop %v2538
  %v2545 = vrsqrt.pop %v2539
  %v2546 = vrsqrt.pop %v2540
  %v2547 = vrsqrt.pop %v2541
  %v2548 = vrsqrt.pop %v2542
  %v2549 = vmul.f32 %v2501, %v2543
  %v2550 = vmul.f32 %v2502, %v2544
  %v2551 = vmul.f32 %v2503, %v2545
  %v2552 = vmul.f32 %v2504, %v2546
  %v2553 = vmul.f32 %v2505, %v2547
  %v2554 = vmul.f32 %v2506, %v2548
  %v2555 = vlaneseq
  %v2556 = vshrl.u32 %v2555, 7
  %v2557 = vsub.s32 0, %v2556
  %v2558 = vrot.slane %v2475, %v2557
  %v2559 = vmul.f32 %v2549, %v2558
  %v2560 = vmul.f32 %v2550, %v2558
  %v2561 = vmul.f32 %v2551, %v2558
  %v2562 = vmul.f32 %v2552, %v2558
  %v2563 = vmul.f32 %v2553, %v2558
  %v2564 = vmul.f32 %v2554, %v2558
  %v2565 = vlaneseq
  %v2566 = vshrl.u32 %v2565, 7
  %v2567 = vsub.s32 0, %v2566
  %v2568 = vrot.slane %v2476, %v2567
  %v2569 = vadd.f32 %v2559, %v2568
  %v2570 = vadd.f32 %v2560, %v2568
  %v2571 = vadd.f32 %v2561, %v2568
  %v2572 = vadd.f32 %v2562, %v2568
  %v2573 = vadd.f32 %v2563, %v2568
  %v2574 = vadd.f32 %v2564, %v2568
  %2578 = vrot.lane.b32.xlu0 %v2572, 8
  %v2579 = vpop.permute.xlu0 %2578
  %2580 = vrot.lane.b32.xlu0 %v2573, 8
  %v2581 = vpop.permute.xlu0 %2580
  %2582 = vrot.lane.b32.xlu0 %v2574, 8
  %v2583 = vpop.permute.xlu0 %2582
  %v2587 = vsel %vm28, %v2569, %v2579
  %v2588 = vsel %vm28, %v2570, %v2581
  %v2589 = vsel %vm28, %v2571, %v2583
  %2590 = vxpose.xlu0.b32.start [1/16] %v2587, 128
  %2591 = vxpose.xlu0.b32.cont [2/16] %v2588, 128
  %2592 = vxpose.xlu0.b32.cont [3/16] %v2589, 128
  %2593 = vxpose.xlu0.b32.cont [4/16] 0.0, 128
  %2594 = vxpose.xlu0.b32.cont [5/16] 0.0, 128
  %2595 = vxpose.xlu0.b32.cont [6/16] 0.0, 128
  %2596 = vxpose.xlu0.b32.cont [7/16] 0.0, 128
  %2597 = vxpose.xlu0.b32.cont [8/16] 0.0, 128
  %2598 = vxpose.xlu0.b32.cont [9/16] 0.0, 128
  %2599 = vxpose.xlu0.b32.cont [10/16] 0.0, 128
  %2600 = vxpose.xlu0.b32.cont [11/16] 0.0, 128
  %2601 = vxpose.xlu0.b32.cont [12/16] 0.0, 128
  %2602 = vxpose.xlu0.b32.cont [13/16] 0.0, 128
  %2603 = vxpose.xlu0.b32.cont [14/16] 0.0, 128
  %2604 = vxpose.xlu0.b32.cont [15/16] 0.0, 128
  %2605 = vxpose.xlu0.b32.end [16/16] 0.0, 128
  %v2606 = vpop.trf.xlu0
  %v2607 = vpop.trf.xlu0
  %v2608 = vpop.trf.xlu0
  %v2609 = vpop.trf.xlu0
  %v2610 = vpop.trf.xlu0
  %v2611 = vpop.trf.xlu0
  %v2612 = vpop.trf.xlu0
  %v2613 = vpop.trf.xlu0
  %v2614 = vpop.trf.xlu0
  %v2615 = vpop.trf.xlu0
  %v2616 = vpop.trf.xlu0
  %v2617 = vpop.trf.xlu0
  %v2618 = vpop.trf.xlu0
  %v2619 = vpop.trf.xlu0
  %v2620 = vpop.trf.xlu0
  %v2621 = vpop.trf.xlu0
  %v2622 = vld [vmem:[%s1 + $0x38] sm:$0xff]
  %v2623 = vld [vmem:[%s1 + $0x40] sm:$0xff]
  %v2624 = vld [vmem:[%s1 + $0x48] sm:$0xff]
  %v2625 = vld [vmem:[%s1 + $0x50] sm:$0x1]
  %v2626 = vlaneseq
  %v2627 = vshrl.u32 %v2626, 7
  %v2628 = vsub.s32 0, %v2627
  %v2629 = vrot.slane %v2625, %v2628
  %vm2630 = vcmask 195584
  %v2632 = vsel %vm2630, %v2606, 0
  %v2635 = vsel %vm2630, %v2607, 0
  %2637 = vmatprep.subr.mxu0 0.0
  %2638 = vmatpush1.msra.mxu0 0.0
  %2639 = vmatprep.subr.mxu0 0.0
  %2640 = vmatpush1.msra.mxu0 0.0
  %2641 = vmatprep.subr.mxu0 0.0
  %2642 = vmatpush1.msra.mxu0 0.0
  %2643 = vmatprep.subr.mxu0 0.0
  %2644 = vmatpush1.msra.mxu0 0.0
  %2645 = vmatprep.subr.mxu0 0.0
  %2646 = vmatpush1.msra.mxu0 0.0
  %2647 = vmatprep.subr.mxu0 0.0
  %2648 = vmatpush1.msra.mxu0 0.0
  %2649 = vmatprep.subr.mxu0 0.0
  %2650 = vmatpush1.msra.mxu0 0.0
  %2651 = vmatprep.subr.mxu0 0.0
  %2652 = vmatpush1.msra.mxu0 0.0
  %2653 = vmatprep.subr.mxu0 0.0
  %2654 = vmatpush1.msra.mxu0 0.0
  %2655 = vmatprep.subr.mxu0 0.0
  %2656 = vmatpush1.msra.mxu0 0.0
  %2657 = vmatprep.subr.mxu0 0.0
  %2658 = vmatpush1.msra.mxu0 0.0
  %2659 = vmatprep.subr.mxu0 0.0
  %2660 = vmatpush1.msra.mxu0 0.0
  %2661 = vmatprep.subr.mxu0 0.0
  %2662 = vmatpush1.msra.mxu0 0.0
  %2663 = vmatprep.subr.mxu0 0.0
  %2664 = vmatpush1.msra.mxu0 %v2624
  %2665 = vmatprep.subr.mxu0 0.0
  %2666 = vmatpush1.msra.mxu0 %v2623
  %2667 = vmatprep.subr.mxu0 0.0
  %2668 = vmatpush1.msra.mxu0 %v2622
  %2669 = vmatprep.subr.mxu0 0.0
  %2670 = vmatpush2.msra.mxu0 0.0
  %2671 = vmatprep.subr.mxu0 0.0
  %2672 = vmatpush2.msra.mxu0 0.0
  %2673 = vmatprep.subr.mxu0 0.0
  %2674 = vmatpush2.msra.mxu0 0.0
  %2675 = vmatprep.subr.mxu0 0.0
  %2676 = vmatpush2.msra.mxu0 0.0
  %2677 = vmatprep.subr.mxu0 0.0
  %2678 = vmatpush2.msra.mxu0 0.0
  %2679 = vmatprep.subr.mxu0 0.0
  %2680 = vmatpush2.msra.mxu0 0.0
  %2681 = vmatprep.subr.mxu0 0.0
  %2682 = vmatpush2.msra.mxu0 0.0
  %2683 = vmatprep.subr.mxu0 0.0
  %2684 = vmatpush2.msra.mxu0 0.0
  %2685 = vmatprep.subr.mxu0 0.0
  %2686 = vmatpush2.msra.mxu0 0.0
  %2687 = vmatprep.subr.mxu0 0.0
  %2688 = vmatpush2.msra.mxu0 0.0
  %2689 = vmatprep.subr.mxu0 0.0
  %2690 = vmatpush2.msra.mxu0 0.0
  %2691 = vmatprep.subr.mxu0 0.0
  %2692 = vmatpush2.msra.mxu0 0.0
  %2693 = vmatprep.subr.mxu0 0.0
  %2694 = vmatpush2.msra.mxu0 0.0
  %2695 = vmatprep.subr.mxu0 0.0
  %2696 = vmatpush2.msra.mxu0 0.0
  %2697 = vmatprep.subr.mxu0 0.0
  %2698 = vmatpush2.msra.mxu0 0.0
  %2699 = vmatprep.subr.mxu0 0.0
  %2700 = vmatpush2.msra.mxu0 0.0
  %2701 = vmatprep.mubr.f32.mxu0 0.0
  %2702 = vmatmul.mubr.f32.gmra.mxu0 %v2632
  %v2703 = vpop.f32.mrf.mxu0
  %v2704 = vadd.f32 %v2629, %v2703
  %v2705 = vpop.f32.mrf.mxu0
  %2706 = vmatprep.mubr.f32.mxu0 0.0
  %2707 = vmatmul.mubr.f32.gmra.mxu0 %v2635
  %v2708 = vpop.f32.mrf.mxu0
  %v2709 = vadd.f32 %v2629, %v2708
  %v2710 = vpop.f32.mrf.mxu0
  %2711 = vdwg.mxu0
  %v2712 = vld [vmem:[%s1 + $0x58] sm:$0xff]
  %v2713 = vadd.f32 %v2704, %v2712
  %v2714 = vadd.f32 %v2709, %v2712
  %v2715 = vld [vmem:[%s1 + $0x60] sm:$0x1]
  %v2716 = vld [vmem:[%s1 + $0x68] sm:$0x1]
  %vm2717 = vcmask 130048
  %v2718 = vsel %vm2717, %v2713, 0.0
  %2719 = vadd.xlane.f32.xlu0 %v2718
  %v2720 = vpop.xlane.xlu0 %2719
  %v2721 = vsel %vm2717, %v2714, 0.0
  %2722 = vadd.xlane.f32.xlu0 %v2721
  %v2723 = vpop.xlane.xlu0 %2722
  %v2724 = vrcp.pop 16.0
  %v2725 = vmul.f32 %v2720, %v2724
  %v2726 = vmul.f32 %v2723, %v2724
  %v2727 = vsub.f32 %v2713, %v2725
  %v2728 = vsub.f32 %v2714, %v2726
  %v2729 = vmul.f32 %v2727, %v2727
  %v2730 = vmul.f32 %v2728, %v2728
  %v2731 = vsel %vm2717, %v2729, 0.0
  %2732 = vadd.xlane.f32.xlu0 %v2731
  %v2733 = vpop.xlane.xlu0 %2732
  %v2734 = vsel %vm2717, %v2730, 0.0
  %2735 = vadd.xlane.f32.xlu0 %v2734
  %v2736 = vpop.xlane.xlu0 %2735
  %v2737 = vmul.f32 %v2733, %v2724
  %v2738 = vmul.f32 %v2736, %v2724
  %v2739 = vadd.f32 %v2737, 1e-05
  %v2740 = vadd.f32 %v2738, 1e-05
  %v2741 = vrsqrt.pop %v2739
  %v2742 = vrsqrt.pop %v2740
  %v2743 = vmul.f32 %v2727, %v2741
  %v2744 = vmul.f32 %v2728, %v2742
  %v2745 = vlaneseq
  %v2746 = vshrl.u32 %v2745, 7
  %v2747 = vsub.s32 0, %v2746
  %v2748 = vrot.slane %v2715, %v2747
  %v2749 = vmul.f32 %v2743, %v2748
  %v2750 = vmul.f32 %v2744, %v2748
  %v2751 = vlaneseq
  %v2752 = vshrl.u32 %v2751, 7
  %v2753 = vsub.s32 0, %v2752
  %v2754 = vrot.slane %v2716, %v2753
  %v2755 = vadd.f32 %v2749, %v2754
  %v2756 = vadd.f32 %v2750, %v2754
  %v2757 = vld [vmem:[%s1 + $0x70] sm:$0xff]
  %v2758 = vld [vmem:[%s1 + $0x78] sm:$0xff]
  %v2759 = vld [vmem:[%s1 + $0x80] sm:$0x1]
  %v2760 = vlaneseq
  %v2761 = vshrl.u32 %v2760, 7
  %v2762 = vsub.s32 0, %v2761
  %v2763 = vrot.slane %v2759, %v2762
  %v2765 = vsel %vm2717, %v2755, 0
  %v2768 = vsel %vm2717, %v2756, 0
  %2770 = vmatprep.subr.mxu0 0.0
  %2771 = vmatpush1.msra.mxu0 0.0
  %2772 = vmatprep.subr.mxu0 0.0
  %2773 = vmatpush1.msra.mxu0 0.0
  %2774 = vmatprep.subr.mxu0 0.0
  %2775 = vmatpush1.msra.mxu0 0.0
  %2776 = vmatprep.subr.mxu0 0.0
  %2777 = vmatpush1.msra.mxu0 0.0
  %2778 = vmatprep.subr.mxu0 0.0
  %2779 = vmatpush1.msra.mxu0 0.0
  %2780 = vmatprep.subr.mxu0 0.0
  %2781 = vmatpush1.msra.mxu0 0.0
  %2782 = vmatprep.subr.mxu0 0.0
  %2783 = vmatpush1.msra.mxu0 0.0
  %2784 = vmatprep.subr.mxu0 0.0
  %2785 = vmatpush1.msra.mxu0 0.0
  %2786 = vmatprep.subr.mxu0 0.0
  %2787 = vmatpush1.msra.mxu0 0.0
  %2788 = vmatprep.subr.mxu0 0.0
  %2789 = vmatpush1.msra.mxu0 0.0
  %2790 = vmatprep.subr.mxu0 0.0
  %2791 = vmatpush1.msra.mxu0 0.0
  %2792 = vmatprep.subr.mxu0 0.0
  %2793 = vmatpush1.msra.mxu0 0.0
  %2794 = vmatprep.subr.mxu0 0.0
  %2795 = vmatpush1.msra.mxu0 0.0
  %2796 = vmatprep.subr.mxu0 0.0
  %2797 = vmatpush1.msra.mxu0 0.0
  %2798 = vmatprep.subr.mxu0 0.0
  %2799 = vmatpush1.msra.mxu0 %v2758
  %2800 = vmatprep.subr.mxu0 0.0
  %2801 = vmatpush1.msra.mxu0 %v2757
  %2802 = vmatprep.subr.mxu0 0.0
  %2803 = vmatpush2.msra.mxu0 0.0
  %2804 = vmatprep.subr.mxu0 0.0
  %2805 = vmatpush2.msra.mxu0 0.0
  %2806 = vmatprep.subr.mxu0 0.0
  %2807 = vmatpush2.msra.mxu0 0.0
  %2808 = vmatprep.subr.mxu0 0.0
  %2809 = vmatpush2.msra.mxu0 0.0
  %2810 = vmatprep.subr.mxu0 0.0
  %2811 = vmatpush2.msra.mxu0 0.0
  %2812 = vmatprep.subr.mxu0 0.0
  %2813 = vmatpush2.msra.mxu0 0.0
  %2814 = vmatprep.subr.mxu0 0.0
  %2815 = vmatpush2.msra.mxu0 0.0
  %2816 = vmatprep.subr.mxu0 0.0
  %2817 = vmatpush2.msra.mxu0 0.0
  %2818 = vmatprep.subr.mxu0 0.0
  %2819 = vmatpush2.msra.mxu0 0.0
  %2820 = vmatprep.subr.mxu0 0.0
  %2821 = vmatpush2.msra.mxu0 0.0
  %2822 = vmatprep.subr.mxu0 0.0
  %2823 = vmatpush2.msra.mxu0 0.0
  %2824 = vmatprep.subr.mxu0 0.0
  %2825 = vmatpush2.msra.mxu0 0.0
  %2826 = vmatprep.subr.mxu0 0.0
  %2827 = vmatpush2.msra.mxu0 0.0
  %2828 = vmatprep.subr.mxu0 0.0
  %2829 = vmatpush2.msra.mxu0 0.0
  %2830 = vmatprep.subr.mxu0 0.0
  %2831 = vmatpush2.msra.mxu0 0.0
  %2832 = vmatprep.subr.mxu0 0.0
  %2833 = vmatpush2.msra.mxu0 0.0
  %2834 = vmatprep.mubr.f32.mxu0 0.0
  %2835 = vmatmul.mubr.f32.gmra.mxu0 %v2765
  %v2836 = vpop.f32.mrf.mxu0
  %v2837 = vadd.f32 %v2763, %v2836
  %v2838 = vpop.f32.mrf.mxu0
  %2839 = vmatprep.mubr.f32.mxu0 0.0
  %2840 = vmatmul.mubr.f32.gmra.mxu0 %v2768
  %v2841 = vpop.f32.mrf.mxu0
  %v2842 = vadd.f32 %v2763, %v2841
  %v2843 = vpop.f32.mrf.mxu0
  %2844 = vdwg.mxu0
  %2847 = vrot.lane.b32.xlu0 %v2837, 112
  %v2848 = vpop.permute.xlu0 %2847
  %2849 = vrot.lane.b32.xlu0 %v2842, 112
  %v2850 = vpop.permute.xlu0 %2849
  %2853 = vrot.lane.b32.xlu0 %v2837, 96
  %v2854 = vpop.permute.xlu0 %2853
  %2855 = vrot.lane.b32.xlu0 %v2842, 96
  %v2856 = vpop.permute.xlu0 %2855
  %2859 = vrot.lane.b32.xlu0 %v2837, 80
  %v2860 = vpop.permute.xlu0 %2859
  %2861 = vrot.lane.b32.xlu0 %v2842, 80
  %v2862 = vpop.permute.xlu0 %2861
  %v2865 = vcombine.high %v2837, %v2837
  %v2867 = vunpack.c.l.s4 1966171168
  %v2868 = vunpack.c.0.s8 %v2867
  %v2869 = vlaneseq
  %v2870 = vshrl.u32 %v2869, 7
  %v2871 = vsub.s32 %v2868, %v2870
  %v2872 = vrot.slane %v2837, %v2871
  %v2874 = vunpack.c.l.s4 1966171168
  %v2875 = vunpack.c.0.s8 %v2874
  %v2876 = vlaneseq
  %v2877 = vshrl.u32 %v2876, 7
  %v2878 = vsub.s32 %v2875, %v2877
  %v2879 = vrot.slane %v2865, %v2878
  %v2880 = vcombine.high %v2872, %v2872
  %v2881 = vcombine.high %v2879, %v2879
  %v2883 = vunpack.c.l.s4 1966171168
  %v2884 = vunpack.c.0.s8 %v2883
  %v2885 = vlaneseq
  %v2886 = vshrl.u32 %v2885, 7
  %v2887 = vsub.s32 %v2884, %v2886
  %v2888 = vrot.slane %v2872, %v2887
  %v2890 = vunpack.c.l.s4 1966171168
  %v2891 = vunpack.c.0.s8 %v2890
  %v2892 = vlaneseq
  %v2893 = vshrl.u32 %v2892, 7
  %v2894 = vsub.s32 %v2891, %v2893
  %v2895 = vrot.slane %v2879, %v2894
  %v2897 = vunpack.c.l.s4 1966171168
  %v2898 = vunpack.c.0.s8 %v2897
  %v2899 = vlaneseq
  %v2900 = vshrl.u32 %v2899, 7
  %v2901 = vsub.s32 %v2898, %v2900
  %v2902 = vrot.slane %v2880, %v2901
  %v2904 = vunpack.c.l.s4 1966171168
  %v2905 = vunpack.c.0.s8 %v2904
  %v2906 = vlaneseq
  %v2907 = vshrl.u32 %v2906, 7
  %v2908 = vsub.s32 %v2905, %v2907
  %v2909 = vrot.slane %v2881, %v2908
  %v2910 = vcombine.high %v2888, %v2888
  %v2911 = vcombine.high %v2895, %v2895
  %v2912 = vcombine.high %v2902, %v2902
  %v2913 = vcombine.high %v2909, %v2909
  %v2914 = vcombine.high %v2842, %v2842
  %v2916 = vunpack.c.l.s4 1966171168
  %v2917 = vunpack.c.0.s8 %v2916
  %v2918 = vlaneseq
  %v2919 = vshrl.u32 %v2918, 7
  %v2920 = vsub.s32 %v2917, %v2919
  %v2921 = vrot.slane %v2842, %v2920
  %v2923 = vunpack.c.l.s4 1966171168
  %v2924 = vunpack.c.0.s8 %v2923
  %v2925 = vlaneseq
  %v2926 = vshrl.u32 %v2925, 7
  %v2927 = vsub.s32 %v2924, %v2926
  %v2928 = vrot.slane %v2914, %v2927
  %v2929 = vcombine.high %v2921, %v2921
  %v2930 = vcombine.high %v2928, %v2928
  %v2932 = vunpack.c.l.s4 1966171168
  %v2933 = vunpack.c.0.s8 %v2932
  %v2934 = vlaneseq
  %v2935 = vshrl.u32 %v2934, 7
  %v2936 = vsub.s32 %v2933, %v2935
  %v2937 = vrot.slane %v2921, %v2936
  %v2939 = vunpack.c.l.s4 1966171168
  %v2940 = vunpack.c.0.s8 %v2939
  %v2941 = vlaneseq
  %v2942 = vshrl.u32 %v2941, 7
  %v2943 = vsub.s32 %v2940, %v2942
  %v2944 = vrot.slane %v2928, %v2943
  %v2946 = vunpack.c.l.s4 1966171168
  %v2947 = vunpack.c.0.s8 %v2946
  %v2948 = vlaneseq
  %v2949 = vshrl.u32 %v2948, 7
  %v2950 = vsub.s32 %v2947, %v2949
  %v2951 = vrot.slane %v2929, %v2950
  %v2953 = vunpack.c.l.s4 1966171168
  %v2954 = vunpack.c.0.s8 %v2953
  %v2955 = vlaneseq
  %v2956 = vshrl.u32 %v2955, 7
  %v2957 = vsub.s32 %v2954, %v2956
  %v2958 = vrot.slane %v2930, %v2957
  %v2959 = vcombine.high %v2937, %v2937
  %v2960 = vcombine.high %v2944, %v2944
  %v2961 = vcombine.high %v2951, %v2951
  %v2962 = vcombine.high %v2958, %v2958
  %v2963 = vcombine.high %v2848, %v2848
  %v2965 = vunpack.c.l.s4 1966171168
  %v2966 = vunpack.c.0.s8 %v2965
  %v2967 = vlaneseq
  %v2968 = vshrl.u32 %v2967, 7
  %v2969 = vsub.s32 %v2966, %v2968
  %v2970 = vrot.slane %v2848, %v2969
  %v2972 = vunpack.c.l.s4 1966171168
  %v2973 = vunpack.c.0.s8 %v2972
  %v2974 = vlaneseq
  %v2975 = vshrl.u32 %v2974, 7
  %v2976 = vsub.s32 %v2973, %v2975
  %v2977 = vrot.slane %v2963, %v2976
  %v2978 = vcombine.high %v2970, %v2970
  %v2979 = vcombine.high %v2977, %v2977
  %v2981 = vunpack.c.l.s4 1966171168
  %v2982 = vunpack.c.0.s8 %v2981
  %v2983 = vlaneseq
  %v2984 = vshrl.u32 %v2983, 7
  %v2985 = vsub.s32 %v2982, %v2984
  %v2986 = vrot.slane %v2970, %v2985
  %v2988 = vunpack.c.l.s4 1966171168
  %v2989 = vunpack.c.0.s8 %v2988
  %v2990 = vlaneseq
  %v2991 = vshrl.u32 %v2990, 7
  %v2992 = vsub.s32 %v2989, %v2991
  %v2993 = vrot.slane %v2977, %v2992
  %v2995 = vunpack.c.l.s4 1966171168
  %v2996 = vunpack.c.0.s8 %v2995
  %v2997 = vlaneseq
  %v2998 = vshrl.u32 %v2997, 7
  %v2999 = vsub.s32 %v2996, %v2998
  %v3000 = vrot.slane %v2978, %v2999
  %v3002 = vunpack.c.l.s4 1966171168
  %v3003 = vunpack.c.0.s8 %v3002
  %v3004 = vlaneseq
  %v3005 = vshrl.u32 %v3004, 7
  %v3006 = vsub.s32 %v3003, %v3005
  %v3007 = vrot.slane %v2979, %v3006
  %v3008 = vcombine.high %v2986, %v2986
  %v3009 = vcombine.high %v2993, %v2993
  %v3010 = vcombine.high %v3000, %v3000
  %v3011 = vcombine.high %v3007, %v3007
  %v3012 = vcombine.high %v2850, %v2850
  %v3014 = vunpack.c.l.s4 1966171168
  %v3015 = vunpack.c.0.s8 %v3014
  %v3016 = vlaneseq
  %v3017 = vshrl.u32 %v3016, 7
  %v3018 = vsub.s32 %v3015, %v3017
  %v3019 = vrot.slane %v2850, %v3018
  %v3021 = vunpack.c.l.s4 1966171168
  %v3022 = vunpack.c.0.s8 %v3021
  %v3023 = vlaneseq
  %v3024 = vshrl.u32 %v3023, 7
  %v3025 = vsub.s32 %v3022, %v3024
  %v3026 = vrot.slane %v3012, %v3025
  %v3027 = vcombine.high %v3019, %v3019
  %v3028 = vcombine.high %v3026, %v3026
  %v3030 = vunpack.c.l.s4 1966171168
  %v3031 = vunpack.c.0.s8 %v3030
  %v3032 = vlaneseq
  %v3033 = vshrl.u32 %v3032, 7
  %v3034 = vsub.s32 %v3031, %v3033
  %v3035 = vrot.slane %v3019, %v3034
  %v3037 = vunpack.c.l.s4 1966171168
  %v3038 = vunpack.c.0.s8 %v3037
  %v3039 = vlaneseq
  %v3040 = vshrl.u32 %v3039, 7
  %v3041 = vsub.s32 %v3038, %v3040
  %v3042 = vrot.slane %v3026, %v3041
  %v3044 = vunpack.c.l.s4 1966171168
  %v3045 = vunpack.c.0.s8 %v3044
  %v3046 = vlaneseq
  %v3047 = vshrl.u32 %v3046, 7
  %v3048 = vsub.s32 %v3045, %v3047
  %v3049 = vrot.slane %v3027, %v3048
  %v3051 = vunpack.c.l.s4 1966171168
  %v3052 = vunpack.c.0.s8 %v3051
  %v3053 = vlaneseq
  %v3054 = vshrl.u32 %v3053, 7
  %v3055 = vsub.s32 %v3052, %v3054
  %v3056 = vrot.slane %v3028, %v3055
  %v3057 = vcombine.high %v3035, %v3035
  %v3058 = vcombine.high %v3042, %v3042
  %v3059 = vcombine.high %v3049, %v3049
  %v3060 = vcombine.high %v3056, %v3056
  %v3061 = vcombine.high %v2854, %v2854
  %v3063 = vunpack.c.l.s4 1966171168
  %v3064 = vunpack.c.0.s8 %v3063
  %v3065 = vlaneseq
  %v3066 = vshrl.u32 %v3065, 7
  %v3067 = vsub.s32 %v3064, %v3066
  %v3068 = vrot.slane %v2854, %v3067
  %v3070 = vunpack.c.l.s4 1966171168
  %v3071 = vunpack.c.0.s8 %v3070
  %v3072 = vlaneseq
  %v3073 = vshrl.u32 %v3072, 7
  %v3074 = vsub.s32 %v3071, %v3073
  %v3075 = vrot.slane %v3061, %v3074
  %v3076 = vcombine.high %v3068, %v3068
  %v3077 = vcombine.high %v3075, %v3075
  %v3079 = vunpack.c.l.s4 1966171168
  %v3080 = vunpack.c.0.s8 %v3079
  %v3081 = vlaneseq
  %v3082 = vshrl.u32 %v3081, 7
  %v3083 = vsub.s32 %v3080, %v3082
  %v3084 = vrot.slane %v3068, %v3083
  %v3086 = vunpack.c.l.s4 1966171168
  %v3087 = vunpack.c.0.s8 %v3086
  %v3088 = vlaneseq
  %v3089 = vshrl.u32 %v3088, 7
  %v3090 = vsub.s32 %v3087, %v3089
  %v3091 = vrot.slane %v3075, %v3090
  %v3093 = vunpack.c.l.s4 1966171168
  %v3094 = vunpack.c.0.s8 %v3093
  %v3095 = vlaneseq
  %v3096 = vshrl.u32 %v3095, 7
  %v3097 = vsub.s32 %v3094, %v3096
  %v3098 = vrot.slane %v3076, %v3097
  %v3100 = vunpack.c.l.s4 1966171168
  %v3101 = vunpack.c.0.s8 %v3100
  %v3102 = vlaneseq
  %v3103 = vshrl.u32 %v3102, 7
  %v3104 = vsub.s32 %v3101, %v3103
  %v3105 = vrot.slane %v3077, %v3104
  %v3106 = vcombine.high %v3084, %v3084
  %v3107 = vcombine.high %v3091, %v3091
  %v3108 = vcombine.high %v3098, %v3098
  %v3109 = vcombine.high %v3105, %v3105
  %v3110 = vcombine.high %v2856, %v2856
  %v3112 = vunpack.c.l.s4 1966171168
  %v3113 = vunpack.c.0.s8 %v3112
  %v3114 = vlaneseq
  %v3115 = vshrl.u32 %v3114, 7
  %v3116 = vsub.s32 %v3113, %v3115
  %v3117 = vrot.slane %v2856, %v3116
  %v3119 = vunpack.c.l.s4 1966171168
  %v3120 = vunpack.c.0.s8 %v3119
  %v3121 = vlaneseq
  %v3122 = vshrl.u32 %v3121, 7
  %v3123 = vsub.s32 %v3120, %v3122
  %v3124 = vrot.slane %v3110, %v3123
  %v3125 = vcombine.high %v3117, %v3117
  %v3126 = vcombine.high %v3124, %v3124
  %v3128 = vunpack.c.l.s4 1966171168
  %v3129 = vunpack.c.0.s8 %v3128
  %v3130 = vlaneseq
  %v3131 = vshrl.u32 %v3130, 7
  %v3132 = vsub.s32 %v3129, %v3131
  %v3133 = vrot.slane %v3117, %v3132
  %v3135 = vunpack.c.l.s4 1966171168
  %v3136 = vunpack.c.0.s8 %v3135
  %v3137 = vlaneseq
  %v3138 = vshrl.u32 %v3137, 7
  %v3139 = vsub.s32 %v3136, %v3138
  %v3140 = vrot.slane %v3124, %v3139
  %v3142 = vunpack.c.l.s4 1966171168
  %v3143 = vunpack.c.0.s8 %v3142
  %v3144 = vlaneseq
  %v3145 = vshrl.u32 %v3144, 7
  %v3146 = vsub.s32 %v3143, %v3145
  %v3147 = vrot.slane %v3125, %v3146
  %v3149 = vunpack.c.l.s4 1966171168
  %v3150 = vunpack.c.0.s8 %v3149
  %v3151 = vlaneseq
  %v3152 = vshrl.u32 %v3151, 7
  %v3153 = vsub.s32 %v3150, %v3152
  %v3154 = vrot.slane %v3126, %v3153
  %v3155 = vcombine.high %v3133, %v3133
  %v3156 = vcombine.high %v3140, %v3140
  %v3157 = vcombine.high %v3147, %v3147
  %v3158 = vcombine.high %v3154, %v3154
  %v3159 = vcombine.high %v2860, %v2860
  %v3161 = vunpack.c.l.s4 1966171168
  %v3162 = vunpack.c.0.s8 %v3161
  %v3163 = vlaneseq
  %v3164 = vshrl.u32 %v3163, 7
  %v3165 = vsub.s32 %v3162, %v3164
  %v3166 = vrot.slane %v2860, %v3165
  %v3168 = vunpack.c.l.s4 1966171168
  %v3169 = vunpack.c.0.s8 %v3168
  %v3170 = vlaneseq
  %v3171 = vshrl.u32 %v3170, 7
  %v3172 = vsub.s32 %v3169, %v3171
  %v3173 = vrot.slane %v3159, %v3172
  %v3174 = vcombine.high %v3166, %v3166
  %v3175 = vcombine.high %v3173, %v3173
  %v3177 = vunpack.c.l.s4 1966171168
  %v3178 = vunpack.c.0.s8 %v3177
  %v3179 = vlaneseq
  %v3180 = vshrl.u32 %v3179, 7
  %v3181 = vsub.s32 %v3178, %v3180
  %v3182 = vrot.slane %v3166, %v3181
  %v3184 = vunpack.c.l.s4 1966171168
  %v3185 = vunpack.c.0.s8 %v3184
  %v3186 = vlaneseq
  %v3187 = vshrl.u32 %v3186, 7
  %v3188 = vsub.s32 %v3185, %v3187
  %v3189 = vrot.slane %v3173, %v3188
  %v3191 = vunpack.c.l.s4 1966171168
  %v3192 = vunpack.c.0.s8 %v3191
  %v3193 = vlaneseq
  %v3194 = vshrl.u32 %v3193, 7
  %v3195 = vsub.s32 %v3192, %v3194
  %v3196 = vrot.slane %v3174, %v3195
  %v3198 = vunpack.c.l.s4 1966171168
  %v3199 = vunpack.c.0.s8 %v3198
  %v3200 = vlaneseq
  %v3201 = vshrl.u32 %v3200, 7
  %v3202 = vsub.s32 %v3199, %v3201
  %v3203 = vrot.slane %v3175, %v3202
  %v3204 = vcombine.high %v3182, %v3182
  %v3205 = vcombine.high %v3189, %v3189
  %v3206 = vcombine.high %v3196, %v3196
  %v3207 = vcombine.high %v3203, %v3203
  %v3208 = vcombine.high %v2862, %v2862
  %v3210 = vunpack.c.l.s4 1966171168
  %v3211 = vunpack.c.0.s8 %v3210
  %v3212 = vlaneseq
  %v3213 = vshrl.u32 %v3212, 7
  %v3214 = vsub.s32 %v3211, %v3213
  %v3215 = vrot.slane %v2862, %v3214
  %v3217 = vunpack.c.l.s4 1966171168
  %v3218 = vunpack.c.0.s8 %v3217
  %v3219 = vlaneseq
  %v3220 = vshrl.u32 %v3219, 7
  %v3221 = vsub.s32 %v3218, %v3220
  %v3222 = vrot.slane %v3208, %v3221
  %v3223 = vcombine.high %v3215, %v3215
  %v3224 = vcombine.high %v3222, %v3222
  %v3226 = vunpack.c.l.s4 1966171168
  %v3227 = vunpack.c.0.s8 %v3226
  %v3228 = vlaneseq
  %v3229 = vshrl.u32 %v3228, 7
  %v3230 = vsub.s32 %v3227, %v3229
  %v3231 = vrot.slane %v3215, %v3230
  %v3233 = vunpack.c.l.s4 1966171168
  %v3234 = vunpack.c.0.s8 %v3233
  %v3235 = vlaneseq
  %v3236 = vshrl.u32 %v3235, 7
  %v3237 = vsub.s32 %v3234, %v3236
  %v3238 = vrot.slane %v3222, %v3237
  %v3240 = vunpack.c.l.s4 1966171168
  %v3241 = vunpack.c.0.s8 %v3240
  %v3242 = vlaneseq
  %v3243 = vshrl.u32 %v3242, 7
  %v3244 = vsub.s32 %v3241, %v3243
  %v3245 = vrot.slane %v3223, %v3244
  %v3247 = vunpack.c.l.s4 1966171168
  %v3248 = vunpack.c.0.s8 %v3247
  %v3249 = vlaneseq
  %v3250 = vshrl.u32 %v3249, 7
  %v3251 = vsub.s32 %v3248, %v3250
  %v3252 = vrot.slane %v3224, %v3251
  %v3253 = vcombine.high %v3231, %v3231
  %v3254 = vcombine.high %v3238, %v3238
  %v3255 = vcombine.high %v3245, %v3245
  %v3256 = vcombine.high %v3252, %v3252
  %v3257 = vlaneseq
  %v3258 = vshrl.u32 %v3257, 7
  %v3259 = vsub.s32 0, %v3258
  %v3260 = vrot.slane %v2888, %v3259
  %v3261 = vlaneseq
  %v3262 = vshrl.u32 %v3261, 7
  %v3263 = vsub.s32 0, %v3262
  %v3264 = vrot.slane %v2902, %v3263
  %v3265 = vlaneseq
  %v3266 = vshrl.u32 %v3265, 7
  %v3267 = vsub.s32 0, %v3266
  %v3268 = vrot.slane %v2910, %v3267
  %v3269 = vlaneseq
  %v3270 = vshrl.u32 %v3269, 7
  %v3271 = vsub.s32 0, %v3270
  %v3272 = vrot.slane %v2912, %v3271
  %v3273 = vlaneseq
  %v3274 = vshrl.u32 %v3273, 7
  %v3275 = vsub.s32 0, %v3274
  %v3276 = vrot.slane %v2895, %v3275
  %v3277 = vlaneseq
  %v3278 = vshrl.u32 %v3277, 7
  %v3279 = vsub.s32 0, %v3278
  %v3280 = vrot.slane %v2909, %v3279
  %v3281 = vlaneseq
  %v3282 = vshrl.u32 %v3281, 7
  %v3283 = vsub.s32 0, %v3282
  %v3284 = vrot.slane %v2911, %v3283
  %v3285 = vlaneseq
  %v3286 = vshrl.u32 %v3285, 7
  %v3287 = vsub.s32 0, %v3286
  %v3288 = vrot.slane %v2913, %v3287
  %v3289 = vlaneseq
  %v3290 = vshrl.u32 %v3289, 7
  %v3291 = vsub.s32 0, %v3290
  %v3292 = vrot.slane %v2937, %v3291
  %v3293 = vlaneseq
  %v3294 = vshrl.u32 %v3293, 7
  %v3295 = vsub.s32 0, %v3294
  %v3296 = vrot.slane %v2951, %v3295
  %v3297 = vlaneseq
  %v3298 = vshrl.u32 %v3297, 7
  %v3299 = vsub.s32 0, %v3298
  %v3300 = vrot.slane %v2959, %v3299
  %v3301 = vlaneseq
  %v3302 = vshrl.u32 %v3301, 7
  %v3303 = vsub.s32 0, %v3302
  %v3304 = vrot.slane %v2961, %v3303
  %v3305 = vlaneseq
  %v3306 = vshrl.u32 %v3305, 7
  %v3307 = vsub.s32 0, %v3306
  %v3308 = vrot.slane %v2944, %v3307
  %v3309 = vlaneseq
  %v3310 = vshrl.u32 %v3309, 7
  %v3311 = vsub.s32 0, %v3310
  %v3312 = vrot.slane %v2958, %v3311
  %v3313 = vlaneseq
  %v3314 = vshrl.u32 %v3313, 7
  %v3315 = vsub.s32 0, %v3314
  %v3316 = vrot.slane %v2960, %v3315
  %v3317 = vlaneseq
  %v3318 = vshrl.u32 %v3317, 7
  %v3319 = vsub.s32 0, %v3318
  %v3320 = vrot.slane %v2962, %v3319
  %v3321 = vlaneseq
  %v3322 = vshrl.u32 %v3321, 7
  %v3323 = vsub.s32 0, %v3322
  %v3324 = vrot.slane %v2986, %v3323
  %v3325 = vlaneseq
  %v3326 = vshrl.u32 %v3325, 7
  %v3327 = vsub.s32 0, %v3326
  %v3328 = vrot.slane %v3000, %v3327
  %v3329 = vlaneseq
  %v3330 = vshrl.u32 %v3329, 7
  %v3331 = vsub.s32 0, %v3330
  %v3332 = vrot.slane %v3008, %v3331
  %v3333 = vlaneseq
  %v3334 = vshrl.u32 %v3333, 7
  %v3335 = vsub.s32 0, %v3334
  %v3336 = vrot.slane %v3010, %v3335
  %v3337 = vlaneseq
  %v3338 = vshrl.u32 %v3337, 7
  %v3339 = vsub.s32 0, %v3338
  %v3340 = vrot.slane %v2993, %v3339
  %v3341 = vlaneseq
  %v3342 = vshrl.u32 %v3341, 7
  %v3343 = vsub.s32 0, %v3342
  %v3344 = vrot.slane %v3007, %v3343
  %v3345 = vlaneseq
  %v3346 = vshrl.u32 %v3345, 7
  %v3347 = vsub.s32 0, %v3346
  %v3348 = vrot.slane %v3009, %v3347
  %v3349 = vlaneseq
  %v3350 = vshrl.u32 %v3349, 7
  %v3351 = vsub.s32 0, %v3350
  %v3352 = vrot.slane %v3011, %v3351
  %v3353 = vlaneseq
  %v3354 = vshrl.u32 %v3353, 7
  %v3355 = vsub.s32 0, %v3354
  %v3356 = vrot.slane %v3035, %v3355
  %v3357 = vlaneseq
  %v3358 = vshrl.u32 %v3357, 7
  %v3359 = vsub.s32 0, %v3358
  %v3360 = vrot.slane %v3049, %v3359
  %v3361 = vlaneseq
  %v3362 = vshrl.u32 %v3361, 7
  %v3363 = vsub.s32 0, %v3362
  %v3364 = vrot.slane %v3057, %v3363
  %v3365 = vlaneseq
  %v3366 = vshrl.u32 %v3365, 7
  %v3367 = vsub.s32 0, %v3366
  %v3368 = vrot.slane %v3059, %v3367
  %v3369 = vlaneseq
  %v3370 = vshrl.u32 %v3369, 7
  %v3371 = vsub.s32 0, %v3370
  %v3372 = vrot.slane %v3042, %v3371
  %v3373 = vlaneseq
  %v3374 = vshrl.u32 %v3373, 7
  %v3375 = vsub.s32 0, %v3374
  %v3376 = vrot.slane %v3056, %v3375
  %v3377 = vlaneseq
  %v3378 = vshrl.u32 %v3377, 7
  %v3379 = vsub.s32 0, %v3378
  %v3380 = vrot.slane %v3058, %v3379
  %v3381 = vlaneseq
  %v3382 = vshrl.u32 %v3381, 7
  %v3383 = vsub.s32 0, %v3382
  %v3384 = vrot.slane %v3060, %v3383
  %v3385 = vlaneseq
  %v3386 = vshrl.u32 %v3385, 7
  %v3387 = vsub.s32 0, %v3386
  %v3388 = vrot.slane %v3084, %v3387
  %v3389 = vlaneseq
  %v3390 = vshrl.u32 %v3389, 7
  %v3391 = vsub.s32 0, %v3390
  %v3392 = vrot.slane %v3098, %v3391
  %v3393 = vlaneseq
  %v3394 = vshrl.u32 %v3393, 7
  %v3395 = vsub.s32 0, %v3394
  %v3396 = vrot.slane %v3106, %v3395
  %v3397 = vlaneseq
  %v3398 = vshrl.u32 %v3397, 7
  %v3399 = vsub.s32 0, %v3398
  %v3400 = vrot.slane %v3108, %v3399
  %v3401 = vlaneseq
  %v3402 = vshrl.u32 %v3401, 7
  %v3403 = vsub.s32 0, %v3402
  %v3404 = vrot.slane %v3091, %v3403
  %v3405 = vlaneseq
  %v3406 = vshrl.u32 %v3405, 7
  %v3407 = vsub.s32 0, %v3406
  %v3408 = vrot.slane %v3105, %v3407
  %v3409 = vlaneseq
  %v3410 = vshrl.u32 %v3409, 7
  %v3411 = vsub.s32 0, %v3410
  %v3412 = vrot.slane %v3107, %v3411
  %v3413 = vlaneseq
  %v3414 = vshrl.u32 %v3413, 7
  %v3415 = vsub.s32 0, %v3414
  %v3416 = vrot.slane %v3109, %v3415
  %v3417 = vlaneseq
  %v3418 = vshrl.u32 %v3417, 7
  %v3419 = vsub.s32 0, %v3418
  %v3420 = vrot.slane %v3133, %v3419
  %v3421 = vlaneseq
  %v3422 = vshrl.u32 %v3421, 7
  %v3423 = vsub.s32 0, %v3422
  %v3424 = vrot.slane %v3147, %v3423
  %v3425 = vlaneseq
  %v3426 = vshrl.u32 %v3425, 7
  %v3427 = vsub.s32 0, %v3426
  %v3428 = vrot.slane %v3155, %v3427
  %v3429 = vlaneseq
  %v3430 = vshrl.u32 %v3429, 7
  %v3431 = vsub.s32 0, %v3430
  %v3432 = vrot.slane %v3157, %v3431
  %v3433 = vlaneseq
  %v3434 = vshrl.u32 %v3433, 7
  %v3435 = vsub.s32 0, %v3434
  %v3436 = vrot.slane %v3140, %v3435
  %v3437 = vlaneseq
  %v3438 = vshrl.u32 %v3437, 7
  %v3439 = vsub.s32 0, %v3438
  %v3440 = vrot.slane %v3154, %v3439
  %v3441 = vlaneseq
  %v3442 = vshrl.u32 %v3441, 7
  %v3443 = vsub.s32 0, %v3442
  %v3444 = vrot.slane %v3156, %v3443
  %v3445 = vlaneseq
  %v3446 = vshrl.u32 %v3445, 7
  %v3447 = vsub.s32 0, %v3446
  %v3448 = vrot.slane %v3158, %v3447
  %v3449 = vlaneseq
  %v3450 = vshrl.u32 %v3449, 7
  %v3451 = vsub.s32 0, %v3450
  %v3452 = vrot.slane %v3182, %v3451
  %v3453 = vlaneseq
  %v3454 = vshrl.u32 %v3453, 7
  %v3455 = vsub.s32 0, %v3454
  %v3456 = vrot.slane %v3196, %v3455
  %v3457 = vlaneseq
  %v3458 = vshrl.u32 %v3457, 7
  %v3459 = vsub.s32 0, %v3458
  %v3460 = vrot.slane %v3204, %v3459
  %v3461 = vlaneseq
  %v3462 = vshrl.u32 %v3461, 7
  %v3463 = vsub.s32 0, %v3462
  %v3464 = vrot.slane %v3206, %v3463
  %v3465 = vlaneseq
  %v3466 = vshrl.u32 %v3465, 7
  %v3467 = vsub.s32 0, %v3466
  %v3468 = vrot.slane %v3189, %v3467
  %v3469 = vlaneseq
  %v3470 = vshrl.u32 %v3469, 7
  %v3471 = vsub.s32 0, %v3470
  %v3472 = vrot.slane %v3203, %v3471
  %v3473 = vlaneseq
  %v3474 = vshrl.u32 %v3473, 7
  %v3475 = vsub.s32 0, %v3474
  %v3476 = vrot.slane %v3205, %v3475
  %v3477 = vlaneseq
  %v3478 = vshrl.u32 %v3477, 7
  %v3479 = vsub.s32 0, %v3478
  %v3480 = vrot.slane %v3207, %v3479
  %v3481 = vlaneseq
  %v3482 = vshrl.u32 %v3481, 7
  %v3483 = vsub.s32 0, %v3482
  %v3484 = vrot.slane %v3231, %v3483
  %v3485 = vlaneseq
  %v3486 = vshrl.u32 %v3485, 7
  %v3487 = vsub.s32 0, %v3486
  %v3488 = vrot.slane %v3245, %v3487
  %v3489 = vlaneseq
  %v3490 = vshrl.u32 %v3489, 7
  %v3491 = vsub.s32 0, %v3490
  %v3492 = vrot.slane %v3253, %v3491
  %v3493 = vlaneseq
  %v3494 = vshrl.u32 %v3493, 7
  %v3495 = vsub.s32 0, %v3494
  %v3496 = vrot.slane %v3255, %v3495
  %v3497 = vlaneseq
  %v3498 = vshrl.u32 %v3497, 7
  %v3499 = vsub.s32 0, %v3498
  %v3500 = vrot.slane %v3238, %v3499
  %v3501 = vlaneseq
  %v3502 = vshrl.u32 %v3501, 7
  %v3503 = vsub.s32 0, %v3502
  %v3504 = vrot.slane %v3252, %v3503
  %v3505 = vlaneseq
  %v3506 = vshrl.u32 %v3505, 7
  %v3507 = vsub.s32 0, %v3506
  %v3508 = vrot.slane %v3254, %v3507
  %v3509 = vlaneseq
  %v3510 = vshrl.u32 %v3509, 7
  %v3511 = vsub.s32 0, %v3510
  %v3512 = vrot.slane %v3256, %v3511
  %3577 = vrot.lane.b32.xlu0 %v2837, 8
  %v3578 = vpop.permute.xlu0 %3577
  %3579 = vrot.lane.b32.xlu0 %v2842, 8
  %v3580 = vpop.permute.xlu0 %3579
  %3581 = vrot.lane.b32.xlu0 %v2848, 8
  %v3582 = vpop.permute.xlu0 %3581
  %3583 = vrot.lane.b32.xlu0 %v2850, 8
  %v3584 = vpop.permute.xlu0 %3583
  %3585 = vrot.lane.b32.xlu0 %v2854, 8
  %v3586 = vpop.permute.xlu0 %3585
  %3587 = vrot.lane.b32.xlu0 %v2856, 8
  %v3588 = vpop.permute.xlu0 %3587
  %3589 = vrot.lane.b32.xlu0 %v2860, 8
  %v3590 = vpop.permute.xlu0 %3589
  %3591 = vrot.lane.b32.xlu0 %v2862, 8
  %v3592 = vpop.permute.xlu0 %3591
  %v3601 = vadd.f32 %v3260, %v3578
  %v3602 = vadd.f32 %v3264, %v3578
  %v3603 = vadd.f32 %v3268, %v3578
  %v3604 = vadd.f32 %v3272, %v3578
  %v3605 = vadd.f32 %v3276, %v3578
  %v3606 = vadd.f32 %v3280, %v3578
  %v3607 = vadd.f32 %v3284, %v3578
  %v3608 = vadd.f32 %v3288, %v3578
  %v3609 = vadd.f32 %v3292, %v3580
  %v3610 = vadd.f32 %v3296, %v3580
  %v3611 = vadd.f32 %v3300, %v3580
  %v3612 = vadd.f32 %v3304, %v3580
  %v3613 = vadd.f32 %v3308, %v3580
  %v3614 = vadd.f32 %v3312, %v3580
  %v3615 = vadd.f32 %v3316, %v3580
  %v3616 = vadd.f32 %v3320, %v3580
  %v3617 = vadd.f32 %v3324, %v3582
  %v3618 = vadd.f32 %v3328, %v3582
  %v3619 = vadd.f32 %v3332, %v3582
  %v3620 = vadd.f32 %v3336, %v3582
  %v3621 = vadd.f32 %v3340, %v3582
  %v3622 = vadd.f32 %v3344, %v3582
  %v3623 = vadd.f32 %v3348, %v3582
  %v3624 = vadd.f32 %v3352, %v3582
  %v3625 = vadd.f32 %v3356, %v3584
  %v3626 = vadd.f32 %v3360, %v3584
  %v3627 = vadd.f32 %v3364, %v3584
  %v3628 = vadd.f32 %v3368, %v3584
  %v3629 = vadd.f32 %v3372, %v3584
  %v3630 = vadd.f32 %v3376, %v3584
  %v3631 = vadd.f32 %v3380, %v3584
  %v3632 = vadd.f32 %v3384, %v3584
  %v3633 = vadd.f32 %v3388, %v3586
  %v3634 = vadd.f32 %v3392, %v3586
  %v3635 = vadd.f32 %v3396, %v3586
  %v3636 = vadd.f32 %v3400, %v3586
  %v3637 = vadd.f32 %v3404, %v3586
  %v3638 = vadd.f32 %v3408, %v3586
  %v3639 = vadd.f32 %v3412, %v3586
  %v3640 = vadd.f32 %v3416, %v3586
  %v3641 = vadd.f32 %v3420, %v3588
  %v3642 = vadd.f32 %v3424, %v3588
  %v3643 = vadd.f32 %v3428, %v3588
  %v3644 = vadd.f32 %v3432, %v3588
  %v3645 = vadd.f32 %v3436, %v3588
  %v3646 = vadd.f32 %v3440, %v3588
  %v3647 = vadd.f32 %v3444, %v3588
  %v3648 = vadd.f32 %v3448, %v3588
  %v3649 = vadd.f32 %v3452, %v3590
  %v3650 = vadd.f32 %v3456, %v3590
  %v3651 = vadd.f32 %v3460, %v3590
  %v3652 = vadd.f32 %v3464, %v3590
  %v3653 = vadd.f32 %v3468, %v3590
  %v3654 = vadd.f32 %v3472, %v3590
  %v3655 = vadd.f32 %v3476, %v3590
  %v3656 = vadd.f32 %v3480, %v3590
  %v3657 = vadd.f32 %v3484, %v3592
  %v3658 = vadd.f32 %v3488, %v3592
  %v3659 = vadd.f32 %v3492, %v3592
  %v3660 = vadd.f32 %v3496, %v3592
  %v3661 = vadd.f32 %v3500, %v3592
  %v3662 = vadd.f32 %v3504, %v3592
  %v3663 = vadd.f32 %v3508, %v3592
  %v3664 = vadd.f32 %v3512, %v3592
  %vm3665 = vcmp.gt.f32.partialorder %v3601, 0.0
  %vm3666 = vcmp.gt.f32.partialorder %v3602, 0.0
  %vm3667 = vcmp.gt.f32.partialorder %v3603, 0.0
  %vm3668 = vcmp.gt.f32.partialorder %v3604, 0.0
  %vm3669 = vcmp.gt.f32.partialorder %v3605, 0.0
  %vm3670 = vcmp.gt.f32.partialorder %v3606, 0.0
  %vm3671 = vcmp.gt.f32.partialorder %v3607, 0.0
  %vm3672 = vcmp.gt.f32.partialorder %v3608, 0.0
  %vm3673 = vcmp.gt.f32.partialorder %v3609, 0.0
  %vm3674 = vcmp.gt.f32.partialorder %v3610, 0.0
  %vm3675 = vcmp.gt.f32.partialorder %v3611, 0.0
  %vm3676 = vcmp.gt.f32.partialorder %v3612, 0.0
  %vm3677 = vcmp.gt.f32.partialorder %v3613, 0.0
  %vm3678 = vcmp.gt.f32.partialorder %v3614, 0.0
  %vm3679 = vcmp.gt.f32.partialorder %v3615, 0.0
  %vm3680 = vcmp.gt.f32.partialorder %v3616, 0.0
  %vm3681 = vcmp.gt.f32.partialorder %v3617, 0.0
  %vm3682 = vcmp.gt.f32.partialorder %v3618, 0.0
  %vm3683 = vcmp.gt.f32.partialorder %v3619, 0.0
  %vm3684 = vcmp.gt.f32.partialorder %v3620, 0.0
  %vm3685 = vcmp.gt.f32.partialorder %v3621, 0.0
  %vm3686 = vcmp.gt.f32.partialorder %v3622, 0.0
  %vm3687 = vcmp.gt.f32.partialorder %v3623, 0.0
  %vm3688 = vcmp.gt.f32.partialorder %v3624, 0.0
  %vm3689 = vcmp.gt.f32.partialorder %v3625, 0.0
  %vm3690 = vcmp.gt.f32.partialorder %v3626, 0.0
  %vm3691 = vcmp.gt.f32.partialorder %v3627, 0.0
  %vm3692 = vcmp.gt.f32.partialorder %v3628, 0.0
  %vm3693 = vcmp.gt.f32.partialorder %v3629, 0.0
  %vm3694 = vcmp.gt.f32.partialorder %v3630, 0.0
  %vm3695 = vcmp.gt.f32.partialorder %v3631, 0.0
  %vm3696 = vcmp.gt.f32.partialorder %v3632, 0.0
  %vm3697 = vcmp.gt.f32.partialorder %v3633, 0.0
  %vm3698 = vcmp.gt.f32.partialorder %v3634, 0.0
  %vm3699 = vcmp.gt.f32.partialorder %v3635, 0.0
  %vm3700 = vcmp.gt.f32.partialorder %v3636, 0.0
  %vm3701 = vcmp.gt.f32.partialorder %v3637, 0.0
  %vm3702 = vcmp.gt.f32.partialorder %v3638, 0.0
  %vm3703 = vcmp.gt.f32.partialorder %v3639, 0.0
  %vm3704 = vcmp.gt.f32.partialorder %v3640, 0.0
  %vm3705 = vcmp.gt.f32.partialorder %v3641, 0.0
  %vm3706 = vcmp.gt.f32.partialorder %v3642, 0.0
  %vm3707 = vcmp.gt.f32.partialorder %v3643, 0.0
  %vm3708 = vcmp.gt.f32.partialorder %v3644, 0.0
  %vm3709 = vcmp.gt.f32.partialorder %v3645, 0.0
  %vm3710 = vcmp.gt.f32.partialorder %v3646, 0.0
  %vm3711 = vcmp.gt.f32.partialorder %v3647, 0.0
  %vm3712 = vcmp.gt.f32.partialorder %v3648, 0.0
  %vm3713 = vcmp.gt.f32.partialorder %v3649, 0.0
  %vm3714 = vcmp.gt.f32.partialorder %v3650, 0.0
  %vm3715 = vcmp.gt.f32.partialorder %v3651, 0.0
  %vm3716 = vcmp.gt.f32.partialorder %v3652, 0.0
  %vm3717 = vcmp.gt.f32.partialorder %v3653, 0.0
  %vm3718 = vcmp.gt.f32.partialorder %v3654, 0.0
  %vm3719 = vcmp.gt.f32.partialorder %v3655, 0.0
  %vm3720 = vcmp.gt.f32.partialorder %v3656, 0.0
  %vm3721 = vcmp.gt.f32.partialorder %v3657, 0.0
  %vm3722 = vcmp.gt.f32.partialorder %v3658, 0.0
  %vm3723 = vcmp.gt.f32.partialorder %v3659, 0.0
  %vm3724 = vcmp.gt.f32.partialorder %v3660, 0.0
  %vm3725 = vcmp.gt.f32.partialorder %v3661, 0.0
  %vm3726 = vcmp.gt.f32.partialorder %v3662, 0.0
  %vm3727 = vcmp.gt.f32.partialorder %v3663, 0.0
  %vm3728 = vcmp.gt.f32.partialorder %v3664, 0.0
  %v3729 = vmul.f32 %v3601, 0.2
  %v3730 = vmul.f32 %v3602, 0.2
  %v3731 = vmul.f32 %v3603, 0.2
  %v3732 = vmul.f32 %v3604, 0.2
  %v3733 = vmul.f32 %v3605, 0.2
  %v3734 = vmul.f32 %v3606, 0.2
  %v3735 = vmul.f32 %v3607, 0.2
  %v3736 = vmul.f32 %v3608, 0.2
  %v3737 = vmul.f32 %v3609, 0.2
  %v3738 = vmul.f32 %v3610, 0.2
  %v3739 = vmul.f32 %v3611, 0.2
  %v3740 = vmul.f32 %v3612, 0.2
  %v3741 = vmul.f32 %v3613, 0.2
  %v3742 = vmul.f32 %v3614, 0.2
  %v3743 = vmul.f32 %v3615, 0.2
  %v3744 = vmul.f32 %v3616, 0.2
  %v3745 = vmul.f32 %v3617, 0.2
  %v3746 = vmul.f32 %v3618, 0.2
  %v3747 = vmul.f32 %v3619, 0.2
  %v3748 = vmul.f32 %v3620, 0.2
  %v3749 = vmul.f32 %v3621, 0.2
  %v3750 = vmul.f32 %v3622, 0.2
  %v3751 = vmul.f32 %v3623, 0.2
  %v3752 = vmul.f32 %v3624, 0.2
  %v3753 = vmul.f32 %v3625, 0.2
  %v3754 = vmul.f32 %v3626, 0.2
  %v3755 = vmul.f32 %v3627, 0.2
  %v3756 = vmul.f32 %v3628, 0.2
  %v3757 = vmul.f32 %v3629, 0.2
  %v3758 = vmul.f32 %v3630, 0.2
  %v3759 = vmul.f32 %v3631, 0.2
  %v3760 = vmul.f32 %v3632, 0.2
  %v3761 = vmul.f32 %v3633, 0.2
  %v3762 = vmul.f32 %v3634, 0.2
  %v3763 = vmul.f32 %v3635, 0.2
  %v3764 = vmul.f32 %v3636, 0.2
  %v3765 = vmul.f32 %v3637, 0.2
  %v3766 = vmul.f32 %v3638, 0.2
  %v3767 = vmul.f32 %v3639, 0.2
  %v3768 = vmul.f32 %v3640, 0.2
  %v3769 = vmul.f32 %v3641, 0.2
  %v3770 = vmul.f32 %v3642, 0.2
  %v3771 = vmul.f32 %v3643, 0.2
  %v3772 = vmul.f32 %v3644, 0.2
  %v3773 = vmul.f32 %v3645, 0.2
  %v3774 = vmul.f32 %v3646, 0.2
  %v3775 = vmul.f32 %v3647, 0.2
  %v3776 = vmul.f32 %v3648, 0.2
  %v3777 = vmul.f32 %v3649, 0.2
  %v3778 = vmul.f32 %v3650, 0.2
  %v3779 = vmul.f32 %v3651, 0.2
  %v3780 = vmul.f32 %v3652, 0.2
  %v3781 = vmul.f32 %v3653, 0.2
  %v3782 = vmul.f32 %v3654, 0.2
  %v3783 = vmul.f32 %v3655, 0.2
  %v3784 = vmul.f32 %v3656, 0.2
  %v3785 = vmul.f32 %v3657, 0.2
  %v3786 = vmul.f32 %v3658, 0.2
  %v3787 = vmul.f32 %v3659, 0.2
  %v3788 = vmul.f32 %v3660, 0.2
  %v3789 = vmul.f32 %v3661, 0.2
  %v3790 = vmul.f32 %v3662, 0.2
  %v3791 = vmul.f32 %v3663, 0.2
  %v3792 = vmul.f32 %v3664, 0.2
  %v3793 = vsel %vm3665, %v3601, %v3729
  %v3794 = vsel %vm3666, %v3602, %v3730
  %v3795 = vsel %vm3667, %v3603, %v3731
  %v3796 = vsel %vm3668, %v3604, %v3732
  %v3797 = vsel %vm3669, %v3605, %v3733
  %v3798 = vsel %vm3670, %v3606, %v3734
  %v3799 = vsel %vm3671, %v3607, %v3735
  %v3800 = vsel %vm3672, %v3608, %v3736
  %v3801 = vsel %vm3673, %v3609, %v3737
  %v3802 = vsel %vm3674, %v3610, %v3738
  %v3803 = vsel %vm3675, %v3611, %v3739
  %v3804 = vsel %vm3676, %v3612, %v3740
  %v3805 = vsel %vm3677, %v3613, %v3741
  %v3806 = vsel %vm3678, %v3614, %v3742
  %v3807 = vsel %vm3679, %v3615, %v3743
  %v3808 = vsel %vm3680, %v3616, %v3744
  %v3809 = vsel %vm3681, %v3617, %v3745
  %v3810 = vsel %vm3682, %v3618, %v3746
  %v3811 = vsel %vm3683, %v3619, %v3747
  %v3812 = vsel %vm3684, %v3620, %v3748
  %v3813 = vsel %vm3685, %v3621, %v3749
  %v3814 = vsel %vm3686, %v3622, %v3750
  %v3815 = vsel %vm3687, %v3623, %v3751
  %v3816 = vsel %vm3688, %v3624, %v3752
  %v3817 = vsel %vm3689, %v3625, %v3753
  %v3818 = vsel %vm3690, %v3626, %v3754
  %v3819 = vsel %vm3691, %v3627, %v3755
  %v3820 = vsel %vm3692, %v3628, %v3756
  %v3821 = vsel %vm3693, %v3629, %v3757
  %v3822 = vsel %vm3694, %v3630, %v3758
  %v3823 = vsel %vm3695, %v3631, %v3759
  %v3824 = vsel %vm3696, %v3632, %v3760
  %v3825 = vsel %vm3697, %v3633, %v3761
  %v3826 = vsel %vm3698, %v3634, %v3762
  %v3827 = vsel %vm3699, %v3635, %v3763
  %v3828 = vsel %vm3700, %v3636, %v3764
  %v3829 = vsel %vm3701, %v3637, %v3765
  %v3830 = vsel %vm3702, %v3638, %v3766
  %v3831 = vsel %vm3703, %v3639, %v3767
  %v3832 = vsel %vm3704, %v3640, %v3768
  %v3833 = vsel %vm3705, %v3641, %v3769
  %v3834 = vsel %vm3706, %v3642, %v3770
  %v3835 = vsel %vm3707, %v3643, %v3771
  %v3836 = vsel %vm3708, %v3644, %v3772
  %v3837 = vsel %vm3709, %v3645, %v3773
  %v3838 = vsel %vm3710, %v3646, %v3774
  %v3839 = vsel %vm3711, %v3647, %v3775
  %v3840 = vsel %vm3712, %v3648, %v3776
  %v3841 = vsel %vm3713, %v3649, %v3777
  %v3842 = vsel %vm3714, %v3650, %v3778
  %v3843 = vsel %vm3715, %v3651, %v3779
  %v3844 = vsel %vm3716, %v3652, %v3780
  %v3845 = vsel %vm3717, %v3653, %v3781
  %v3846 = vsel %vm3718, %v3654, %v3782
  %v3847 = vsel %vm3719, %v3655, %v3783
  %v3848 = vsel %vm3720, %v3656, %v3784
  %v3849 = vsel %vm3721, %v3657, %v3785
  %v3850 = vsel %vm3722, %v3658, %v3786
  %v3851 = vsel %vm3723, %v3659, %v3787
  %v3852 = vsel %vm3724, %v3660, %v3788
  %v3853 = vsel %vm3725, %v3661, %v3789
  %v3854 = vsel %vm3726, %v3662, %v3790
  %v3855 = vsel %vm3727, %v3663, %v3791
  %v3856 = vsel %vm3728, %v3664, %v3792
  %v3857 = vld [vmem:[%s1 + $0x88] sm:$0xff]
  %v3859 = vcombine.high %v3857, %v3857
  %v3861 = vunpack.c.l.s4 1966171168
  %v3862 = vunpack.c.0.s8 %v3861
  %v3863 = vlaneseq
  %v3864 = vshrl.u32 %v3863, 7
  %v3865 = vsub.s32 %v3862, %v3864
  %v3866 = vrot.slane %v3857, %v3865
  %v3868 = vunpack.c.l.s4 1966171168
  %v3869 = vunpack.c.0.s8 %v3868
  %v3870 = vlaneseq
  %v3871 = vshrl.u32 %v3870, 7
  %v3872 = vsub.s32 %v3869, %v3871
  %v3873 = vrot.slane %v3859, %v3872
  %v3874 = vcombine.high %v3866, %v3866
  %v3875 = vcombine.high %v3873, %v3873
  %v3877 = vunpack.c.l.s4 1966171168
  %v3878 = vunpack.c.0.s8 %v3877
  %v3879 = vlaneseq
  %v3880 = vshrl.u32 %v3879, 7
  %v3881 = vsub.s32 %v3878, %v3880
  %v3882 = vrot.slane %v3866, %v3881
  %v3884 = vunpack.c.l.s4 1966171168
  %v3885 = vunpack.c.0.s8 %v3884
  %v3886 = vlaneseq
  %v3887 = vshrl.u32 %v3886, 7
  %v3888 = vsub.s32 %v3885, %v3887
  %v3889 = vrot.slane %v3873, %v3888
  %v3891 = vunpack.c.l.s4 1966171168
  %v3892 = vunpack.c.0.s8 %v3891
  %v3893 = vlaneseq
  %v3894 = vshrl.u32 %v3893, 7
  %v3895 = vsub.s32 %v3892, %v3894
  %v3896 = vrot.slane %v3874, %v3895
  %v3898 = vunpack.c.l.s4 1966171168
  %v3899 = vunpack.c.0.s8 %v3898
  %v3900 = vlaneseq
  %v3901 = vshrl.u32 %v3900, 7
  %v3902 = vsub.s32 %v3899, %v3901
  %v3903 = vrot.slane %v3875, %v3902
  %v3904 = vcombine.high %v3882, %v3882
  %v3905 = vcombine.high %v3889, %v3889
  %v3906 = vcombine.high %v3896, %v3896
  %v3907 = vcombine.high %v3903, %v3903
  %v3908 = vlaneseq
  %v3909 = vshrl.u32 %v3908, 7
  %v3910 = vsub.s32 0, %v3909
  %v3911 = vrot.slane %v3882, %v3910
  %v3912 = vlaneseq
  %v3913 = vshrl.u32 %v3912, 7
  %v3914 = vsub.s32 0, %v3913
  %v3915 = vrot.slane %v3896, %v3914
  %v3916 = vlaneseq
  %v3917 = vshrl.u32 %v3916, 7
  %v3918 = vsub.s32 0, %v3917
  %v3919 = vrot.slane %v3904, %v3918
  %v3920 = vlaneseq
  %v3921 = vshrl.u32 %v3920, 7
  %v3922 = vsub.s32 0, %v3921
  %v3923 = vrot.slane %v3906, %v3922
  %v3924 = vlaneseq
  %v3925 = vshrl.u32 %v3924, 7
  %v3926 = vsub.s32 0, %v3925
  %v3927 = vrot.slane %v3889, %v3926
  %v3928 = vlaneseq
  %v3929 = vshrl.u32 %v3928, 7
  %v3930 = vsub.s32 0, %v3929
  %v3931 = vrot.slane %v3903, %v3930
  %v3932 = vlaneseq
  %v3933 = vshrl.u32 %v3932, 7
  %v3934 = vsub.s32 0, %v3933
  %v3935 = vrot.slane %v3905, %v3934
  %v3936 = vlaneseq
  %v3937 = vshrl.u32 %v3936, 7
  %v3938 = vsub.s32 0, %v3937
  %v3939 = vrot.slane %v3907, %v3938
  %3940 = vrot.lane.b32.xlu0 %v3911, 8
  %v3941 = vpop.permute.xlu0 %3940
  %3942 = vrot.lane.b32.xlu0 %v3915, 8
  %v3943 = vpop.permute.xlu0 %3942
  %3944 = vrot.lane.b32.xlu0 %v3919, 8
  %v3945 = vpop.permute.xlu0 %3944
  %3946 = vrot.lane.b32.xlu0 %v3923, 8
  %v3947 = vpop.permute.xlu0 %3946
  %3948 = vrot.lane.b32.xlu0 %v3927, 8
  %v3949 = vpop.permute.xlu0 %3948
  %3950 = vrot.lane.b32.xlu0 %v3931, 8
  %v3951 = vpop.permute.xlu0 %3950
  %3952 = vrot.lane.b32.xlu0 %v3935, 8
  %v3953 = vpop.permute.xlu0 %3952
  %3954 = vrot.lane.b32.xlu0 %v3939, 8
  %v3955 = vpop.permute.xlu0 %3954
  %v3964 = vmul.f32 %v3793, %v3941
  %v3965 = vmul.f32 %v3794, %v3941
  %v3966 = vmul.f32 %v3795, %v3941
  %v3967 = vmul.f32 %v3796, %v3941
  %v3968 = vmul.f32 %v3797, %v3941
  %v3969 = vmul.f32 %v3798, %v3941
  %v3970 = vmul.f32 %v3799, %v3941
  %v3971 = vmul.f32 %v3800, %v3941
  %v3972 = vmul.f32 %v3801, %v3943
  %v3973 = vmul.f32 %v3802, %v3943
  %v3974 = vmul.f32 %v3803, %v3943
  %v3975 = vmul.f32 %v3804, %v3943
  %v3976 = vmul.f32 %v3805, %v3943
  %v3977 = vmul.f32 %v3806, %v3943
  %v3978 = vmul.f32 %v3807, %v3943
  %v3979 = vmul.f32 %v3808, %v3943
  %v3980 = vmul.f32 %v3809, %v3945
  %v3981 = vmul.f32 %v3810, %v3945
  %v3982 = vmul.f32 %v3811, %v3945
  %v3983 = vmul.f32 %v3812, %v3945
  %v3984 = vmul.f32 %v3813, %v3945
  %v3985 = vmul.f32 %v3814, %v3945
  %v3986 = vmul.f32 %v3815, %v3945
  %v3987 = vmul.f32 %v3816, %v3945
  %v3988 = vmul.f32 %v3817, %v3947
  %v3989 = vmul.f32 %v3818, %v3947
  %v3990 = vmul.f32 %v3819, %v3947
  %v3991 = vmul.f32 %v3820, %v3947
  %v3992 = vmul.f32 %v3821, %v3947
  %v3993 = vmul.f32 %v3822, %v3947
  %v3994 = vmul.f32 %v3823, %v3947
  %v3995 = vmul.f32 %v3824, %v3947
  %v3996 = vmul.f32 %v3825, %v3949
  %v3997 = vmul.f32 %v3826, %v3949
  %v3998 = vmul.f32 %v3827, %v3949
  %v3999 = vmul.f32 %v3828, %v3949
  %v4000 = vmul.f32 %v3829, %v3949
  %v4001 = vmul.f32 %v3830, %v3949
  %v4002 = vmul.f32 %v3831, %v3949
  %v4003 = vmul.f32 %v3832, %v3949
  %v4004 = vmul.f32 %v3833, %v3951
  %v4005 = vmul.f32 %v3834, %v3951
  %v4006 = vmul.f32 %v3835, %v3951
  %v4007 = vmul.f32 %v3836, %v3951
  %v4008 = vmul.f32 %v3837, %v3951
  %v4009 = vmul.f32 %v3838, %v3951
  %v4010 = vmul.f32 %v3839, %v3951
  %v4011 = vmul.f32 %v3840, %v3951
  %v4012 = vmul.f32 %v3841, %v3953
  %v4013 = vmul.f32 %v3842, %v3953
  %v4014 = vmul.f32 %v3843, %v3953
  %v4015 = vmul.f32 %v3844, %v3953
  %v4016 = vmul.f32 %v3845, %v3953
  %v4017 = vmul.f32 %v3846, %v3953
  %v4018 = vmul.f32 %v3847, %v3953
  %v4019 = vmul.f32 %v3848, %v3953
  %v4020 = vmul.f32 %v3849, %v3955
  %v4021 = vmul.f32 %v3850, %v3955
  %v4022 = vmul.f32 %v3851, %v3955
  %v4023 = vmul.f32 %v3852, %v3955
  %v4024 = vmul.f32 %v3853, %v3955
  %v4025 = vmul.f32 %v3854, %v3955
  %v4026 = vmul.f32 %v3855, %v3955
  %v4027 = vmul.f32 %v3856, %v3955
  %4092 = vrot.lane.b32.xlu0 %v3964, 120
  %v4093 = vpop.permute.xlu0 %4092
  %4094 = vrot.lane.b32.xlu0 %v3965, 120
  %v4095 = vpop.permute.xlu0 %4094
  %4096 = vrot.lane.b32.xlu0 %v3966, 120
  %v4097 = vpop.permute.xlu0 %4096
  %4098 = vrot.lane.b32.xlu0 %v3967, 120
  %v4099 = vpop.permute.xlu0 %4098
  %4100 = vrot.lane.b32.xlu0 %v3968, 120
  %v4101 = vpop.permute.xlu0 %4100
  %4102 = vrot.lane.b32.xlu0 %v3969, 120
  %v4103 = vpop.permute.xlu0 %4102
  %4104 = vrot.lane.b32.xlu0 %v3970, 120
  %v4105 = vpop.permute.xlu0 %4104
  %4106 = vrot.lane.b32.xlu0 %v3971, 120
  %v4107 = vpop.permute.xlu0 %4106
  %4108 = vrot.lane.b32.xlu0 %v3972, 120
  %v4109 = vpop.permute.xlu0 %4108
  %4110 = vrot.lane.b32.xlu0 %v3973, 120
  %v4111 = vpop.permute.xlu0 %4110
  %4112 = vrot.lane.b32.xlu0 %v3974, 120
  %v4113 = vpop.permute.xlu0 %4112
  %4114 = vrot.lane.b32.xlu0 %v3975, 120
  %v4115 = vpop.permute.xlu0 %4114
  %4116 = vrot.lane.b32.xlu0 %v3976, 120
  %v4117 = vpop.permute.xlu0 %4116
  %4118 = vrot.lane.b32.xlu0 %v3977, 120
  %v4119 = vpop.permute.xlu0 %4118
  %4120 = vrot.lane.b32.xlu0 %v3978, 120
  %v4121 = vpop.permute.xlu0 %4120
  %4122 = vrot.lane.b32.xlu0 %v3979, 120
  %v4123 = vpop.permute.xlu0 %4122
  %4124 = vrot.lane.b32.xlu0 %v3980, 120
  %v4125 = vpop.permute.xlu0 %4124
  %4126 = vrot.lane.b32.xlu0 %v3981, 120
  %v4127 = vpop.permute.xlu0 %4126
  %4128 = vrot.lane.b32.xlu0 %v3982, 120
  %v4129 = vpop.permute.xlu0 %4128
  %4130 = vrot.lane.b32.xlu0 %v3983, 120
  %v4131 = vpop.permute.xlu0 %4130
  %4132 = vrot.lane.b32.xlu0 %v3984, 120
  %v4133 = vpop.permute.xlu0 %4132
  %4134 = vrot.lane.b32.xlu0 %v3985, 120
  %v4135 = vpop.permute.xlu0 %4134
  %4136 = vrot.lane.b32.xlu0 %v3986, 120
  %v4137 = vpop.permute.xlu0 %4136
  %4138 = vrot.lane.b32.xlu0 %v3987, 120
  %v4139 = vpop.permute.xlu0 %4138
  %4140 = vrot.lane.b32.xlu0 %v3988, 120
  %v4141 = vpop.permute.xlu0 %4140
  %4142 = vrot.lane.b32.xlu0 %v3989, 120
  %v4143 = vpop.permute.xlu0 %4142
  %4144 = vrot.lane.b32.xlu0 %v3990, 120
  %v4145 = vpop.permute.xlu0 %4144
  %4146 = vrot.lane.b32.xlu0 %v3991, 120
  %v4147 = vpop.permute.xlu0 %4146
  %4148 = vrot.lane.b32.xlu0 %v3992, 120
  %v4149 = vpop.permute.xlu0 %4148
  %4150 = vrot.lane.b32.xlu0 %v3993, 120
  %v4151 = vpop.permute.xlu0 %4150
  %4152 = vrot.lane.b32.xlu0 %v3994, 120
  %v4153 = vpop.permute.xlu0 %4152
  %4154 = vrot.lane.b32.xlu0 %v3995, 120
  %v4155 = vpop.permute.xlu0 %4154
  %4156 = vrot.lane.b32.xlu0 %v3996, 120
  %v4157 = vpop.permute.xlu0 %4156
  %4158 = vrot.lane.b32.xlu0 %v3997, 120
  %v4159 = vpop.permute.xlu0 %4158
  %4160 = vrot.lane.b32.xlu0 %v3998, 120
  %v4161 = vpop.permute.xlu0 %4160
  %4162 = vrot.lane.b32.xlu0 %v3999, 120
  %v4163 = vpop.permute.xlu0 %4162
  %4164 = vrot.lane.b32.xlu0 %v4000, 120
  %v4165 = vpop.permute.xlu0 %4164
  %4166 = vrot.lane.b32.xlu0 %v4001, 120
  %v4167 = vpop.permute.xlu0 %4166
  %4168 = vrot.lane.b32.xlu0 %v4002, 120
  %v4169 = vpop.permute.xlu0 %4168
  %4170 = vrot.lane.b32.xlu0 %v4003, 120
  %v4171 = vpop.permute.xlu0 %4170
  %4172 = vrot.lane.b32.xlu0 %v4004, 120
  %v4173 = vpop.permute.xlu0 %4172
  %4174 = vrot.lane.b32.xlu0 %v4005, 120
  %v4175 = vpop.permute.xlu0 %4174
  %4176 = vrot.lane.b32.xlu0 %v4006, 120
  %v4177 = vpop.permute.xlu0 %4176
  %4178 = vrot.lane.b32.xlu0 %v4007, 120
  %v4179 = vpop.permute.xlu0 %4178
  %4180 = vrot.lane.b32.xlu0 %v4008, 120
  %v4181 = vpop.permute.xlu0 %4180
  %4182 = vrot.lane.b32.xlu0 %v4009, 120
  %v4183 = vpop.permute.xlu0 %4182
  %4184 = vrot.lane.b32.xlu0 %v4010, 120
  %v4185 = vpop.permute.xlu0 %4184
  %4186 = vrot.lane.b32.xlu0 %v4011, 120
  %v4187 = vpop.permute.xlu0 %4186
  %4188 = vrot.lane.b32.xlu0 %v4012, 120
  %v4189 = vpop.permute.xlu0 %4188
  %4190 = vrot.lane.b32.xlu0 %v4013, 120
  %v4191 = vpop.permute.xlu0 %4190
  %4192 = vrot.lane.b32.xlu0 %v4014, 120
  %v4193 = vpop.permute.xlu0 %4192
  %4194 = vrot.lane.b32.xlu0 %v4015, 120
  %v4195 = vpop.permute.xlu0 %4194
  %4196 = vrot.lane.b32.xlu0 %v4016, 120
  %v4197 = vpop.permute.xlu0 %4196
  %4198 = vrot.lane.b32.xlu0 %v4017, 120
  %v4199 = vpop.permute.xlu0 %4198
  %4200 = vrot.lane.b32.xlu0 %v4018, 120
  %v4201 = vpop.permute.xlu0 %4200
  %4202 = vrot.lane.b32.xlu0 %v4019, 120
  %v4203 = vpop.permute.xlu0 %4202
  %4204 = vrot.lane.b32.xlu0 %v4020, 120
  %v4205 = vpop.permute.xlu0 %4204
  %4206 = vrot.lane.b32.xlu0 %v4021, 120
  %v4207 = vpop.permute.xlu0 %4206
  %4208 = vrot.lane.b32.xlu0 %v4022, 120
  %v4209 = vpop.permute.xlu0 %4208
  %4210 = vrot.lane.b32.xlu0 %v4023, 120
  %v4211 = vpop.permute.xlu0 %4210
  %4212 = vrot.lane.b32.xlu0 %v4024, 120
  %v4213 = vpop.permute.xlu0 %4212
  %4214 = vrot.lane.b32.xlu0 %v4025, 120
  %v4215 = vpop.permute.xlu0 %4214
  %4216 = vrot.lane.b32.xlu0 %v4026, 120
  %v4217 = vpop.permute.xlu0 %4216
  %4218 = vrot.lane.b32.xlu0 %v4027, 120
  %v4219 = vpop.permute.xlu0 %4218
  %v4284 = vsel %vm28, %v4093, 0.0
  %4285 = vadd.xlane.f32.xlu0 %v4284
  %v4286 = vpop.xlane.xlu0 %4285
  %v4287 = vsel %vm28, %v4095, 0.0
  %4288 = vadd.xlane.f32.xlu0 %v4287
  %v4289 = vpop.xlane.xlu0 %4288
  %v4290 = vsel %vm28, %v4097, 0.0
  %4291 = vadd.xlane.f32.xlu0 %v4290
  %v4292 = vpop.xlane.xlu0 %4291
  %v4293 = vsel %vm28, %v4099, 0.0
  %4294 = vadd.xlane.f32.xlu0 %v4293
  %v4295 = vpop.xlane.xlu0 %4294
  %v4296 = vsel %vm28, %v4101, 0.0
  %4297 = vadd.xlane.f32.xlu0 %v4296
  %v4298 = vpop.xlane.xlu0 %4297
  %v4299 = vsel %vm28, %v4103, 0.0
  %4300 = vadd.xlane.f32.xlu0 %v4299
  %v4301 = vpop.xlane.xlu0 %4300
  %v4302 = vsel %vm28, %v4105, 0.0
  %4303 = vadd.xlane.f32.xlu0 %v4302
  %v4304 = vpop.xlane.xlu0 %4303
  %v4305 = vsel %vm28, %v4107, 0.0
  %4306 = vadd.xlane.f32.xlu0 %v4305
  %v4307 = vpop.xlane.xlu0 %4306
  %v4308 = vsel %vm28, %v4109, 0.0
  %4309 = vadd.xlane.f32.xlu0 %v4308
  %v4310 = vpop.xlane.xlu0 %4309
  %v4311 = vsel %vm28, %v4111, 0.0
  %4312 = vadd.xlane.f32.xlu0 %v4311
  %v4313 = vpop.xlane.xlu0 %4312
  %v4314 = vsel %vm28, %v4113, 0.0
  %4315 = vadd.xlane.f32.xlu0 %v4314
  %v4316 = vpop.xlane.xlu0 %4315
  %v4317 = vsel %vm28, %v4115, 0.0
  %4318 = vadd.xlane.f32.xlu0 %v4317
  %v4319 = vpop.xlane.xlu0 %4318
  %v4320 = vsel %vm28, %v4117, 0.0
  %4321 = vadd.xlane.f32.xlu0 %v4320
  %v4322 = vpop.xlane.xlu0 %4321
  %v4323 = vsel %vm28, %v4119, 0.0
  %4324 = vadd.xlane.f32.xlu0 %v4323
  %v4325 = vpop.xlane.xlu0 %4324
  %v4326 = vsel %vm28, %v4121, 0.0
  %4327 = vadd.xlane.f32.xlu0 %v4326
  %v4328 = vpop.xlane.xlu0 %4327
  %v4329 = vsel %vm28, %v4123, 0.0
  %4330 = vadd.xlane.f32.xlu0 %v4329
  %v4331 = vpop.xlane.xlu0 %4330
  %v4332 = vsel %vm28, %v4125, 0.0
  %4333 = vadd.xlane.f32.xlu0 %v4332
  %v4334 = vpop.xlane.xlu0 %4333
  %v4335 = vsel %vm28, %v4127, 0.0
  %4336 = vadd.xlane.f32.xlu0 %v4335
  %v4337 = vpop.xlane.xlu0 %4336
  %v4338 = vsel %vm28, %v4129, 0.0
  %4339 = vadd.xlane.f32.xlu0 %v4338
  %v4340 = vpop.xlane.xlu0 %4339
  %v4341 = vsel %vm28, %v4131, 0.0
  %4342 = vadd.xlane.f32.xlu0 %v4341
  %v4343 = vpop.xlane.xlu0 %4342
  %v4344 = vsel %vm28, %v4133, 0.0
  %4345 = vadd.xlane.f32.xlu0 %v4344
  %v4346 = vpop.xlane.xlu0 %4345
  %v4347 = vsel %vm28, %v4135, 0.0
  %4348 = vadd.xlane.f32.xlu0 %v4347
  %v4349 = vpop.xlane.xlu0 %4348
  %v4350 = vsel %vm28, %v4137, 0.0
  %4351 = vadd.xlane.f32.xlu0 %v4350
  %v4352 = vpop.xlane.xlu0 %4351
  %v4353 = vsel %vm28, %v4139, 0.0
  %4354 = vadd.xlane.f32.xlu0 %v4353
  %v4355 = vpop.xlane.xlu0 %4354
  %v4356 = vsel %vm28, %v4141, 0.0
  %4357 = vadd.xlane.f32.xlu0 %v4356
  %v4358 = vpop.xlane.xlu0 %4357
  %v4359 = vsel %vm28, %v4143, 0.0
  %4360 = vadd.xlane.f32.xlu0 %v4359
  %v4361 = vpop.xlane.xlu0 %4360
  %v4362 = vsel %vm28, %v4145, 0.0
  %4363 = vadd.xlane.f32.xlu0 %v4362
  %v4364 = vpop.xlane.xlu0 %4363
  %v4365 = vsel %vm28, %v4147, 0.0
  %4366 = vadd.xlane.f32.xlu0 %v4365
  %v4367 = vpop.xlane.xlu0 %4366
  %v4368 = vsel %vm28, %v4149, 0.0
  %4369 = vadd.xlane.f32.xlu0 %v4368
  %v4370 = vpop.xlane.xlu0 %4369
  %v4371 = vsel %vm28, %v4151, 0.0
  %4372 = vadd.xlane.f32.xlu0 %v4371
  %v4373 = vpop.xlane.xlu0 %4372
  %v4374 = vsel %vm28, %v4153, 0.0
  %4375 = vadd.xlane.f32.xlu0 %v4374
  %v4376 = vpop.xlane.xlu0 %4375
  %v4377 = vsel %vm28, %v4155, 0.0
  %4378 = vadd.xlane.f32.xlu0 %v4377
  %v4379 = vpop.xlane.xlu0 %4378
  %v4380 = vsel %vm28, %v4157, 0.0
  %4381 = vadd.xlane.f32.xlu0 %v4380
  %v4382 = vpop.xlane.xlu0 %4381
  %v4383 = vsel %vm28, %v4159, 0.0
  %4384 = vadd.xlane.f32.xlu0 %v4383
  %v4385 = vpop.xlane.xlu0 %4384
  %v4386 = vsel %vm28, %v4161, 0.0
  %4387 = vadd.xlane.f32.xlu0 %v4386
  %v4388 = vpop.xlane.xlu0 %4387
  %v4389 = vsel %vm28, %v4163, 0.0
  %4390 = vadd.xlane.f32.xlu0 %v4389
  %v4391 = vpop.xlane.xlu0 %4390
  %v4392 = vsel %vm28, %v4165, 0.0
  %4393 = vadd.xlane.f32.xlu0 %v4392
  %v4394 = vpop.xlane.xlu0 %4393
  %v4395 = vsel %vm28, %v4167, 0.0
  %4396 = vadd.xlane.f32.xlu0 %v4395
  %v4397 = vpop.xlane.xlu0 %4396
  %v4398 = vsel %vm28, %v4169, 0.0
  %4399 = vadd.xlane.f32.xlu0 %v4398
  %v4400 = vpop.xlane.xlu0 %4399
  %v4401 = vsel %vm28, %v4171, 0.0
  %4402 = vadd.xlane.f32.xlu0 %v4401
  %v4403 = vpop.xlane.xlu0 %4402
  %v4404 = vsel %vm28, %v4173, 0.0
  %4405 = vadd.xlane.f32.xlu0 %v4404
  %v4406 = vpop.xlane.xlu0 %4405
  %v4407 = vsel %vm28, %v4175, 0.0
  %4408 = vadd.xlane.f32.xlu0 %v4407
  %v4409 = vpop.xlane.xlu0 %4408
  %v4410 = vsel %vm28, %v4177, 0.0
  %4411 = vadd.xlane.f32.xlu0 %v4410
  %v4412 = vpop.xlane.xlu0 %4411
  %v4413 = vsel %vm28, %v4179, 0.0
  %4414 = vadd.xlane.f32.xlu0 %v4413
  %v4415 = vpop.xlane.xlu0 %4414
  %v4416 = vsel %vm28, %v4181, 0.0
  %4417 = vadd.xlane.f32.xlu0 %v4416
  %v4418 = vpop.xlane.xlu0 %4417
  %v4419 = vsel %vm28, %v4183, 0.0
  %4420 = vadd.xlane.f32.xlu0 %v4419
  %v4421 = vpop.xlane.xlu0 %4420
  %v4422 = vsel %vm28, %v4185, 0.0
  %4423 = vadd.xlane.f32.xlu0 %v4422
  %v4424 = vpop.xlane.xlu0 %4423
  %v4425 = vsel %vm28, %v4187, 0.0
  %4426 = vadd.xlane.f32.xlu0 %v4425
  %v4427 = vpop.xlane.xlu0 %4426
  %v4428 = vsel %vm28, %v4189, 0.0
  %4429 = vadd.xlane.f32.xlu0 %v4428
  %v4430 = vpop.xlane.xlu0 %4429
  %v4431 = vsel %vm28, %v4191, 0.0
  %4432 = vadd.xlane.f32.xlu0 %v4431
  %v4433 = vpop.xlane.xlu0 %4432
  %v4434 = vsel %vm28, %v4193, 0.0
  %4435 = vadd.xlane.f32.xlu0 %v4434
  %v4436 = vpop.xlane.xlu0 %4435
  %v4437 = vsel %vm28, %v4195, 0.0
  %4438 = vadd.xlane.f32.xlu0 %v4437
  %v4439 = vpop.xlane.xlu0 %4438
  %v4440 = vsel %vm28, %v4197, 0.0
  %4441 = vadd.xlane.f32.xlu0 %v4440
  %v4442 = vpop.xlane.xlu0 %4441
  %v4443 = vsel %vm28, %v4199, 0.0
  %4444 = vadd.xlane.f32.xlu0 %v4443
  %v4445 = vpop.xlane.xlu0 %4444
  %v4446 = vsel %vm28, %v4201, 0.0
  %4447 = vadd.xlane.f32.xlu0 %v4446
  %v4448 = vpop.xlane.xlu0 %4447
  %v4449 = vsel %vm28, %v4203, 0.0
  %4450 = vadd.xlane.f32.xlu0 %v4449
  %v4451 = vpop.xlane.xlu0 %4450
  %v4452 = vsel %vm28, %v4205, 0.0
  %4453 = vadd.xlane.f32.xlu0 %v4452
  %v4454 = vpop.xlane.xlu0 %4453
  %v4455 = vsel %vm28, %v4207, 0.0
  %4456 = vadd.xlane.f32.xlu0 %v4455
  %v4457 = vpop.xlane.xlu0 %4456
  %v4458 = vsel %vm28, %v4209, 0.0
  %4459 = vadd.xlane.f32.xlu0 %v4458
  %v4460 = vpop.xlane.xlu0 %4459
  %v4461 = vsel %vm28, %v4211, 0.0
  %4462 = vadd.xlane.f32.xlu0 %v4461
  %v4463 = vpop.xlane.xlu0 %4462
  %v4464 = vsel %vm28, %v4213, 0.0
  %4465 = vadd.xlane.f32.xlu0 %v4464
  %v4466 = vpop.xlane.xlu0 %4465
  %v4467 = vsel %vm28, %v4215, 0.0
  %4468 = vadd.xlane.f32.xlu0 %v4467
  %v4469 = vpop.xlane.xlu0 %4468
  %v4470 = vsel %vm28, %v4217, 0.0
  %4471 = vadd.xlane.f32.xlu0 %v4470
  %v4472 = vpop.xlane.xlu0 %4471
  %v4473 = vsel %vm28, %v4219, 0.0
  %4474 = vadd.xlane.f32.xlu0 %v4473
  %v4475 = vpop.xlane.xlu0 %4474
  %v4476 = vld [vmem:[%s1 + $0x98] sm:$0xff]
  %v4478 = vlaneseq
  %v4479 = vshrl.u32 %v4478, 7
  %v4480 = vsub.s32 0, %v4479
  %v4481 = vrot.slane %v4476, %v4480
  %4483 = vbcast.lane.b32.xlu0 %v4481, 256
  %v4484 = vpop.permute.xlu0 %4483
  %v4485 = vlaneseq
  %v4486 = vshrl.u32 %v4485, 7
  %v4487 = vsub.s32 1, %v4486
  %v4488 = vrot.slane %v4476, %v4487
  %4490 = vbcast.lane.b32.xlu0 %v4488, 256
  %v4491 = vpop.permute.xlu0 %4490
  %v4492 = vlaneseq
  %v4493 = vshrl.u32 %v4492, 7
  %v4494 = vsub.s32 2, %v4493
  %v4495 = vrot.slane %v4476, %v4494
  %4497 = vbcast.lane.b32.xlu0 %v4495, 256
  %v4498 = vpop.permute.xlu0 %4497
  %v4499 = vlaneseq
  %v4500 = vshrl.u32 %v4499, 7
  %v4501 = vsub.s32 3, %v4500
  %v4502 = vrot.slane %v4476, %v4501
  %4504 = vbcast.lane.b32.xlu0 %v4502, 256
  %v4505 = vpop.permute.xlu0 %4504
  %v4506 = vlaneseq
  %v4507 = vshrl.u32 %v4506, 7
  %v4508 = vsub.s32 4, %v4507
  %v4509 = vrot.slane %v4476, %v4508
  %4511 = vbcast.lane.b32.xlu0 %v4509, 256
  %v4512 = vpop.permute.xlu0 %4511
  %v4513 = vlaneseq
  %v4514 = vshrl.u32 %v4513, 7
  %v4515 = vsub.s32 5, %v4514
  %v4516 = vrot.slane %v4476, %v4515
  %4518 = vbcast.lane.b32.xlu0 %v4516, 256
  %v4519 = vpop.permute.xlu0 %4518
  %v4520 = vlaneseq
  %v4521 = vshrl.u32 %v4520, 7
  %v4522 = vsub.s32 6, %v4521
  %v4523 = vrot.slane %v4476, %v4522
  %4525 = vbcast.lane.b32.xlu0 %v4523, 256
  %v4526 = vpop.permute.xlu0 %4525
  %v4527 = vlaneseq
  %v4528 = vshrl.u32 %v4527, 7
  %v4529 = vsub.s32 7, %v4528
  %v4530 = vrot.slane %v4476, %v4529
  %4532 = vbcast.lane.b32.xlu0 %v4530, 256
  %v4533 = vpop.permute.xlu0 %4532
  %v4542 = vadd.f32 %v4286, %v4484
  %v4543 = vadd.f32 %v4289, %v4491
  %v4544 = vadd.f32 %v4292, %v4498
  %v4545 = vadd.f32 %v4295, %v4505
  %v4546 = vadd.f32 %v4298, %v4512
  %v4547 = vadd.f32 %v4301, %v4519
  %v4548 = vadd.f32 %v4304, %v4526
  %v4549 = vadd.f32 %v4307, %v4533
  %v4550 = vadd.f32 %v4310, %v4484
  %v4551 = vadd.f32 %v4313, %v4491
  %v4552 = vadd.f32 %v4316, %v4498
  %v4553 = vadd.f32 %v4319, %v4505
  %v4554 = vadd.f32 %v4322, %v4512
  %v4555 = vadd.f32 %v4325, %v4519
  %v4556 = vadd.f32 %v4328, %v4526
  %v4557 = vadd.f32 %v4331, %v4533
  %v4558 = vadd.f32 %v4334, %v4484
  %v4559 = vadd.f32 %v4337, %v4491
  %v4560 = vadd.f32 %v4340, %v4498
  %v4561 = vadd.f32 %v4343, %v4505
  %v4562 = vadd.f32 %v4346, %v4512
  %v4563 = vadd.f32 %v4349, %v4519
  %v4564 = vadd.f32 %v4352, %v4526
  %v4565 = vadd.f32 %v4355, %v4533
  %v4566 = vadd.f32 %v4358, %v4484
  %v4567 = vadd.f32 %v4361, %v4491
  %v4568 = vadd.f32 %v4364, %v4498
  %v4569 = vadd.f32 %v4367, %v4505
  %v4570 = vadd.f32 %v4370, %v4512
  %v4571 = vadd.f32 %v4373, %v4519
  %v4572 = vadd.f32 %v4376, %v4526
  %v4573 = vadd.f32 %v4379, %v4533
  %v4574 = vadd.f32 %v4382, %v4484
  %v4575 = vadd.f32 %v4385, %v4491
  %v4576 = vadd.f32 %v4388, %v4498
  %v4577 = vadd.f32 %v4391, %v4505
  %v4578 = vadd.f32 %v4394, %v4512
  %v4579 = vadd.f32 %v4397, %v4519
  %v4580 = vadd.f32 %v4400, %v4526
  %v4581 = vadd.f32 %v4403, %v4533
  %v4582 = vadd.f32 %v4406, %v4484
  %v4583 = vadd.f32 %v4409, %v4491
  %v4584 = vadd.f32 %v4412, %v4498
  %v4585 = vadd.f32 %v4415, %v4505
  %v4586 = vadd.f32 %v4418, %v4512
  %v4587 = vadd.f32 %v4421, %v4519
  %v4588 = vadd.f32 %v4424, %v4526
  %v4589 = vadd.f32 %v4427, %v4533
  %v4590 = vadd.f32 %v4430, %v4484
  %v4591 = vadd.f32 %v4433, %v4491
  %v4592 = vadd.f32 %v4436, %v4498
  %v4593 = vadd.f32 %v4439, %v4505
  %v4594 = vadd.f32 %v4442, %v4512
  %v4595 = vadd.f32 %v4445, %v4519
  %v4596 = vadd.f32 %v4448, %v4526
  %v4597 = vadd.f32 %v4451, %v4533
  %v4598 = vadd.f32 %v4454, %v4484
  %v4599 = vadd.f32 %v4457, %v4491
  %v4600 = vadd.f32 %v4460, %v4498
  %v4601 = vadd.f32 %v4463, %v4505
  %v4602 = vadd.f32 %v4466, %v4512
  %v4603 = vadd.f32 %v4469, %v4519
  %v4604 = vadd.f32 %v4472, %v4526
  %v4605 = vadd.f32 %v4475, %v4533
  %4670 = vset.pattern.permute.xlu0 0
  %4671 = vperm.xlu0 %4670, %v4542
  %v4672 = vpop.permute.xlu0 %4671
  %4673 = vset.pattern.permute.xlu0 0
  %4674 = vperm.xlu0 %4673, %v4543
  %v4675 = vpop.permute.xlu0 %4674
  %4676 = vset.pattern.permute.xlu0 0
  %4677 = vperm.xlu0 %4676, %v4544
  %v4678 = vpop.permute.xlu0 %4677
  %4679 = vset.pattern.permute.xlu0 0
  %4680 = vperm.xlu0 %4679, %v4545
  %v4681 = vpop.permute.xlu0 %4680
  %4682 = vset.pattern.permute.xlu0 0
  %4683 = vperm.xlu0 %4682, %v4546
  %v4684 = vpop.permute.xlu0 %4683
  %4685 = vset.pattern.permute.xlu0 0
  %4686 = vperm.xlu0 %4685, %v4547
  %v4687 = vpop.permute.xlu0 %4686
  %4688 = vset.pattern.permute.xlu0 0
  %4689 = vperm.xlu0 %4688, %v4548
  %v4690 = vpop.permute.xlu0 %4689
  %4691 = vset.pattern.permute.xlu0 0
  %4692 = vperm.xlu0 %4691, %v4549
  %v4693 = vpop.permute.xlu0 %4692
  %4694 = vset.pattern.permute.xlu0 0
  %4695 = vperm.xlu0 %4694, %v4550
  %v4696 = vpop.permute.xlu0 %4695
  %4697 = vset.pattern.permute.xlu0 0
  %4698 = vperm.xlu0 %4697, %v4551
  %v4699 = vpop.permute.xlu0 %4698
  %4700 = vset.pattern.permute.xlu0 0
  %4701 = vperm.xlu0 %4700, %v4552
  %v4702 = vpop.permute.xlu0 %4701
  %4703 = vset.pattern.permute.xlu0 0
  %4704 = vperm.xlu0 %4703, %v4553
  %v4705 = vpop.permute.xlu0 %4704
  %4706 = vset.pattern.permute.xlu0 0
  %4707 = vperm.xlu0 %4706, %v4554
  %v4708 = vpop.permute.xlu0 %4707
  %4709 = vset.pattern.permute.xlu0 0
  %4710 = vperm.xlu0 %4709, %v4555
  %v4711 = vpop.permute.xlu0 %4710
  %4712 = vset.pattern.permute.xlu0 0
  %4713 = vperm.xlu0 %4712, %v4556
  %v4714 = vpop.permute.xlu0 %4713
  %4715 = vset.pattern.permute.xlu0 0
  %4716 = vperm.xlu0 %4715, %v4557
  %v4717 = vpop.permute.xlu0 %4716
  %4718 = vset.pattern.permute.xlu0 0
  %4719 = vperm.xlu0 %4718, %v4558
  %v4720 = vpop.permute.xlu0 %4719
  %4721 = vset.pattern.permute.xlu0 0
  %4722 = vperm.xlu0 %4721, %v4559
  %v4723 = vpop.permute.xlu0 %4722
  %4724 = vset.pattern.permute.xlu0 0
  %4725 = vperm.xlu0 %4724, %v4560
  %v4726 = vpop.permute.xlu0 %4725
  %4727 = vset.pattern.permute.xlu0 0
  %4728 = vperm.xlu0 %4727, %v4561
  %v4729 = vpop.permute.xlu0 %4728
  %4730 = vset.pattern.permute.xlu0 0
  %4731 = vperm.xlu0 %4730, %v4562
  %v4732 = vpop.permute.xlu0 %4731
  %4733 = vset.pattern.permute.xlu0 0
  %4734 = vperm.xlu0 %4733, %v4563
  %v4735 = vpop.permute.xlu0 %4734
  %4736 = vset.pattern.permute.xlu0 0
  %4737 = vperm.xlu0 %4736, %v4564
  %v4738 = vpop.permute.xlu0 %4737
  %4739 = vset.pattern.permute.xlu0 0
  %4740 = vperm.xlu0 %4739, %v4565
  %v4741 = vpop.permute.xlu0 %4740
  %4742 = vset.pattern.permute.xlu0 0
  %4743 = vperm.xlu0 %4742, %v4566
  %v4744 = vpop.permute.xlu0 %4743
  %4745 = vset.pattern.permute.xlu0 0
  %4746 = vperm.xlu0 %4745, %v4567
  %v4747 = vpop.permute.xlu0 %4746
  %4748 = vset.pattern.permute.xlu0 0
  %4749 = vperm.xlu0 %4748, %v4568
  %v4750 = vpop.permute.xlu0 %4749
  %4751 = vset.pattern.permute.xlu0 0
  %4752 = vperm.xlu0 %4751, %v4569
  %v4753 = vpop.permute.xlu0 %4752
  %4754 = vset.pattern.permute.xlu0 0
  %4755 = vperm.xlu0 %4754, %v4570
  %v4756 = vpop.permute.xlu0 %4755
  %4757 = vset.pattern.permute.xlu0 0
  %4758 = vperm.xlu0 %4757, %v4571
  %v4759 = vpop.permute.xlu0 %4758
  %4760 = vset.pattern.permute.xlu0 0
  %4761 = vperm.xlu0 %4760, %v4572
  %v4762 = vpop.permute.xlu0 %4761
  %4763 = vset.pattern.permute.xlu0 0
  %4764 = vperm.xlu0 %4763, %v4573
  %v4765 = vpop.permute.xlu0 %4764
  %4766 = vset.pattern.permute.xlu0 0
  %4767 = vperm.xlu0 %4766, %v4574
  %v4768 = vpop.permute.xlu0 %4767
  %4769 = vset.pattern.permute.xlu0 0
  %4770 = vperm.xlu0 %4769, %v4575
  %v4771 = vpop.permute.xlu0 %4770
  %4772 = vset.pattern.permute.xlu0 0
  %4773 = vperm.xlu0 %4772, %v4576
  %v4774 = vpop.permute.xlu0 %4773
  %4775 = vset.pattern.permute.xlu0 0
  %4776 = vperm.xlu0 %4775, %v4577
  %v4777 = vpop.permute.xlu0 %4776
  %4778 = vset.pattern.permute.xlu0 0
  %4779 = vperm.xlu0 %4778, %v4578
  %v4780 = vpop.permute.xlu0 %4779
  %4781 = vset.pattern.permute.xlu0 0
  %4782 = vperm.xlu0 %4781, %v4579
  %v4783 = vpop.permute.xlu0 %4782
  %4784 = vset.pattern.permute.xlu0 0
  %4785 = vperm.xlu0 %4784, %v4580
  %v4786 = vpop.permute.xlu0 %4785
  %4787 = vset.pattern.permute.xlu0 0
  %4788 = vperm.xlu0 %4787, %v4581
  %v4789 = vpop.permute.xlu0 %4788
  %4790 = vset.pattern.permute.xlu0 0
  %4791 = vperm.xlu0 %4790, %v4582
  %v4792 = vpop.permute.xlu0 %4791
  %4793 = vset.pattern.permute.xlu0 0
  %4794 = vperm.xlu0 %4793, %v4583
  %v4795 = vpop.permute.xlu0 %4794
  %4796 = vset.pattern.permute.xlu0 0
  %4797 = vperm.xlu0 %4796, %v4584
  %v4798 = vpop.permute.xlu0 %4797
  %4799 = vset.pattern.permute.xlu0 0
  %4800 = vperm.xlu0 %4799, %v4585
  %v4801 = vpop.permute.xlu0 %4800
  %4802 = vset.pattern.permute.xlu0 0
  %4803 = vperm.xlu0 %4802, %v4586
  %v4804 = vpop.permute.xlu0 %4803
  %4805 = vset.pattern.permute.xlu0 0
  %4806 = vperm.xlu0 %4805, %v4587
  %v4807 = vpop.permute.xlu0 %4806
  %4808 = vset.pattern.permute.xlu0 0
  %4809 = vperm.xlu0 %4808, %v4588
  %v4810 = vpop.permute.xlu0 %4809
  %4811 = vset.pattern.permute.xlu0 0
  %4812 = vperm.xlu0 %4811, %v4589
  %v4813 = vpop.permute.xlu0 %4812
  %4814 = vset.pattern.permute.xlu0 0
  %4815 = vperm.xlu0 %4814, %v4590
  %v4816 = vpop.permute.xlu0 %4815
  %4817 = vset.pattern.permute.xlu0 0
  %4818 = vperm.xlu0 %4817, %v4591
  %v4819 = vpop.permute.xlu0 %4818
  %4820 = vset.pattern.permute.xlu0 0
  %4821 = vperm.xlu0 %4820, %v4592
  %v4822 = vpop.permute.xlu0 %4821
  %4823 = vset.pattern.permute.xlu0 0
  %4824 = vperm.xlu0 %4823, %v4593
  %v4825 = vpop.permute.xlu0 %4824
  %4826 = vset.pattern.permute.xlu0 0
  %4827 = vperm.xlu0 %4826, %v4594
  %v4828 = vpop.permute.xlu0 %4827
  %4829 = vset.pattern.permute.xlu0 0
  %4830 = vperm.xlu0 %4829, %v4595
  %v4831 = vpop.permute.xlu0 %4830
  %4832 = vset.pattern.permute.xlu0 0
  %4833 = vperm.xlu0 %4832, %v4596
  %v4834 = vpop.permute.xlu0 %4833
  %4835 = vset.pattern.permute.xlu0 0
  %4836 = vperm.xlu0 %4835, %v4597
  %v4837 = vpop.permute.xlu0 %4836
  %4838 = vset.pattern.permute.xlu0 0
  %4839 = vperm.xlu0 %4838, %v4598
  %v4840 = vpop.permute.xlu0 %4839
  %4841 = vset.pattern.permute.xlu0 0
  %4842 = vperm.xlu0 %4841, %v4599
  %v4843 = vpop.permute.xlu0 %4842
  %4844 = vset.pattern.permute.xlu0 0
  %4845 = vperm.xlu0 %4844, %v4600
  %v4846 = vpop.permute.xlu0 %4845
  %4847 = vset.pattern.permute.xlu0 0
  %4848 = vperm.xlu0 %4847, %v4601
  %v4849 = vpop.permute.xlu0 %4848
  %4850 = vset.pattern.permute.xlu0 0
  %4851 = vperm.xlu0 %4850, %v4602
  %v4852 = vpop.permute.xlu0 %4851
  %4853 = vset.pattern.permute.xlu0 0
  %4854 = vperm.xlu0 %4853, %v4603
  %v4855 = vpop.permute.xlu0 %4854
  %4856 = vset.pattern.permute.xlu0 0
  %4857 = vperm.xlu0 %4856, %v4604
  %v4858 = vpop.permute.xlu0 %4857
  %4859 = vset.pattern.permute.xlu0 0
  %4860 = vperm.xlu0 %4859, %v4605
  %v4861 = vpop.permute.xlu0 %4860
  %v4862 = vlaneseq
  %v4863 = vand.u32 %v4862, 127
  %v4864 = vlaneseq
  %v4865 = vshrl.u32 %v4864, 7
  %v4866 = vsub.s32 %v4863, %v4865
  %v4867 = vrot.slane %v4672, %v4866
  %v4868 = vlaneseq
  %v4869 = vshrl.u32 %v4868, 7
  %v4870 = vsub.s32 %v4863, %v4869
  %v4871 = vrot.slane %v4675, %v4870
  %v4872 = vlaneseq
  %v4873 = vshrl.u32 %v4872, 7
  %v4874 = vsub.s32 %v4863, %v4873
  %v4875 = vrot.slane %v4678, %v4874
  %v4876 = vlaneseq
  %v4877 = vshrl.u32 %v4876, 7
  %v4878 = vsub.s32 %v4863, %v4877
  %v4879 = vrot.slane %v4681, %v4878
  %v4880 = vlaneseq
  %v4881 = vshrl.u32 %v4880, 7
  %v4882 = vsub.s32 %v4863, %v4881
  %v4883 = vrot.slane %v4684, %v4882
  %v4884 = vlaneseq
  %v4885 = vshrl.u32 %v4884, 7
  %v4886 = vsub.s32 %v4863, %v4885
  %v4887 = vrot.slane %v4687, %v4886
  %v4888 = vlaneseq
  %v4889 = vshrl.u32 %v4888, 7
  %v4890 = vsub.s32 %v4863, %v4889
  %v4891 = vrot.slane %v4690, %v4890
  %v4892 = vlaneseq
  %v4893 = vshrl.u32 %v4892, 7
  %v4894 = vsub.s32 %v4863, %v4893
  %v4895 = vrot.slane %v4693, %v4894
  %v4896 = vlaneseq
  %v4897 = vshrl.u32 %v4896, 7
  %v4898 = vsub.s32 %v4863, %v4897
  %v4899 = vrot.slane %v4696, %v4898
  %v4900 = vlaneseq
  %v4901 = vshrl.u32 %v4900, 7
  %v4902 = vsub.s32 %v4863, %v4901
  %v4903 = vrot.slane %v4699, %v4902
  %v4904 = vlaneseq
  %v4905 = vshrl.u32 %v4904, 7
  %v4906 = vsub.s32 %v4863, %v4905
  %v4907 = vrot.slane %v4702, %v4906
  %v4908 = vlaneseq
  %v4909 = vshrl.u32 %v4908, 7
  %v4910 = vsub.s32 %v4863, %v4909
  %v4911 = vrot.slane %v4705, %v4910
  %v4912 = vlaneseq
  %v4913 = vshrl.u32 %v4912, 7
  %v4914 = vsub.s32 %v4863, %v4913
  %v4915 = vrot.slane %v4708, %v4914
  %v4916 = vlaneseq
  %v4917 = vshrl.u32 %v4916, 7
  %v4918 = vsub.s32 %v4863, %v4917
  %v4919 = vrot.slane %v4711, %v4918
  %v4920 = vlaneseq
  %v4921 = vshrl.u32 %v4920, 7
  %v4922 = vsub.s32 %v4863, %v4921
  %v4923 = vrot.slane %v4714, %v4922
  %v4924 = vlaneseq
  %v4925 = vshrl.u32 %v4924, 7
  %v4926 = vsub.s32 %v4863, %v4925
  %v4927 = vrot.slane %v4717, %v4926
  %v4928 = vlaneseq
  %v4929 = vshrl.u32 %v4928, 7
  %v4930 = vsub.s32 %v4863, %v4929
  %v4931 = vrot.slane %v4720, %v4930
  %v4932 = vlaneseq
  %v4933 = vshrl.u32 %v4932, 7
  %v4934 = vsub.s32 %v4863, %v4933
  %v4935 = vrot.slane %v4723, %v4934
  %v4936 = vlaneseq
  %v4937 = vshrl.u32 %v4936, 7
  %v4938 = vsub.s32 %v4863, %v4937
  %v4939 = vrot.slane %v4726, %v4938
  %v4940 = vlaneseq
  %v4941 = vshrl.u32 %v4940, 7
  %v4942 = vsub.s32 %v4863, %v4941
  %v4943 = vrot.slane %v4729, %v4942
  %v4944 = vlaneseq
  %v4945 = vshrl.u32 %v4944, 7
  %v4946 = vsub.s32 %v4863, %v4945
  %v4947 = vrot.slane %v4732, %v4946
  %v4948 = vlaneseq
  %v4949 = vshrl.u32 %v4948, 7
  %v4950 = vsub.s32 %v4863, %v4949
  %v4951 = vrot.slane %v4735, %v4950
  %v4952 = vlaneseq
  %v4953 = vshrl.u32 %v4952, 7
  %v4954 = vsub.s32 %v4863, %v4953
  %v4955 = vrot.slane %v4738, %v4954
  %v4956 = vlaneseq
  %v4957 = vshrl.u32 %v4956, 7
  %v4958 = vsub.s32 %v4863, %v4957
  %v4959 = vrot.slane %v4741, %v4958
  %v4960 = vlaneseq
  %v4961 = vshrl.u32 %v4960, 7
  %v4962 = vsub.s32 %v4863, %v4961
  %v4963 = vrot.slane %v4744, %v4962
  %v4964 = vlaneseq
  %v4965 = vshrl.u32 %v4964, 7
  %v4966 = vsub.s32 %v4863, %v4965
  %v4967 = vrot.slane %v4747, %v4966
  %v4968 = vlaneseq
  %v4969 = vshrl.u32 %v4968, 7
  %v4970 = vsub.s32 %v4863, %v4969
  %v4971 = vrot.slane %v4750, %v4970
  %v4972 = vlaneseq
  %v4973 = vshrl.u32 %v4972, 7
  %v4974 = vsub.s32 %v4863, %v4973
  %v4975 = vrot.slane %v4753, %v4974
  %v4976 = vlaneseq
  %v4977 = vshrl.u32 %v4976, 7
  %v4978 = vsub.s32 %v4863, %v4977
  %v4979 = vrot.slane %v4756, %v4978
  %v4980 = vlaneseq
  %v4981 = vshrl.u32 %v4980, 7
  %v4982 = vsub.s32 %v4863, %v4981
  %v4983 = vrot.slane %v4759, %v4982
  %v4984 = vlaneseq
  %v4985 = vshrl.u32 %v4984, 7
  %v4986 = vsub.s32 %v4863, %v4985
  %v4987 = vrot.slane %v4762, %v4986
  %v4988 = vlaneseq
  %v4989 = vshrl.u32 %v4988, 7
  %v4990 = vsub.s32 %v4863, %v4989
  %v4991 = vrot.slane %v4765, %v4990
  %v4992 = vlaneseq
  %v4993 = vshrl.u32 %v4992, 7
  %v4994 = vsub.s32 %v4863, %v4993
  %v4995 = vrot.slane %v4768, %v4994
  %v4996 = vlaneseq
  %v4997 = vshrl.u32 %v4996, 7
  %v4998 = vsub.s32 %v4863, %v4997
  %v4999 = vrot.slane %v4771, %v4998
  %v5000 = vlaneseq
  %v5001 = vshrl.u32 %v5000, 7
  %v5002 = vsub.s32 %v4863, %v5001
  %v5003 = vrot.slane %v4774, %v5002
  %v5004 = vlaneseq
  %v5005 = vshrl.u32 %v5004, 7
  %v5006 = vsub.s32 %v4863, %v5005
  %v5007 = vrot.slane %v4777, %v5006
  %v5008 = vlaneseq
  %v5009 = vshrl.u32 %v5008, 7
  %v5010 = vsub.s32 %v4863, %v5009
  %v5011 = vrot.slane %v4780, %v5010
  %v5012 = vlaneseq
  %v5013 = vshrl.u32 %v5012, 7
  %v5014 = vsub.s32 %v4863, %v5013
  %v5015 = vrot.slane %v4783, %v5014
  %v5016 = vlaneseq
  %v5017 = vshrl.u32 %v5016, 7
  %v5018 = vsub.s32 %v4863, %v5017
  %v5019 = vrot.slane %v4786, %v5018
  %v5020 = vlaneseq
  %v5021 = vshrl.u32 %v5020, 7
  %v5022 = vsub.s32 %v4863, %v5021
  %v5023 = vrot.slane %v4789, %v5022
  %v5024 = vlaneseq
  %v5025 = vshrl.u32 %v5024, 7
  %v5026 = vsub.s32 %v4863, %v5025
  %v5027 = vrot.slane %v4792, %v5026
  %v5028 = vlaneseq
  %v5029 = vshrl.u32 %v5028, 7
  %v5030 = vsub.s32 %v4863, %v5029
  %v5031 = vrot.slane %v4795, %v5030
  %v5032 = vlaneseq
  %v5033 = vshrl.u32 %v5032, 7
  %v5034 = vsub.s32 %v4863, %v5033
  %v5035 = vrot.slane %v4798, %v5034
  %v5036 = vlaneseq
  %v5037 = vshrl.u32 %v5036, 7
  %v5038 = vsub.s32 %v4863, %v5037
  %v5039 = vrot.slane %v4801, %v5038
  %v5040 = vlaneseq
  %v5041 = vshrl.u32 %v5040, 7
  %v5042 = vsub.s32 %v4863, %v5041
  %v5043 = vrot.slane %v4804, %v5042
  %v5044 = vlaneseq
  %v5045 = vshrl.u32 %v5044, 7
  %v5046 = vsub.s32 %v4863, %v5045
  %v5047 = vrot.slane %v4807, %v5046
  %v5048 = vlaneseq
  %v5049 = vshrl.u32 %v5048, 7
  %v5050 = vsub.s32 %v4863, %v5049
  %v5051 = vrot.slane %v4810, %v5050
  %v5052 = vlaneseq
  %v5053 = vshrl.u32 %v5052, 7
  %v5054 = vsub.s32 %v4863, %v5053
  %v5055 = vrot.slane %v4813, %v5054
  %v5056 = vlaneseq
  %v5057 = vshrl.u32 %v5056, 7
  %v5058 = vsub.s32 %v4863, %v5057
  %v5059 = vrot.slane %v4816, %v5058
  %v5060 = vlaneseq
  %v5061 = vshrl.u32 %v5060, 7
  %v5062 = vsub.s32 %v4863, %v5061
  %v5063 = vrot.slane %v4819, %v5062
  %v5064 = vlaneseq
  %v5065 = vshrl.u32 %v5064, 7
  %v5066 = vsub.s32 %v4863, %v5065
  %v5067 = vrot.slane %v4822, %v5066
  %v5068 = vlaneseq
  %v5069 = vshrl.u32 %v5068, 7
  %v5070 = vsub.s32 %v4863, %v5069
  %v5071 = vrot.slane %v4825, %v5070
  %v5072 = vlaneseq
  %v5073 = vshrl.u32 %v5072, 7
  %v5074 = vsub.s32 %v4863, %v5073
  %v5075 = vrot.slane %v4828, %v5074
  %v5076 = vlaneseq
  %v5077 = vshrl.u32 %v5076, 7
  %v5078 = vsub.s32 %v4863, %v5077
  %v5079 = vrot.slane %v4831, %v5078
  %v5080 = vlaneseq
  %v5081 = vshrl.u32 %v5080, 7
  %v5082 = vsub.s32 %v4863, %v5081
  %v5083 = vrot.slane %v4834, %v5082
  %v5084 = vlaneseq
  %v5085 = vshrl.u32 %v5084, 7
  %v5086 = vsub.s32 %v4863, %v5085
  %v5087 = vrot.slane %v4837, %v5086
  %v5088 = vlaneseq
  %v5089 = vshrl.u32 %v5088, 7
  %v5090 = vsub.s32 %v4863, %v5089
  %v5091 = vrot.slane %v4840, %v5090
  %v5092 = vlaneseq
  %v5093 = vshrl.u32 %v5092, 7
  %v5094 = vsub.s32 %v4863, %v5093
  %v5095 = vrot.slane %v4843, %v5094
  %v5096 = vlaneseq
  %v5097 = vshrl.u32 %v5096, 7
  %v5098 = vsub.s32 %v4863, %v5097
  %v5099 = vrot.slane %v4846, %v5098
  %v5100 = vlaneseq
  %v5101 = vshrl.u32 %v5100, 7
  %v5102 = vsub.s32 %v4863, %v5101
  %v5103 = vrot.slane %v4849, %v5102
  %v5104 = vlaneseq
  %v5105 = vshrl.u32 %v5104, 7
  %v5106 = vsub.s32 %v4863, %v5105
  %v5107 = vrot.slane %v4852, %v5106
  %v5108 = vlaneseq
  %v5109 = vshrl.u32 %v5108, 7
  %v5110 = vsub.s32 %v4863, %v5109
  %v5111 = vrot.slane %v4855, %v5110
  %v5112 = vlaneseq
  %v5113 = vshrl.u32 %v5112, 7
  %v5114 = vsub.s32 %v4863, %v5113
  %v5115 = vrot.slane %v4858, %v5114
  %v5116 = vlaneseq
  %v5117 = vshrl.u32 %v5116, 7
  %v5118 = vsub.s32 %v4863, %v5117
  %v5119 = vrot.slane %v4861, %v5118
  %vm5120 = vcmask 1041409
  %v5121 = vsel %vm5120, %v4871, %v4867
  %vm5122 = vcmask 1042434
  %v5123 = vsel %vm5122, %v4875, %v5121
  %vm5124 = vcmask 1043459
  %v5125 = vsel %vm5124, %v4879, %v5123
  %vm5126 = vcmask 1044484
  %v5127 = vsel %vm5126, %v4883, %v5125
  %vm5128 = vcmask 1045509
  %v5129 = vsel %vm5128, %v4887, %v5127
  %vm5130 = vcmask 1046534
  %v5131 = vsel %vm5130, %v4891, %v5129
  %vm5132 = vcmask 1047559
  %v5133 = vsel %vm5132, %v4895, %v5131
  %v5134 = vsel %vm5120, %v4903, %v4899
  %v5135 = vsel %vm5122, %v4907, %v5134
  %v5136 = vsel %vm5124, %v4911, %v5135
  %v5137 = vsel %vm5126, %v4915, %v5136
  %v5138 = vsel %vm5128, %v4919, %v5137
  %v5139 = vsel %vm5130, %v4923, %v5138
  %v5140 = vsel %vm5132, %v4927, %v5139
  %v5141 = vsel %vm5120, %v4935, %v4931
  %v5142 = vsel %vm5122, %v4939, %v5141
  %v5143 = vsel %vm5124, %v4943, %v5142
  %v5144 = vsel %vm5126, %v4947, %v5143
  %v5145 = vsel %vm5128, %v4951, %v5144
  %v5146 = vsel %vm5130, %v4955, %v5145
  %v5147 = vsel %vm5132, %v4959, %v5146
  %v5148 = vsel %vm5120, %v4967, %v4963
  %v5149 = vsel %vm5122, %v4971, %v5148
  %v5150 = vsel %vm5124, %v4975, %v5149
  %v5151 = vsel %vm5126, %v4979, %v5150
  %v5152 = vsel %vm5128, %v4983, %v5151
  %v5153 = vsel %vm5130, %v4987, %v5152
  %v5154 = vsel %vm5132, %v4991, %v5153
  %v5155 = vsel %vm5120, %v4999, %v4995
  %v5156 = vsel %vm5122, %v5003, %v5155
  %v5157 = vsel %vm5124, %v5007, %v5156
  %v5158 = vsel %vm5126, %v5011, %v5157
  %v5159 = vsel %vm5128, %v5015, %v5158
  %v5160 = vsel %vm5130, %v5019, %v5159
  %v5161 = vsel %vm5132, %v5023, %v5160
  %v5162 = vsel %vm5120, %v5031, %v5027
  %v5163 = vsel %vm5122, %v5035, %v5162
  %v5164 = vsel %vm5124, %v5039, %v5163
  %v5165 = vsel %vm5126, %v5043, %v5164
  %v5166 = vsel %vm5128, %v5047, %v5165
  %v5167 = vsel %vm5130, %v5051, %v5166
  %v5168 = vsel %vm5132, %v5055, %v5167
  %v5169 = vsel %vm5120, %v5063, %v5059
  %v5170 = vsel %vm5122, %v5067, %v5169
  %v5171 = vsel %vm5124, %v5071, %v5170
  %v5172 = vsel %vm5126, %v5075, %v5171
  %v5173 = vsel %vm5128, %v5079, %v5172
  %v5174 = vsel %vm5130, %v5083, %v5173
  %v5175 = vsel %vm5132, %v5087, %v5174
  %v5176 = vsel %vm5120, %v5095, %v5091
  %v5177 = vsel %vm5122, %v5099, %v5176
  %v5178 = vsel %vm5124, %v5103, %v5177
  %v5179 = vsel %vm5126, %v5107, %v5178
  %v5180 = vsel %vm5128, %v5111, %v5179
  %v5181 = vsel %vm5130, %v5115, %v5180
  %v5182 = vsel %vm5132, %v5119, %v5181
  %v5191 = vsel %vm28, %v5133, -inf
  %5192 = vmax.xlane.f32.xlu0 %v5191
  %v5193 = vpop.xlane.xlu0 %5192
  %v5194 = vsel %vm28, %v5140, -inf
  %5195 = vmax.xlane.f32.xlu0 %v5194
  %v5196 = vpop.xlane.xlu0 %5195
  %v5197 = vsel %vm28, %v5147, -inf
  %5198 = vmax.xlane.f32.xlu0 %v5197
  %v5199 = vpop.xlane.xlu0 %5198
  %v5200 = vsel %vm28, %v5154, -inf
  %5201 = vmax.xlane.f32.xlu0 %v5200
  %v5202 = vpop.xlane.xlu0 %5201
  %v5203 = vsel %vm28, %v5161, -inf
  %5204 = vmax.xlane.f32.xlu0 %v5203
  %v5205 = vpop.xlane.xlu0 %5204
  %v5206 = vsel %vm28, %v5168, -inf
  %5207 = vmax.xlane.f32.xlu0 %v5206
  %v5208 = vpop.xlane.xlu0 %5207
  %v5209 = vsel %vm28, %v5175, -inf
  %5210 = vmax.xlane.f32.xlu0 %v5209
  %v5211 = vpop.xlane.xlu0 %5210
  %v5212 = vsel %vm28, %v5182, -inf
  %5213 = vmax.xlane.f32.xlu0 %v5212
  %v5214 = vpop.xlane.xlu0 %5213
  %v5223 = vlaneseq
  %v5224 = vshrl.u32 %v5223, 7
  %v5225 = vsub.s32 0, %v5224
  %v5226 = vrot.slane %v5193, %v5225
  %v5227 = vlaneseq
  %v5228 = vshrl.u32 %v5227, 7
  %v5229 = vsub.s32 1, %v5228
  %v5230 = vrot.slane %v5193, %v5229
  %v5231 = vlaneseq
  %v5232 = vshrl.u32 %v5231, 7
  %v5233 = vsub.s32 2, %v5232
  %v5234 = vrot.slane %v5193, %v5233
  %v5235 = vlaneseq
  %v5236 = vshrl.u32 %v5235, 7
  %v5237 = vsub.s32 3, %v5236
  %v5238 = vrot.slane %v5193, %v5237
  %v5239 = vlaneseq
  %v5240 = vshrl.u32 %v5239, 7
  %v5241 = vsub.s32 4, %v5240
  %v5242 = vrot.slane %v5193, %v5241
  %v5243 = vlaneseq
  %v5244 = vshrl.u32 %v5243, 7
  %v5245 = vsub.s32 5, %v5244
  %v5246 = vrot.slane %v5193, %v5245
  %v5247 = vlaneseq
  %v5248 = vshrl.u32 %v5247, 7
  %v5249 = vsub.s32 6, %v5248
  %v5250 = vrot.slane %v5193, %v5249
  %v5251 = vlaneseq
  %v5252 = vshrl.u32 %v5251, 7
  %v5253 = vsub.s32 7, %v5252
  %v5254 = vrot.slane %v5193, %v5253
  %v5255 = vlaneseq
  %v5256 = vshrl.u32 %v5255, 7
  %v5257 = vsub.s32 0, %v5256
  %v5258 = vrot.slane %v5196, %v5257
  %v5259 = vlaneseq
  %v5260 = vshrl.u32 %v5259, 7
  %v5261 = vsub.s32 1, %v5260
  %v5262 = vrot.slane %v5196, %v5261
  %v5263 = vlaneseq
  %v5264 = vshrl.u32 %v5263, 7
  %v5265 = vsub.s32 2, %v5264
  %v5266 = vrot.slane %v5196, %v5265
  %v5267 = vlaneseq
  %v5268 = vshrl.u32 %v5267, 7
  %v5269 = vsub.s32 3, %v5268
  %v5270 = vrot.slane %v5196, %v5269
  %v5271 = vlaneseq
  %v5272 = vshrl.u32 %v5271, 7
  %v5273 = vsub.s32 4, %v5272
  %v5274 = vrot.slane %v5196, %v5273
  %v5275 = vlaneseq
  %v5276 = vshrl.u32 %v5275, 7
  %v5277 = vsub.s32 5, %v5276
  %v5278 = vrot.slane %v5196, %v5277
  %v5279 = vlaneseq
  %v5280 = vshrl.u32 %v5279, 7
  %v5281 = vsub.s32 6, %v5280
  %v5282 = vrot.slane %v5196, %v5281
  %v5283 = vlaneseq
  %v5284 = vshrl.u32 %v5283, 7
  %v5285 = vsub.s32 7, %v5284
  %v5286 = vrot.slane %v5196, %v5285
  %v5287 = vlaneseq
  %v5288 = vshrl.u32 %v5287, 7
  %v5289 = vsub.s32 0, %v5288
  %v5290 = vrot.slane %v5199, %v5289
  %v5291 = vlaneseq
  %v5292 = vshrl.u32 %v5291, 7
  %v5293 = vsub.s32 1, %v5292
  %v5294 = vrot.slane %v5199, %v5293
  %v5295 = vlaneseq
  %v5296 = vshrl.u32 %v5295, 7
  %v5297 = vsub.s32 2, %v5296
  %v5298 = vrot.slane %v5199, %v5297
  %v5299 = vlaneseq
  %v5300 = vshrl.u32 %v5299, 7
  %v5301 = vsub.s32 3, %v5300
  %v5302 = vrot.slane %v5199, %v5301
  %v5303 = vlaneseq
  %v5304 = vshrl.u32 %v5303, 7
  %v5305 = vsub.s32 4, %v5304
  %v5306 = vrot.slane %v5199, %v5305
  %v5307 = vlaneseq
  %v5308 = vshrl.u32 %v5307, 7
  %v5309 = vsub.s32 5, %v5308
  %v5310 = vrot.slane %v5199, %v5309
  %v5311 = vlaneseq
  %v5312 = vshrl.u32 %v5311, 7
  %v5313 = vsub.s32 6, %v5312
  %v5314 = vrot.slane %v5199, %v5313
  %v5315 = vlaneseq
  %v5316 = vshrl.u32 %v5315, 7
  %v5317 = vsub.s32 7, %v5316
  %v5318 = vrot.slane %v5199, %v5317
  %v5319 = vlaneseq
  %v5320 = vshrl.u32 %v5319, 7
  %v5321 = vsub.s32 0, %v5320
  %v5322 = vrot.slane %v5202, %v5321
  %v5323 = vlaneseq
  %v5324 = vshrl.u32 %v5323, 7
  %v5325 = vsub.s32 1, %v5324
  %v5326 = vrot.slane %v5202, %v5325
  %v5327 = vlaneseq
  %v5328 = vshrl.u32 %v5327, 7
  %v5329 = vsub.s32 2, %v5328
  %v5330 = vrot.slane %v5202, %v5329
  %v5331 = vlaneseq
  %v5332 = vshrl.u32 %v5331, 7
  %v5333 = vsub.s32 3, %v5332
  %v5334 = vrot.slane %v5202, %v5333
  %v5335 = vlaneseq
  %v5336 = vshrl.u32 %v5335, 7
  %v5337 = vsub.s32 4, %v5336
  %v5338 = vrot.slane %v5202, %v5337
  %v5339 = vlaneseq
  %v5340 = vshrl.u32 %v5339, 7
  %v5341 = vsub.s32 5, %v5340
  %v5342 = vrot.slane %v5202, %v5341
  %v5343 = vlaneseq
  %v5344 = vshrl.u32 %v5343, 7
  %v5345 = vsub.s32 6, %v5344
  %v5346 = vrot.slane %v5202, %v5345
  %v5347 = vlaneseq
  %v5348 = vshrl.u32 %v5347, 7
  %v5349 = vsub.s32 7, %v5348
  %v5350 = vrot.slane %v5202, %v5349
  %v5351 = vlaneseq
  %v5352 = vshrl.u32 %v5351, 7
  %v5353 = vsub.s32 0, %v5352
  %v5354 = vrot.slane %v5205, %v5353
  %v5355 = vlaneseq
  %v5356 = vshrl.u32 %v5355, 7
  %v5357 = vsub.s32 1, %v5356
  %v5358 = vrot.slane %v5205, %v5357
  %v5359 = vlaneseq
  %v5360 = vshrl.u32 %v5359, 7
  %v5361 = vsub.s32 2, %v5360
  %v5362 = vrot.slane %v5205, %v5361
  %v5363 = vlaneseq
  %v5364 = vshrl.u32 %v5363, 7
  %v5365 = vsub.s32 3, %v5364
  %v5366 = vrot.slane %v5205, %v5365
  %v5367 = vlaneseq
  %v5368 = vshrl.u32 %v5367, 7
  %v5369 = vsub.s32 4, %v5368
  %v5370 = vrot.slane %v5205, %v5369
  %v5371 = vlaneseq
  %v5372 = vshrl.u32 %v5371, 7
  %v5373 = vsub.s32 5, %v5372
  %v5374 = vrot.slane %v5205, %v5373
  %v5375 = vlaneseq
  %v5376 = vshrl.u32 %v5375, 7
  %v5377 = vsub.s32 6, %v5376
  %v5378 = vrot.slane %v5205, %v5377
  %v5379 = vlaneseq
  %v5380 = vshrl.u32 %v5379, 7
  %v5381 = vsub.s32 7, %v5380
  %v5382 = vrot.slane %v5205, %v5381
  %v5383 = vlaneseq
  %v5384 = vshrl.u32 %v5383, 7
  %v5385 = vsub.s32 0, %v5384
  %v5386 = vrot.slane %v5208, %v5385
  %v5387 = vlaneseq
  %v5388 = vshrl.u32 %v5387, 7
  %v5389 = vsub.s32 1, %v5388
  %v5390 = vrot.slane %v5208, %v5389
  %v5391 = vlaneseq
  %v5392 = vshrl.u32 %v5391, 7
  %v5393 = vsub.s32 2, %v5392
  %v5394 = vrot.slane %v5208, %v5393
  %v5395 = vlaneseq
  %v5396 = vshrl.u32 %v5395, 7
  %v5397 = vsub.s32 3, %v5396
  %v5398 = vrot.slane %v5208, %v5397
  %v5399 = vlaneseq
  %v5400 = vshrl.u32 %v5399, 7
  %v5401 = vsub.s32 4, %v5400
  %v5402 = vrot.slane %v5208, %v5401
  %v5403 = vlaneseq
  %v5404 = vshrl.u32 %v5403, 7
  %v5405 = vsub.s32 5, %v5404
  %v5406 = vrot.slane %v5208, %v5405
  %v5407 = vlaneseq
  %v5408 = vshrl.u32 %v5407, 7
  %v5409 = vsub.s32 6, %v5408
  %v5410 = vrot.slane %v5208, %v5409
  %v5411 = vlaneseq
  %v5412 = vshrl.u32 %v5411, 7
  %v5413 = vsub.s32 7, %v5412
  %v5414 = vrot.slane %v5208, %v5413
  %v5415 = vlaneseq
  %v5416 = vshrl.u32 %v5415, 7
  %v5417 = vsub.s32 0, %v5416
  %v5418 = vrot.slane %v5211, %v5417
  %v5419 = vlaneseq
  %v5420 = vshrl.u32 %v5419, 7
  %v5421 = vsub.s32 1, %v5420
  %v5422 = vrot.slane %v5211, %v5421
  %v5423 = vlaneseq
  %v5424 = vshrl.u32 %v5423, 7
  %v5425 = vsub.s32 2, %v5424
  %v5426 = vrot.slane %v5211, %v5425
  %v5427 = vlaneseq
  %v5428 = vshrl.u32 %v5427, 7
  %v5429 = vsub.s32 3, %v5428
  %v5430 = vrot.slane %v5211, %v5429
  %v5431 = vlaneseq
  %v5432 = vshrl.u32 %v5431, 7
  %v5433 = vsub.s32 4, %v5432
  %v5434 = vrot.slane %v5211, %v5433
  %v5435 = vlaneseq
  %v5436 = vshrl.u32 %v5435, 7
  %v5437 = vsub.s32 5, %v5436
  %v5438 = vrot.slane %v5211, %v5437
  %v5439 = vlaneseq
  %v5440 = vshrl.u32 %v5439, 7
  %v5441 = vsub.s32 6, %v5440
  %v5442 = vrot.slane %v5211, %v5441
  %v5443 = vlaneseq
  %v5444 = vshrl.u32 %v5443, 7
  %v5445 = vsub.s32 7, %v5444
  %v5446 = vrot.slane %v5211, %v5445
  %v5447 = vlaneseq
  %v5448 = vshrl.u32 %v5447, 7
  %v5449 = vsub.s32 0, %v5448
  %v5450 = vrot.slane %v5214, %v5449
  %v5451 = vlaneseq
  %v5452 = vshrl.u32 %v5451, 7
  %v5453 = vsub.s32 1, %v5452
  %v5454 = vrot.slane %v5214, %v5453
  %v5455 = vlaneseq
  %v5456 = vshrl.u32 %v5455, 7
  %v5457 = vsub.s32 2, %v5456
  %v5458 = vrot.slane %v5214, %v5457
  %v5459 = vlaneseq
  %v5460 = vshrl.u32 %v5459, 7
  %v5461 = vsub.s32 3, %v5460
  %v5462 = vrot.slane %v5214, %v5461
  %v5463 = vlaneseq
  %v5464 = vshrl.u32 %v5463, 7
  %v5465 = vsub.s32 4, %v5464
  %v5466 = vrot.slane %v5214, %v5465
  %v5467 = vlaneseq
  %v5468 = vshrl.u32 %v5467, 7
  %v5469 = vsub.s32 5, %v5468
  %v5470 = vrot.slane %v5214, %v5469
  %v5471 = vlaneseq
  %v5472 = vshrl.u32 %v5471, 7
  %v5473 = vsub.s32 6, %v5472
  %v5474 = vrot.slane %v5214, %v5473
  %v5475 = vlaneseq
  %v5476 = vshrl.u32 %v5475, 7
  %v5477 = vsub.s32 7, %v5476
  %v5478 = vrot.slane %v5214, %v5477
  %v5543 = vsub.f32 %v4542, %v5226
  %v5544 = vsub.f32 %v4543, %v5230
  %v5545 = vsub.f32 %v4544, %v5234
  %v5546 = vsub.f32 %v4545, %v5238
  %v5547 = vsub.f32 %v4546, %v5242
  %v5548 = vsub.f32 %v4547, %v5246
  %v5549 = vsub.f32 %v4548, %v5250
  %v5550 = vsub.f32 %v4549, %v5254
  %v5551 = vsub.f32 %v4550, %v5258
  %v5552 = vsub.f32 %v4551, %v5262
  %v5553 = vsub.f32 %v4552, %v5266
  %v5554 = vsub.f32 %v4553, %v5270
  %v5555 = vsub.f32 %v4554, %v5274
  %v5556 = vsub.f32 %v4555, %v5278
  %v5557 = vsub.f32 %v4556, %v5282
  %v5558 = vsub.f32 %v4557, %v5286
  %v5559 = vsub.f32 %v4558, %v5290
  %v5560 = vsub.f32 %v4559, %v5294
  %v5561 = vsub.f32 %v4560, %v5298
  %v5562 = vsub.f32 %v4561, %v5302
  %v5563 = vsub.f32 %v4562, %v5306
  %v5564 = vsub.f32 %v4563, %v5310
  %v5565 = vsub.f32 %v4564, %v5314
  %v5566 = vsub.f32 %v4565, %v5318
  %v5567 = vsub.f32 %v4566, %v5322
  %v5568 = vsub.f32 %v4567, %v5326
  %v5569 = vsub.f32 %v4568, %v5330
  %v5570 = vsub.f32 %v4569, %v5334
  %v5571 = vsub.f32 %v4570, %v5338
  %v5572 = vsub.f32 %v4571, %v5342
  %v5573 = vsub.f32 %v4572, %v5346
  %v5574 = vsub.f32 %v4573, %v5350
  %v5575 = vsub.f32 %v4574, %v5354
  %v5576 = vsub.f32 %v4575, %v5358
  %v5577 = vsub.f32 %v4576, %v5362
  %v5578 = vsub.f32 %v4577, %v5366
  %v5579 = vsub.f32 %v4578, %v5370
  %v5580 = vsub.f32 %v4579, %v5374
  %v5581 = vsub.f32 %v4580, %v5378
  %v5582 = vsub.f32 %v4581, %v5382
  %v5583 = vsub.f32 %v4582, %v5386
  %v5584 = vsub.f32 %v4583, %v5390
  %v5585 = vsub.f32 %v4584, %v5394
  %v5586 = vsub.f32 %v4585, %v5398
  %v5587 = vsub.f32 %v4586, %v5402
  %v5588 = vsub.f32 %v4587, %v5406
  %v5589 = vsub.f32 %v4588, %v5410
  %v5590 = vsub.f32 %v4589, %v5414
  %v5591 = vsub.f32 %v4590, %v5418
  %v5592 = vsub.f32 %v4591, %v5422
  %v5593 = vsub.f32 %v4592, %v5426
  %v5594 = vsub.f32 %v4593, %v5430
  %v5595 = vsub.f32 %v4594, %v5434
  %v5596 = vsub.f32 %v4595, %v5438
  %v5597 = vsub.f32 %v4596, %v5442
  %v5598 = vsub.f32 %v4597, %v5446
  %v5599 = vsub.f32 %v4598, %v5450
  %v5600 = vsub.f32 %v4599, %v5454
  %v5601 = vsub.f32 %v4600, %v5458
  %v5602 = vsub.f32 %v4601, %v5462
  %v5603 = vsub.f32 %v4602, %v5466
  %v5604 = vsub.f32 %v4603, %v5470
  %v5605 = vsub.f32 %v4604, %v5474
  %v5606 = vsub.f32 %v4605, %v5478
  %v5607 = vmul.f32 %v5543, 1.442695
  %v5608 = vpow.pop %v5607
  %v5609 = vmul.f32 %v5544, 1.442695
  %v5610 = vpow.pop %v5609
  %v5611 = vmul.f32 %v5545, 1.442695
  %v5612 = vpow.pop %v5611
  %v5613 = vmul.f32 %v5546, 1.442695
  %v5614 = vpow.pop %v5613
  %v5615 = vmul.f32 %v5547, 1.442695
  %v5616 = vpow.pop %v5615
  %v5617 = vmul.f32 %v5548, 1.442695
  %v5618 = vpow.pop %v5617
  %v5619 = vmul.f32 %v5549, 1.442695
  %v5620 = vpow.pop %v5619
  %v5621 = vmul.f32 %v5550, 1.442695
  %v5622 = vpow.pop %v5621
  %v5623 = vmul.f32 %v5551, 1.442695
  %v5624 = vpow.pop %v5623
  %v5625 = vmul.f32 %v5552, 1.442695
  %v5626 = vpow.pop %v5625
  %v5627 = vmul.f32 %v5553, 1.442695
  %v5628 = vpow.pop %v5627
  %v5629 = vmul.f32 %v5554, 1.442695
  %v5630 = vpow.pop %v5629
  %v5631 = vmul.f32 %v5555, 1.442695
  %v5632 = vpow.pop %v5631
  %v5633 = vmul.f32 %v5556, 1.442695
  %v5634 = vpow.pop %v5633
  %v5635 = vmul.f32 %v5557, 1.442695
  %v5636 = vpow.pop %v5635
  %v5637 = vmul.f32 %v5558, 1.442695
  %v5638 = vpow.pop %v5637
  %v5639 = vmul.f32 %v5559, 1.442695
  %v5640 = vpow.pop %v5639
  %v5641 = vmul.f32 %v5560, 1.442695
  %v5642 = vpow.pop %v5641
  %v5643 = vmul.f32 %v5561, 1.442695
  %v5644 = vpow.pop %v5643
  %v5645 = vmul.f32 %v5562, 1.442695
  %v5646 = vpow.pop %v5645
  %v5647 = vmul.f32 %v5563, 1.442695
  %v5648 = vpow.pop %v5647
  %v5649 = vmul.f32 %v5564, 1.442695
  %v5650 = vpow.pop %v5649
  %v5651 = vmul.f32 %v5565, 1.442695
  %v5652 = vpow.pop %v5651
  %v5653 = vmul.f32 %v5566, 1.442695
  %v5654 = vpow.pop %v5653
  %v5655 = vmul.f32 %v5567, 1.442695
  %v5656 = vpow.pop %v5655
  %v5657 = vmul.f32 %v5568, 1.442695
  %v5658 = vpow.pop %v5657
  %v5659 = vmul.f32 %v5569, 1.442695
  %v5660 = vpow.pop %v5659
  %v5661 = vmul.f32 %v5570, 1.442695
  %v5662 = vpow.pop %v5661
  %v5663 = vmul.f32 %v5571, 1.442695
  %v5664 = vpow.pop %v5663
  %v5665 = vmul.f32 %v5572, 1.442695
  %v5666 = vpow.pop %v5665
  %v5667 = vmul.f32 %v5573, 1.442695
  %v5668 = vpow.pop %v5667
  %v5669 = vmul.f32 %v5574, 1.442695
  %v5670 = vpow.pop %v5669
  %v5671 = vmul.f32 %v5575, 1.442695
  %v5672 = vpow.pop %v5671
  %v5673 = vmul.f32 %v5576, 1.442695
  %v5674 = vpow.pop %v5673
  %v5675 = vmul.f32 %v5577, 1.442695
  %v5676 = vpow.pop %v5675
  %v5677 = vmul.f32 %v5578, 1.442695
  %v5678 = vpow.pop %v5677
  %v5679 = vmul.f32 %v5579, 1.442695
  %v5680 = vpow.pop %v5679
  %v5681 = vmul.f32 %v5580, 1.442695
  %v5682 = vpow.pop %v5681
  %v5683 = vmul.f32 %v5581, 1.442695
  %v5684 = vpow.pop %v5683
  %v5685 = vmul.f32 %v5582, 1.442695
  %v5686 = vpow.pop %v5685
  %v5687 = vmul.f32 %v5583, 1.442695
  %v5688 = vpow.pop %v5687
  %v5689 = vmul.f32 %v5584, 1.442695
  %v5690 = vpow.pop %v5689
  %v5691 = vmul.f32 %v5585, 1.442695
  %v5692 = vpow.pop %v5691
  %v5693 = vmul.f32 %v5586, 1.442695
  %v5694 = vpow.pop %v5693
  %v5695 = vmul.f32 %v5587, 1.442695
  %v5696 = vpow.pop %v5695
  %v5697 = vmul.f32 %v5588, 1.442695
  %v5698 = vpow.pop %v5697
  %v5699 = vmul.f32 %v5589, 1.442695
  %v5700 = vpow.pop %v5699
  %v5701 = vmul.f32 %v5590, 1.442695
  %v5702 = vpow.pop %v5701
  %v5703 = vmul.f32 %v5591, 1.442695
  %v5704 = vpow.pop %v5703
  %v5705 = vmul.f32 %v5592, 1.442695
  %v5706 = vpow.pop %v5705
  %v5707 = vmul.f32 %v5593, 1.442695
  %v5708 = vpow.pop %v5707
  %v5709 = vmul.f32 %v5594, 1.442695
  %v5710 = vpow.pop %v5709
  %v5711 = vmul.f32 %v5595, 1.442695
  %v5712 = vpow.pop %v5711
  %v5713 = vmul.f32 %v5596, 1.442695
  %v5714 = vpow.pop %v5713
  %v5715 = vmul.f32 %v5597, 1.442695
  %v5716 = vpow.pop %v5715
  %v5717 = vmul.f32 %v5598, 1.442695
  %v5718 = vpow.pop %v5717
  %v5719 = vmul.f32 %v5599, 1.442695
  %v5720 = vpow.pop %v5719
  %v5721 = vmul.f32 %v5600, 1.442695
  %v5722 = vpow.pop %v5721
  %v5723 = vmul.f32 %v5601, 1.442695
  %v5724 = vpow.pop %v5723
  %v5725 = vmul.f32 %v5602, 1.442695
  %v5726 = vpow.pop %v5725
  %v5727 = vmul.f32 %v5603, 1.442695
  %v5728 = vpow.pop %v5727
  %v5729 = vmul.f32 %v5604, 1.442695
  %v5730 = vpow.pop %v5729
  %v5731 = vmul.f32 %v5605, 1.442695
  %v5732 = vpow.pop %v5731
  %v5733 = vmul.f32 %v5606, 1.442695
  %v5734 = vpow.pop %v5733
  %5799 = vset.pattern.permute.xlu0 0
  %5800 = vperm.xlu0 %5799, %v5608
  %v5801 = vpop.permute.xlu0 %5800
  %5802 = vset.pattern.permute.xlu0 0
  %5803 = vperm.xlu0 %5802, %v5610
  %v5804 = vpop.permute.xlu0 %5803
  %5805 = vset.pattern.permute.xlu0 0
  %5806 = vperm.xlu0 %5805, %v5612
  %v5807 = vpop.permute.xlu0 %5806
  %5808 = vset.pattern.permute.xlu0 0
  %5809 = vperm.xlu0 %5808, %v5614
  %v5810 = vpop.permute.xlu0 %5809
  %5811 = vset.pattern.permute.xlu0 0
  %5812 = vperm.xlu0 %5811, %v5616
  %v5813 = vpop.permute.xlu0 %5812
  %5814 = vset.pattern.permute.xlu0 0
  %5815 = vperm.xlu0 %5814, %v5618
  %v5816 = vpop.permute.xlu0 %5815
  %5817 = vset.pattern.permute.xlu0 0
  %5818 = vperm.xlu0 %5817, %v5620
  %v5819 = vpop.permute.xlu0 %5818
  %5820 = vset.pattern.permute.xlu0 0
  %5821 = vperm.xlu0 %5820, %v5622
  %v5822 = vpop.permute.xlu0 %5821
  %5823 = vset.pattern.permute.xlu0 0
  %5824 = vperm.xlu0 %5823, %v5624
  %v5825 = vpop.permute.xlu0 %5824
  %5826 = vset.pattern.permute.xlu0 0
  %5827 = vperm.xlu0 %5826, %v5626
  %v5828 = vpop.permute.xlu0 %5827
  %5829 = vset.pattern.permute.xlu0 0
  %5830 = vperm.xlu0 %5829, %v5628
  %v5831 = vpop.permute.xlu0 %5830
  %5832 = vset.pattern.permute.xlu0 0
  %5833 = vperm.xlu0 %5832, %v5630
  %v5834 = vpop.permute.xlu0 %5833
  %5835 = vset.pattern.permute.xlu0 0
  %5836 = vperm.xlu0 %5835, %v5632
  %v5837 = vpop.permute.xlu0 %5836
  %5838 = vset.pattern.permute.xlu0 0
  %5839 = vperm.xlu0 %5838, %v5634
  %v5840 = vpop.permute.xlu0 %5839
  %5841 = vset.pattern.permute.xlu0 0
  %5842 = vperm.xlu0 %5841, %v5636
  %v5843 = vpop.permute.xlu0 %5842
  %5844 = vset.pattern.permute.xlu0 0
  %5845 = vperm.xlu0 %5844, %v5638
  %v5846 = vpop.permute.xlu0 %5845
  %5847 = vset.pattern.permute.xlu0 0
  %5848 = vperm.xlu0 %5847, %v5640
  %v5849 = vpop.permute.xlu0 %5848
  %5850 = vset.pattern.permute.xlu0 0
  %5851 = vperm.xlu0 %5850, %v5642
  %v5852 = vpop.permute.xlu0 %5851
  %5853 = vset.pattern.permute.xlu0 0
  %5854 = vperm.xlu0 %5853, %v5644
  %v5855 = vpop.permute.xlu0 %5854
  %5856 = vset.pattern.permute.xlu0 0
  %5857 = vperm.xlu0 %5856, %v5646
  %v5858 = vpop.permute.xlu0 %5857
  %5859 = vset.pattern.permute.xlu0 0
  %5860 = vperm.xlu0 %5859, %v5648
  %v5861 = vpop.permute.xlu0 %5860
  %5862 = vset.pattern.permute.xlu0 0
  %5863 = vperm.xlu0 %5862, %v5650
  %v5864 = vpop.permute.xlu0 %5863
  %5865 = vset.pattern.permute.xlu0 0
  %5866 = vperm.xlu0 %5865, %v5652
  %v5867 = vpop.permute.xlu0 %5866
  %5868 = vset.pattern.permute.xlu0 0
  %5869 = vperm.xlu0 %5868, %v5654
  %v5870 = vpop.permute.xlu0 %5869
  %5871 = vset.pattern.permute.xlu0 0
  %5872 = vperm.xlu0 %5871, %v5656
  %v5873 = vpop.permute.xlu0 %5872
  %5874 = vset.pattern.permute.xlu0 0
  %5875 = vperm.xlu0 %5874, %v5658
  %v5876 = vpop.permute.xlu0 %5875
  %5877 = vset.pattern.permute.xlu0 0
  %5878 = vperm.xlu0 %5877, %v5660
  %v5879 = vpop.permute.xlu0 %5878
  %5880 = vset.pattern.permute.xlu0 0
  %5881 = vperm.xlu0 %5880, %v5662
  %v5882 = vpop.permute.xlu0 %5881
  %5883 = vset.pattern.permute.xlu0 0
  %5884 = vperm.xlu0 %5883, %v5664
  %v5885 = vpop.permute.xlu0 %5884
  %5886 = vset.pattern.permute.xlu0 0
  %5887 = vperm.xlu0 %5886, %v5666
  %v5888 = vpop.permute.xlu0 %5887
  %5889 = vset.pattern.permute.xlu0 0
  %5890 = vperm.xlu0 %5889, %v5668
  %v5891 = vpop.permute.xlu0 %5890
  %5892 = vset.pattern.permute.xlu0 0
  %5893 = vperm.xlu0 %5892, %v5670
  %v5894 = vpop.permute.xlu0 %5893
  %5895 = vset.pattern.permute.xlu0 0
  %5896 = vperm.xlu0 %5895, %v5672
  %v5897 = vpop.permute.xlu0 %5896
  %5898 = vset.pattern.permute.xlu0 0
  %5899 = vperm.xlu0 %5898, %v5674
  %v5900 = vpop.permute.xlu0 %5899
  %5901 = vset.pattern.permute.xlu0 0
  %5902 = vperm.xlu0 %5901, %v5676
  %v5903 = vpop.permute.xlu0 %5902
  %5904 = vset.pattern.permute.xlu0 0
  %5905 = vperm.xlu0 %5904, %v5678
  %v5906 = vpop.permute.xlu0 %5905
  %5907 = vset.pattern.permute.xlu0 0
  %5908 = vperm.xlu0 %5907, %v5680
  %v5909 = vpop.permute.xlu0 %5908
  %5910 = vset.pattern.permute.xlu0 0
  %5911 = vperm.xlu0 %5910, %v5682
  %v5912 = vpop.permute.xlu0 %5911
  %5913 = vset.pattern.permute.xlu0 0
  %5914 = vperm.xlu0 %5913, %v5684
  %v5915 = vpop.permute.xlu0 %5914
  %5916 = vset.pattern.permute.xlu0 0
  %5917 = vperm.xlu0 %5916, %v5686
  %v5918 = vpop.permute.xlu0 %5917
  %5919 = vset.pattern.permute.xlu0 0
  %5920 = vperm.xlu0 %5919, %v5688
  %v5921 = vpop.permute.xlu0 %5920
  %5922 = vset.pattern.permute.xlu0 0
  %5923 = vperm.xlu0 %5922, %v5690
  %v5924 = vpop.permute.xlu0 %5923
  %5925 = vset.pattern.permute.xlu0 0
  %5926 = vperm.xlu0 %5925, %v5692
  %v5927 = vpop.permute.xlu0 %5926
  %5928 = vset.pattern.permute.xlu0 0
  %5929 = vperm.xlu0 %5928, %v5694
  %v5930 = vpop.permute.xlu0 %5929
  %5931 = vset.pattern.permute.xlu0 0
  %5932 = vperm.xlu0 %5931, %v5696
  %v5933 = vpop.permute.xlu0 %5932
  %5934 = vset.pattern.permute.xlu0 0
  %5935 = vperm.xlu0 %5934, %v5698
  %v5936 = vpop.permute.xlu0 %5935
  %5937 = vset.pattern.permute.xlu0 0
  %5938 = vperm.xlu0 %5937, %v5700
  %v5939 = vpop.permute.xlu0 %5938
  %5940 = vset.pattern.permute.xlu0 0
  %5941 = vperm.xlu0 %5940, %v5702
  %v5942 = vpop.permute.xlu0 %5941
  %5943 = vset.pattern.permute.xlu0 0
  %5944 = vperm.xlu0 %5943, %v5704
  %v5945 = vpop.permute.xlu0 %5944
  %5946 = vset.pattern.permute.xlu0 0
  %5947 = vperm.xlu0 %5946, %v5706
  %v5948 = vpop.permute.xlu0 %5947
  %5949 = vset.pattern.permute.xlu0 0
  %5950 = vperm.xlu0 %5949, %v5708
  %v5951 = vpop.permute.xlu0 %5950
  %5952 = vset.pattern.permute.xlu0 0
  %5953 = vperm.xlu0 %5952, %v5710
  %v5954 = vpop.permute.xlu0 %5953
  %5955 = vset.pattern.permute.xlu0 0
  %5956 = vperm.xlu0 %5955, %v5712
  %v5957 = vpop.permute.xlu0 %5956
  %5958 = vset.pattern.permute.xlu0 0
  %5959 = vperm.xlu0 %5958, %v5714
  %v5960 = vpop.permute.xlu0 %5959
  %5961 = vset.pattern.permute.xlu0 0
  %5962 = vperm.xlu0 %5961, %v5716
  %v5963 = vpop.permute.xlu0 %5962
  %5964 = vset.pattern.permute.xlu0 0
  %5965 = vperm.xlu0 %5964, %v5718
  %v5966 = vpop.permute.xlu0 %5965
  %5967 = vset.pattern.permute.xlu0 0
  %5968 = vperm.xlu0 %5967, %v5720
  %v5969 = vpop.permute.xlu0 %5968
  %5970 = vset.pattern.permute.xlu0 0
  %5971 = vperm.xlu0 %5970, %v5722
  %v5972 = vpop.permute.xlu0 %5971
  %5973 = vset.pattern.permute.xlu0 0
  %5974 = vperm.xlu0 %5973, %v5724
  %v5975 = vpop.permute.xlu0 %5974
  %5976 = vset.pattern.permute.xlu0 0
  %5977 = vperm.xlu0 %5976, %v5726
  %v5978 = vpop.permute.xlu0 %5977
  %5979 = vset.pattern.permute.xlu0 0
  %5980 = vperm.xlu0 %5979, %v5728
  %v5981 = vpop.permute.xlu0 %5980
  %5982 = vset.pattern.permute.xlu0 0
  %5983 = vperm.xlu0 %5982, %v5730
  %v5984 = vpop.permute.xlu0 %5983
  %5985 = vset.pattern.permute.xlu0 0
  %5986 = vperm.xlu0 %5985, %v5732
  %v5987 = vpop.permute.xlu0 %5986
  %5988 = vset.pattern.permute.xlu0 0
  %5989 = vperm.xlu0 %5988, %v5734
  %v5990 = vpop.permute.xlu0 %5989
  %v5991 = vlaneseq
  %v5992 = vshrl.u32 %v5991, 7
  %v5993 = vsub.s32 %v4863, %v5992
  %v5994 = vrot.slane %v5801, %v5993
  %v5995 = vlaneseq
  %v5996 = vshrl.u32 %v5995, 7
  %v5997 = vsub.s32 %v4863, %v5996
  %v5998 = vrot.slane %v5804, %v5997
  %v5999 = vlaneseq
  %v6000 = vshrl.u32 %v5999, 7
  %v6001 = vsub.s32 %v4863, %v6000
  %v6002 = vrot.slane %v5807, %v6001
  %v6003 = vlaneseq
  %v6004 = vshrl.u32 %v6003, 7
  %v6005 = vsub.s32 %v4863, %v6004
  %v6006 = vrot.slane %v5810, %v6005
  %v6007 = vlaneseq
  %v6008 = vshrl.u32 %v6007, 7
  %v6009 = vsub.s32 %v4863, %v6008
  %v6010 = vrot.slane %v5813, %v6009
  %v6011 = vlaneseq
  %v6012 = vshrl.u32 %v6011, 7
  %v6013 = vsub.s32 %v4863, %v6012
  %v6014 = vrot.slane %v5816, %v6013
  %v6015 = vlaneseq
  %v6016 = vshrl.u32 %v6015, 7
  %v6017 = vsub.s32 %v4863, %v6016
  %v6018 = vrot.slane %v5819, %v6017
  %v6019 = vlaneseq
  %v6020 = vshrl.u32 %v6019, 7
  %v6021 = vsub.s32 %v4863, %v6020
  %v6022 = vrot.slane %v5822, %v6021
  %v6023 = vlaneseq
  %v6024 = vshrl.u32 %v6023, 7
  %v6025 = vsub.s32 %v4863, %v6024
  %v6026 = vrot.slane %v5825, %v6025
  %v6027 = vlaneseq
  %v6028 = vshrl.u32 %v6027, 7
  %v6029 = vsub.s32 %v4863, %v6028
  %v6030 = vrot.slane %v5828, %v6029
  %v6031 = vlaneseq
  %v6032 = vshrl.u32 %v6031, 7
  %v6033 = vsub.s32 %v4863, %v6032
  %v6034 = vrot.slane %v5831, %v6033
  %v6035 = vlaneseq
  %v6036 = vshrl.u32 %v6035, 7
  %v6037 = vsub.s32 %v4863, %v6036
  %v6038 = vrot.slane %v5834, %v6037
  %v6039 = vlaneseq
  %v6040 = vshrl.u32 %v6039, 7
  %v6041 = vsub.s32 %v4863, %v6040
  %v6042 = vrot.slane %v5837, %v6041
  %v6043 = vlaneseq
  %v6044 = vshrl.u32 %v6043, 7
  %v6045 = vsub.s32 %v4863, %v6044
  %v6046 = vrot.slane %v5840, %v6045
  %v6047 = vlaneseq
  %v6048 = vshrl.u32 %v6047, 7
  %v6049 = vsub.s32 %v4863, %v6048
  %v6050 = vrot.slane %v5843, %v6049
  %v6051 = vlaneseq
  %v6052 = vshrl.u32 %v6051, 7
  %v6053 = vsub.s32 %v4863, %v6052
  %v6054 = vrot.slane %v5846, %v6053
  %v6055 = vlaneseq
  %v6056 = vshrl.u32 %v6055, 7
  %v6057 = vsub.s32 %v4863, %v6056
  %v6058 = vrot.slane %v5849, %v6057
  %v6059 = vlaneseq
  %v6060 = vshrl.u32 %v6059, 7
  %v6061 = vsub.s32 %v4863, %v6060
  %v6062 = vrot.slane %v5852, %v6061
  %v6063 = vlaneseq
  %v6064 = vshrl.u32 %v6063, 7
  %v6065 = vsub.s32 %v4863, %v6064
  %v6066 = vrot.slane %v5855, %v6065
  %v6067 = vlaneseq
  %v6068 = vshrl.u32 %v6067, 7
  %v6069 = vsub.s32 %v4863, %v6068
  %v6070 = vrot.slane %v5858, %v6069
  %v6071 = vlaneseq
  %v6072 = vshrl.u32 %v6071, 7
  %v6073 = vsub.s32 %v4863, %v6072
  %v6074 = vrot.slane %v5861, %v6073
  %v6075 = vlaneseq
  %v6076 = vshrl.u32 %v6075, 7
  %v6077 = vsub.s32 %v4863, %v6076
  %v6078 = vrot.slane %v5864, %v6077
  %v6079 = vlaneseq
  %v6080 = vshrl.u32 %v6079, 7
  %v6081 = vsub.s32 %v4863, %v6080
  %v6082 = vrot.slane %v5867, %v6081
  %v6083 = vlaneseq
  %v6084 = vshrl.u32 %v6083, 7
  %v6085 = vsub.s32 %v4863, %v6084
  %v6086 = vrot.slane %v5870, %v6085
  %v6087 = vlaneseq
  %v6088 = vshrl.u32 %v6087, 7
  %v6089 = vsub.s32 %v4863, %v6088
  %v6090 = vrot.slane %v5873, %v6089
  %v6091 = vlaneseq
  %v6092 = vshrl.u32 %v6091, 7
  %v6093 = vsub.s32 %v4863, %v6092
  %v6094 = vrot.slane %v5876, %v6093
  %v6095 = vlaneseq
  %v6096 = vshrl.u32 %v6095, 7
  %v6097 = vsub.s32 %v4863, %v6096
  %v6098 = vrot.slane %v5879, %v6097
  %v6099 = vlaneseq
  %v6100 = vshrl.u32 %v6099, 7
  %v6101 = vsub.s32 %v4863, %v6100
  %v6102 = vrot.slane %v5882, %v6101
  %v6103 = vlaneseq
  %v6104 = vshrl.u32 %v6103, 7
  %v6105 = vsub.s32 %v4863, %v6104
  %v6106 = vrot.slane %v5885, %v6105
  %v6107 = vlaneseq
  %v6108 = vshrl.u32 %v6107, 7
  %v6109 = vsub.s32 %v4863, %v6108
  %v6110 = vrot.slane %v5888, %v6109
  %v6111 = vlaneseq
  %v6112 = vshrl.u32 %v6111, 7
  %v6113 = vsub.s32 %v4863, %v6112
  %v6114 = vrot.slane %v5891, %v6113
  %v6115 = vlaneseq
  %v6116 = vshrl.u32 %v6115, 7
  %v6117 = vsub.s32 %v4863, %v6116
  %v6118 = vrot.slane %v5894, %v6117
  %v6119 = vlaneseq
  %v6120 = vshrl.u32 %v6119, 7
  %v6121 = vsub.s32 %v4863, %v6120
  %v6122 = vrot.slane %v5897, %v6121
  %v6123 = vlaneseq
  %v6124 = vshrl.u32 %v6123, 7
  %v6125 = vsub.s32 %v4863, %v6124
  %v6126 = vrot.slane %v5900, %v6125
  %v6127 = vlaneseq
  %v6128 = vshrl.u32 %v6127, 7
  %v6129 = vsub.s32 %v4863, %v6128
  %v6130 = vrot.slane %v5903, %v6129
  %v6131 = vlaneseq
  %v6132 = vshrl.u32 %v6131, 7
  %v6133 = vsub.s32 %v4863, %v6132
  %v6134 = vrot.slane %v5906, %v6133
  %v6135 = vlaneseq
  %v6136 = vshrl.u32 %v6135, 7
  %v6137 = vsub.s32 %v4863, %v6136
  %v6138 = vrot.slane %v5909, %v6137
  %v6139 = vlaneseq
  %v6140 = vshrl.u32 %v6139, 7
  %v6141 = vsub.s32 %v4863, %v6140
  %v6142 = vrot.slane %v5912, %v6141
  %v6143 = vlaneseq
  %v6144 = vshrl.u32 %v6143, 7
  %v6145 = vsub.s32 %v4863, %v6144
  %v6146 = vrot.slane %v5915, %v6145
  %v6147 = vlaneseq
  %v6148 = vshrl.u32 %v6147, 7
  %v6149 = vsub.s32 %v4863, %v6148
  %v6150 = vrot.slane %v5918, %v6149
  %v6151 = vlaneseq
  %v6152 = vshrl.u32 %v6151, 7
  %v6153 = vsub.s32 %v4863, %v6152
  %v6154 = vrot.slane %v5921, %v6153
  %v6155 = vlaneseq
  %v6156 = vshrl.u32 %v6155, 7
  %v6157 = vsub.s32 %v4863, %v6156
  %v6158 = vrot.slane %v5924, %v6157
  %v6159 = vlaneseq
  %v6160 = vshrl.u32 %v6159, 7
  %v6161 = vsub.s32 %v4863, %v6160
  %v6162 = vrot.slane %v5927, %v6161
  %v6163 = vlaneseq
  %v6164 = vshrl.u32 %v6163, 7
  %v6165 = vsub.s32 %v4863, %v6164
  %v6166 = vrot.slane %v5930, %v6165
  %v6167 = vlaneseq
  %v6168 = vshrl.u32 %v6167, 7
  %v6169 = vsub.s32 %v4863, %v6168
  %v6170 = vrot.slane %v5933, %v6169
  %v6171 = vlaneseq
  %v6172 = vshrl.u32 %v6171, 7
  %v6173 = vsub.s32 %v4863, %v6172
  %v6174 = vrot.slane %v5936, %v6173
  %v6175 = vlaneseq
  %v6176 = vshrl.u32 %v6175, 7
  %v6177 = vsub.s32 %v4863, %v6176
  %v6178 = vrot.slane %v5939, %v6177
  %v6179 = vlaneseq
  %v6180 = vshrl.u32 %v6179, 7
  %v6181 = vsub.s32 %v4863, %v6180
  %v6182 = vrot.slane %v5942, %v6181
  %v6183 = vlaneseq
  %v6184 = vshrl.u32 %v6183, 7
  %v6185 = vsub.s32 %v4863, %v6184
  %v6186 = vrot.slane %v5945, %v6185
  %v6187 = vlaneseq
  %v6188 = vshrl.u32 %v6187, 7
  %v6189 = vsub.s32 %v4863, %v6188
  %v6190 = vrot.slane %v5948, %v6189
  %v6191 = vlaneseq
  %v6192 = vshrl.u32 %v6191, 7
  %v6193 = vsub.s32 %v4863, %v6192
  %v6194 = vrot.slane %v5951, %v6193
  %v6195 = vlaneseq
  %v6196 = vshrl.u32 %v6195, 7
  %v6197 = vsub.s32 %v4863, %v6196
  %v6198 = vrot.slane %v5954, %v6197
  %v6199 = vlaneseq
  %v6200 = vshrl.u32 %v6199, 7
  %v6201 = vsub.s32 %v4863, %v6200
  %v6202 = vrot.slane %v5957, %v6201
  %v6203 = vlaneseq
  %v6204 = vshrl.u32 %v6203, 7
  %v6205 = vsub.s32 %v4863, %v6204
  %v6206 = vrot.slane %v5960, %v6205
  %v6207 = vlaneseq
  %v6208 = vshrl.u32 %v6207, 7
  %v6209 = vsub.s32 %v4863, %v6208
  %v6210 = vrot.slane %v5963, %v6209
  %v6211 = vlaneseq
  %v6212 = vshrl.u32 %v6211, 7
  %v6213 = vsub.s32 %v4863, %v6212
  %v6214 = vrot.slane %v5966, %v6213
  %v6215 = vlaneseq
  %v6216 = vshrl.u32 %v6215, 7
  %v6217 = vsub.s32 %v4863, %v6216
  %v6218 = vrot.slane %v5969, %v6217
  %v6219 = vlaneseq
  %v6220 = vshrl.u32 %v6219, 7
  %v6221 = vsub.s32 %v4863, %v6220
  %v6222 = vrot.slane %v5972, %v6221
  %v6223 = vlaneseq
  %v6224 = vshrl.u32 %v6223, 7
  %v6225 = vsub.s32 %v4863, %v6224
  %v6226 = vrot.slane %v5975, %v6225
  %v6227 = vlaneseq
  %v6228 = vshrl.u32 %v6227, 7
  %v6229 = vsub.s32 %v4863, %v6228
  %v6230 = vrot.slane %v5978, %v6229
  %v6231 = vlaneseq
  %v6232 = vshrl.u32 %v6231, 7
  %v6233 = vsub.s32 %v4863, %v6232
  %v6234 = vrot.slane %v5981, %v6233
  %v6235 = vlaneseq
  %v6236 = vshrl.u32 %v6235, 7
  %v6237 = vsub.s32 %v4863, %v6236
  %v6238 = vrot.slane %v5984, %v6237
  %v6239 = vlaneseq
  %v6240 = vshrl.u32 %v6239, 7
  %v6241 = vsub.s32 %v4863, %v6240
  %v6242 = vrot.slane %v5987, %v6241
  %v6243 = vlaneseq
  %v6244 = vshrl.u32 %v6243, 7
  %v6245 = vsub.s32 %v4863, %v6244
  %v6246 = vrot.slane %v5990, %v6245
  %v6247 = vsel %vm5120, %v5998, %v5994
  %v6248 = vsel %vm5122, %v6002, %v6247
  %v6249 = vsel %vm5124, %v6006, %v6248
  %v6250 = vsel %vm5126, %v6010, %v6249
  %v6251 = vsel %vm5128, %v6014, %v6250
  %v6252 = vsel %vm5130, %v6018, %v6251
  %v6253 = vsel %vm5132, %v6022, %v6252
  %v6254 = vsel %vm5120, %v6030, %v6026
  %v6255 = vsel %vm5122, %v6034, %v6254
  %v6256 = vsel %vm5124, %v6038, %v6255
  %v6257 = vsel %vm5126, %v6042, %v6256
  %v6258 = vsel %vm5128, %v6046, %v6257
  %v6259 = vsel %vm5130, %v6050, %v6258
  %v6260 = vsel %vm5132, %v6054, %v6259
  %v6261 = vsel %vm5120, %v6062, %v6058
  %v6262 = vsel %vm5122, %v6066, %v6261
  %v6263 = vsel %vm5124, %v6070, %v6262
  %v6264 = vsel %vm5126, %v6074, %v6263
  %v6265 = vsel %vm5128, %v6078, %v6264
  %v6266 = vsel %vm5130, %v6082, %v6265
  %v6267 = vsel %vm5132, %v6086, %v6266
  %v6268 = vsel %vm5120, %v6094, %v6090
  %v6269 = vsel %vm5122, %v6098, %v6268
  %v6270 = vsel %vm5124, %v6102, %v6269
  %v6271 = vsel %vm5126, %v6106, %v6270
  %v6272 = vsel %vm5128, %v6110, %v6271
  %v6273 = vsel %vm5130, %v6114, %v6272
  %v6274 = vsel %vm5132, %v6118, %v6273
  %v6275 = vsel %vm5120, %v6126, %v6122
  %v6276 = vsel %vm5122, %v6130, %v6275
  %v6277 = vsel %vm5124, %v6134, %v6276
  %v6278 = vsel %vm5126, %v6138, %v6277
  %v6279 = vsel %vm5128, %v6142, %v6278
  %v6280 = vsel %vm5130, %v6146, %v6279
  %v6281 = vsel %vm5132, %v6150, %v6280
  %v6282 = vsel %vm5120, %v6158, %v6154
  %v6283 = vsel %vm5122, %v6162, %v6282
  %v6284 = vsel %vm5124, %v6166, %v6283
  %v6285 = vsel %vm5126, %v6170, %v6284
  %v6286 = vsel %vm5128, %v6174, %v6285
  %v6287 = vsel %vm5130, %v6178, %v6286
  %v6288 = vsel %vm5132, %v6182, %v6287
  %v6289 = vsel %vm5120, %v6190, %v6186
  %v6290 = vsel %vm5122, %v6194, %v6289
  %v6291 = vsel %vm5124, %v6198, %v6290
  %v6292 = vsel %vm5126, %v6202, %v6291
  %v6293 = vsel %vm5128, %v6206, %v6292
  %v6294 = vsel %vm5130, %v6210, %v6293
  %v6295 = vsel %vm5132, %v6214, %v6294
  %v6296 = vsel %vm5120, %v6222, %v6218
  %v6297 = vsel %vm5122, %v6226, %v6296
  %v6298 = vsel %vm5124, %v6230, %v6297
  %v6299 = vsel %vm5126, %v6234, %v6298
  %v6300 = vsel %vm5128, %v6238, %v6299
  %v6301 = vsel %vm5130, %v6242, %v6300
  %v6302 = vsel %vm5132, %v6246, %v6301
  %v6311 = vsel %vm28, %v6253, 0.0
  %6312 = vadd.xlane.f32.xlu0 %v6311
  %v6313 = vpop.xlane.xlu0 %6312
  %v6314 = vsel %vm28, %v6260, 0.0
  %6315 = vadd.xlane.f32.xlu0 %v6314
  %v6316 = vpop.xlane.xlu0 %6315
  %v6317 = vsel %vm28, %v6267, 0.0
  %6318 = vadd.xlane.f32.xlu0 %v6317
  %v6319 = vpop.xlane.xlu0 %6318
  %v6320 = vsel %vm28, %v6274, 0.0
  %6321 = vadd.xlane.f32.xlu0 %v6320
  %v6322 = vpop.xlane.xlu0 %6321
  %v6323 = vsel %vm28, %v6281, 0.0
  %6324 = vadd.xlane.f32.xlu0 %v6323
  %v6325 = vpop.xlane.xlu0 %6324
  %v6326 = vsel %vm28, %v6288, 0.0
  %6327 = vadd.xlane.f32.xlu0 %v6326
  %v6328 = vpop.xlane.xlu0 %6327
  %v6329 = vsel %vm28, %v6295, 0.0
  %6330 = vadd.xlane.f32.xlu0 %v6329
  %v6331 = vpop.xlane.xlu0 %6330
  %v6332 = vsel %vm28, %v6302, 0.0
  %6333 = vadd.xlane.f32.xlu0 %v6332
  %v6334 = vpop.xlane.xlu0 %6333
  %v6335 = vrcp.pop %v6313
  %v6336 = vrcp.pop %v6316
  %v6337 = vrcp.pop %v6319
  %v6338 = vrcp.pop %v6322
  %v6339 = vrcp.pop %v6325
  %v6340 = vrcp.pop %v6328
  %v6341 = vrcp.pop %v6331
  %v6342 = vrcp.pop %v6334
  %v6351 = vlaneseq
  %v6352 = vshrl.u32 %v6351, 7
  %v6353 = vsub.s32 0, %v6352
  %v6354 = vrot.slane %v6335, %v6353
  %v6355 = vlaneseq
  %v6356 = vshrl.u32 %v6355, 7
  %v6357 = vsub.s32 1, %v6356
  %v6358 = vrot.slane %v6335, %v6357
  %v6359 = vlaneseq
  %v6360 = vshrl.u32 %v6359, 7
  %v6361 = vsub.s32 2, %v6360
  %v6362 = vrot.slane %v6335, %v6361
  %v6363 = vlaneseq
  %v6364 = vshrl.u32 %v6363, 7
  %v6365 = vsub.s32 3, %v6364
  %v6366 = vrot.slane %v6335, %v6365
  %v6367 = vlaneseq
  %v6368 = vshrl.u32 %v6367, 7
  %v6369 = vsub.s32 4, %v6368
  %v6370 = vrot.slane %v6335, %v6369
  %v6371 = vlaneseq
  %v6372 = vshrl.u32 %v6371, 7
  %v6373 = vsub.s32 5, %v6372
  %v6374 = vrot.slane %v6335, %v6373
  %v6375 = vlaneseq
  %v6376 = vshrl.u32 %v6375, 7
  %v6377 = vsub.s32 6, %v6376
  %v6378 = vrot.slane %v6335, %v6377
  %v6379 = vlaneseq
  %v6380 = vshrl.u32 %v6379, 7
  %v6381 = vsub.s32 7, %v6380
  %v6382 = vrot.slane %v6335, %v6381
  %v6383 = vlaneseq
  %v6384 = vshrl.u32 %v6383, 7
  %v6385 = vsub.s32 0, %v6384
  %v6386 = vrot.slane %v6336, %v6385
  %v6387 = vlaneseq
  %v6388 = vshrl.u32 %v6387, 7
  %v6389 = vsub.s32 1, %v6388
  %v6390 = vrot.slane %v6336, %v6389
  %v6391 = vlaneseq
  %v6392 = vshrl.u32 %v6391, 7
  %v6393 = vsub.s32 2, %v6392
  %v6394 = vrot.slane %v6336, %v6393
  %v6395 = vlaneseq
  %v6396 = vshrl.u32 %v6395, 7
  %v6397 = vsub.s32 3, %v6396
  %v6398 = vrot.slane %v6336, %v6397
  %v6399 = vlaneseq
  %v6400 = vshrl.u32 %v6399, 7
  %v6401 = vsub.s32 4, %v6400
  %v6402 = vrot.slane %v6336, %v6401
  %v6403 = vlaneseq
  %v6404 = vshrl.u32 %v6403, 7
  %v6405 = vsub.s32 5, %v6404
  %v6406 = vrot.slane %v6336, %v6405
  %v6407 = vlaneseq
  %v6408 = vshrl.u32 %v6407, 7
  %v6409 = vsub.s32 6, %v6408
  %v6410 = vrot.slane %v6336, %v6409
  %v6411 = vlaneseq
  %v6412 = vshrl.u32 %v6411, 7
  %v6413 = vsub.s32 7, %v6412
  %v6414 = vrot.slane %v6336, %v6413
  %v6415 = vlaneseq
  %v6416 = vshrl.u32 %v6415, 7
  %v6417 = vsub.s32 0, %v6416
  %v6418 = vrot.slane %v6337, %v6417
  %v6419 = vlaneseq
  %v6420 = vshrl.u32 %v6419, 7
  %v6421 = vsub.s32 1, %v6420
  %v6422 = vrot.slane %v6337, %v6421
  %v6423 = vlaneseq
  %v6424 = vshrl.u32 %v6423, 7
  %v6425 = vsub.s32 2, %v6424
  %v6426 = vrot.slane %v6337, %v6425
  %v6427 = vlaneseq
  %v6428 = vshrl.u32 %v6427, 7
  %v6429 = vsub.s32 3, %v6428
  %v6430 = vrot.slane %v6337, %v6429
  %v6431 = vlaneseq
  %v6432 = vshrl.u32 %v6431, 7
  %v6433 = vsub.s32 4, %v6432
  %v6434 = vrot.slane %v6337, %v6433
  %v6435 = vlaneseq
  %v6436 = vshrl.u32 %v6435, 7
  %v6437 = vsub.s32 5, %v6436
  %v6438 = vrot.slane %v6337, %v6437
  %v6439 = vlaneseq
  %v6440 = vshrl.u32 %v6439, 7
  %v6441 = vsub.s32 6, %v6440
  %v6442 = vrot.slane %v6337, %v6441
  %v6443 = vlaneseq
  %v6444 = vshrl.u32 %v6443, 7
  %v6445 = vsub.s32 7, %v6444
  %v6446 = vrot.slane %v6337, %v6445
  %v6447 = vlaneseq
  %v6448 = vshrl.u32 %v6447, 7
  %v6449 = vsub.s32 0, %v6448
  %v6450 = vrot.slane %v6338, %v6449
  %v6451 = vlaneseq
  %v6452 = vshrl.u32 %v6451, 7
  %v6453 = vsub.s32 1, %v6452
  %v6454 = vrot.slane %v6338, %v6453
  %v6455 = vlaneseq
  %v6456 = vshrl.u32 %v6455, 7
  %v6457 = vsub.s32 2, %v6456
  %v6458 = vrot.slane %v6338, %v6457
  %v6459 = vlaneseq
  %v6460 = vshrl.u32 %v6459, 7
  %v6461 = vsub.s32 3, %v6460
  %v6462 = vrot.slane %v6338, %v6461
  %v6463 = vlaneseq
  %v6464 = vshrl.u32 %v6463, 7
  %v6465 = vsub.s32 4, %v6464
  %v6466 = vrot.slane %v6338, %v6465
  %v6467 = vlaneseq
  %v6468 = vshrl.u32 %v6467, 7
  %v6469 = vsub.s32 5, %v6468
  %v6470 = vrot.slane %v6338, %v6469
  %v6471 = vlaneseq
  %v6472 = vshrl.u32 %v6471, 7
  %v6473 = vsub.s32 6, %v6472
  %v6474 = vrot.slane %v6338, %v6473
  %v6475 = vlaneseq
  %v6476 = vshrl.u32 %v6475, 7
  %v6477 = vsub.s32 7, %v6476
  %v6478 = vrot.slane %v6338, %v6477
  %v6479 = vlaneseq
  %v6480 = vshrl.u32 %v6479, 7
  %v6481 = vsub.s32 0, %v6480
  %v6482 = vrot.slane %v6339, %v6481
  %v6483 = vlaneseq
  %v6484 = vshrl.u32 %v6483, 7
  %v6485 = vsub.s32 1, %v6484
  %v6486 = vrot.slane %v6339, %v6485
  %v6487 = vlaneseq
  %v6488 = vshrl.u32 %v6487, 7
  %v6489 = vsub.s32 2, %v6488
  %v6490 = vrot.slane %v6339, %v6489
  %v6491 = vlaneseq
  %v6492 = vshrl.u32 %v6491, 7
  %v6493 = vsub.s32 3, %v6492
  %v6494 = vrot.slane %v6339, %v6493
  %v6495 = vlaneseq
  %v6496 = vshrl.u32 %v6495, 7
  %v6497 = vsub.s32 4, %v6496
  %v6498 = vrot.slane %v6339, %v6497
  %v6499 = vlaneseq
  %v6500 = vshrl.u32 %v6499, 7
  %v6501 = vsub.s32 5, %v6500
  %v6502 = vrot.slane %v6339, %v6501
  %v6503 = vlaneseq
  %v6504 = vshrl.u32 %v6503, 7
  %v6505 = vsub.s32 6, %v6504
  %v6506 = vrot.slane %v6339, %v6505
  %v6507 = vlaneseq
  %v6508 = vshrl.u32 %v6507, 7
  %v6509 = vsub.s32 7, %v6508
  %v6510 = vrot.slane %v6339, %v6509
  %v6511 = vlaneseq
  %v6512 = vshrl.u32 %v6511, 7
  %v6513 = vsub.s32 0, %v6512
  %v6514 = vrot.slane %v6340, %v6513
  %v6515 = vlaneseq
  %v6516 = vshrl.u32 %v6515, 7
  %v6517 = vsub.s32 1, %v6516
  %v6518 = vrot.slane %v6340, %v6517
  %v6519 = vlaneseq
  %v6520 = vshrl.u32 %v6519, 7
  %v6521 = vsub.s32 2, %v6520
  %v6522 = vrot.slane %v6340, %v6521
  %v6523 = vlaneseq
  %v6524 = vshrl.u32 %v6523, 7
  %v6525 = vsub.s32 3, %v6524
  %v6526 = vrot.slane %v6340, %v6525
  %v6527 = vlaneseq
  %v6528 = vshrl.u32 %v6527, 7
  %v6529 = vsub.s32 4, %v6528
  %v6530 = vrot.slane %v6340, %v6529
  %v6531 = vlaneseq
  %v6532 = vshrl.u32 %v6531, 7
  %v6533 = vsub.s32 5, %v6532
  %v6534 = vrot.slane %v6340, %v6533
  %v6535 = vlaneseq
  %v6536 = vshrl.u32 %v6535, 7
  %v6537 = vsub.s32 6, %v6536
  %v6538 = vrot.slane %v6340, %v6537
  %v6539 = vlaneseq
  %v6540 = vshrl.u32 %v6539, 7
  %v6541 = vsub.s32 7, %v6540
  %v6542 = vrot.slane %v6340, %v6541
  %v6543 = vlaneseq
  %v6544 = vshrl.u32 %v6543, 7
  %v6545 = vsub.s32 0, %v6544
  %v6546 = vrot.slane %v6341, %v6545
  %v6547 = vlaneseq
  %v6548 = vshrl.u32 %v6547, 7
  %v6549 = vsub.s32 1, %v6548
  %v6550 = vrot.slane %v6341, %v6549
  %v6551 = vlaneseq
  %v6552 = vshrl.u32 %v6551, 7
  %v6553 = vsub.s32 2, %v6552
  %v6554 = vrot.slane %v6341, %v6553
  %v6555 = vlaneseq
  %v6556 = vshrl.u32 %v6555, 7
  %v6557 = vsub.s32 3, %v6556
  %v6558 = vrot.slane %v6341, %v6557
  %v6559 = vlaneseq
  %v6560 = vshrl.u32 %v6559, 7
  %v6561 = vsub.s32 4, %v6560
  %v6562 = vrot.slane %v6341, %v6561
  %v6563 = vlaneseq
  %v6564 = vshrl.u32 %v6563, 7
  %v6565 = vsub.s32 5, %v6564
  %v6566 = vrot.slane %v6341, %v6565
  %v6567 = vlaneseq
  %v6568 = vshrl.u32 %v6567, 7
  %v6569 = vsub.s32 6, %v6568
  %v6570 = vrot.slane %v6341, %v6569
  %v6571 = vlaneseq
  %v6572 = vshrl.u32 %v6571, 7
  %v6573 = vsub.s32 7, %v6572
  %v6574 = vrot.slane %v6341, %v6573
  %v6575 = vlaneseq
  %v6576 = vshrl.u32 %v6575, 7
  %v6577 = vsub.s32 0, %v6576
  %v6578 = vrot.slane %v6342, %v6577
  %v6579 = vlaneseq
  %v6580 = vshrl.u32 %v6579, 7
  %v6581 = vsub.s32 1, %v6580
  %v6582 = vrot.slane %v6342, %v6581
  %v6583 = vlaneseq
  %v6584 = vshrl.u32 %v6583, 7
  %v6585 = vsub.s32 2, %v6584
  %v6586 = vrot.slane %v6342, %v6585
  %v6587 = vlaneseq
  %v6588 = vshrl.u32 %v6587, 7
  %v6589 = vsub.s32 3, %v6588
  %v6590 = vrot.slane %v6342, %v6589
  %v6591 = vlaneseq
  %v6592 = vshrl.u32 %v6591, 7
  %v6593 = vsub.s32 4, %v6592
  %v6594 = vrot.slane %v6342, %v6593
  %v6595 = vlaneseq
  %v6596 = vshrl.u32 %v6595, 7
  %v6597 = vsub.s32 5, %v6596
  %v6598 = vrot.slane %v6342, %v6597
  %v6599 = vlaneseq
  %v6600 = vshrl.u32 %v6599, 7
  %v6601 = vsub.s32 6, %v6600
  %v6602 = vrot.slane %v6342, %v6601
  %v6603 = vlaneseq
  %v6604 = vshrl.u32 %v6603, 7
  %v6605 = vsub.s32 7, %v6604
  %v6606 = vrot.slane %v6342, %v6605
  %v6671 = vmul.f32 %v5608, %v6354
  %v6672 = vmul.f32 %v5610, %v6358
  %v6673 = vmul.f32 %v5612, %v6362
  %v6674 = vmul.f32 %v5614, %v6366
  %v6675 = vmul.f32 %v5616, %v6370
  %v6676 = vmul.f32 %v5618, %v6374
  %v6677 = vmul.f32 %v5620, %v6378
  %v6678 = vmul.f32 %v5622, %v6382
  %v6679 = vmul.f32 %v5624, %v6386
  %v6680 = vmul.f32 %v5626, %v6390
  %v6681 = vmul.f32 %v5628, %v6394
  %v6682 = vmul.f32 %v5630, %v6398
  %v6683 = vmul.f32 %v5632, %v6402
  %v6684 = vmul.f32 %v5634, %v6406
  %v6685 = vmul.f32 %v5636, %v6410
  %v6686 = vmul.f32 %v5638, %v6414
  %v6687 = vmul.f32 %v5640, %v6418
  %v6688 = vmul.f32 %v5642, %v6422
  %v6689 = vmul.f32 %v5644, %v6426
  %v6690 = vmul.f32 %v5646, %v6430
  %v6691 = vmul.f32 %v5648, %v6434
  %v6692 = vmul.f32 %v5650, %v6438
  %v6693 = vmul.f32 %v5652, %v6442
  %v6694 = vmul.f32 %v5654, %v6446
  %v6695 = vmul.f32 %v5656, %v6450
  %v6696 = vmul.f32 %v5658, %v6454
  %v6697 = vmul.f32 %v5660, %v6458
  %v6698 = vmul.f32 %v5662, %v6462
  %v6699 = vmul.f32 %v5664, %v6466
  %v6700 = vmul.f32 %v5666, %v6470
  %v6701 = vmul.f32 %v5668, %v6474
  %v6702 = vmul.f32 %v5670, %v6478
  %v6703 = vmul.f32 %v5672, %v6482
  %v6704 = vmul.f32 %v5674, %v6486
  %v6705 = vmul.f32 %v5676, %v6490
  %v6706 = vmul.f32 %v5678, %v6494
  %v6707 = vmul.f32 %v5680, %v6498
  %v6708 = vmul.f32 %v5682, %v6502
  %v6709 = vmul.f32 %v5684, %v6506
  %v6710 = vmul.f32 %v5686, %v6510
  %v6711 = vmul.f32 %v5688, %v6514
  %v6712 = vmul.f32 %v5690, %v6518
  %v6713 = vmul.f32 %v5692, %v6522
  %v6714 = vmul.f32 %v5694, %v6526
  %v6715 = vmul.f32 %v5696, %v6530
  %v6716 = vmul.f32 %v5698, %v6534
  %v6717 = vmul.f32 %v5700, %v6538
  %v6718 = vmul.f32 %v5702, %v6542
  %v6719 = vmul.f32 %v5704, %v6546
  %v6720 = vmul.f32 %v5706, %v6550
  %v6721 = vmul.f32 %v5708, %v6554
  %v6722 = vmul.f32 %v5710, %v6558
  %v6723 = vmul.f32 %v5712, %v6562
  %v6724 = vmul.f32 %v5714, %v6566
  %v6725 = vmul.f32 %v5716, %v6570
  %v6726 = vmul.f32 %v5718, %v6574
  %v6727 = vmul.f32 %v5720, %v6578
  %v6728 = vmul.f32 %v5722, %v6582
  %v6729 = vmul.f32 %v5724, %v6586
  %v6730 = vmul.f32 %v5726, %v6590
  %v6731 = vmul.f32 %v5728, %v6594
  %v6732 = vmul.f32 %v5730, %v6598
  %v6733 = vmul.f32 %v5732, %v6602
  %v6734 = vmul.f32 %v5734, %v6606
  %6743 = vset.pattern.permute.xlu0 0
  %6744 = vperm.xlu0 %6743, %v6671
  %v6745 = vpop.permute.xlu0 %6744
  %6746 = vset.pattern.permute.xlu0 0
  %6747 = vperm.xlu0 %6746, %v6672
  %v6748 = vpop.permute.xlu0 %6747
  %6749 = vset.pattern.permute.xlu0 0
  %6750 = vperm.xlu0 %6749, %v6673
  %v6751 = vpop.permute.xlu0 %6750
  %6752 = vset.pattern.permute.xlu0 0
  %6753 = vperm.xlu0 %6752, %v6674
  %v6754 = vpop.permute.xlu0 %6753
  %6755 = vset.pattern.permute.xlu0 0
  %6756 = vperm.xlu0 %6755, %v6675
  %v6757 = vpop.permute.xlu0 %6756
  %6758 = vset.pattern.permute.xlu0 0
  %6759 = vperm.xlu0 %6758, %v6676
  %v6760 = vpop.permute.xlu0 %6759
  %6761 = vset.pattern.permute.xlu0 0
  %6762 = vperm.xlu0 %6761, %v6677
  %v6763 = vpop.permute.xlu0 %6762
  %6764 = vset.pattern.permute.xlu0 0
  %6765 = vperm.xlu0 %6764, %v6678
  %v6766 = vpop.permute.xlu0 %6765
  %v6767 = vlaneseq
  %v6768 = vshrl.u32 %v6767, 7
  %v6769 = vsub.s32 %v4863, %v6768
  %v6770 = vrot.slane %v6745, %v6769
  %v6771 = vlaneseq
  %v6772 = vshrl.u32 %v6771, 7
  %v6773 = vsub.s32 %v4863, %v6772
  %v6774 = vrot.slane %v6748, %v6773
  %v6775 = vlaneseq
  %v6776 = vshrl.u32 %v6775, 7
  %v6777 = vsub.s32 %v4863, %v6776
  %v6778 = vrot.slane %v6751, %v6777
  %v6779 = vlaneseq
  %v6780 = vshrl.u32 %v6779, 7
  %v6781 = vsub.s32 %v4863, %v6780
  %v6782 = vrot.slane %v6754, %v6781
  %v6783 = vlaneseq
  %v6784 = vshrl.u32 %v6783, 7
  %v6785 = vsub.s32 %v4863, %v6784
  %v6786 = vrot.slane %v6757, %v6785
  %v6787 = vlaneseq
  %v6788 = vshrl.u32 %v6787, 7
  %v6789 = vsub.s32 %v4863, %v6788
  %v6790 = vrot.slane %v6760, %v6789
  %v6791 = vlaneseq
  %v6792 = vshrl.u32 %v6791, 7
  %v6793 = vsub.s32 %v4863, %v6792
  %v6794 = vrot.slane %v6763, %v6793
  %v6795 = vlaneseq
  %v6796 = vshrl.u32 %v6795, 7
  %v6797 = vsub.s32 %v4863, %v6796
  %v6798 = vrot.slane %v6766, %v6797
  %v6799 = vsel %vm5120, %v6774, %v6770
  %v6800 = vsel %vm5122, %v6778, %v6799
  %v6801 = vsel %vm5124, %v6782, %v6800
  %v6802 = vsel %vm5126, %v6786, %v6801
  %v6803 = vsel %vm5128, %v6790, %v6802
  %v6804 = vsel %vm5130, %v6794, %v6803
  %v6805 = vsel %vm5132, %v6798, %v6804
  %v6806 = vsel %vm28, %v6805, 0
  %6808 = vmatprep.subr.mxu0 0.0
  %6809 = vmatpush1.msra.mxu0 0.0
  %6810 = vmatprep.subr.mxu0 0.0
  %6811 = vmatpush1.msra.mxu0 0.0
  %6812 = vmatprep.subr.mxu0 0.0
  %6813 = vmatpush1.msra.mxu0 0.0
  %6814 = vmatprep.subr.mxu0 0.0
  %6815 = vmatpush1.msra.mxu0 0.0
  %6816 = vmatprep.subr.mxu0 0.0
  %6817 = vmatpush1.msra.mxu0 0.0
  %6818 = vmatprep.subr.mxu0 0.0
  %6819 = vmatpush1.msra.mxu0 0.0
  %6820 = vmatprep.subr.mxu0 0.0
  %6821 = vmatpush1.msra.mxu0 0.0
  %6822 = vmatprep.subr.mxu0 0.0
  %6823 = vmatpush1.msra.mxu0 0.0
  %6824 = vmatprep.subr.mxu0 0.0
  %6825 = vmatpush1.msra.mxu0 0.0
  %6826 = vmatprep.subr.mxu0 0.0
  %6827 = vmatpush1.msra.mxu0 0.0
  %6828 = vmatprep.subr.mxu0 0.0
  %6829 = vmatpush1.msra.mxu0 0.0
  %6830 = vmatprep.subr.mxu0 0.0
  %6831 = vmatpush1.msra.mxu0 0.0
  %6832 = vmatprep.subr.mxu0 0.0
  %6833 = vmatpush1.msra.mxu0 0.0
  %6834 = vmatprep.subr.mxu0 0.0
  %6835 = vmatpush1.msra.mxu0 0.0
  %6836 = vmatprep.subr.mxu0 0.0
  %6837 = vmatpush1.msra.mxu0 0.0
  %6838 = vmatprep.subr.mxu0 0.0
  %6839 = vmatpush1.msra.mxu0 %v2837
  %6840 = vmatprep.subr.mxu0 0.0
  %6841 = vmatpush2.msra.mxu0 0.0
  %6842 = vmatprep.subr.mxu0 0.0
  %6843 = vmatpush2.msra.mxu0 0.0
  %6844 = vmatprep.subr.mxu0 0.0
  %6845 = vmatpush2.msra.mxu0 0.0
  %6846 = vmatprep.subr.mxu0 0.0
  %6847 = vmatpush2.msra.mxu0 0.0
  %6848 = vmatprep.subr.mxu0 0.0
  %6849 = vmatpush2.msra.mxu0 0.0
  %6850 = vmatprep.subr.mxu0 0.0
  %6851 = vmatpush2.msra.mxu0 0.0
  %6852 = vmatprep.subr.mxu0 0.0
  %6853 = vmatpush2.msra.mxu0 0.0
  %6854 = vmatprep.subr.mxu0 0.0
  %6855 = vmatpush2.msra.mxu0 0.0
  %6856 = vmatprep.subr.mxu0 0.0
  %6857 = vmatpush2.msra.mxu0 0.0
  %6858 = vmatprep.subr.mxu0 0.0
  %6859 = vmatpush2.msra.mxu0 0.0
  %6860 = vmatprep.subr.mxu0 0.0
  %6861 = vmatpush2.msra.mxu0 0.0
  %6862 = vmatprep.subr.mxu0 0.0
  %6863 = vmatpush2.msra.mxu0 0.0
  %6864 = vmatprep.subr.mxu0 0.0
  %6865 = vmatpush2.msra.mxu0 0.0
  %6866 = vmatprep.subr.mxu0 0.0
  %6867 = vmatpush2.msra.mxu0 0.0
  %6868 = vmatprep.subr.mxu0 0.0
  %6869 = vmatpush2.msra.mxu0 0.0
  %6870 = vmatprep.subr.mxu0 0.0
  %6871 = vmatpush2.msra.mxu0 0.0
  %6872 = vmatprep.mubr.f32.mxu0 0.0
  %6873 = vmatmul.mubr.f32.gmra.mxu0 %v6806
  %v6874 = vpop.f32.mrf.mxu0
  %v6875 = vadd.f32 0.0, %v6874
  %v6876 = vpop.f32.mrf.mxu0
  %6877 = vdwg.mxu0
  %6886 = vset.pattern.permute.xlu0 0
  %6887 = vperm.xlu0 %6886, %v6679
  %v6888 = vpop.permute.xlu0 %6887
  %6889 = vset.pattern.permute.xlu0 0
  %6890 = vperm.xlu0 %6889, %v6680
  %v6891 = vpop.permute.xlu0 %6890
  %6892 = vset.pattern.permute.xlu0 0
  %6893 = vperm.xlu0 %6892, %v6681
  %v6894 = vpop.permute.xlu0 %6893
  %6895 = vset.pattern.permute.xlu0 0
  %6896 = vperm.xlu0 %6895, %v6682
  %v6897 = vpop.permute.xlu0 %6896
  %6898 = vset.pattern.permute.xlu0 0
  %6899 = vperm.xlu0 %6898, %v6683
  %v6900 = vpop.permute.xlu0 %6899
  %6901 = vset.pattern.permute.xlu0 0
  %6902 = vperm.xlu0 %6901, %v6684
  %v6903 = vpop.permute.xlu0 %6902
  %6904 = vset.pattern.permute.xlu0 0
  %6905 = vperm.xlu0 %6904, %v6685
  %v6906 = vpop.permute.xlu0 %6905
  %6907 = vset.pattern.permute.xlu0 0
  %6908 = vperm.xlu0 %6907, %v6686
  %v6909 = vpop.permute.xlu0 %6908
  %v6910 = vlaneseq
  %v6911 = vshrl.u32 %v6910, 7
  %v6912 = vsub.s32 %v4863, %v6911
  %v6913 = vrot.slane %v6888, %v6912
  %v6914 = vlaneseq
  %v6915 = vshrl.u32 %v6914, 7
  %v6916 = vsub.s32 %v4863, %v6915
  %v6917 = vrot.slane %v6891, %v6916
  %v6918 = vlaneseq
  %v6919 = vshrl.u32 %v6918, 7
  %v6920 = vsub.s32 %v4863, %v6919
  %v6921 = vrot.slane %v6894, %v6920
  %v6922 = vlaneseq
  %v6923 = vshrl.u32 %v6922, 7
  %v6924 = vsub.s32 %v4863, %v6923
  %v6925 = vrot.slane %v6897, %v6924
  %v6926 = vlaneseq
  %v6927 = vshrl.u32 %v6926, 7
  %v6928 = vsub.s32 %v4863, %v6927
  %v6929 = vrot.slane %v6900, %v6928
  %v6930 = vlaneseq
  %v6931 = vshrl.u32 %v6930, 7
  %v6932 = vsub.s32 %v4863, %v6931
  %v6933 = vrot.slane %v6903, %v6932
  %v6934 = vlaneseq
  %v6935 = vshrl.u32 %v6934, 7
  %v6936 = vsub.s32 %v4863, %v6935
  %v6937 = vrot.slane %v6906, %v6936
  %v6938 = vlaneseq
  %v6939 = vshrl.u32 %v6938, 7
  %v6940 = vsub.s32 %v4863, %v6939
  %v6941 = vrot.slane %v6909, %v6940
  %v6942 = vsel %vm5120, %v6917, %v6913
  %v6943 = vsel %vm5122, %v6921, %v6942
  %v6944 = vsel %vm5124, %v6925, %v6943
  %v6945 = vsel %vm5126, %v6929, %v6944
  %v6946 = vsel %vm5128, %v6933, %v6945
  %v6947 = vsel %vm5130, %v6937, %v6946
  %v6948 = vsel %vm5132, %v6941, %v6947
  %v6949 = vsel %vm28, %v6948, 0
  %6951 = vmatprep.subr.mxu0 0.0
  %6952 = vmatpush1.msra.mxu0 0.0
  %6953 = vmatprep.subr.mxu0 0.0
  %6954 = vmatpush1.msra.mxu0 0.0
  %6955 = vmatprep.subr.mxu0 0.0
  %6956 = vmatpush1.msra.mxu0 0.0
  %6957 = vmatprep.subr.mxu0 0.0
  %6958 = vmatpush1.msra.mxu0 0.0
  %6959 = vmatprep.subr.mxu0 0.0
  %6960 = vmatpush1.msra.mxu0 0.0
  %6961 = vmatprep.subr.mxu0 0.0
  %6962 = vmatpush1.msra.mxu0 0.0
  %6963 = vmatprep.subr.mxu0 0.0
  %6964 = vmatpush1.msra.mxu0 0.0
  %6965 = vmatprep.subr.mxu0 0.0
  %6966 = vmatpush1.msra.mxu0 0.0
  %6967 = vmatprep.subr.mxu0 0.0
  %6968 = vmatpush1.msra.mxu0 0.0
  %6969 = vmatprep.subr.mxu0 0.0
  %6970 = vmatpush1.msra.mxu0 0.0
  %6971 = vmatprep.subr.mxu0 0.0
  %6972 = vmatpush1.msra.mxu0 0.0
  %6973 = vmatprep.subr.mxu0 0.0
  %6974 = vmatpush1.msra.mxu0 0.0
  %6975 = vmatprep.subr.mxu0 0.0
  %6976 = vmatpush1.msra.mxu0 0.0
  %6977 = vmatprep.subr.mxu0 0.0
  %6978 = vmatpush1.msra.mxu0 0.0
  %6979 = vmatprep.subr.mxu0 0.0
  %6980 = vmatpush1.msra.mxu0 0.0
  %6981 = vmatprep.subr.mxu0 0.0
  %6982 = vmatpush1.msra.mxu0 %v2842
  %6983 = vmatprep.subr.mxu0 0.0
  %6984 = vmatpush2.msra.mxu0 0.0
  %6985 = vmatprep.subr.mxu0 0.0
  %6986 = vmatpush2.msra.mxu0 0.0
  %6987 = vmatprep.subr.mxu0 0.0
  %6988 = vmatpush2.msra.mxu0 0.0
  %6989 = vmatprep.subr.mxu0 0.0
  %6990 = vmatpush2.msra.mxu0 0.0
  %6991 = vmatprep.subr.mxu0 0.0
  %6992 = vmatpush2.msra.mxu0 0.0
  %6993 = vmatprep.subr.mxu0 0.0
  %6994 = vmatpush2.msra.mxu0 0.0
  %6995 = vmatprep.subr.mxu0 0.0
  %6996 = vmatpush2.msra.mxu0 0.0
  %6997 = vmatprep.subr.mxu0 0.0
  %6998 = vmatpush2.msra.mxu0 0.0
  %6999 = vmatprep.subr.mxu0 0.0
  %7000 = vmatpush2.msra.mxu0 0.0
  %7001 = vmatprep.subr.mxu0 0.0
  %7002 = vmatpush2.msra.mxu0 0.0
  %7003 = vmatprep.subr.mxu0 0.0
  %7004 = vmatpush2.msra.mxu0 0.0
  %7005 = vmatprep.subr.mxu0 0.0
  %7006 = vmatpush2.msra.mxu0 0.0
  %7007 = vmatprep.subr.mxu0 0.0
  %7008 = vmatpush2.msra.mxu0 0.0
  %7009 = vmatprep.subr.mxu0 0.0
  %7010 = vmatpush2.msra.mxu0 0.0
  %7011 = vmatprep.subr.mxu0 0.0
  %7012 = vmatpush2.msra.mxu0 0.0
  %7013 = vmatprep.subr.mxu0 0.0
  %7014 = vmatpush2.msra.mxu0 0.0
  %7015 = vmatprep.mubr.f32.mxu0 0.0
  %7016 = vmatmul.mubr.f32.gmra.mxu0 %v6949
  %v7017 = vpop.f32.mrf.mxu0
  %v7018 = vadd.f32 0.0, %v7017
  %v7019 = vpop.f32.mrf.mxu0
  %7020 = vdwg.mxu0
  %7029 = vset.pattern.permute.xlu0 0
  %7030 = vperm.xlu0 %7029, %v6687
  %v7031 = vpop.permute.xlu0 %7030
  %7032 = vset.pattern.permute.xlu0 0
  %7033 = vperm.xlu0 %7032, %v6688
  %v7034 = vpop.permute.xlu0 %7033
  %7035 = vset.pattern.permute.xlu0 0
  %7036 = vperm.xlu0 %7035, %v6689
  %v7037 = vpop.permute.xlu0 %7036
  %7038 = vset.pattern.permute.xlu0 0
  %7039 = vperm.xlu0 %7038, %v6690
  %v7040 = vpop.permute.xlu0 %7039
  %7041 = vset.pattern.permute.xlu0 0
  %7042 = vperm.xlu0 %7041, %v6691
  %v7043 = vpop.permute.xlu0 %7042
  %7044 = vset.pattern.permute.xlu0 0
  %7045 = vperm.xlu0 %7044, %v6692
  %v7046 = vpop.permute.xlu0 %7045
  %7047 = vset.pattern.permute.xlu0 0
  %7048 = vperm.xlu0 %7047, %v6693
  %v7049 = vpop.permute.xlu0 %7048
  %7050 = vset.pattern.permute.xlu0 0
  %7051 = vperm.xlu0 %7050, %v6694
  %v7052 = vpop.permute.xlu0 %7051
  %v7053 = vlaneseq
  %v7054 = vshrl.u32 %v7053, 7
  %v7055 = vsub.s32 %v4863, %v7054
  %v7056 = vrot.slane %v7031, %v7055
  %v7057 = vlaneseq
  %v7058 = vshrl.u32 %v7057, 7
  %v7059 = vsub.s32 %v4863, %v7058
  %v7060 = vrot.slane %v7034, %v7059
  %v7061 = vlaneseq
  %v7062 = vshrl.u32 %v7061, 7
  %v7063 = vsub.s32 %v4863, %v7062
  %v7064 = vrot.slane %v7037, %v7063
  %v7065 = vlaneseq
  %v7066 = vshrl.u32 %v7065, 7
  %v7067 = vsub.s32 %v4863, %v7066
  %v7068 = vrot.slane %v7040, %v7067
  %v7069 = vlaneseq
  %v7070 = vshrl.u32 %v7069, 7
  %v7071 = vsub.s32 %v4863, %v7070
  %v7072 = vrot.slane %v7043, %v7071
  %v7073 = vlaneseq
  %v7074 = vshrl.u32 %v7073, 7
  %v7075 = vsub.s32 %v4863, %v7074
  %v7076 = vrot.slane %v7046, %v7075
  %v7077 = vlaneseq
  %v7078 = vshrl.u32 %v7077, 7
  %v7079 = vsub.s32 %v4863, %v7078
  %v7080 = vrot.slane %v7049, %v7079
  %v7081 = vlaneseq
  %v7082 = vshrl.u32 %v7081, 7
  %v7083 = vsub.s32 %v4863, %v7082
  %v7084 = vrot.slane %v7052, %v7083
  %v7085 = vsel %vm5120, %v7060, %v7056
  %v7086 = vsel %vm5122, %v7064, %v7085
  %v7087 = vsel %vm5124, %v7068, %v7086
  %v7088 = vsel %vm5126, %v7072, %v7087
  %v7089 = vsel %vm5128, %v7076, %v7088
  %v7090 = vsel %vm5130, %v7080, %v7089
  %v7091 = vsel %vm5132, %v7084, %v7090
  %v7092 = vsel %vm28, %v7091, 0
  %7094 = vmatprep.subr.mxu0 0.0
  %7095 = vmatpush1.msra.mxu0 0.0
  %7096 = vmatprep.subr.mxu0 0.0
  %7097 = vmatpush1.msra.mxu0 0.0
  %7098 = vmatprep.subr.mxu0 0.0
  %7099 = vmatpush1.msra.mxu0 0.0
  %7100 = vmatprep.subr.mxu0 0.0
  %7101 = vmatpush1.msra.mxu0 0.0
  %7102 = vmatprep.subr.mxu0 0.0
  %7103 = vmatpush1.msra.mxu0 0.0
  %7104 = vmatprep.subr.mxu0 0.0
  %7105 = vmatpush1.msra.mxu0 0.0
  %7106 = vmatprep.subr.mxu0 0.0
  %7107 = vmatpush1.msra.mxu0 0.0
  %7108 = vmatprep.subr.mxu0 0.0
  %7109 = vmatpush1.msra.mxu0 0.0
  %7110 = vmatprep.subr.mxu0 0.0
  %7111 = vmatpush1.msra.mxu0 0.0
  %7112 = vmatprep.subr.mxu0 0.0
  %7113 = vmatpush1.msra.mxu0 0.0
  %7114 = vmatprep.subr.mxu0 0.0
  %7115 = vmatpush1.msra.mxu0 0.0
  %7116 = vmatprep.subr.mxu0 0.0
  %7117 = vmatpush1.msra.mxu0 0.0
  %7118 = vmatprep.subr.mxu0 0.0
  %7119 = vmatpush1.msra.mxu0 0.0
  %7120 = vmatprep.subr.mxu0 0.0
  %7121 = vmatpush1.msra.mxu0 0.0
  %7122 = vmatprep.subr.mxu0 0.0
  %7123 = vmatpush1.msra.mxu0 0.0
  %7124 = vmatprep.subr.mxu0 0.0
  %7125 = vmatpush1.msra.mxu0 %v2848
  %7126 = vmatprep.subr.mxu0 0.0
  %7127 = vmatpush2.msra.mxu0 0.0
  %7128 = vmatprep.subr.mxu0 0.0
  %7129 = vmatpush2.msra.mxu0 0.0
  %7130 = vmatprep.subr.mxu0 0.0
  %7131 = vmatpush2.msra.mxu0 0.0
  %7132 = vmatprep.subr.mxu0 0.0
  %7133 = vmatpush2.msra.mxu0 0.0
  %7134 = vmatprep.subr.mxu0 0.0
  %7135 = vmatpush2.msra.mxu0 0.0
  %7136 = vmatprep.subr.mxu0 0.0
  %7137 = vmatpush2.msra.mxu0 0.0
  %7138 = vmatprep.subr.mxu0 0.0
  %7139 = vmatpush2.msra.mxu0 0.0
  %7140 = vmatprep.subr.mxu0 0.0
  %7141 = vmatpush2.msra.mxu0 0.0
  %7142 = vmatprep.subr.mxu0 0.0
  %7143 = vmatpush2.msra.mxu0 0.0
  %7144 = vmatprep.subr.mxu0 0.0
  %7145 = vmatpush2.msra.mxu0 0.0
  %7146 = vmatprep.subr.mxu0 0.0
  %7147 = vmatpush2.msra.mxu0 0.0
  %7148 = vmatprep.subr.mxu0 0.0
  %7149 = vmatpush2.msra.mxu0 0.0
  %7150 = vmatprep.subr.mxu0 0.0
  %7151 = vmatpush2.msra.mxu0 0.0
  %7152 = vmatprep.subr.mxu0 0.0
  %7153 = vmatpush2.msra.mxu0 0.0
  %7154 = vmatprep.subr.mxu0 0.0
  %7155 = vmatpush2.msra.mxu0 0.0
  %7156 = vmatprep.subr.mxu0 0.0
  %7157 = vmatpush2.msra.mxu0 0.0
  %7158 = vmatprep.mubr.f32.mxu0 0.0
  %7159 = vmatmul.mubr.f32.gmra.mxu0 %v7092
  %v7160 = vpop.f32.mrf.mxu0
  %v7161 = vadd.f32 0.0, %v7160
  %v7162 = vpop.f32.mrf.mxu0
  %7163 = vdwg.mxu0
  %7172 = vset.pattern.permute.xlu0 0
  %7173 = vperm.xlu0 %7172, %v6695
  %v7174 = vpop.permute.xlu0 %7173
  %7175 = vset.pattern.permute.xlu0 0
  %7176 = vperm.xlu0 %7175, %v6696
  %v7177 = vpop.permute.xlu0 %7176
  %7178 = vset.pattern.permute.xlu0 0
  %7179 = vperm.xlu0 %7178, %v6697
  %v7180 = vpop.permute.xlu0 %7179
  %7181 = vset.pattern.permute.xlu0 0
  %7182 = vperm.xlu0 %7181, %v6698
  %v7183 = vpop.permute.xlu0 %7182
  %7184 = vset.pattern.permute.xlu0 0
  %7185 = vperm.xlu0 %7184, %v6699
  %v7186 = vpop.permute.xlu0 %7185
  %7187 = vset.pattern.permute.xlu0 0
  %7188 = vperm.xlu0 %7187, %v6700
  %v7189 = vpop.permute.xlu0 %7188
  %7190 = vset.pattern.permute.xlu0 0
  %7191 = vperm.xlu0 %7190, %v6701
  %v7192 = vpop.permute.xlu0 %7191
  %7193 = vset.pattern.permute.xlu0 0
  %7194 = vperm.xlu0 %7193, %v6702
  %v7195 = vpop.permute.xlu0 %7194
  %v7196 = vlaneseq
  %v7197 = vshrl.u32 %v7196, 7
  %v7198 = vsub.s32 %v4863, %v7197
  %v7199 = vrot.slane %v7174, %v7198
  %v7200 = vlaneseq
  %v7201 = vshrl.u32 %v7200, 7
  %v7202 = vsub.s32 %v4863, %v7201
  %v7203 = vrot.slane %v7177, %v7202
  %v7204 = vlaneseq
  %v7205 = vshrl.u32 %v7204, 7
  %v7206 = vsub.s32 %v4863, %v7205
  %v7207 = vrot.slane %v7180, %v7206
  %v7208 = vlaneseq
  %v7209 = vshrl.u32 %v7208, 7
  %v7210 = vsub.s32 %v4863, %v7209
  %v7211 = vrot.slane %v7183, %v7210
  %v7212 = vlaneseq
  %v7213 = vshrl.u32 %v7212, 7
  %v7214 = vsub.s32 %v4863, %v7213
  %v7215 = vrot.slane %v7186, %v7214
  %v7216 = vlaneseq
  %v7217 = vshrl.u32 %v7216, 7
  %v7218 = vsub.s32 %v4863, %v7217
  %v7219 = vrot.slane %v7189, %v7218
  %v7220 = vlaneseq
  %v7221 = vshrl.u32 %v7220, 7
  %v7222 = vsub.s32 %v4863, %v7221
  %v7223 = vrot.slane %v7192, %v7222
  %v7224 = vlaneseq
  %v7225 = vshrl.u32 %v7224, 7
  %v7226 = vsub.s32 %v4863, %v7225
  %v7227 = vrot.slane %v7195, %v7226
  %v7228 = vsel %vm5120, %v7203, %v7199
  %v7229 = vsel %vm5122, %v7207, %v7228
  %v7230 = vsel %vm5124, %v7211, %v7229
  %v7231 = vsel %vm5126, %v7215, %v7230
  %v7232 = vsel %vm5128, %v7219, %v7231
  %v7233 = vsel %vm5130, %v7223, %v7232
  %v7234 = vsel %vm5132, %v7227, %v7233
  %v7235 = vsel %vm28, %v7234, 0
  %7237 = vmatprep.subr.mxu0 0.0
  %7238 = vmatpush1.msra.mxu0 0.0
  %7239 = vmatprep.subr.mxu0 0.0
  %7240 = vmatpush1.msra.mxu0 0.0
  %7241 = vmatprep.subr.mxu0 0.0
  %7242 = vmatpush1.msra.mxu0 0.0
  %7243 = vmatprep.subr.mxu0 0.0
  %7244 = vmatpush1.msra.mxu0 0.0
  %7245 = vmatprep.subr.mxu0 0.0
  %7246 = vmatpush1.msra.mxu0 0.0
  %7247 = vmatprep.subr.mxu0 0.0
  %7248 = vmatpush1.msra.mxu0 0.0
  %7249 = vmatprep.subr.mxu0 0.0
  %7250 = vmatpush1.msra.mxu0 0.0
  %7251 = vmatprep.subr.mxu0 0.0
  %7252 = vmatpush1.msra.mxu0 0.0
  %7253 = vmatprep.subr.mxu0 0.0
  %7254 = vmatpush1.msra.mxu0 0.0
  %7255 = vmatprep.subr.mxu0 0.0
  %7256 = vmatpush1.msra.mxu0 0.0
  %7257 = vmatprep.subr.mxu0 0.0
  %7258 = vmatpush1.msra.mxu0 0.0
  %7259 = vmatprep.subr.mxu0 0.0
  %7260 = vmatpush1.msra.mxu0 0.0
  %7261 = vmatprep.subr.mxu0 0.0
  %7262 = vmatpush1.msra.mxu0 0.0
  %7263 = vmatprep.subr.mxu0 0.0
  %7264 = vmatpush1.msra.mxu0 0.0
  %7265 = vmatprep.subr.mxu0 0.0
  %7266 = vmatpush1.msra.mxu0 0.0
  %7267 = vmatprep.subr.mxu0 0.0
  %7268 = vmatpush1.msra.mxu0 %v2850
  %7269 = vmatprep.subr.mxu0 0.0
  %7270 = vmatpush2.msra.mxu0 0.0
  %7271 = vmatprep.subr.mxu0 0.0
  %7272 = vmatpush2.msra.mxu0 0.0
  %7273 = vmatprep.subr.mxu0 0.0
  %7274 = vmatpush2.msra.mxu0 0.0
  %7275 = vmatprep.subr.mxu0 0.0
  %7276 = vmatpush2.msra.mxu0 0.0
  %7277 = vmatprep.subr.mxu0 0.0
  %7278 = vmatpush2.msra.mxu0 0.0
  %7279 = vmatprep.subr.mxu0 0.0
  %7280 = vmatpush2.msra.mxu0 0.0
  %7281 = vmatprep.subr.mxu0 0.0
  %7282 = vmatpush2.msra.mxu0 0.0
  %7283 = vmatprep.subr.mxu0 0.0
  %7284 = vmatpush2.msra.mxu0 0.0
  %7285 = vmatprep.subr.mxu0 0.0
  %7286 = vmatpush2.msra.mxu0 0.0
  %7287 = vmatprep.subr.mxu0 0.0
  %7288 = vmatpush2.msra.mxu0 0.0
  %7289 = vmatprep.subr.mxu0 0.0
  %7290 = vmatpush2.msra.mxu0 0.0
  %7291 = vmatprep.subr.mxu0 0.0
  %7292 = vmatpush2.msra.mxu0 0.0
  %7293 = vmatprep.subr.mxu0 0.0
  %7294 = vmatpush2.msra.mxu0 0.0
  %7295 = vmatprep.subr.mxu0 0.0
  %7296 = vmatpush2.msra.mxu0 0.0
  %7297 = vmatprep.subr.mxu0 0.0
  %7298 = vmatpush2.msra.mxu0 0.0
  %7299 = vmatprep.subr.mxu0 0.0
  %7300 = vmatpush2.msra.mxu0 0.0
  %7301 = vmatprep.mubr.f32.mxu0 0.0
  %7302 = vmatmul.mubr.f32.gmra.mxu0 %v7235
  %v7303 = vpop.f32.mrf.mxu0
  %v7304 = vadd.f32 0.0, %v7303
  %v7305 = vpop.f32.mrf.mxu0
  %7306 = vdwg.mxu0
  %7315 = vset.pattern.permute.xlu0 0
  %7316 = vperm.xlu0 %7315, %v6703
  %v7317 = vpop.permute.xlu0 %7316
  %7318 = vset.pattern.permute.xlu0 0
  %7319 = vperm.xlu0 %7318, %v6704
  %v7320 = vpop.permute.xlu0 %7319
  %7321 = vset.pattern.permute.xlu0 0
  %7322 = vperm.xlu0 %7321, %v6705
  %v7323 = vpop.permute.xlu0 %7322
  %7324 = vset.pattern.permute.xlu0 0
  %7325 = vperm.xlu0 %7324, %v6706
  %v7326 = vpop.permute.xlu0 %7325
  %7327 = vset.pattern.permute.xlu0 0
  %7328 = vperm.xlu0 %7327, %v6707
  %v7329 = vpop.permute.xlu0 %7328
  %7330 = vset.pattern.permute.xlu0 0
  %7331 = vperm.xlu0 %7330, %v6708
  %v7332 = vpop.permute.xlu0 %7331
  %7333 = vset.pattern.permute.xlu0 0
  %7334 = vperm.xlu0 %7333, %v6709
  %v7335 = vpop.permute.xlu0 %7334
  %7336 = vset.pattern.permute.xlu0 0
  %7337 = vperm.xlu0 %7336, %v6710
  %v7338 = vpop.permute.xlu0 %7337
  %v7339 = vlaneseq
  %v7340 = vshrl.u32 %v7339, 7
  %v7341 = vsub.s32 %v4863, %v7340
  %v7342 = vrot.slane %v7317, %v7341
  %v7343 = vlaneseq
  %v7344 = vshrl.u32 %v7343, 7
  %v7345 = vsub.s32 %v4863, %v7344
  %v7346 = vrot.slane %v7320, %v7345
  %v7347 = vlaneseq
  %v7348 = vshrl.u32 %v7347, 7
  %v7349 = vsub.s32 %v4863, %v7348
  %v7350 = vrot.slane %v7323, %v7349
  %v7351 = vlaneseq
  %v7352 = vshrl.u32 %v7351, 7
  %v7353 = vsub.s32 %v4863, %v7352
  %v7354 = vrot.slane %v7326, %v7353
  %v7355 = vlaneseq
  %v7356 = vshrl.u32 %v7355, 7
  %v7357 = vsub.s32 %v4863, %v7356
  %v7358 = vrot.slane %v7329, %v7357
  %v7359 = vlaneseq
  %v7360 = vshrl.u32 %v7359, 7
  %v7361 = vsub.s32 %v4863, %v7360
  %v7362 = vrot.slane %v7332, %v7361
  %v7363 = vlaneseq
  %v7364 = vshrl.u32 %v7363, 7
  %v7365 = vsub.s32 %v4863, %v7364
  %v7366 = vrot.slane %v7335, %v7365
  %v7367 = vlaneseq
  %v7368 = vshrl.u32 %v7367, 7
  %v7369 = vsub.s32 %v4863, %v7368
  %v7370 = vrot.slane %v7338, %v7369
  %v7371 = vsel %vm5120, %v7346, %v7342
  %v7372 = vsel %vm5122, %v7350, %v7371
  %v7373 = vsel %vm5124, %v7354, %v7372
  %v7374 = vsel %vm5126, %v7358, %v7373
  %v7375 = vsel %vm5128, %v7362, %v7374
  %v7376 = vsel %vm5130, %v7366, %v7375
  %v7377 = vsel %vm5132, %v7370, %v7376
  %v7378 = vsel %vm28, %v7377, 0
  %7380 = vmatprep.subr.mxu0 0.0
  %7381 = vmatpush1.msra.mxu0 0.0
  %7382 = vmatprep.subr.mxu0 0.0
  %7383 = vmatpush1.msra.mxu0 0.0
  %7384 = vmatprep.subr.mxu0 0.0
  %7385 = vmatpush1.msra.mxu0 0.0
  %7386 = vmatprep.subr.mxu0 0.0
  %7387 = vmatpush1.msra.mxu0 0.0
  %7388 = vmatprep.subr.mxu0 0.0
  %7389 = vmatpush1.msra.mxu0 0.0
  %7390 = vmatprep.subr.mxu0 0.0
  %7391 = vmatpush1.msra.mxu0 0.0
  %7392 = vmatprep.subr.mxu0 0.0
  %7393 = vmatpush1.msra.mxu0 0.0
  %7394 = vmatprep.subr.mxu0 0.0
  %7395 = vmatpush1.msra.mxu0 0.0
  %7396 = vmatprep.subr.mxu0 0.0
  %7397 = vmatpush1.msra.mxu0 0.0
  %7398 = vmatprep.subr.mxu0 0.0
  %7399 = vmatpush1.msra.mxu0 0.0
  %7400 = vmatprep.subr.mxu0 0.0
  %7401 = vmatpush1.msra.mxu0 0.0
  %7402 = vmatprep.subr.mxu0 0.0
  %7403 = vmatpush1.msra.mxu0 0.0
  %7404 = vmatprep.subr.mxu0 0.0
  %7405 = vmatpush1.msra.mxu0 0.0
  %7406 = vmatprep.subr.mxu0 0.0
  %7407 = vmatpush1.msra.mxu0 0.0
  %7408 = vmatprep.subr.mxu0 0.0
  %7409 = vmatpush1.msra.mxu0 0.0
  %7410 = vmatprep.subr.mxu0 0.0
  %7411 = vmatpush1.msra.mxu0 %v2854
  %7412 = vmatprep.subr.mxu0 0.0
  %7413 = vmatpush2.msra.mxu0 0.0
  %7414 = vmatprep.subr.mxu0 0.0
  %7415 = vmatpush2.msra.mxu0 0.0
  %7416 = vmatprep.subr.mxu0 0.0
  %7417 = vmatpush2.msra.mxu0 0.0
  %7418 = vmatprep.subr.mxu0 0.0
  %7419 = vmatpush2.msra.mxu0 0.0
  %7420 = vmatprep.subr.mxu0 0.0
  %7421 = vmatpush2.msra.mxu0 0.0
  %7422 = vmatprep.subr.mxu0 0.0
  %7423 = vmatpush2.msra.mxu0 0.0
  %7424 = vmatprep.subr.mxu0 0.0
  %7425 = vmatpush2.msra.mxu0 0.0
  %7426 = vmatprep.subr.mxu0 0.0
  %7427 = vmatpush2.msra.mxu0 0.0
  %7428 = vmatprep.subr.mxu0 0.0
  %7429 = vmatpush2.msra.mxu0 0.0
  %7430 = vmatprep.subr.mxu0 0.0
  %7431 = vmatpush2.msra.mxu0 0.0
  %7432 = vmatprep.subr.mxu0 0.0
  %7433 = vmatpush2.msra.mxu0 0.0
  %7434 = vmatprep.subr.mxu0 0.0
  %7435 = vmatpush2.msra.mxu0 0.0
  %7436 = vmatprep.subr.mxu0 0.0
  %7437 = vmatpush2.msra.mxu0 0.0
  %7438 = vmatprep.subr.mxu0 0.0
  %7439 = vmatpush2.msra.mxu0 0.0
  %7440 = vmatprep.subr.mxu0 0.0
  %7441 = vmatpush2.msra.mxu0 0.0
  %7442 = vmatprep.subr.mxu0 0.0
  %7443 = vmatpush2.msra.mxu0 0.0
  %7444 = vmatprep.mubr.f32.mxu0 0.0
  %7445 = vmatmul.mubr.f32.gmra.mxu0 %v7378
  %v7446 = vpop.f32.mrf.mxu0
  %v7447 = vadd.f32 0.0, %v7446
  %v7448 = vpop.f32.mrf.mxu0
  %7449 = vdwg.mxu0
  %7458 = vset.pattern.permute.xlu0 0
  %7459 = vperm.xlu0 %7458, %v6711
  %v7460 = vpop.permute.xlu0 %7459
  %7461 = vset.pattern.permute.xlu0 0
  %7462 = vperm.xlu0 %7461, %v6712
  %v7463 = vpop.permute.xlu0 %7462
  %7464 = vset.pattern.permute.xlu0 0
  %7465 = vperm.xlu0 %7464, %v6713
  %v7466 = vpop.permute.xlu0 %7465
  %7467 = vset.pattern.permute.xlu0 0
  %7468 = vperm.xlu0 %7467, %v6714
  %v7469 = vpop.permute.xlu0 %7468
  %7470 = vset.pattern.permute.xlu0 0
  %7471 = vperm.xlu0 %7470, %v6715
  %v7472 = vpop.permute.xlu0 %7471
  %7473 = vset.pattern.permute.xlu0 0
  %7474 = vperm.xlu0 %7473, %v6716
  %v7475 = vpop.permute.xlu0 %7474
  %7476 = vset.pattern.permute.xlu0 0
  %7477 = vperm.xlu0 %7476, %v6717
  %v7478 = vpop.permute.xlu0 %7477
  %7479 = vset.pattern.permute.xlu0 0
  %7480 = vperm.xlu0 %7479, %v6718
  %v7481 = vpop.permute.xlu0 %7480
  %v7482 = vlaneseq
  %v7483 = vshrl.u32 %v7482, 7
  %v7484 = vsub.s32 %v4863, %v7483
  %v7485 = vrot.slane %v7460, %v7484
  %v7486 = vlaneseq
  %v7487 = vshrl.u32 %v7486, 7
  %v7488 = vsub.s32 %v4863, %v7487
  %v7489 = vrot.slane %v7463, %v7488
  %v7490 = vlaneseq
  %v7491 = vshrl.u32 %v7490, 7
  %v7492 = vsub.s32 %v4863, %v7491
  %v7493 = vrot.slane %v7466, %v7492
  %v7494 = vlaneseq
  %v7495 = vshrl.u32 %v7494, 7
  %v7496 = vsub.s32 %v4863, %v7495
  %v7497 = vrot.slane %v7469, %v7496
  %v7498 = vlaneseq
  %v7499 = vshrl.u32 %v7498, 7
  %v7500 = vsub.s32 %v4863, %v7499
  %v7501 = vrot.slane %v7472, %v7500
  %v7502 = vlaneseq
  %v7503 = vshrl.u32 %v7502, 7
  %v7504 = vsub.s32 %v4863, %v7503
  %v7505 = vrot.slane %v7475, %v7504
  %v7506 = vlaneseq
  %v7507 = vshrl.u32 %v7506, 7
  %v7508 = vsub.s32 %v4863, %v7507
  %v7509 = vrot.slane %v7478, %v7508
  %v7510 = vlaneseq
  %v7511 = vshrl.u32 %v7510, 7
  %v7512 = vsub.s32 %v4863, %v7511
  %v7513 = vrot.slane %v7481, %v7512
  %v7514 = vsel %vm5120, %v7489, %v7485
  %v7515 = vsel %vm5122, %v7493, %v7514
  %v7516 = vsel %vm5124, %v7497, %v7515
  %v7517 = vsel %vm5126, %v7501, %v7516
  %v7518 = vsel %vm5128, %v7505, %v7517
  %v7519 = vsel %vm5130, %v7509, %v7518
  %v7520 = vsel %vm5132, %v7513, %v7519
  %v7521 = vsel %vm28, %v7520, 0
  %7523 = vmatprep.subr.mxu0 0.0
  %7524 = vmatpush1.msra.mxu0 0.0
  %7525 = vmatprep.subr.mxu0 0.0
  %7526 = vmatpush1.msra.mxu0 0.0
  %7527 = vmatprep.subr.mxu0 0.0
  %7528 = vmatpush1.msra.mxu0 0.0
  %7529 = vmatprep.subr.mxu0 0.0
  %7530 = vmatpush1.msra.mxu0 0.0
  %7531 = vmatprep.subr.mxu0 0.0
  %7532 = vmatpush1.msra.mxu0 0.0
  %7533 = vmatprep.subr.mxu0 0.0
  %7534 = vmatpush1.msra.mxu0 0.0
  %7535 = vmatprep.subr.mxu0 0.0
  %7536 = vmatpush1.msra.mxu0 0.0
  %7537 = vmatprep.subr.mxu0 0.0
  %7538 = vmatpush1.msra.mxu0 0.0
  %7539 = vmatprep.subr.mxu0 0.0
  %7540 = vmatpush1.msra.mxu0 0.0
  %7541 = vmatprep.subr.mxu0 0.0
  %7542 = vmatpush1.msra.mxu0 0.0
  %7543 = vmatprep.subr.mxu0 0.0
  %7544 = vmatpush1.msra.mxu0 0.0
  %7545 = vmatprep.subr.mxu0 0.0
  %7546 = vmatpush1.msra.mxu0 0.0
  %7547 = vmatprep.subr.mxu0 0.0
  %7548 = vmatpush1.msra.mxu0 0.0
  %7549 = vmatprep.subr.mxu0 0.0
  %7550 = vmatpush1.msra.mxu0 0.0
  %7551 = vmatprep.subr.mxu0 0.0
  %7552 = vmatpush1.msra.mxu0 0.0
  %7553 = vmatprep.subr.mxu0 0.0
  %7554 = vmatpush1.msra.mxu0 %v2856
  %7555 = vmatprep.subr.mxu0 0.0
  %7556 = vmatpush2.msra.mxu0 0.0
  %7557 = vmatprep.subr.mxu0 0.0
  %7558 = vmatpush2.msra.mxu0 0.0
  %7559 = vmatprep.subr.mxu0 0.0
  %7560 = vmatpush2.msra.mxu0 0.0
  %7561 = vmatprep.subr.mxu0 0.0
  %7562 = vmatpush2.msra.mxu0 0.0
  %7563 = vmatprep.subr.mxu0 0.0
  %7564 = vmatpush2.msra.mxu0 0.0
  %7565 = vmatprep.subr.mxu0 0.0
  %7566 = vmatpush2.msra.mxu0 0.0
  %7567 = vmatprep.subr.mxu0 0.0
  %7568 = vmatpush2.msra.mxu0 0.0
  %7569 = vmatprep.subr.mxu0 0.0
  %7570 = vmatpush2.msra.mxu0 0.0
  %7571 = vmatprep.subr.mxu0 0.0
  %7572 = vmatpush2.msra.mxu0 0.0
  %7573 = vmatprep.subr.mxu0 0.0
  %7574 = vmatpush2.msra.mxu0 0.0
  %7575 = vmatprep.subr.mxu0 0.0
  %7576 = vmatpush2.msra.mxu0 0.0
  %7577 = vmatprep.subr.mxu0 0.0
  %7578 = vmatpush2.msra.mxu0 0.0
  %7579 = vmatprep.subr.mxu0 0.0
  %7580 = vmatpush2.msra.mxu0 0.0
  %7581 = vmatprep.subr.mxu0 0.0
  %7582 = vmatpush2.msra.mxu0 0.0
  %7583 = vmatprep.subr.mxu0 0.0
  %7584 = vmatpush2.msra.mxu0 0.0
  %7585 = vmatprep.subr.mxu0 0.0
  %7586 = vmatpush2.msra.mxu0 0.0
  %7587 = vmatprep.mubr.f32.mxu0 0.0
  %7588 = vmatmul.mubr.f32.gmra.mxu0 %v7521
  %v7589 = vpop.f32.mrf.mxu0
  %v7590 = vadd.f32 0.0, %v7589
  %v7591 = vpop.f32.mrf.mxu0
  %7592 = vdwg.mxu0
  %7601 = vset.pattern.permute.xlu0 0
  %7602 = vperm.xlu0 %7601, %v6719
  %v7603 = vpop.permute.xlu0 %7602
  %7604 = vset.pattern.permute.xlu0 0
  %7605 = vperm.xlu0 %7604, %v6720
  %v7606 = vpop.permute.xlu0 %7605
  %7607 = vset.pattern.permute.xlu0 0
  %7608 = vperm.xlu0 %7607, %v6721
  %v7609 = vpop.permute.xlu0 %7608
  %7610 = vset.pattern.permute.xlu0 0
  %7611 = vperm.xlu0 %7610, %v6722
  %v7612 = vpop.permute.xlu0 %7611
  %7613 = vset.pattern.permute.xlu0 0
  %7614 = vperm.xlu0 %7613, %v6723
  %v7615 = vpop.permute.xlu0 %7614
  %7616 = vset.pattern.permute.xlu0 0
  %7617 = vperm.xlu0 %7616, %v6724
  %v7618 = vpop.permute.xlu0 %7617
  %7619 = vset.pattern.permute.xlu0 0
  %7620 = vperm.xlu0 %7619, %v6725
  %v7621 = vpop.permute.xlu0 %7620
  %7622 = vset.pattern.permute.xlu0 0
  %7623 = vperm.xlu0 %7622, %v6726
  %v7624 = vpop.permute.xlu0 %7623
  %v7625 = vlaneseq
  %v7626 = vshrl.u32 %v7625, 7
  %v7627 = vsub.s32 %v4863, %v7626
  %v7628 = vrot.slane %v7603, %v7627
  %v7629 = vlaneseq
  %v7630 = vshrl.u32 %v7629, 7
  %v7631 = vsub.s32 %v4863, %v7630
  %v7632 = vrot.slane %v7606, %v7631
  %v7633 = vlaneseq
  %v7634 = vshrl.u32 %v7633, 7
  %v7635 = vsub.s32 %v4863, %v7634
  %v7636 = vrot.slane %v7609, %v7635
  %v7637 = vlaneseq
  %v7638 = vshrl.u32 %v7637, 7
  %v7639 = vsub.s32 %v4863, %v7638
  %v7640 = vrot.slane %v7612, %v7639
  %v7641 = vlaneseq
  %v7642 = vshrl.u32 %v7641, 7
  %v7643 = vsub.s32 %v4863, %v7642
  %v7644 = vrot.slane %v7615, %v7643
  %v7645 = vlaneseq
  %v7646 = vshrl.u32 %v7645, 7
  %v7647 = vsub.s32 %v4863, %v7646
  %v7648 = vrot.slane %v7618, %v7647
  %v7649 = vlaneseq
  %v7650 = vshrl.u32 %v7649, 7
  %v7651 = vsub.s32 %v4863, %v7650
  %v7652 = vrot.slane %v7621, %v7651
  %v7653 = vlaneseq
  %v7654 = vshrl.u32 %v7653, 7
  %v7655 = vsub.s32 %v4863, %v7654
  %v7656 = vrot.slane %v7624, %v7655
  %v7657 = vsel %vm5120, %v7632, %v7628
  %v7658 = vsel %vm5122, %v7636, %v7657
  %v7659 = vsel %vm5124, %v7640, %v7658
  %v7660 = vsel %vm5126, %v7644, %v7659
  %v7661 = vsel %vm5128, %v7648, %v7660
  %v7662 = vsel %vm5130, %v7652, %v7661
  %v7663 = vsel %vm5132, %v7656, %v7662
  %v7664 = vsel %vm28, %v7663, 0
  %7666 = vmatprep.subr.mxu0 0.0
  %7667 = vmatpush1.msra.mxu0 0.0
  %7668 = vmatprep.subr.mxu0 0.0
  %7669 = vmatpush1.msra.mxu0 0.0
  %7670 = vmatprep.subr.mxu0 0.0
  %7671 = vmatpush1.msra.mxu0 0.0
  %7672 = vmatprep.subr.mxu0 0.0
  %7673 = vmatpush1.msra.mxu0 0.0
  %7674 = vmatprep.subr.mxu0 0.0
  %7675 = vmatpush1.msra.mxu0 0.0
  %7676 = vmatprep.subr.mxu0 0.0
  %7677 = vmatpush1.msra.mxu0 0.0
  %7678 = vmatprep.subr.mxu0 0.0
  %7679 = vmatpush1.msra.mxu0 0.0
  %7680 = vmatprep.subr.mxu0 0.0
  %7681 = vmatpush1.msra.mxu0 0.0
  %7682 = vmatprep.subr.mxu0 0.0
  %7683 = vmatpush1.msra.mxu0 0.0
  %7684 = vmatprep.subr.mxu0 0.0
  %7685 = vmatpush1.msra.mxu0 0.0
  %7686 = vmatprep.subr.mxu0 0.0
  %7687 = vmatpush1.msra.mxu0 0.0
  %7688 = vmatprep.subr.mxu0 0.0
  %7689 = vmatpush1.msra.mxu0 0.0
  %7690 = vmatprep.subr.mxu0 0.0
  %7691 = vmatpush1.msra.mxu0 0.0
  %7692 = vmatprep.subr.mxu0 0.0
  %7693 = vmatpush1.msra.mxu0 0.0
  %7694 = vmatprep.subr.mxu0 0.0
  %7695 = vmatpush1.msra.mxu0 0.0
  %7696 = vmatprep.subr.mxu0 0.0
  %7697 = vmatpush1.msra.mxu0 %v2860
  %7698 = vmatprep.subr.mxu0 0.0
  %7699 = vmatpush2.msra.mxu0 0.0
  %7700 = vmatprep.subr.mxu0 0.0
  %7701 = vmatpush2.msra.mxu0 0.0
  %7702 = vmatprep.subr.mxu0 0.0
  %7703 = vmatpush2.msra.mxu0 0.0
  %7704 = vmatprep.subr.mxu0 0.0
  %7705 = vmatpush2.msra.mxu0 0.0
  %7706 = vmatprep.subr.mxu0 0.0
  %7707 = vmatpush2.msra.mxu0 0.0
  %7708 = vmatprep.subr.mxu0 0.0
  %7709 = vmatpush2.msra.mxu0 0.0
  %7710 = vmatprep.subr.mxu0 0.0
  %7711 = vmatpush2.msra.mxu0 0.0
  %7712 = vmatprep.subr.mxu0 0.0
  %7713 = vmatpush2.msra.mxu0 0.0
  %7714 = vmatprep.subr.mxu0 0.0
  %7715 = vmatpush2.msra.mxu0 0.0
  %7716 = vmatprep.subr.mxu0 0.0
  %7717 = vmatpush2.msra.mxu0 0.0
  %7718 = vmatprep.subr.mxu0 0.0
  %7719 = vmatpush2.msra.mxu0 0.0
  %7720 = vmatprep.subr.mxu0 0.0
  %7721 = vmatpush2.msra.mxu0 0.0
  %7722 = vmatprep.subr.mxu0 0.0
  %7723 = vmatpush2.msra.mxu0 0.0
  %7724 = vmatprep.subr.mxu0 0.0
  %7725 = vmatpush2.msra.mxu0 0.0
  %7726 = vmatprep.subr.mxu0 0.0
  %7727 = vmatpush2.msra.mxu0 0.0
  %7728 = vmatprep.subr.mxu0 0.0
  %7729 = vmatpush2.msra.mxu0 0.0
  %7730 = vmatprep.mubr.f32.mxu0 0.0
  %7731 = vmatmul.mubr.f32.gmra.mxu0 %v7664
  %v7732 = vpop.f32.mrf.mxu0
  %v7733 = vadd.f32 0.0, %v7732
  %v7734 = vpop.f32.mrf.mxu0
  %7735 = vdwg.mxu0
  %7744 = vset.pattern.permute.xlu0 0
  %7745 = vperm.xlu0 %7744, %v6727
  %v7746 = vpop.permute.xlu0 %7745
  %7747 = vset.pattern.permute.xlu0 0
  %7748 = vperm.xlu0 %7747, %v6728
  %v7749 = vpop.permute.xlu0 %7748
  %7750 = vset.pattern.permute.xlu0 0
  %7751 = vperm.xlu0 %7750, %v6729
  %v7752 = vpop.permute.xlu0 %7751
  %7753 = vset.pattern.permute.xlu0 0
  %7754 = vperm.xlu0 %7753, %v6730
  %v7755 = vpop.permute.xlu0 %7754
  %7756 = vset.pattern.permute.xlu0 0
  %7757 = vperm.xlu0 %7756, %v6731
  %v7758 = vpop.permute.xlu0 %7757
  %7759 = vset.pattern.permute.xlu0 0
  %7760 = vperm.xlu0 %7759, %v6732
  %v7761 = vpop.permute.xlu0 %7760
  %7762 = vset.pattern.permute.xlu0 0
  %7763 = vperm.xlu0 %7762, %v6733
  %v7764 = vpop.permute.xlu0 %7763
  %7765 = vset.pattern.permute.xlu0 0
  %7766 = vperm.xlu0 %7765, %v6734
  %v7767 = vpop.permute.xlu0 %7766
  %v7768 = vlaneseq
  %v7769 = vshrl.u32 %v7768, 7
  %v7770 = vsub.s32 %v4863, %v7769
  %v7771 = vrot.slane %v7746, %v7770
  %v7772 = vlaneseq
  %v7773 = vshrl.u32 %v7772, 7
  %v7774 = vsub.s32 %v4863, %v7773
  %v7775 = vrot.slane %v7749, %v7774
  %v7776 = vlaneseq
  %v7777 = vshrl.u32 %v7776, 7
  %v7778 = vsub.s32 %v4863, %v7777
  %v7779 = vrot.slane %v7752, %v7778
  %v7780 = vlaneseq
  %v7781 = vshrl.u32 %v7780, 7
  %v7782 = vsub.s32 %v4863, %v7781
  %v7783 = vrot.slane %v7755, %v7782
  %v7784 = vlaneseq
  %v7785 = vshrl.u32 %v7784, 7
  %v7786 = vsub.s32 %v4863, %v7785
  %v7787 = vrot.slane %v7758, %v7786
  %v7788 = vlaneseq
  %v7789 = vshrl.u32 %v7788, 7
  %v7790 = vsub.s32 %v4863, %v7789
  %v7791 = vrot.slane %v7761, %v7790
  %v7792 = vlaneseq
  %v7793 = vshrl.u32 %v7792, 7
  %v7794 = vsub.s32 %v4863, %v7793
  %v7795 = vrot.slane %v7764, %v7794
  %v7796 = vlaneseq
  %v7797 = vshrl.u32 %v7796, 7
  %v7798 = vsub.s32 %v4863, %v7797
  %v7799 = vrot.slane %v7767, %v7798
  %v7800 = vsel %vm5120, %v7775, %v7771
  %v7801 = vsel %vm5122, %v7779, %v7800
  %v7802 = vsel %vm5124, %v7783, %v7801
  %v7803 = vsel %vm5126, %v7787, %v7802
  %v7804 = vsel %vm5128, %v7791, %v7803
  %v7805 = vsel %vm5130, %v7795, %v7804
  %v7806 = vsel %vm5132, %v7799, %v7805
  %v7807 = vsel %vm28, %v7806, 0
  %7809 = vmatprep.subr.mxu0 0.0
  %7810 = vmatpush1.msra.mxu0 0.0
  %7811 = vmatprep.subr.mxu0 0.0
  %7812 = vmatpush1.msra.mxu0 0.0
  %7813 = vmatprep.subr.mxu0 0.0
  %7814 = vmatpush1.msra.mxu0 0.0
  %7815 = vmatprep.subr.mxu0 0.0
  %7816 = vmatpush1.msra.mxu0 0.0
  %7817 = vmatprep.subr.mxu0 0.0
  %7818 = vmatpush1.msra.mxu0 0.0
  %7819 = vmatprep.subr.mxu0 0.0
  %7820 = vmatpush1.msra.mxu0 0.0
  %7821 = vmatprep.subr.mxu0 0.0
  %7822 = vmatpush1.msra.mxu0 0.0
  %7823 = vmatprep.subr.mxu0 0.0
  %7824 = vmatpush1.msra.mxu0 0.0
  %7825 = vmatprep.subr.mxu0 0.0
  %7826 = vmatpush1.msra.mxu0 0.0
  %7827 = vmatprep.subr.mxu0 0.0
  %7828 = vmatpush1.msra.mxu0 0.0
  %7829 = vmatprep.subr.mxu0 0.0
  %7830 = vmatpush1.msra.mxu0 0.0
  %7831 = vmatprep.subr.mxu0 0.0
  %7832 = vmatpush1.msra.mxu0 0.0
  %7833 = vmatprep.subr.mxu0 0.0
  %7834 = vmatpush1.msra.mxu0 0.0
  %7835 = vmatprep.subr.mxu0 0.0
  %7836 = vmatpush1.msra.mxu0 0.0
  %7837 = vmatprep.subr.mxu0 0.0
  %7838 = vmatpush1.msra.mxu0 0.0
  %7839 = vmatprep.subr.mxu0 0.0
  %7840 = vmatpush1.msra.mxu0 %v2862
  %7841 = vmatprep.subr.mxu0 0.0
  %7842 = vmatpush2.msra.mxu0 0.0
  %7843 = vmatprep.subr.mxu0 0.0
  %7844 = vmatpush2.msra.mxu0 0.0
  %7845 = vmatprep.subr.mxu0 0.0
  %7846 = vmatpush2.msra.mxu0 0.0
  %7847 = vmatprep.subr.mxu0 0.0
  %7848 = vmatpush2.msra.mxu0 0.0
  %7849 = vmatprep.subr.mxu0 0.0
  %7850 = vmatpush2.msra.mxu0 0.0
  %7851 = vmatprep.subr.mxu0 0.0
  %7852 = vmatpush2.msra.mxu0 0.0
  %7853 = vmatprep.subr.mxu0 0.0
  %7854 = vmatpush2.msra.mxu0 0.0
  %7855 = vmatprep.subr.mxu0 0.0
  %7856 = vmatpush2.msra.mxu0 0.0
  %7857 = vmatprep.subr.mxu0 0.0
  %7858 = vmatpush2.msra.mxu0 0.0
  %7859 = vmatprep.subr.mxu0 0.0
  %7860 = vmatpush2.msra.mxu0 0.0
  %7861 = vmatprep.subr.mxu0 0.0
  %7862 = vmatpush2.msra.mxu0 0.0
  %7863 = vmatprep.subr.mxu0 0.0
  %7864 = vmatpush2.msra.mxu0 0.0
  %7865 = vmatprep.subr.mxu0 0.0
  %7866 = vmatpush2.msra.mxu0 0.0
  %7867 = vmatprep.subr.mxu0 0.0
  %7868 = vmatpush2.msra.mxu0 0.0
  %7869 = vmatprep.subr.mxu0 0.0
  %7870 = vmatpush2.msra.mxu0 0.0
  %7871 = vmatprep.subr.mxu0 0.0
  %7872 = vmatpush2.msra.mxu0 0.0
  %7873 = vmatprep.mubr.f32.mxu0 0.0
  %7874 = vmatmul.mubr.f32.gmra.mxu0 %v7807
  %v7875 = vpop.f32.mrf.mxu0
  %v7876 = vadd.f32 0.0, %v7875
  %v7877 = vpop.f32.mrf.mxu0
  %7878 = vdwg.mxu0
  %7881 = vrot.lane.b32.xlu0 %v7161, 8
  %v7882 = vpop.permute.xlu0 %7881
  %7883 = vrot.lane.b32.xlu0 %v7304, 8
  %v7884 = vpop.permute.xlu0 %7883
  %7889 = vrot.lane.b32.xlu0 %v7447, 16
  %v7890 = vpop.permute.xlu0 %7889
  %7891 = vrot.lane.b32.xlu0 %v7590, 16
  %v7892 = vpop.permute.xlu0 %7891
  %7897 = vrot.lane.b32.xlu0 %v7733, 24
  %v7898 = vpop.permute.xlu0 %7897
  %7899 = vrot.lane.b32.xlu0 %v7876, 24
  %v7900 = vpop.permute.xlu0 %7899
  %v7903 = vsel %vm28, %v6875, %v7882
  %v7904 = vsel %vm28, %v7018, %v7884
  %v7905 = vsel %vm2717, %v7903, %v7890
  %v7906 = vsel %vm2717, %v7904, %v7892
  %v7907 = vsel %vm2630, %v7905, %v7898
  %v7908 = vsel %vm2630, %v7906, %v7900
  %v7909 = vld [vmem:[%s1 + $0x90] sm:$0x1]
  %v7910 = vlaneseq
  %v7911 = vshrl.u32 %v7910, 7
  %v7912 = vsub.s32 0, %v7911
  %v7913 = vrot.slane %v7909, %v7912
  %v7914 = vadd.f32 %v7907, %v7913
  %v7915 = vadd.f32 %v7908, %v7913
  %v7916 = vld [vmem:[%s1 + $0xa0] sm:$0xff]
  %v7917 = vld [vmem:[%s1 + $0xa8] sm:$0xff]
  %v7918 = vld [vmem:[%s1 + $0xb0] sm:$0xff]
  %v7919 = vld [vmem:[%s1 + $0xb8] sm:$0xff]
  %v7920 = vld [vmem:[%s1 + $0xc0] sm:$0x1]
  %v7921 = vlaneseq
  %v7922 = vshrl.u32 %v7921, 7
  %v7923 = vsub.s32 0, %v7922
  %v7924 = vrot.slane %v7920, %v7923
  %vm7925 = vcmask 261120
  %v7927 = vsel %vm7925, %v7914, 0
  %v7930 = vsel %vm7925, %v7915, 0
  %7932 = vmatprep.subr.mxu0 0.0
  %7933 = vmatpush1.msra.mxu0 0.0
  %7934 = vmatprep.subr.mxu0 0.0
  %7935 = vmatpush1.msra.mxu0 0.0
  %7936 = vmatprep.subr.mxu0 0.0
  %7937 = vmatpush1.msra.mxu0 0.0
  %7938 = vmatprep.subr.mxu0 0.0
  %7939 = vmatpush1.msra.mxu0 0.0
  %7940 = vmatprep.subr.mxu0 0.0
  %7941 = vmatpush1.msra.mxu0 0.0
  %7942 = vmatprep.subr.mxu0 0.0
  %7943 = vmatpush1.msra.mxu0 0.0
  %7944 = vmatprep.subr.mxu0 0.0
  %7945 = vmatpush1.msra.mxu0 0.0
  %7946 = vmatprep.subr.mxu0 0.0
  %7947 = vmatpush1.msra.mxu0 0.0
  %7948 = vmatprep.subr.mxu0 0.0
  %7949 = vmatpush1.msra.mxu0 0.0
  %7950 = vmatprep.subr.mxu0 0.0
  %7951 = vmatpush1.msra.mxu0 0.0
  %7952 = vmatprep.subr.mxu0 0.0
  %7953 = vmatpush1.msra.mxu0 0.0
  %7954 = vmatprep.subr.mxu0 0.0
  %7955 = vmatpush1.msra.mxu0 0.0
  %7956 = vmatprep.subr.mxu0 0.0
  %7957 = vmatpush1.msra.mxu0 %v7919
  %7958 = vmatprep.subr.mxu0 0.0
  %7959 = vmatpush1.msra.mxu0 %v7918
  %7960 = vmatprep.subr.mxu0 0.0
  %7961 = vmatpush1.msra.mxu0 %v7917
  %7962 = vmatprep.subr.mxu0 0.0
  %7963 = vmatpush1.msra.mxu0 %v7916
  %7964 = vmatprep.subr.mxu0 0.0
  %7965 = vmatpush2.msra.mxu0 0.0
  %7966 = vmatprep.subr.mxu0 0.0
  %7967 = vmatpush2.msra.mxu0 0.0
  %7968 = vmatprep.subr.mxu0 0.0
  %7969 = vmatpush2.msra.mxu0 0.0
  %7970 = vmatprep.subr.mxu0 0.0
  %7971 = vmatpush2.msra.mxu0 0.0
  %7972 = vmatprep.subr.mxu0 0.0
  %7973 = vmatpush2.msra.mxu0 0.0
  %7974 = vmatprep.subr.mxu0 0.0
  %7975 = vmatpush2.msra.mxu0 0.0
  %7976 = vmatprep.subr.mxu0 0.0
  %7977 = vmatpush2.msra.mxu0 0.0
  %7978 = vmatprep.subr.mxu0 0.0
  %7979 = vmatpush2.msra.mxu0 0.0
  %7980 = vmatprep.subr.mxu0 0.0
  %7981 = vmatpush2.msra.mxu0 0.0
  %7982 = vmatprep.subr.mxu0 0.0
  %7983 = vmatpush2.msra.mxu0 0.0
  %7984 = vmatprep.subr.mxu0 0.0
  %7985 = vmatpush2.msra.mxu0 0.0
  %7986 = vmatprep.subr.mxu0 0.0
  %7987 = vmatpush2.msra.mxu0 0.0
  %7988 = vmatprep.subr.mxu0 0.0
  %7989 = vmatpush2.msra.mxu0 0.0
  %7990 = vmatprep.subr.mxu0 0.0
  %7991 = vmatpush2.msra.mxu0 0.0
  %7992 = vmatprep.subr.mxu0 0.0
  %7993 = vmatpush2.msra.mxu0 0.0
  %7994 = vmatprep.subr.mxu0 0.0
  %7995 = vmatpush2.msra.mxu0 0.0
  %7996 = vmatprep.mubr.f32.mxu0 0.0
  %7997 = vmatmul.mubr.f32.gmra.mxu0 %v7927
  %v7998 = vpop.f32.mrf.mxu0
  %v7999 = vadd.f32 %v7924, %v7998
  %v8000 = vpop.f32.mrf.mxu0
  %8001 = vmatprep.mubr.f32.mxu0 0.0
  %8002 = vmatmul.mubr.f32.gmra.mxu0 %v7930
  %v8003 = vpop.f32.mrf.mxu0
  %v8004 = vadd.f32 %v7924, %v8003
  %v8005 = vpop.f32.mrf.mxu0
  %8006 = vdwg.mxu0
  %v8007 = vtanh.pop %v7999
  %v8008 = vtanh.pop %v8004
  %v8009 = vxor.u32 %v7999, 2147483648
  %v8010 = vxor.u32 %v8004, 2147483648
  %v8011 = vmul.f32 %v8009, 1.442695
  %v8012 = vpow.pop %v8011
  %v8013 = vmul.f32 %v8010, 1.442695
  %v8014 = vpow.pop %v8013
  %v8015 = vadd.f32 %v8012, 1.0
  %v8016 = vadd.f32 %v8014, 1.0
  %v8017 = vrcp.pop %v8015
  %v8018 = vmul.f32 1.0, %v8017
  %v8019 = vrcp.pop %v8016
  %v8020 = vmul.f32 1.0, %v8019
  %8023 = vrot.lane.b32.xlu0 %v8018, 80
  %v8024 = vpop.permute.xlu0 %8023
  %8025 = vrot.lane.b32.xlu0 %v8020, 80
  %v8026 = vpop.permute.xlu0 %8025
  %v8029 = vmul.f32 %v8007, %v8024
  %v8030 = vmul.f32 %v8008, %v8026
  %v8031 = vld [vmem:[%s1 + $0xc8] sm:$0xff]
  %v8032 = vld [vmem:[%s1 + $0xd0] sm:$0xff]
  %v8033 = vld [vmem:[%s1 + $0xd8] sm:$0xff]
  %v8034 = vld [vmem:[%s1 + $0xe0] sm:$0xff]
  %v8035 = vld [vmem:[%s1 + $0xe8] sm:$0xff]
  %v8036 = vld [vmem:[%s1 + $0xf0] sm:$0xff]
  %v8037 = vld [vmem:[%s1 + $0xf8] sm:$0x1]
  %v8038 = vlaneseq
  %v8039 = vshrl.u32 %v8038, 7
  %v8040 = vsub.s32 0, %v8039
  %v8041 = vrot.slane %v8037, %v8040
  %vm8042 = vcmask 392192
  %v8044 = vsel %vm8042, %v8029, 0
  %v8047 = vsel %vm8042, %v8030, 0
  %8049 = vmatprep.subr.mxu0 0.0
  %8050 = vmatpush1.msra.mxu0 0.0
  %8051 = vmatprep.subr.mxu0 0.0
  %8052 = vmatpush1.msra.mxu0 0.0
  %8053 = vmatprep.subr.mxu0 0.0
  %8054 = vmatpush1.msra.mxu0 0.0
  %8055 = vmatprep.subr.mxu0 0.0
  %8056 = vmatpush1.msra.mxu0 0.0
  %8057 = vmatprep.subr.mxu0 0.0
  %8058 = vmatpush1.msra.mxu0 0.0
  %8059 = vmatprep.subr.mxu0 0.0
  %8060 = vmatpush1.msra.mxu0 0.0
  %8061 = vmatprep.subr.mxu0 0.0
  %8062 = vmatpush1.msra.mxu0 0.0
  %8063 = vmatprep.subr.mxu0 0.0
  %8064 = vmatpush1.msra.mxu0 0.0
  %8065 = vmatprep.subr.mxu0 0.0
  %8066 = vmatpush1.msra.mxu0 0.0
  %8067 = vmatprep.subr.mxu0 0.0
  %8068 = vmatpush1.msra.mxu0 0.0
  %8069 = vmatprep.subr.mxu0 0.0
  %8070 = vmatpush1.msra.mxu0 %v8036
  %8071 = vmatprep.subr.mxu0 0.0
  %8072 = vmatpush1.msra.mxu0 %v8035
  %8073 = vmatprep.subr.mxu0 0.0
  %8074 = vmatpush1.msra.mxu0 %v8034
  %8075 = vmatprep.subr.mxu0 0.0
  %8076 = vmatpush1.msra.mxu0 %v8033
  %8077 = vmatprep.subr.mxu0 0.0
  %8078 = vmatpush1.msra.mxu0 %v8032
  %8079 = vmatprep.subr.mxu0 0.0
  %8080 = vmatpush1.msra.mxu0 %v8031
  %8081 = vmatprep.subr.mxu0 0.0
  %8082 = vmatpush2.msra.mxu0 0.0
  %8083 = vmatprep.subr.mxu0 0.0
  %8084 = vmatpush2.msra.mxu0 0.0
  %8085 = vmatprep.subr.mxu0 0.0
  %8086 = vmatpush2.msra.mxu0 0.0
  %8087 = vmatprep.subr.mxu0 0.0
  %8088 = vmatpush2.msra.mxu0 0.0
  %8089 = vmatprep.subr.mxu0 0.0
  %8090 = vmatpush2.msra.mxu0 0.0
  %8091 = vmatprep.subr.mxu0 0.0
  %8092 = vmatpush2.msra.mxu0 0.0
  %8093 = vmatprep.subr.mxu0 0.0
  %8094 = vmatpush2.msra.mxu0 0.0
  %8095 = vmatprep.subr.mxu0 0.0
  %8096 = vmatpush2.msra.mxu0 0.0
  %8097 = vmatprep.subr.mxu0 0.0
  %8098 = vmatpush2.msra.mxu0 0.0
  %8099 = vmatprep.subr.mxu0 0.0
  %8100 = vmatpush2.msra.mxu0 0.0
  %8101 = vmatprep.subr.mxu0 0.0
  %8102 = vmatpush2.msra.mxu0 0.0
  %8103 = vmatprep.subr.mxu0 0.0
  %8104 = vmatpush2.msra.mxu0 0.0
  %8105 = vmatprep.subr.mxu0 0.0
  %8106 = vmatpush2.msra.mxu0 0.0
  %8107 = vmatprep.subr.mxu0 0.0
  %8108 = vmatpush2.msra.mxu0 0.0
  %8109 = vmatprep.subr.mxu0 0.0
  %8110 = vmatpush2.msra.mxu0 0.0
  %8111 = vmatprep.subr.mxu0 0.0
  %8112 = vmatpush2.msra.mxu0 0.0
  %8113 = vmatprep.mubr.f32.mxu0 0.0
  %8114 = vmatmul.mubr.f32.gmra.mxu0 %v8044
  %v8115 = vpop.f32.mrf.mxu0
  %v8116 = vadd.f32 %v8041, %v8115
  %v8117 = vpop.f32.mrf.mxu0
  %8118 = vmatprep.mubr.f32.mxu0 0.0
  %8119 = vmatmul.mubr.f32.gmra.mxu0 %v8047
  %v8120 = vpop.f32.mrf.mxu0
  %v8121 = vadd.f32 %v8041, %v8120
  %v8122 = vpop.f32.mrf.mxu0
  %8123 = vdwg.mxu0
  %v8124 = vmax.f32 %v8116, 0.0
  %v8125 = vmax.f32 %v8121, 0.0
  %v8126 = vld [vmem:[%s1 + $0x100] sm:$0xff]
  %v8127 = vld [vmem:[%s1 + $0x108] sm:$0xff]
  %v8128 = vld [vmem:[%s1 + $0x110] sm:$0xff]
  %v8129 = vld [vmem:[%s1 + $0x118] sm:$0x1]
  %v8130 = vlaneseq
  %v8131 = vshrl.u32 %v8130, 7
  %v8132 = vsub.s32 0, %v8131
  %v8133 = vrot.slane %v8129, %v8132
  %v8135 = vsel %vm2630, %v17, 0
  %v8138 = vsel %vm2630, %v18, 0
  %8140 = vmatprep.subr.mxu0 0.0
  %8141 = vmatpush1.msra.mxu0 0.0
  %8142 = vmatprep.subr.mxu0 0.0
  %8143 = vmatpush1.msra.mxu0 0.0
  %8144 = vmatprep.subr.mxu0 0.0
  %8145 = vmatpush1.msra.mxu0 0.0
  %8146 = vmatprep.subr.mxu0 0.0
  %8147 = vmatpush1.msra.mxu0 0.0
  %8148 = vmatprep.subr.mxu0 0.0
  %8149 = vmatpush1.msra.mxu0 0.0
  %8150 = vmatprep.subr.mxu0 0.0
  %8151 = vmatpush1.msra.mxu0 0.0
  %8152 = vmatprep.subr.mxu0 0.0
  %8153 = vmatpush1.msra.mxu0 0.0
  %8154 = vmatprep.subr.mxu0 0.0
  %8155 = vmatpush1.msra.mxu0 0.0
  %8156 = vmatprep.subr.mxu0 0.0
  %8157 = vmatpush1.msra.mxu0 0.0
  %8158 = vmatprep.subr.mxu0 0.0
  %8159 = vmatpush1.msra.mxu0 0.0
  %8160 = vmatprep.subr.mxu0 0.0
  %8161 = vmatpush1.msra.mxu0 0.0
  %8162 = vmatprep.subr.mxu0 0.0
  %8163 = vmatpush1.msra.mxu0 0.0
  %8164 = vmatprep.subr.mxu0 0.0
  %8165 = vmatpush1.msra.mxu0 0.0
  %8166 = vmatprep.subr.mxu0 0.0
  %8167 = vmatpush1.msra.mxu0 %v8128
  %8168 = vmatprep.subr.mxu0 0.0
  %8169 = vmatpush1.msra.mxu0 %v8127
  %8170 = vmatprep.subr.mxu0 0.0
  %8171 = vmatpush1.msra.mxu0 %v8126
  %8172 = vmatprep.subr.mxu0 0.0
  %8173 = vmatpush2.msra.mxu0 0.0
  %8174 = vmatprep.subr.mxu0 0.0
  %8175 = vmatpush2.msra.mxu0 0.0
  %8176 = vmatprep.subr.mxu0 0.0
  %8177 = vmatpush2.msra.mxu0 0.0
  %8178 = vmatprep.subr.mxu0 0.0
  %8179 = vmatpush2.msra.mxu0 0.0
  %8180 = vmatprep.subr.mxu0 0.0
  %8181 = vmatpush2.msra.mxu0 0.0
  %8182 = vmatprep.subr.mxu0 0.0
  %8183 = vmatpush2.msra.mxu0 0.0
  %8184 = vmatprep.subr.mxu0 0.0
  %8185 = vmatpush2.msra.mxu0 0.0
  %8186 = vmatprep.subr.mxu0 0.0
  %8187 = vmatpush2.msra.mxu0 0.0
  %8188 = vmatprep.subr.mxu0 0.0
  %8189 = vmatpush2.msra.mxu0 0.0
  %8190 = vmatprep.subr.mxu0 0.0
  %8191 = vmatpush2.msra.mxu0 0.0
  %8192 = vmatprep.subr.mxu0 0.0
  %8193 = vmatpush2.msra.mxu0 0.0
  %8194 = vmatprep.subr.mxu0 0.0
  %8195 = vmatpush2.msra.mxu0 0.0
  %8196 = vmatprep.subr.mxu0 0.0
  %8197 = vmatpush2.msra.mxu0 0.0
  %8198 = vmatprep.subr.mxu0 0.0
  %8199 = vmatpush2.msra.mxu0 0.0
  %8200 = vmatprep.subr.mxu0 0.0
  %8201 = vmatpush2.msra.mxu0 0.0
  %8202 = vmatprep.subr.mxu0 0.0
  %8203 = vmatpush2.msra.mxu0 0.0
  %8204 = vmatprep.mubr.f32.mxu0 0.0
  %8205 = vmatmul.mubr.f32.gmra.mxu0 %v8135
  %v8206 = vpop.f32.mrf.mxu0
  %v8207 = vadd.f32 %v8133, %v8206
  %v8208 = vpop.f32.mrf.mxu0
  %8209 = vmatprep.mubr.f32.mxu0 0.0
  %8210 = vmatmul.mubr.f32.gmra.mxu0 %v8138
  %v8211 = vpop.f32.mrf.mxu0
  %v8212 = vadd.f32 %v8133, %v8211
  %v8213 = vpop.f32.mrf.mxu0
  %8214 = vdwg.mxu0
  %v8215 = vadd.f32 %v8207, %v8124
  %v8216 = vadd.f32 %v8212, %v8125
  %v8217 = vmax.f32 %v8215, 0.0
  %v8218 = vmax.f32 %v8216, 0.0
  %v8219 = vld [vmem:[%s1 + $0x130] sm:$0xff]
  %v8220 = vld [vmem:[%s1 + $0x138] sm:$0xff]
  %v8221 = vld [vmem:[%s1 + $0x140] sm:$0xff]
  %v8222 = vld [vmem:[%s1 + $0x148] sm:$0xff]
  %v8224 = vsel %vm7925, %v8217, 0
  %v8227 = vsel %vm7925, %v8218, 0
  %8229 = vmatprep.subr.mxu0 0.0
  %8230 = vmatpush1.msra.mxu0 0.0
  %8231 = vmatprep.subr.mxu0 0.0
  %8232 = vmatpush1.msra.mxu0 0.0
  %8233 = vmatprep.subr.mxu0 0.0
  %8234 = vmatpush1.msra.mxu0 0.0
  %8235 = vmatprep.subr.mxu0 0.0
  %8236 = vmatpush1.msra.mxu0 0.0
  %8237 = vmatprep.subr.mxu0 0.0
  %8238 = vmatpush1.msra.mxu0 0.0
  %8239 = vmatprep.subr.mxu0 0.0
  %8240 = vmatpush1.msra.mxu0 0.0
  %8241 = vmatprep.subr.mxu0 0.0
  %8242 = vmatpush1.msra.mxu0 0.0
  %8243 = vmatprep.subr.mxu0 0.0
  %8244 = vmatpush1.msra.mxu0 0.0
  %8245 = vmatprep.subr.mxu0 0.0
  %8246 = vmatpush1.msra.mxu0 0.0
  %8247 = vmatprep.subr.mxu0 0.0
  %8248 = vmatpush1.msra.mxu0 0.0
  %8249 = vmatprep.subr.mxu0 0.0
  %8250 = vmatpush1.msra.mxu0 0.0
  %8251 = vmatprep.subr.mxu0 0.0
  %8252 = vmatpush1.msra.mxu0 0.0
  %8253 = vmatprep.subr.mxu0 0.0
  %8254 = vmatpush1.msra.mxu0 %v8222
  %8255 = vmatprep.subr.mxu0 0.0
  %8256 = vmatpush1.msra.mxu0 %v8221
  %8257 = vmatprep.subr.mxu0 0.0
  %8258 = vmatpush1.msra.mxu0 %v8220
  %8259 = vmatprep.subr.mxu0 0.0
  %8260 = vmatpush1.msra.mxu0 %v8219
  %8261 = vmatprep.subr.mxu0 0.0
  %8262 = vmatpush2.msra.mxu0 0.0
  %8263 = vmatprep.subr.mxu0 0.0
  %8264 = vmatpush2.msra.mxu0 0.0
  %8265 = vmatprep.subr.mxu0 0.0
  %8266 = vmatpush2.msra.mxu0 0.0
  %8267 = vmatprep.subr.mxu0 0.0
  %8268 = vmatpush2.msra.mxu0 0.0
  %8269 = vmatprep.subr.mxu0 0.0
  %8270 = vmatpush2.msra.mxu0 0.0
  %8271 = vmatprep.subr.mxu0 0.0
  %8272 = vmatpush2.msra.mxu0 0.0
  %8273 = vmatprep.subr.mxu0 0.0
  %8274 = vmatpush2.msra.mxu0 0.0
  %8275 = vmatprep.subr.mxu0 0.0
  %8276 = vmatpush2.msra.mxu0 0.0
  %8277 = vmatprep.subr.mxu0 0.0
  %8278 = vmatpush2.msra.mxu0 0.0
  %8279 = vmatprep.subr.mxu0 0.0
  %8280 = vmatpush2.msra.mxu0 0.0
  %8281 = vmatprep.subr.mxu0 0.0
  %8282 = vmatpush2.msra.mxu0 0.0
  %8283 = vmatprep.subr.mxu0 0.0
  %8284 = vmatpush2.msra.mxu0 0.0
  %8285 = vmatprep.subr.mxu0 0.0
  %8286 = vmatpush2.msra.mxu0 0.0
  %8287 = vmatprep.subr.mxu0 0.0
  %8288 = vmatpush2.msra.mxu0 0.0
  %8289 = vmatprep.subr.mxu0 0.0
  %8290 = vmatpush2.msra.mxu0 0.0
  %8291 = vmatprep.subr.mxu0 0.0
  %8292 = vmatpush2.msra.mxu0 0.0
  %8293 = vmatprep.mubr.f32.mxu0 0.0
  %8294 = vmatmul.mubr.f32.gmra.mxu0 %v8224
  %v8295 = vpop.f32.mrf.mxu0
  %v8296 = vadd.f32 0.0, %v8295
  %v8297 = vpop.f32.mrf.mxu0
  %8298 = vmatprep.mubr.f32.mxu0 0.0
  %8299 = vmatmul.mubr.f32.gmra.mxu0 %v8227
  %v8300 = vpop.f32.mrf.mxu0
  %v8301 = vadd.f32 0.0, %v8300
  %v8302 = vpop.f32.mrf.mxu0
  %8303 = vdwg.mxu0
  %v8304 = vmul.f32 %v8217, %v8217
  %v8305 = vmul.f32 %v8218, %v8218
  %v8307 = vsel %vm7925, %v8304, 0
  %v8310 = vsel %vm7925, %v8305, 0
  %8312 = vmatprep.subr.mxu0 0.0
  %8313 = vmatpush1.msra.mxu0 0.0
  %8314 = vmatprep.subr.mxu0 0.0
  %8315 = vmatpush1.msra.mxu0 0.0
  %8316 = vmatprep.subr.mxu0 0.0
  %8317 = vmatpush1.msra.mxu0 0.0
  %8318 = vmatprep.subr.mxu0 0.0
  %8319 = vmatpush1.msra.mxu0 0.0
  %8320 = vmatprep.subr.mxu0 0.0
  %8321 = vmatpush1.msra.mxu0 0.0
  %8322 = vmatprep.subr.mxu0 0.0
  %8323 = vmatpush1.msra.mxu0 0.0
  %8324 = vmatprep.subr.mxu0 0.0
  %8325 = vmatpush1.msra.mxu0 0.0
  %8326 = vmatprep.subr.mxu0 0.0
  %8327 = vmatpush1.msra.mxu0 0.0
  %8328 = vmatprep.subr.mxu0 0.0
  %8329 = vmatpush1.msra.mxu0 0.0
  %8330 = vmatprep.subr.mxu0 0.0
  %8331 = vmatpush1.msra.mxu0 0.0
  %8332 = vmatprep.subr.mxu0 0.0
  %8333 = vmatpush1.msra.mxu0 0.0
  %8334 = vmatprep.subr.mxu0 0.0
  %8335 = vmatpush1.msra.mxu0 0.0
  %8336 = vmatprep.subr.mxu0 0.0
  %8337 = vmatpush1.msra.mxu0 %v8222
  %8338 = vmatprep.subr.mxu0 0.0
  %8339 = vmatpush1.msra.mxu0 %v8221
  %8340 = vmatprep.subr.mxu0 0.0
  %8341 = vmatpush1.msra.mxu0 %v8220
  %8342 = vmatprep.subr.mxu0 0.0
  %8343 = vmatpush1.msra.mxu0 %v8219
  %8344 = vmatprep.subr.mxu0 0.0
  %8345 = vmatpush2.msra.mxu0 0.0
  %8346 = vmatprep.subr.mxu0 0.0
  %8347 = vmatpush2.msra.mxu0 0.0
  %8348 = vmatprep.subr.mxu0 0.0
  %8349 = vmatpush2.msra.mxu0 0.0
  %8350 = vmatprep.subr.mxu0 0.0
  %8351 = vmatpush2.msra.mxu0 0.0
  %8352 = vmatprep.subr.mxu0 0.0
  %8353 = vmatpush2.msra.mxu0 0.0
  %8354 = vmatprep.subr.mxu0 0.0
  %8355 = vmatpush2.msra.mxu0 0.0
  %8356 = vmatprep.subr.mxu0 0.0
  %8357 = vmatpush2.msra.mxu0 0.0
  %8358 = vmatprep.subr.mxu0 0.0
  %8359 = vmatpush2.msra.mxu0 0.0
  %8360 = vmatprep.subr.mxu0 0.0
  %8361 = vmatpush2.msra.mxu0 0.0
  %8362 = vmatprep.subr.mxu0 0.0
  %8363 = vmatpush2.msra.mxu0 0.0
  %8364 = vmatprep.subr.mxu0 0.0
  %8365 = vmatpush2.msra.mxu0 0.0
  %8366 = vmatprep.subr.mxu0 0.0
  %8367 = vmatpush2.msra.mxu0 0.0
  %8368 = vmatprep.subr.mxu0 0.0
  %8369 = vmatpush2.msra.mxu0 0.0
  %8370 = vmatprep.subr.mxu0 0.0
  %8371 = vmatpush2.msra.mxu0 0.0
  %8372 = vmatprep.subr.mxu0 0.0
  %8373 = vmatpush2.msra.mxu0 0.0
  %8374 = vmatprep.subr.mxu0 0.0
  %8375 = vmatpush2.msra.mxu0 0.0
  %8376 = vmatprep.mubr.f32.mxu0 0.0
  %8377 = vmatmul.mubr.f32.gmra.mxu0 %v8307
  %v8378 = vpop.f32.mrf.mxu0
  %v8379 = vadd.f32 0.0, %v8378
  %v8380 = vpop.f32.mrf.mxu0
  %8381 = vmatprep.mubr.f32.mxu0 0.0
  %8382 = vmatmul.mubr.f32.gmra.mxu0 %v8310
  %v8383 = vpop.f32.mrf.mxu0
  %v8384 = vadd.f32 0.0, %v8383
  %v8385 = vpop.f32.mrf.mxu0
  %8386 = vdwg.mxu0
  %v8387 = vmul.f32 %v8296, %v8296
  %v8388 = vmul.f32 %v8301, %v8301
  %v8389 = vsub.f32 %v8379, %v8387
  %v8390 = vsub.f32 %v8384, %v8388
  %v8391 = vmax.f32 %v8389, 0.0
  %v8392 = vmax.f32 %v8390, 0.0
  %v8393 = vsub.f32 %v8217, %v8296
  %v8394 = vsub.f32 %v8218, %v8301
  %v8395 = vadd.f32 %v8391, 1e-05
  %v8396 = vadd.f32 %v8392, 1e-05
  %v8397 = vrsqrt.pop %v8395
  %v8398 = vrsqrt.pop %v8396
  %v8399 = vmul.f32 %v8393, %v8397
  %v8400 = vmul.f32 %v8394, %v8398
  %v8401 = vld [vmem:[%s1 + $0x120] sm:$0x1]
  %v8402 = vlaneseq
  %v8403 = vshrl.u32 %v8402, 7
  %v8404 = vsub.s32 0, %v8403
  %v8405 = vrot.slane %v8401, %v8404
  %v8406 = vmul.f32 %v8399, %v8405
  %v8407 = vmul.f32 %v8400, %v8405
  %v8408 = vld [vmem:[%s1 + $0x128] sm:$0x1]
  %v8409 = vlaneseq
  %v8410 = vshrl.u32 %v8409, 7
  %v8411 = vsub.s32 0, %v8410
  %v8412 = vrot.slane %v8408, %v8411
  %v8413 = vadd.f32 %v8406, %v8412
  %v8414 = vadd.f32 %v8407, %v8412
  %8415 = vst.msk [vmem:[%s2] sm:$0xff] %vm7925, %v8413
  %8416 = vst.msk [vmem:[%s2 + $0x8] sm:$0xff] %vm7925, %v8414
  // Predicated region
  $region10: #{gboot_block_forward.1} parent=0 // pred_check
    _
  $region11: #{gboot_block_forward.1} parent=0 // pred_check_branch
    %8418 = sbr.rel (0) target = $region13
  $region12: #{gboot_block_forward.1} parent=0 // pred_region
    _
  $region13: #{gboot_block_forward.1} parent=0 // pred_fallthru
    _
  // Predicated region
  $region14: #{gboot_block_forward.1} parent=0 // pred_check
    _
  $region15: #{gboot_block_forward.1} parent=0 // pred_check_branch
    %8420 = sbr.rel (0) target = $region17
  $region16: #{gboot_block_forward.1} parent=0 // pred_region
    _
  $region17: #{gboot_block_forward.1} parent=0 // pred_fallthru
    _

</llo_original>
